<compile_context>
chip_gen: v7x
topology: tpu7x:2x2x1
jax: 0.10.0
libtpu: 0.0.40
codegen_flags: <defaults>
</compile_context>

<pallas_src>
import jax
import jax.numpy as jnp
from jax import lax
from jax.experimental import pallas as pl
from jax.experimental.pallas import tpu as pltpu

IMAGENET_MEAN = (0.485, 0.456, 0.406)
IMAGENET_STD = (0.229, 0.224, 0.225)
LAYER_WEIGHT_0 = 0.38461538  # PerceptualLoss.weights[0]


# ---------------------------------------------------------------------------
# Fused kernel: normalize + pixel L1 + conv1+ReLU + conv2+ReLU + feature L1
# ---------------------------------------------------------------------------
def _perceptual_kernel(x_ref, y_ref, mean_ref, istd_ref,
                       w1_ref, b1_ref, w2_ref, b2_ref,
                       s0_ref, s1_ref,
                       pin_ref, col_ref, fpad_ref):
    # x/y   : (1, H, W, 3) raw inputs
    # mean  : (1, 1, 3), istd: (1, 1, 3)
    # w1    : (9*128, 128) block-diag conv1 weight (inv_std folded in)
    # b1    : (1, 128) = [b1 | b1]
    # w2    : (9*128, 128) block-diag conv2 weight
    # b2    : (1, 128) = [b2 | b2]
    # s0/s1 : (1, 1, 1) per-image partial L1 sums (pixel / feature space)
    # pin   : (H+2, W+2, 128) scratch: lanes 0:3 = x-mean, 3:6 = y-mean, rest 0
    # col   : (H*W, 9*128) shared im2col scratch (conv1 then conv2)
    # fpad  : (H+2, W+2, 128) scratch: conv1 outputs, zero border (SAME pad)
    _, H, W, Cin = x_ref.shape
    Hp, Wp, L = pin_ref.shape
    C1 = L // 2                                             # 64

    x = x_ref[0]                                            # (H, W, 3)
    y = y_ref[0]
    mean_v = mean_ref[...]                                  # (1, 1, 3)
    istd_v = istd_ref[...]                                  # (1, 1, 3)

    # Pixel-space L1 partial for this image: |xn - yn| == |x - y| / std.
    s0_ref[...] = jnp.sum(jnp.abs(x - y) * istd_v).reshape(1, 1, 1)

    # Padded conv1 input.  Zero the whole scratch once per step (border gives
    # SAME padding; unused lanes must be finite so the zero rows of w1big
    # never multiply VMEM garbage), then write the 6 active interior lanes.
    pin_ref[...] = jnp.zeros_like(pin_ref)
    pin_ref[1:H + 1, 1:W + 1, 0:Cin] = x - mean_v
    pin_ref[1:H + 1, 1:W + 1, Cin:2 * Cin] = y - mean_v

    def conv3x3_relu(src_ref, w_ref_, b_ref_):
        # im2col: 9 lane-dense (H*W, 128) copies at 128-aligned lane offsets.
        for k in range(9):
            ky, kx = divmod(k, 3)
            col_ref[:, k * L:(k + 1) * L] = (
                src_ref[ky:ky + H, kx:kx + W, :].reshape(H * W, L))
        out = jnp.dot(col_ref[...], w_ref_[...],
                      preferred_element_type=jnp.float32)
        return jnp.maximum(out + b_ref_[...], 0.0)          # (H*W, 128)

    # conv1 + ReLU for x AND y in one MXU push (block-diagonal weight):
    # lanes 0:64 = relu(conv1(xn)), lanes 64:128 = relu(conv1(yn)).
    f1 = conv3x3_relu(pin_ref, w1_ref, b1_ref)

    # conv2 SAME padding: zero only the 1-px border, then one unmasked
    # 128-lane-dense interior store of the conv1 output.
    fpad_ref[0:1, :, :] = jnp.zeros((1, Wp, L), jnp.float32)
    fpad_ref[Hp - 1:Hp, :, :] = jnp.zeros((1, Wp, L), jnp.float32)
    fpad_ref[:, 0:1, :] = jnp.zeros((Hp, 1, L), jnp.float32)
    fpad_ref[:, Wp - 1:Wp, :] = jnp.zeros((Hp, 1, L), jnp.float32)
    fpad_ref[1:H + 1, 1:W + 1, :] = f1.reshape(H, W, L)

    # conv2 + ReLU for fx AND fy in one MXU push, fused with the feature L1
    # (the conv2 feature maps never leave registers/VMEM).
    f2 = conv3x3_relu(fpad_ref, w2_ref, b2_ref)
    fx = f2[:, 0:C1]
    fy = f2[:, C1:L]
    s1_ref[...] = jnp.sum(jnp.abs(fx - fy)).reshape(1, 1, 1)


# ---------------------------------------------------------------------------
# Wrapper (layout / weight prep glue)
# ---------------------------------------------------------------------------
def perceptual_loss(x_nchw, y_nchw, params):
    """num_layers=1 PerceptualLoss forward. Inputs are NCHW (PyTorch layout)."""
    w1, b1, w2, b2 = params                  # conv weights in HWIO
    B, C, H, W = x_nchw.shape
    C1 = w1.shape[-1]                        # 64
    C2 = w2.shape[-1]                        # 64
    assert C == 3 and C1 == 64 and C2 == 64
    assert H % 8 == 0 and W % 8 == 0         # keeps in-kernel reshapes layout-free
    L = 2 * C1                               # 128 lanes: x path | y path

    x = jnp.transpose(x_nchw, (0, 2, 3, 1)).astype(jnp.float32)   # NHWC
    y = jnp.transpose(y_nchw, (0, 2, 3, 1)).astype(jnp.float32)

    mean = jnp.asarray(IMAGENET_MEAN, jnp.float32).reshape(1, 1, 3)
    inv_std = (1.0 / jnp.asarray(IMAGENET_STD, jnp.float32)).reshape(1, 1, 3)

    # conv1 weight: fold inv_std (exact: padded zeros stay zero) and lay it out
    # block-diagonally over a 9*128-row K:
    #   rows k*128 + (0:3) -> output lanes 0:64   (x path)
    #   rows k*128 + (3:6) -> output lanes 64:128 (y path)
    w1f = (w1.astype(jnp.float32) * inv_std.reshape(1, 1, 3, 1)).reshape(9, C, C1)
    w1big = jnp.zeros((9, L, L), jnp.float32)
    w1big = w1big.at[:, 0:C, 0:C1].set(w1f)
    w1big = w1big.at[:, C:2 * C, C1:L].set(w1f)
    w1big = w1big.reshape(9 * L, L)

    # conv2 weight, block-diagonal per tap: fx stays in lanes 0:64, fy in 64:128.
    w2r = w2.astype(jnp.float32).reshape(9, C1, C2)
    w2big = jnp.zeros((9, L, L), jnp.float32)
    w2big = w2big.at[:, 0:C1, 0:C2].set(w2r)
    w2big = w2big.at[:, C1:L, C2:L].set(w2r)
    w2big = w2big.reshape(9 * L, L)

    b1cat = jnp.concatenate([b1, b1]).astype(jnp.float32).reshape(1, L)
    b2cat = jnp.concatenate([b2, b2]).astype(jnp.float32).reshape(1, L)

    s0, s1 = pl.pallas_call(
        _perceptual_kernel,
        out_shape=(jax.ShapeDtypeStruct((B, 1, 1), jnp.float32),
                   jax.ShapeDtypeStruct((B, 1, 1), jnp.float32)),
        grid=(B,),
        in_specs=[
            pl.BlockSpec((1, H, W, C), lambda i: (i, 0, 0, 0)),
            pl.BlockSpec((1, H, W, C), lambda i: (i, 0, 0, 0)),
            pl.BlockSpec((1, 1, C), lambda i: (0, 0, 0)),
            pl.BlockSpec((1, 1, C), lambda i: (0, 0, 0)),
            pl.BlockSpec((9 * L, L), lambda i: (0, 0)),
            pl.BlockSpec((1, L), lambda i: (0, 0)),
            pl.BlockSpec((9 * L, L), lambda i: (0, 0)),
            pl.BlockSpec((1, L), lambda i: (0, 0)),
        ],
        out_specs=(
            pl.BlockSpec((1, 1, 1), lambda i: (i, 0, 0)),
            pl.BlockSpec((1, 1, 1), lambda i: (i, 0, 0)),
        ),
        scratch_shapes=[
            pltpu.VMEM((H + 2, W + 2, L), jnp.float32),    # padded conv1 input
            pltpu.VMEM((H * W, 9 * L), jnp.float32),       # shared im2col slab
            pltpu.VMEM((H + 2, W + 2, L), jnp.float32),    # padded conv1 output
        ],
        compiler_params=pltpu.CompilerParams(
            dimension_semantics=("parallel",)),
    )(x, y, mean, inv_std, w1big, b1cat, w2big, b2cat)

    loss0 = jnp.sum(s0) / (B * H * W * C)
    loss1 = jnp.sum(s1) / (B * H * W * C2)
    return loss0 + LAYER_WEIGHT_0 * loss1


# ---------------------------------------------------------------------------
# Pure-JAX reference (for correctness check)
# ---------------------------------------------------------------------------
def _reference_loss(x_nchw, y_nchw, params):
    w1, b1, w2, b2 = params
    x = jnp.transpose(x_nchw, (0, 2, 3, 1)).astype(jnp.float32)
    y = jnp.transpose(y_nchw, (0, 2, 3, 1)).astype(jnp.float32)
    mean = jnp.asarray(IMAGENET_MEAN, jnp.float32).reshape(1, 1, 1, 3)
    std = jnp.asarray(IMAGENET_STD, jnp.float32).reshape(1, 1, 1, 3)
    xn, yn = (x - mean) / std, (y - mean) / std
    loss = jnp.mean(jnp.abs(xn - yn))
    dn = ("NHWC", "HWIO", "NHWC")

    def conv(t, w, b):
        o = lax.conv_general_dilated(t, w, (1, 1), "SAME", dimension_numbers=dn)
        return jnp.maximum(o + b.reshape(1, 1, 1, -1), 0.0)

    fx = conv(conv(xn, w1, b1), w2, b2)
    fy = conv(conv(yn, w1, b1), w2, b2)
    return loss + LAYER_WEIGHT_0 * jnp.mean(jnp.abs(fx - fy))


if __name__ == "__main__":
    key = jax.random.PRNGKey(0)
    kx, ky, k1, k2, k3, k4 = jax.random.split(key, 6)

    B, C, H, W = 2, 3, 16, 16
    x = jax.random.uniform(kx, (B, C, H, W), jnp.float32)
    y = jax.random.uniform(ky, (B, C, H, W), jnp.float32)

    # Deterministic synthetic weights with VGG19 features[0]/[2] shapes (OIHW).
    w1_oihw = jax.random.normal(k1, (64, 3, 3, 3), jnp.float32) * 0.1
    b1 = jax.random.normal(k2, (64,), jnp.float32) * 0.1
    w2_oihw = jax.random.normal(k3, (64, 64, 3, 3), jnp.float32) * 0.05
    b2 = jax.random.normal(k4, (64,), jnp.float32) * 0.05
    # OIHW -> HWIO for the NHWC kernels.
    params = (jnp.transpose(w1_oihw, (2, 3, 1, 0)), b1,
              jnp.transpose(w2_oihw, (2, 3, 1, 0)), b2)

    loss = jax.block_until_ready(perceptual_loss(x, y, params))
    ref = jax.block_until_ready(_reference_loss(x, y, params))

    assert jnp.isfinite(loss), "non-finite loss"
    assert abs(float(loss) - float(ref)) < 1e-3 * max(1.0, abs(float(ref))), (loss, ref)
    print("KERNEL_OK")
</pallas_src>

<mosaic_0001>
module attributes {stable_mosaic.version = 11 : i64} {
  func.func @_perceptual_kernel(%arg0: i32, %arg1: memref<1x16x16x3xf32, #tpu.memory_space<vmem>>, %arg2: memref<1x16x16x3xf32, #tpu.memory_space<vmem>>, %arg3: memref<1x1x3xf32, #tpu.memory_space<vmem>>, %arg4: memref<1x1x3xf32, #tpu.memory_space<vmem>>, %arg5: memref<1152x128xf32, #tpu.memory_space<vmem>>, %arg6: memref<1x128xf32, #tpu.memory_space<vmem>>, %arg7: memref<1152x128xf32, #tpu.memory_space<vmem>>, %arg8: memref<1x128xf32, #tpu.memory_space<vmem>>, %arg9: memref<1x1x1xf32, #tpu.memory_space<vmem>>, %arg10: memref<1x1x1xf32, #tpu.memory_space<vmem>>, %arg11: memref<18x18x128xf32, #tpu.memory_space<vmem>>, %arg12: memref<256x1152xf32, #tpu.memory_space<vmem>>, %arg13: memref<18x18x128xf32, #tpu.memory_space<vmem>>) attributes {dimension_semantics = [#tpu.dimension_semantics<parallel>], iteration_bounds = array<i64: 2>, scalar_prefetch = 0 : i64, scratch_operands = 3 : i64, tpu.core_type = #tpu.core_type<tc>, window_params = [{transform_indices = @transform_0, window_bounds = array<i64: 1, 16, 16, 3>}, {transform_indices = @transform_1, window_bounds = array<i64: 1, 16, 16, 3>}, {pipeline_mode = #tpu.pipeline_mode<synchronous>, transform_indices = @transform_2, window_bounds = array<i64: 1, 1, 3>}, {pipeline_mode = #tpu.pipeline_mode<synchronous>, transform_indices = @transform_3, window_bounds = array<i64: 1, 1, 3>}, {pipeline_mode = #tpu.pipeline_mode<synchronous>, transform_indices = @transform_4, window_bounds = array<i64: 1152, 128>}, {pipeline_mode = #tpu.pipeline_mode<synchronous>, transform_indices = @transform_5, window_bounds = array<i64: 1, 128>}, {pipeline_mode = #tpu.pipeline_mode<synchronous>, transform_indices = @transform_6, window_bounds = array<i64: 1152, 128>}, {pipeline_mode = #tpu.pipeline_mode<synchronous>, transform_indices = @transform_7, window_bounds = array<i64: 1, 128>}, {transform_indices = @transform_8, window_bounds = array<i64: 1, 1, 1>}, {transform_indices = @transform_9, window_bounds = array<i64: 1, 1, 1>}]} {
    %c0 = arith.constant 0 : index
    %c0_0 = arith.constant 0 : index
    %c0_1 = arith.constant 0 : index
    %c0_2 = arith.constant 0 : index
    %0 = vector.load %arg1[%c0, %c0_0, %c0_1, %c0_2] : memref<1x16x16x3xf32, #tpu.memory_space<vmem>>, vector<1x16x16x3xf32>
    %1 = vector.shape_cast %0 : vector<1x16x16x3xf32> to vector<16x16x3xf32>
    %c0_3 = arith.constant 0 : index
    %c0_4 = arith.constant 0 : index
    %c0_5 = arith.constant 0 : index
    %c0_6 = arith.constant 0 : index
    %2 = vector.load %arg2[%c0_3, %c0_4, %c0_5, %c0_6] : memref<1x16x16x3xf32, #tpu.memory_space<vmem>>, vector<1x16x16x3xf32>
    %3 = vector.shape_cast %2 : vector<1x16x16x3xf32> to vector<16x16x3xf32>
    %c0_7 = arith.constant 0 : index
    %c0_8 = arith.constant 0 : index
    %c0_9 = arith.constant 0 : index
    %4 = vector.load %arg3[%c0_7, %c0_8, %c0_9] : memref<1x1x3xf32, #tpu.memory_space<vmem>>, vector<1x1x3xf32>
    %c0_10 = arith.constant 0 : index
    %c0_11 = arith.constant 0 : index
    %c0_12 = arith.constant 0 : index
    %5 = vector.load %arg4[%c0_10, %c0_11, %c0_12] : memref<1x1x3xf32, #tpu.memory_space<vmem>>, vector<1x1x3xf32>
    %6 = arith.subf %1, %3 : vector<16x16x3xf32>
    %7 = math.absf %6 : vector<16x16x3xf32>
    %8 = vector.broadcast %5 : vector<1x1x3xf32> to vector<16x16x3xf32>
    %9 = arith.mulf %7, %8 : vector<16x16x3xf32>
    %10 = vector.shape_cast %9 : vector<16x16x3xf32> to vector<1x16x16x3xf32>
    %cst = arith.constant dense<0.000000e+00> : vector<1xf32>
    %11 = vector.multi_reduction <add>, %10, %cst [1, 2, 3] : vector<1x16x16x3xf32> to vector<1xf32>
    %12 = vector.shape_cast %11 : vector<1xf32> to vector<1x1x1x1xf32>
    %13 = vector.extract %12[0, 0, 0, 0] : f32 from vector<1x1x1x1xf32>
    %14 = vector.broadcast %13 : f32 to vector<1x1x1xf32>
    %c0_13 = arith.constant 0 : index
    %c0_14 = arith.constant 0 : index
    %c0_15 = arith.constant 0 : index
    %15 = vector.load %arg9[%c0_13, %c0_14, %c0_15] : memref<1x1x1xf32, #tpu.memory_space<vmem>>, vector<1x1x1xf32>
    tpu.vector_store %arg9[%c0_13, %c0_14, %c0_15], %14 {strides = array<i32>} : memref<1x1x1xf32, #tpu.memory_space<vmem>>, vector<1x1x1xf32>,
    %cst_16 = arith.constant 0.000000e+00 : f32
    %16 = vector.broadcast %cst_16 : f32 to vector<18x18x128xf32>
    %c0_17 = arith.constant 0 : index
    %c0_18 = arith.constant 0 : index
    %c0_19 = arith.constant 0 : index
    %17 = vector.load %arg11[%c0_17, %c0_18, %c0_19] : memref<18x18x128xf32, #tpu.memory_space<vmem>>, vector<18x18x128xf32>
    tpu.vector_store %arg11[%c0_17, %c0_18, %c0_19], %16 {strides = array<i32>} : memref<18x18x128xf32, #tpu.memory_space<vmem>>, vector<18x18x128xf32>,
    %18 = vector.broadcast %4 : vector<1x1x3xf32> to vector<16x16x3xf32>
    %19 = arith.subf %1, %18 : vector<16x16x3xf32>
    %c1 = arith.constant 1 : index
    %c1_20 = arith.constant 1 : index
    %c0_21 = arith.constant 0 : index
    %20 = vector.load %arg11[%c1, %c1_20, %c0_21] : memref<18x18x128xf32, #tpu.memory_space<vmem>>, vector<16x16x3xf32>
    tpu.vector_store %arg11[%c1, %c1_20, %c0_21], %19 {strides = array<i32>} : memref<18x18x128xf32, #tpu.memory_space<vmem>>, vector<16x16x3xf32>,
    %21 = vector.broadcast %4 : vector<1x1x3xf32> to vector<16x16x3xf32>
    %22 = arith.subf %3, %21 : vector<16x16x3xf32>
    %c1_22 = arith.constant 1 : index
    %c1_23 = arith.constant 1 : index
    %c3 = arith.constant 3 : index
    %23 = vector.load %arg11[%c1_22, %c1_23, %c3] : memref<18x18x128xf32, #tpu.memory_space<vmem>>, vector<16x16x3xf32>
    tpu.vector_store %arg11[%c1_22, %c1_23, %c3], %22 {strides = array<i32>} : memref<18x18x128xf32, #tpu.memory_space<vmem>>, vector<16x16x3xf32>,
    %c0_24 = arith.constant 0 : index
    %c0_25 = arith.constant 0 : index
    %c0_26 = arith.constant 0 : index
    %24 = vector.load %arg11[%c0_24, %c0_25, %c0_26] : memref<18x18x128xf32, #tpu.memory_space<vmem>>, vector<16x16x128xf32>
    %25 = vector.shape_cast %24 : vector<16x16x128xf32> to vector<256x128xf32>
    %c0_27 = arith.constant 0 : index
    %c0_28 = arith.constant 0 : index
    %26 = vector.load %arg12[%c0_27, %c0_28] : memref<256x1152xf32, #tpu.memory_space<vmem>>, vector<256x128xf32>
    tpu.vector_store %arg12[%c0_27, %c0_28], %25 {strides = array<i32>} : memref<256x1152xf32, #tpu.memory_space<vmem>>, vector<256x128xf32>,
    %c0_29 = arith.constant 0 : index
    %c1_30 = arith.constant 1 : index
    %c0_31 = arith.constant 0 : index
    %27 = vector.load %arg11[%c0_29, %c1_30, %c0_31] : memref<18x18x128xf32, #tpu.memory_space<vmem>>, vector<16x16x128xf32>
    %28 = vector.shape_cast %27 : vector<16x16x128xf32> to vector<256x128xf32>
    %c0_32 = arith.constant 0 : index
    %c128 = arith.constant 128 : index
    %29 = vector.load %arg12[%c0_32, %c128] : memref<256x1152xf32, #tpu.memory_space<vmem>>, vector<256x128xf32>
    tpu.vector_store %arg12[%c0_32, %c128], %28 {strides = array<i32>} : memref<256x1152xf32, #tpu.memory_space<vmem>>, vector<256x128xf32>,
    %c0_33 = arith.constant 0 : index
    %c2 = arith.constant 2 : index
    %c0_34 = arith.constant 0 : index
    %30 = vector.load %arg11[%c0_33, %c2, %c0_34] : memref<18x18x128xf32, #tpu.memory_space<vmem>>, vector<16x16x128xf32>
    %31 = vector.shape_cast %30 : vector<16x16x128xf32> to vector<256x128xf32>
    %c0_35 = arith.constant 0 : index
    %c256 = arith.constant 256 : index
    %32 = vector.load %arg12[%c0_35, %c256] : memref<256x1152xf32, #tpu.memory_space<vmem>>, vector<256x128xf32>
    tpu.vector_store %arg12[%c0_35, %c256], %31 {strides = array<i32>} : memref<256x1152xf32, #tpu.memory_space<vmem>>, vector<256x128xf32>,
    %c1_36 = arith.constant 1 : index
    %c0_37 = arith.constant 0 : index
    %c0_38 = arith.constant 0 : index
    %33 = vector.load %arg11[%c1_36, %c0_37, %c0_38] : memref<18x18x128xf32, #tpu.memory_space<vmem>>, vector<16x16x128xf32>
    %34 = vector.shape_cast %33 : vector<16x16x128xf32> to vector<256x128xf32>
    %c0_39 = arith.constant 0 : index
    %c384 = arith.constant 384 : index
    %35 = vector.load %arg12[%c0_39, %c384] : memref<256x1152xf32, #tpu.memory_space<vmem>>, vector<256x128xf32>
    tpu.vector_store %arg12[%c0_39, %c384], %34 {strides = array<i32>} : memref<256x1152xf32, #tpu.memory_space<vmem>>, vector<256x128xf32>,
    %c1_40 = arith.constant 1 : index
    %c1_41 = arith.constant 1 : index
    %c0_42 = arith.constant 0 : index
    %36 = vector.load %arg11[%c1_40, %c1_41, %c0_42] : memref<18x18x128xf32, #tpu.memory_space<vmem>>, vector<16x16x128xf32>
    %37 = vector.shape_cast %36 : vector<16x16x128xf32> to vector<256x128xf32>
    %c0_43 = arith.constant 0 : index
    %c512 = arith.constant 512 : index
    %38 = vector.load %arg12[%c0_43, %c512] : memref<256x1152xf32, #tpu.memory_space<vmem>>, vector<256x128xf32>
    tpu.vector_store %arg12[%c0_43, %c512], %37 {strides = array<i32>} : memref<256x1152xf32, #tpu.memory_space<vmem>>, vector<256x128xf32>,
    %c1_44 = arith.constant 1 : index
    %c2_45 = arith.constant 2 : index
    %c0_46 = arith.constant 0 : index
    %39 = vector.load %arg11[%c1_44, %c2_45, %c0_46] : memref<18x18x128xf32, #tpu.memory_space<vmem>>, vector<16x16x128xf32>
    %40 = vector.shape_cast %39 : vector<16x16x128xf32> to vector<256x128xf32>
    %c0_47 = arith.constant 0 : index
    %c640 = arith.constant 640 : index
    %41 = vector.load %arg12[%c0_47, %c640] : memref<256x1152xf32, #tpu.memory_space<vmem>>, vector<256x128xf32>
    tpu.vector_store %arg12[%c0_47, %c640], %40 {strides = array<i32>} : memref<256x1152xf32, #tpu.memory_space<vmem>>, vector<256x128xf32>,
    %c2_48 = arith.constant 2 : index
    %c0_49 = arith.constant 0 : index
    %c0_50 = arith.constant 0 : index
    %42 = vector.load %arg11[%c2_48, %c0_49, %c0_50] : memref<18x18x128xf32, #tpu.memory_space<vmem>>, vector<16x16x128xf32>
    %43 = vector.shape_cast %42 : vector<16x16x128xf32> to vector<256x128xf32>
    %c0_51 = arith.constant 0 : index
    %c768 = arith.constant 768 : index
    %44 = vector.load %arg12[%c0_51, %c768] : memref<256x1152xf32, #tpu.memory_space<vmem>>, vector<256x128xf32>
    tpu.vector_store %arg12[%c0_51, %c768], %43 {strides = array<i32>} : memref<256x1152xf32, #tpu.memory_space<vmem>>, vector<256x128xf32>,
    %c2_52 = arith.constant 2 : index
    %c1_53 = arith.constant 1 : index
    %c0_54 = arith.constant 0 : index
    %45 = vector.load %arg11[%c2_52, %c1_53, %c0_54] : memref<18x18x128xf32, #tpu.memory_space<vmem>>, vector<16x16x128xf32>
    %46 = vector.shape_cast %45 : vector<16x16x128xf32> to vector<256x128xf32>
    %c0_55 = arith.constant 0 : index
    %c896 = arith.constant 896 : index
    %47 = vector.load %arg12[%c0_55, %c896] : memref<256x1152xf32, #tpu.memory_space<vmem>>, vector<256x128xf32>
    tpu.vector_store %arg12[%c0_55, %c896], %46 {strides = array<i32>} : memref<256x1152xf32, #tpu.memory_space<vmem>>, vector<256x128xf32>,
    %c2_56 = arith.constant 2 : index
    %c2_57 = arith.constant 2 : index
    %c0_58 = arith.constant 0 : index
    %48 = vector.load %arg11[%c2_56, %c2_57, %c0_58] : memref<18x18x128xf32, #tpu.memory_space<vmem>>, vector<16x16x128xf32>
    %49 = vector.shape_cast %48 : vector<16x16x128xf32> to vector<256x128xf32>
    %c0_59 = arith.constant 0 : index
    %c1024 = arith.constant 1024 : index
    %50 = vector.load %arg12[%c0_59, %c1024] : memref<256x1152xf32, #tpu.memory_space<vmem>>, vector<256x128xf32>
    tpu.vector_store %arg12[%c0_59, %c1024], %49 {strides = array<i32>} : memref<256x1152xf32, #tpu.memory_space<vmem>>, vector<256x128xf32>,
    %c0_60 = arith.constant 0 : index
    %c0_61 = arith.constant 0 : index
    %51 = vector.load %arg12[%c0_60, %c0_61] : memref<256x1152xf32, #tpu.memory_space<vmem>>, vector<256x1152xf32>
    %c0_62 = arith.constant 0 : index
    %c0_63 = arith.constant 0 : index
    %52 = vector.load %arg5[%c0_62, %c0_63] : memref<1152x128xf32, #tpu.memory_space<vmem>>, vector<1152x128xf32>
    %cst_64 = arith.constant dense<0.000000e+00> : vector<256x128xf32>
    %53 = tpu.matmul %51, %52, %cst_64 {dimension_numbers = #tpu.dot_dimension_numbers<[1], [0], [0], [1], [0, 0, 1, 1], [], []>} : vector<256x1152xf32>, vector<1152x128xf32>, vector<256x128xf32> -> vector<256x128xf32>
    %c0_65 = arith.constant 0 : index
    %c0_66 = arith.constant 0 : index
    %54 = vector.load %arg6[%c0_65, %c0_66] : memref<1x128xf32, #tpu.memory_space<vmem>>, vector<1x128xf32>
    %55 = vector.broadcast %54 : vector<1x128xf32> to vector<256x128xf32>
    %56 = arith.addf %53, %55 : vector<256x128xf32>
    %cst_67 = arith.constant 0.000000e+00 : f32
    %57 = vector.broadcast %cst_67 : f32 to vector<256x128xf32>
    %58 = arith.maximumf %56, %57 : vector<256x128xf32>
    %cst_68 = arith.constant 0.000000e+00 : f32
    %59 = vector.broadcast %cst_68 : f32 to vector<1x18x128xf32>
    %c0_69 = arith.constant 0 : index
    %c0_70 = arith.constant 0 : index
    %c0_71 = arith.constant 0 : index
    %60 = vector.load %arg13[%c0_69, %c0_70, %c0_71] : memref<18x18x128xf32, #tpu.memory_space<vmem>>, vector<1x18x128xf32>
    tpu.vector_store %arg13[%c0_69, %c0_70, %c0_71], %59 {strides = array<i32>} : memref<18x18x128xf32, #tpu.memory_space<vmem>>, vector<1x18x128xf32>,
    %cst_72 = arith.constant 0.000000e+00 : f32
    %61 = vector.broadcast %cst_72 : f32 to vector<1x18x128xf32>
    %c17 = arith.constant 17 : index
    %c0_73 = arith.constant 0 : index
    %c0_74 = arith.constant 0 : index
    %62 = vector.load %arg13[%c17, %c0_73, %c0_74] : memref<18x18x128xf32, #tpu.memory_space<vmem>>, vector<1x18x128xf32>
    tpu.vector_store %arg13[%c17, %c0_73, %c0_74], %61 {strides = array<i32>} : memref<18x18x128xf32, #tpu.memory_space<vmem>>, vector<1x18x128xf32>,
    %cst_75 = arith.constant 0.000000e+00 : f32
    %63 = vector.broadcast %cst_75 : f32 to vector<18x1x128xf32>
    %c0_76 = arith.constant 0 : index
    %c0_77 = arith.constant 0 : index
    %c0_78 = arith.constant 0 : index
    %64 = vector.load %arg13[%c0_76, %c0_77, %c0_78] : memref<18x18x128xf32, #tpu.memory_space<vmem>>, vector<18x1x128xf32>
    tpu.vector_store %arg13[%c0_76, %c0_77, %c0_78], %63 {strides = array<i32>} : memref<18x18x128xf32, #tpu.memory_space<vmem>>, vector<18x1x128xf32>,
    %cst_79 = arith.constant 0.000000e+00 : f32
    %65 = vector.broadcast %cst_79 : f32 to vector<18x1x128xf32>
    %c0_80 = arith.constant 0 : index
    %c17_81 = arith.constant 17 : index
    %c0_82 = arith.constant 0 : index
    %66 = vector.load %arg13[%c0_80, %c17_81, %c0_82] : memref<18x18x128xf32, #tpu.memory_space<vmem>>, vector<18x1x128xf32>
    tpu.vector_store %arg13[%c0_80, %c17_81, %c0_82], %65 {strides = array<i32>} : memref<18x18x128xf32, #tpu.memory_space<vmem>>, vector<18x1x128xf32>,
    %67 = vector.shape_cast %58 : vector<256x128xf32> to vector<16x16x128xf32>
    %c1_83 = arith.constant 1 : index
    %c1_84 = arith.constant 1 : index
    %c0_85 = arith.constant 0 : index
    %68 = vector.load %arg13[%c1_83, %c1_84, %c0_85] : memref<18x18x128xf32, #tpu.memory_space<vmem>>, vector<16x16x128xf32>
    tpu.vector_store %arg13[%c1_83, %c1_84, %c0_85], %67 {strides = array<i32>} : memref<18x18x128xf32, #tpu.memory_space<vmem>>, vector<16x16x128xf32>,
    %c0_86 = arith.constant 0 : index
    %c0_87 = arith.constant 0 : index
    %c0_88 = arith.constant 0 : index
    %69 = vector.load %arg13[%c0_86, %c0_87, %c0_88] : memref<18x18x128xf32, #tpu.memory_space<vmem>>, vector<16x16x128xf32>
    %70 = vector.shape_cast %69 : vector<16x16x128xf32> to vector<256x128xf32>
    %c0_89 = arith.constant 0 : index
    %c0_90 = arith.constant 0 : index
    %71 = vector.load %arg12[%c0_89, %c0_90] : memref<256x1152xf32, #tpu.memory_space<vmem>>, vector<256x128xf32>
    tpu.vector_store %arg12[%c0_89, %c0_90], %70 {strides = array<i32>} : memref<256x1152xf32, #tpu.memory_space<vmem>>, vector<256x128xf32>,
    %c0_91 = arith.constant 0 : index
    %c1_92 = arith.constant 1 : index
    %c0_93 = arith.constant 0 : index
    %72 = vector.load %arg13[%c0_91, %c1_92, %c0_93] : memref<18x18x128xf32, #tpu.memory_space<vmem>>, vector<16x16x128xf32>
    %73 = vector.shape_cast %72 : vector<16x16x128xf32> to vector<256x128xf32>
    %c0_94 = arith.constant 0 : index
    %c128_95 = arith.constant 128 : index
    %74 = vector.load %arg12[%c0_94, %c128_95] : memref<256x1152xf32, #tpu.memory_space<vmem>>, vector<256x128xf32>
    tpu.vector_store %arg12[%c0_94, %c128_95], %73 {strides = array<i32>} : memref<256x1152xf32, #tpu.memory_space<vmem>>, vector<256x128xf32>,
    %c0_96 = arith.constant 0 : index
    %c2_97 = arith.constant 2 : index
    %c0_98 = arith.constant 0 : index
    %75 = vector.load %arg13[%c0_96, %c2_97, %c0_98] : memref<18x18x128xf32, #tpu.memory_space<vmem>>, vector<16x16x128xf32>
    %76 = vector.shape_cast %75 : vector<16x16x128xf32> to vector<256x128xf32>
    %c0_99 = arith.constant 0 : index
    %c256_100 = arith.constant 256 : index
    %77 = vector.load %arg12[%c0_99, %c256_100] : memref<256x1152xf32, #tpu.memory_space<vmem>>, vector<256x128xf32>
    tpu.vector_store %arg12[%c0_99, %c256_100], %76 {strides = array<i32>} : memref<256x1152xf32, #tpu.memory_space<vmem>>, vector<256x128xf32>,
    %c1_101 = arith.constant 1 : index
    %c0_102 = arith.constant 0 : index
    %c0_103 = arith.constant 0 : index
    %78 = vector.load %arg13[%c1_101, %c0_102, %c0_103] : memref<18x18x128xf32, #tpu.memory_space<vmem>>, vector<16x16x128xf32>
    %79 = vector.shape_cast %78 : vector<16x16x128xf32> to vector<256x128xf32>
    %c0_104 = arith.constant 0 : index
    %c384_105 = arith.constant 384 : index
    %80 = vector.load %arg12[%c0_104, %c384_105] : memref<256x1152xf32, #tpu.memory_space<vmem>>, vector<256x128xf32>
    tpu.vector_store %arg12[%c0_104, %c384_105], %79 {strides = array<i32>} : memref<256x1152xf32, #tpu.memory_space<vmem>>, vector<256x128xf32>,
    %c1_106 = arith.constant 1 : index
    %c1_107 = arith.constant 1 : index
    %c0_108 = arith.constant 0 : index
    %81 = vector.load %arg13[%c1_106, %c1_107, %c0_108] : memref<18x18x128xf32, #tpu.memory_space<vmem>>, vector<16x16x128xf32>
    %82 = vector.shape_cast %81 : vector<16x16x128xf32> to vector<256x128xf32>
    %c0_109 = arith.constant 0 : index
    %c512_110 = arith.constant 512 : index
    %83 = vector.load %arg12[%c0_109, %c512_110] : memref<256x1152xf32, #tpu.memory_space<vmem>>, vector<256x128xf32>
    tpu.vector_store %arg12[%c0_109, %c512_110], %82 {strides = array<i32>} : memref<256x1152xf32, #tpu.memory_space<vmem>>, vector<256x128xf32>,
    %c1_111 = arith.constant 1 : index
    %c2_112 = arith.constant 2 : index
    %c0_113 = arith.constant 0 : index
    %84 = vector.load %arg13[%c1_111, %c2_112, %c0_113] : memref<18x18x128xf32, #tpu.memory_space<vmem>>, vector<16x16x128xf32>
    %85 = vector.shape_cast %84 : vector<16x16x128xf32> to vector<256x128xf32>
    %c0_114 = arith.constant 0 : index
    %c640_115 = arith.constant 640 : index
    %86 = vector.load %arg12[%c0_114, %c640_115] : memref<256x1152xf32, #tpu.memory_space<vmem>>, vector<256x128xf32>
    tpu.vector_store %arg12[%c0_114, %c640_115], %85 {strides = array<i32>} : memref<256x1152xf32, #tpu.memory_space<vmem>>, vector<256x128xf32>,
    %c2_116 = arith.constant 2 : index
    %c0_117 = arith.constant 0 : index
    %c0_118 = arith.constant 0 : index
    %87 = vector.load %arg13[%c2_116, %c0_117, %c0_118] : memref<18x18x128xf32, #tpu.memory_space<vmem>>, vector<16x16x128xf32>
    %88 = vector.shape_cast %87 : vector<16x16x128xf32> to vector<256x128xf32>
    %c0_119 = arith.constant 0 : index
    %c768_120 = arith.constant 768 : index
    %89 = vector.load %arg12[%c0_119, %c768_120] : memref<256x1152xf32, #tpu.memory_space<vmem>>, vector<256x128xf32>
    tpu.vector_store %arg12[%c0_119, %c768_120], %88 {strides = array<i32>} : memref<256x1152xf32, #tpu.memory_space<vmem>>, vector<256x128xf32>,
    %c2_121 = arith.constant 2 : index
    %c1_122 = arith.constant 1 : index
    %c0_123 = arith.constant 0 : index
    %90 = vector.load %arg13[%c2_121, %c1_122, %c0_123] : memref<18x18x128xf32, #tpu.memory_space<vmem>>, vector<16x16x128xf32>
    %91 = vector.shape_cast %90 : vector<16x16x128xf32> to vector<256x128xf32>
    %c0_124 = arith.constant 0 : index
    %c896_125 = arith.constant 896 : index
    %92 = vector.load %arg12[%c0_124, %c896_125] : memref<256x1152xf32, #tpu.memory_space<vmem>>, vector<256x128xf32>
    tpu.vector_store %arg12[%c0_124, %c896_125], %91 {strides = array<i32>} : memref<256x1152xf32, #tpu.memory_space<vmem>>, vector<256x128xf32>,
    %c2_126 = arith.constant 2 : index
    %c2_127 = arith.constant 2 : index
    %c0_128 = arith.constant 0 : index
    %93 = vector.load %arg13[%c2_126, %c2_127, %c0_128] : memref<18x18x128xf32, #tpu.memory_space<vmem>>, vector<16x16x128xf32>
    %94 = vector.shape_cast %93 : vector<16x16x128xf32> to vector<256x128xf32>
    %c0_129 = arith.constant 0 : index
    %c1024_130 = arith.constant 1024 : index
    %95 = vector.load %arg12[%c0_129, %c1024_130] : memref<256x1152xf32, #tpu.memory_space<vmem>>, vector<256x128xf32>
    tpu.vector_store %arg12[%c0_129, %c1024_130], %94 {strides = array<i32>} : memref<256x1152xf32, #tpu.memory_space<vmem>>, vector<256x128xf32>,
    %c0_131 = arith.constant 0 : index
    %c0_132 = arith.constant 0 : index
    %96 = vector.load %arg12[%c0_131, %c0_132] : memref<256x1152xf32, #tpu.memory_space<vmem>>, vector<256x1152xf32>
    %c0_133 = arith.constant 0 : index
    %c0_134 = arith.constant 0 : index
    %97 = vector.load %arg7[%c0_133, %c0_134] : memref<1152x128xf32, #tpu.memory_space<vmem>>, vector<1152x128xf32>
    %cst_135 = arith.constant dense<0.000000e+00> : vector<256x128xf32>
    %98 = tpu.matmul %96, %97, %cst_135 {dimension_numbers = #tpu.dot_dimension_numbers<[1], [0], [0], [1], [0, 0, 1, 1], [], []>} : vector<256x1152xf32>, vector<1152x128xf32>, vector<256x128xf32> -> vector<256x128xf32>
    %c0_136 = arith.constant 0 : index
    %c0_137 = arith.constant 0 : index
    %99 = vector.load %arg8[%c0_136, %c0_137] : memref<1x128xf32, #tpu.memory_space<vmem>>, vector<1x128xf32>
    %100 = vector.broadcast %99 : vector<1x128xf32> to vector<256x128xf32>
    %101 = arith.addf %98, %100 : vector<256x128xf32>
    %cst_138 = arith.constant 0.000000e+00 : f32
    %102 = vector.broadcast %cst_138 : f32 to vector<256x128xf32>
    %103 = arith.maximumf %101, %102 : vector<256x128xf32>
    %104 = vector.extract_strided_slice %103 {offsets = [0, 0], sizes = [256, 64], strides = [1, 1]} : vector<256x128xf32> to vector<256x64xf32>
    %105 = vector.extract_strided_slice %103 {offsets = [0, 64], sizes = [256, 64], strides = [1, 1]} : vector<256x128xf32> to vector<256x64xf32>
    %106 = arith.subf %104, %105 : vector<256x64xf32>
    %107 = math.absf %106 : vector<256x64xf32>
    %108 = vector.shape_cast %107 : vector<256x64xf32> to vector<1x256x64xf32>
    %cst_139 = arith.constant dense<0.000000e+00> : vector<1xf32>
    %109 = vector.multi_reduction <add>, %108, %cst_139 [1, 2] : vector<1x256x64xf32> to vector<1xf32>
    %110 = vector.shape_cast %109 : vector<1xf32> to vector<1x1x1xf32>
    %111 = vector.extract %110[0, 0, 0] : f32 from vector<1x1x1xf32>
    %112 = vector.broadcast %111 : f32 to vector<1x1x1xf32>
    %c0_140 = arith.constant 0 : index
    %c0_141 = arith.constant 0 : index
    %c0_142 = arith.constant 0 : index
    %113 = vector.load %arg10[%c0_140, %c0_141, %c0_142] : memref<1x1x1xf32, #tpu.memory_space<vmem>>, vector<1x1x1xf32>
    tpu.vector_store %arg10[%c0_140, %c0_141, %c0_142], %112 {strides = array<i32>} : memref<1x1x1xf32, #tpu.memory_space<vmem>>, vector<1x1x1xf32>,
    return
  }
  func.func @transform_0(%arg0: i32) -> (i32, i32, i32, i32) {
    %c0_i32 = arith.constant 0 : i32
    %c0_i32_0 = arith.constant 0 : i32
    %c0_i32_1 = arith.constant 0 : i32
    %c0_i32_2 = arith.constant 0 : i32
    return %arg0, %c0_i32, %c0_i32_0, %c0_i32_1 : i32, i32, i32, i32
  }
  func.func @transform_1(%arg0: i32) -> (i32, i32, i32, i32) {
    %c0_i32 = arith.constant 0 : i32
    %c0_i32_0 = arith.constant 0 : i32
    %c0_i32_1 = arith.constant 0 : i32
    %c0_i32_2 = arith.constant 0 : i32
    return %arg0, %c0_i32, %c0_i32_0, %c0_i32_1 : i32, i32, i32, i32
  }
  func.func @transform_2(%arg0: i32) -> (i32, i32, i32) {
    %c0_i32 = arith.constant 0 : i32
    %c0_i32_0 = arith.constant 0 : i32
    %c0_i32_1 = arith.constant 0 : i32
    %c0_i32_2 = arith.constant 0 : i32
    return %c0_i32, %c0_i32_0, %c0_i32_1 : i32, i32, i32
  }
  func.func @transform_3(%arg0: i32) -> (i32, i32, i32) {
    %c0_i32 = arith.constant 0 : i32
    %c0_i32_0 = arith.constant 0 : i32
    %c0_i32_1 = arith.constant 0 : i32
    %c0_i32_2 = arith.constant 0 : i32
    return %c0_i32, %c0_i32_0, %c0_i32_1 : i32, i32, i32
  }
  func.func @transform_4(%arg0: i32) -> (i32, i32) {
    %c0_i32 = arith.constant 0 : i32
    %c0_i32_0 = arith.constant 0 : i32
    %c0_i32_1 = arith.constant 0 : i32
    return %c0_i32, %c0_i32_0 : i32, i32
  }
  func.func @transform_5(%arg0: i32) -> (i32, i32) {
    %c0_i32 = arith.constant 0 : i32
    %c0_i32_0 = arith.constant 0 : i32
    %c0_i32_1 = arith.constant 0 : i32
    return %c0_i32, %c0_i32_0 : i32, i32
  }
  func.func @transform_6(%arg0: i32) -> (i32, i32) {
    %c0_i32 = arith.constant 0 : i32
    %c0_i32_0 = arith.constant 0 : i32
    %c0_i32_1 = arith.constant 0 : i32
    return %c0_i32, %c0_i32_0 : i32, i32
  }
  func.func @transform_7(%arg0: i32) -> (i32, i32) {
    %c0_i32 = arith.constant 0 : i32
    %c0_i32_0 = arith.constant 0 : i32
    %c0_i32_1 = arith.constant 0 : i32
    return %c0_i32, %c0_i32_0 : i32, i32
  }
  func.func @transform_8(%arg0: i32) -> (i32, i32, i32) {
    %c0_i32 = arith.constant 0 : i32
    %c0_i32_0 = arith.constant 0 : i32
    %c0_i32_1 = arith.constant 0 : i32
    return %arg0, %c0_i32, %c0_i32_0 : i32, i32, i32
  }
  func.func @transform_9(%arg0: i32) -> (i32, i32, i32) {
    %c0_i32 = arith.constant 0 : i32
    %c0_i32_0 = arith.constant 0 : i32
    %c0_i32_1 = arith.constant 0 : i32
    return %arg0, %c0_i32, %c0_i32_0 : i32, i32, i32
  }
}

</mosaic_0001>

<llo_original>
// kernel: tpu_custom_call.1
$region0: #{tpu_custom_call.1}
  #allocation0 [shape = 'u32[]', space=smem, size = 0x4, offset = 0x4, fixed_abs, tag = 'smem constant byte address 0x4 - core index']
  #allocation1 [shape = 'u32[144,128]{1,0:T(1,128)}', space=vmem, size = 0x12000, scoped, tag = 'internal scratch']
  #allocation2 [shape = 'f32[18,18,128]{2,1,0:T(8,128)}', space=vmem, size = 0x36000, scoped, tag = 'scratch operand']
  #allocation3 [shape = 'f32[256,1152]{1,0:T(8,128)}', space=vmem, size = 0x120000, scoped, tag = 'scratch operand']
  #allocation4 [shape = 'f32[18,18,128]{2,1,0:T(8,128)}', space=vmem, size = 0x36000, scoped, tag = 'scratch operand']
  %s0 = inlined_call_operand.vmem [shape: f32[2,16,16,3], index: 0, kind: input, shape index: {}]
  %s1 = inlined_call_operand.vmem [shape: f32[2,16,16,3], index: 1, kind: input, shape index: {}]
  %s2 = inlined_call_operand.vmem [shape: f32[1,1,3], index: 2, kind: input, shape index: {}]
  %s3 = inlined_call_operand.vmem [shape: f32[1,1,3], index: 3, kind: input, shape index: {}]
  %s4 = inlined_call_operand.vmem [shape: f32[1152,128], index: 4, kind: input, shape index: {}]
  %s5 = inlined_call_operand.vmem [shape: f32[1,128], index: 5, kind: input, shape index: {}]
  %s6 = inlined_call_operand.hbm [shape: f32[1152,128], index: 6, kind: input, shape index: {}]
  %s7 = inlined_call_operand.vmem [shape: f32[1,128], index: 7, kind: input, shape index: {}]
  %s8 = inlined_call_operand.vmem [shape: f32[2,1,1], index: 8, kind: output, shape index: {0}]
  %s9 = inlined_call_operand.vmem [shape: f32[2,1,1], index: 9, kind: output, shape index: {1}]
  %10 = xla_tuple %s8, %s9
  %s11 = sld [smem:[#allocation0]]
  $region77: #{tpu_custom_call.1} parent=0
    _
  %s13 = ssub.s32 1, %s11
  %s14 = scalar_select 0, %s13, %s11
  $region1: #{tpu_custom_call.1} parent=0
    #allocation5 [shape = 'u8[589824]{0}', space=vmem, size = 0x90000, scoped, tag = 'input window, operand 6, single buffered']
    #allocation6 [shape = 's32[2]{0}', space=sflag, size = 0x8, scoped, tag = 'scoped memory for tpu_custom_call.1']
    %15 = vsyncpa [#allocation6], 0
    loop: start=0, step=1, limit=4
    $region2: #{tpu_custom_call.1} parent=1 // loop_pre_header
      _
    $region3: #{tpu_custom_call.1} parent=1 // loop_header
      %s17 = sphi 0, %s21
      %p18 = scmp.ge.s32.totalorder %s17, 4
      %s27 = sphi 0, %s29
      %s30 = sphi 0, %s27
      %s31 = sphi 0, %s30
      %s47 = sphi 0, %s31
      %s53 = sphi 0, %s55
      %s56 = sphi 0, %s53
      %s57 = sphi 0, %s56
      %s73 = sphi 0, %s57
      %s77 = sphi 0, %s77
      %s79 = sphi 0, %s77
      %s80 = sphi 0, %s79
      %s94 = sphi 0, %s80
      %s98 = sphi 0, %s98
      %s100 = sphi 0, %s98
      %s101 = sphi 0, %s100
      %s115 = sphi 0, %s101
      %s119 = sphi 0, %s119
      %s121 = sphi 0, %s119
      %s122 = sphi 0, %s121
      %s136 = sphi 0, %s122
      %s140 = sphi 0, %s140
      %s142 = sphi 0, %s140
      %s143 = sphi 0, %s142
      %s157 = sphi 0, %s143
      %s161 = sphi 0, %s161
      %s163 = sphi 0, %s161
      %s164 = sphi 0, %s163
      %s178 = sphi 0, %s164
      %s182 = sphi 0, %s182
      %s184 = sphi 0, %s182
      %s185 = sphi 0, %s184
      %s199 = sphi 0, %s185
      %s205 = sphi 0, %s207
      %s208 = sphi 0, %s205
      %s209 = sphi 0, %s208
      %s225 = sphi 0, %s209
      %s231 = sphi 0, %s233
      %s234 = sphi 0, %s231
      %s235 = sphi 0, %s234
      %s251 = sphi 0, %s235
    $region4: #{tpu_custom_call.1} parent=1 // loop_header_branch
      %20 = sbr.rel (%p18) target = $region8
    $region5: #{tpu_custom_call.1} parent=1 // loop_body
      %s22 = ssub.s32 %s17, 1
      %s23 = ssub.s32 %s17, 2
      %s24 = sadd.s32 %s17, 1
      %s25 = ssub.s32 %s17, %s24
      %p26 = scmp.eq.s32.totalorder %s25, 0
      %s28 = sadd.s32 %s27, 1
      %s29 = scalar_select %p26, %s27, %s28
      %p32 = pneg %p26
      %p33 = scmp.eq.s32.totalorder %s17, 1
      %p34 = por %p32, %p33
      %p35 = scmp.ne.s32.totalorder %s27, %s30
      %p36 = scmp.eq.s32.totalorder %s17, 0
      %p37 = por %p35, %p36
      %p38 = scmp.ne.s32.totalorder %s27, %s30
      %p39 = scmp.eq.s32.totalorder %s22, 1
      %p40 = por %p38, %p39
      %p41 = scmp.ne.s32.totalorder %s30, %s31
      %p42 = scmp.eq.s32.totalorder %s22, 0
      %p43 = por %p41, %p42
      %p44 = scmp.ne.s32.totalorder %s30, %s31
      %p45 = scmp.eq.s32.totalorder %s23, 1
      %p46 = por %p44, %p45
      %p48 = scmp.ne.s32.totalorder %s31, %s47
      %p49 = scmp.eq.s32.totalorder %s23, 0
      %p50 = por %p48, %p49
      %s51 = ssub.s32 %s17, %s24
      %p52 = scmp.eq.s32.totalorder %s51, 0
      %s54 = sadd.s32 %s53, 1
      %s55 = scalar_select %p52, %s53, %s54
      %p58 = pneg %p52
      %p59 = scmp.eq.s32.totalorder %s17, 1
      %p60 = por %p58, %p59
      %p61 = scmp.ne.s32.totalorder %s53, %s56
      %p62 = scmp.eq.s32.totalorder %s17, 0
      %p63 = por %p61, %p62
      %p64 = scmp.ne.s32.totalorder %s53, %s56
      %p65 = scmp.eq.s32.totalorder %s22, 1
      %p66 = por %p64, %p65
      %p67 = scmp.ne.s32.totalorder %s56, %s57
      %p68 = scmp.eq.s32.totalorder %s22, 0
      %p69 = por %p67, %p68
      %p70 = scmp.ne.s32.totalorder %s56, %s57
      %p71 = scmp.eq.s32.totalorder %s23, 1
      %p72 = por %p70, %p71
      %p74 = scmp.ne.s32.totalorder %s57, %s73
      %p75 = scmp.eq.s32.totalorder %s23, 0
      %p76 = por %p74, %p75
      %s78 = sadd.s32 %s77, 1
      %p81 = scmp.eq.s32.totalorder %s17, 1
      %p82 = scmp.ne.s32.totalorder %s77, %s79
      %p83 = scmp.eq.s32.totalorder %s17, 0
      %p84 = por %p82, %p83
      %p85 = scmp.ne.s32.totalorder %s77, %s79
      %p86 = scmp.eq.s32.totalorder %s22, 1
      %p87 = por %p85, %p86
      %p88 = scmp.ne.s32.totalorder %s79, %s80
      %p89 = scmp.eq.s32.totalorder %s22, 0
      %p90 = por %p88, %p89
      %p91 = scmp.ne.s32.totalorder %s79, %s80
      %p92 = scmp.eq.s32.totalorder %s23, 1
      %p93 = por %p91, %p92
      %p95 = scmp.ne.s32.totalorder %s80, %s94
      %p96 = scmp.eq.s32.totalorder %s23, 0
      %p97 = por %p95, %p96
      %s99 = sadd.s32 %s98, 1
      %p102 = scmp.eq.s32.totalorder %s17, 1
      %p103 = scmp.ne.s32.totalorder %s98, %s100
      %p104 = scmp.eq.s32.totalorder %s17, 0
      %p105 = por %p103, %p104
      %p106 = scmp.ne.s32.totalorder %s98, %s100
      %p107 = scmp.eq.s32.totalorder %s22, 1
      %p108 = por %p106, %p107
      %p109 = scmp.ne.s32.totalorder %s100, %s101
      %p110 = scmp.eq.s32.totalorder %s22, 0
      %p111 = por %p109, %p110
      %p112 = scmp.ne.s32.totalorder %s100, %s101
      %p113 = scmp.eq.s32.totalorder %s23, 1
      %p114 = por %p112, %p113
      %p116 = scmp.ne.s32.totalorder %s101, %s115
      %p117 = scmp.eq.s32.totalorder %s23, 0
      %p118 = por %p116, %p117
      %s120 = sadd.s32 %s119, 1
      %p123 = scmp.eq.s32.totalorder %s17, 1
      %p124 = scmp.ne.s32.totalorder %s119, %s121
      %p125 = scmp.eq.s32.totalorder %s17, 0
      %p126 = por %p124, %p125
      %p127 = scmp.ne.s32.totalorder %s119, %s121
      %p128 = scmp.eq.s32.totalorder %s22, 1
      %p129 = por %p127, %p128
      %p130 = scmp.ne.s32.totalorder %s121, %s122
      %p131 = scmp.eq.s32.totalorder %s22, 0
      %p132 = por %p130, %p131
      %p133 = scmp.ne.s32.totalorder %s121, %s122
      %p134 = scmp.eq.s32.totalorder %s23, 1
      %p135 = por %p133, %p134
      %p137 = scmp.ne.s32.totalorder %s122, %s136
      %p138 = scmp.eq.s32.totalorder %s23, 0
      %p139 = por %p137, %p138
      %s141 = sadd.s32 %s140, 1
      %p144 = scmp.eq.s32.totalorder %s17, 1
      %p145 = scmp.ne.s32.totalorder %s140, %s142
      %p146 = scmp.eq.s32.totalorder %s17, 0
      %p147 = por %p145, %p146
      %p148 = scmp.ne.s32.totalorder %s140, %s142
      %p149 = scmp.eq.s32.totalorder %s22, 1
      %p150 = por %p148, %p149
      %p151 = scmp.ne.s32.totalorder %s142, %s143
      %p152 = scmp.eq.s32.totalorder %s22, 0
      %p153 = por %p151, %p152
      %p154 = scmp.ne.s32.totalorder %s142, %s143
      %p155 = scmp.eq.s32.totalorder %s23, 1
      %p156 = por %p154, %p155
      %p158 = scmp.ne.s32.totalorder %s143, %s157
      %p159 = scmp.eq.s32.totalorder %s23, 0
      %p160 = por %p158, %p159
      %s162 = sadd.s32 %s161, 1
      %p165 = scmp.eq.s32.totalorder %s17, 1
      %p166 = scmp.ne.s32.totalorder %s161, %s163
      %p167 = scmp.eq.s32.totalorder %s17, 0
      %p168 = por %p166, %p167
      %p169 = scmp.ne.s32.totalorder %s161, %s163
      %p170 = scmp.eq.s32.totalorder %s22, 1
      %p171 = por %p169, %p170
      %p172 = scmp.ne.s32.totalorder %s163, %s164
      %p173 = scmp.eq.s32.totalorder %s22, 0
      %p174 = por %p172, %p173
      %p175 = scmp.ne.s32.totalorder %s163, %s164
      %p176 = scmp.eq.s32.totalorder %s23, 1
      %p177 = por %p175, %p176
      %p179 = scmp.ne.s32.totalorder %s164, %s178
      %p180 = scmp.eq.s32.totalorder %s23, 0
      %p181 = por %p179, %p180
      %s183 = sadd.s32 %s182, 1
      %p186 = scmp.eq.s32.totalorder %s17, 1
      %p187 = scmp.ne.s32.totalorder %s182, %s184
      %p188 = scmp.eq.s32.totalorder %s17, 0
      %p189 = por %p187, %p188
      %p190 = scmp.ne.s32.totalorder %s182, %s184
      %p191 = scmp.eq.s32.totalorder %s22, 1
      %p192 = por %p190, %p191
      %p193 = scmp.ne.s32.totalorder %s184, %s185
      %p194 = scmp.eq.s32.totalorder %s22, 0
      %p195 = por %p193, %p194
      %p196 = scmp.ne.s32.totalorder %s184, %s185
      %p197 = scmp.eq.s32.totalorder %s23, 1
      %p198 = por %p196, %p197
      %p200 = scmp.ne.s32.totalorder %s185, %s199
      %p201 = scmp.eq.s32.totalorder %s23, 0
      %p202 = por %p200, %p201
      %s203 = ssub.s32 %s17, %s24
      %p204 = scmp.eq.s32.totalorder %s203, 0
      %s206 = sadd.s32 %s205, 1
      %s207 = scalar_select %p204, %s205, %s206
      %p210 = pneg %p204
      %p211 = scmp.eq.s32.totalorder %s17, 1
      %p212 = por %p210, %p211
      %p213 = scmp.ne.s32.totalorder %s205, %s208
      %p214 = scmp.eq.s32.totalorder %s17, 0
      %p215 = por %p213, %p214
      %p216 = scmp.ne.s32.totalorder %s205, %s208
      %p217 = scmp.eq.s32.totalorder %s22, 1
      %p218 = por %p216, %p217
      %p219 = scmp.ne.s32.totalorder %s208, %s209
      %p220 = scmp.eq.s32.totalorder %s22, 0
      %p221 = por %p219, %p220
      %p222 = scmp.ne.s32.totalorder %s208, %s209
      %p223 = scmp.eq.s32.totalorder %s23, 1
      %p224 = por %p222, %p223
      %p226 = scmp.ne.s32.totalorder %s209, %s225
      %p227 = scmp.eq.s32.totalorder %s23, 0
      %p228 = por %p226, %p227
      %s229 = ssub.s32 %s17, %s24
      %p230 = scmp.eq.s32.totalorder %s229, 0
      %s232 = sadd.s32 %s231, 1
      %s233 = scalar_select %p230, %s231, %s232
      %p236 = pneg %p230
      %p237 = scmp.eq.s32.totalorder %s17, 1
      %p238 = por %p236, %p237
      %p239 = scmp.ne.s32.totalorder %s231, %s234
      %p240 = scmp.eq.s32.totalorder %s17, 0
      %p241 = por %p239, %p240
      %p242 = scmp.ne.s32.totalorder %s231, %s234
      %p243 = scmp.eq.s32.totalorder %s22, 1
      %p244 = por %p242, %p243
      %p245 = scmp.ne.s32.totalorder %s234, %s235
      %p246 = scmp.eq.s32.totalorder %s22, 0
      %p247 = por %p245, %p246
      %p248 = scmp.ne.s32.totalorder %s234, %s235
      %p249 = scmp.eq.s32.totalorder %s23, 1
      %p250 = por %p248, %p249
      %p252 = scmp.ne.s32.totalorder %s235, %s251
      %p253 = scmp.eq.s32.totalorder %s23, 0
      %p254 = por %p252, %p253
      %p255 = scmp.le.s32.totalorder 1, %s17
      %p256 = scmp.lt.s32.totalorder %s17, 3
      %p257 = pnand %p255, %p256
      %p258 = pneg %p257
      // Predicated region
      $region9: #{tpu_custom_call.1} parent=5 // pred_check
        _
      $region10: #{tpu_custom_call.1} parent=5 // pred_check_branch
        %260 = sbr.rel (%p257) target = $region12
      $region11: #{tpu_custom_call.1} parent=5 // pred_region
        %s261 = ssub.s32 %s17, 1
        // Predicated region
        $region13: #{tpu_custom_call.1} parent=11 // pred_check
          %p262 = pneg %p90
        $region14: #{tpu_custom_call.1} parent=11 // pred_check_branch
          %264 = sbr.rel (%p262) target = $region16
        $region15: #{tpu_custom_call.1} parent=11 // pred_region
          _
        $region16: #{tpu_custom_call.1} parent=11 // pred_fallthru
          _
        // Predicated region
        $region17: #{tpu_custom_call.1} parent=11 // pred_check
          %p265 = pneg %p111
        $region18: #{tpu_custom_call.1} parent=11 // pred_check_branch
          %267 = sbr.rel (%p265) target = $region20
        $region19: #{tpu_custom_call.1} parent=11 // pred_region
          _
        $region20: #{tpu_custom_call.1} parent=11 // pred_fallthru
          _
        // Predicated region
        $region21: #{tpu_custom_call.1} parent=11 // pred_check
          %p268 = pneg %p132
        $region22: #{tpu_custom_call.1} parent=11 // pred_check_branch
          %270 = sbr.rel (%p268) target = $region24
        $region23: #{tpu_custom_call.1} parent=11 // pred_region
          _
        $region24: #{tpu_custom_call.1} parent=11 // pred_fallthru
          _
        // Predicated region
        $region25: #{tpu_custom_call.1} parent=11 // pred_check
          %p271 = pneg %p153
        $region26: #{tpu_custom_call.1} parent=11 // pred_check_branch
          %273 = sbr.rel (%p271) target = $region28
        $region27: #{tpu_custom_call.1} parent=11 // pred_region
          _
        $region28: #{tpu_custom_call.1} parent=11 // pred_fallthru
          _
        // Predicated region
        $region29: #{tpu_custom_call.1} parent=11 // pred_check
          %p274 = pneg %p174
        $region30: #{tpu_custom_call.1} parent=11 // pred_check_branch
          %276 = sbr.rel (%p274) target = $region32
        $region31: #{tpu_custom_call.1} parent=11 // pred_region
          %s278 = ssub.s32 18432, 18432
          %279 = vsyncadd [#allocation6], %s278
          %s280 = sshll.u32 [#allocation5], 4
          %s281 = int_to_ptr.vmem [resolvable:$true] %s280
          %286 = dma.hbm_to_vmem [thread:$0]  %s6, 18432, %s281, [#allocation6], 128, 128, 8
        $region32: #{tpu_custom_call.1} parent=11 // pred_fallthru
          _
        // Predicated region
        $region33: #{tpu_custom_call.1} parent=11 // pred_check
          %p287 = pneg %p195
        $region34: #{tpu_custom_call.1} parent=11 // pred_check_branch
          %289 = sbr.rel (%p287) target = $region36
        $region35: #{tpu_custom_call.1} parent=11 // pred_region
          _
        $region36: #{tpu_custom_call.1} parent=11 // pred_fallthru
          _
      $region12: #{tpu_custom_call.1} parent=5 // pred_fallthru
        _
      %p290 = scmp.lt.s32.totalorder %s17, 2
      // Predicated region
      $region37: #{tpu_custom_call.1} parent=5 // pred_check
        %p291 = pneg %p290
      $region38: #{tpu_custom_call.1} parent=5 // pred_check_branch
        %293 = sbr.rel (%p291) target = $region40
      $region39: #{tpu_custom_call.1} parent=5 // pred_region
        // Predicated region
        $region41: #{tpu_custom_call.1} parent=39 // pred_check
          %p294 = pneg %p37
        $region42: #{tpu_custom_call.1} parent=39 // pred_check_branch
          %296 = sbr.rel (%p294) target = $region44
        $region43: #{tpu_custom_call.1} parent=39 // pred_region
          %p297 = scmp.lt.s32.totalorder %s17, 1
          %s298 = scalar_select %p297, %s17, 1
          %s299 = smul.addr %s298, 32
          %s300 = smul.addr %s299, 8
          %s301 = scalar_lea.vmem %s0, %s300
        $region44: #{tpu_custom_call.1} parent=39 // pred_fallthru
          _
        // Predicated region
        $region45: #{tpu_custom_call.1} parent=39 // pred_check
          %p302 = pneg %p63
        $region46: #{tpu_custom_call.1} parent=39 // pred_check_branch
          %304 = sbr.rel (%p302) target = $region48
        $region47: #{tpu_custom_call.1} parent=39 // pred_region
          %p305 = scmp.lt.s32.totalorder %s17, 1
          %s306 = scalar_select %p305, %s17, 1
          %s307 = smul.addr %s306, 32
          %s308 = smul.addr %s307, 8
          %s309 = scalar_lea.vmem %s1, %s308
        $region48: #{tpu_custom_call.1} parent=39 // pred_fallthru
          _
      $region40: #{tpu_custom_call.1} parent=5 // pred_fallthru
        _
      %p310 = scmp.le.s32.totalorder 1, %s17
      %p311 = scmp.lt.s32.totalorder %s17, 3
      %p312 = pnand %p310, %p311
      %p313 = pneg %p312
      // Predicated region
      $region49: #{tpu_custom_call.1} parent=5 // pred_check
        _
      $region50: #{tpu_custom_call.1} parent=5 // pred_check_branch
        %315 = sbr.rel (%p312) target = $region52
      $region51: #{tpu_custom_call.1} parent=5 // pred_region
        %s316 = ssub.s32 %s17, 1
        // Predicated region
        $region53: #{tpu_custom_call.1} parent=51 // pred_check
          %p317 = pneg %p174
        $region54: #{tpu_custom_call.1} parent=51 // pred_check_branch
          %319 = sbr.rel (%p317) target = $region56
        $region55: #{tpu_custom_call.1} parent=51 // pred_region
          %320 = dma.done [#allocation6], 18432
        $region56: #{tpu_custom_call.1} parent=51 // pred_fallthru
          _
        %p321 = scmp.lt.s32.totalorder %s22, 1
        %s322 = scalar_select %p321, %s22, 1
        %s323 = smul.addr %s322, 32
        %s324 = smul.addr %s323, 8
        %s325 = scalar_lea.vmem %s0, %s324
        %p326 = pneg %p43
        %p327 = pneg %p40
        %p328 = scmp.lt.s32.totalorder %s22, 1
        %s329 = scalar_select %p328, %s22, 1
        %s330 = smul.addr %s329, 32
        %s331 = smul.addr %s330, 8
        %s332 = scalar_lea.vmem %s1, %s331
        %p333 = pneg %p69
        %p334 = pneg %p66
        %p335 = pneg %p90
        %p336 = pneg %p87
        %p337 = pneg %p111
        %p338 = pneg %p108
        %p339 = pneg %p132
        %p340 = pneg %p129
        %p341 = pneg %p153
        %p342 = pneg %p150
        %p343 = pneg %p174
        %p344 = pneg %p171
        %p345 = pneg %p195
        %p346 = pneg %p192
        %p347 = pneg %p221
        %p348 = pneg %p218
        %p349 = scmp.lt.s32.totalorder %s22, 1
        %s350 = scalar_select %p349, %s22, 1
        %s351 = scalar_lea.vmem %s8, %s350
        %p352 = pneg %p247
        %p353 = pneg %p244
        %p354 = scmp.lt.s32.totalorder %s22, 1
        %s355 = scalar_select %p354, %s22, 1
        %s356 = scalar_lea.vmem %s9, %s355
        %p357 = scmp.lt.s32.totalorder %s22, 1
        %s358 = scalar_select %p357, %s22, 1
        %s359 = smul.addr %s358, 32
        %s360 = smul.addr %s359, 8
        %s361 = scalar_lea.vmem %s0, %s360
        %p362 = scmp.lt.s32.totalorder %s22, 1
        %s363 = scalar_select %p362, %s22, 1
        %s364 = smul.addr %s363, 32
        %s365 = smul.addr %s364, 8
        %s366 = scalar_lea.vmem %s1, %s365
        %p367 = scmp.lt.s32.totalorder %s22, 1
        %s368 = scalar_select %p367, %s22, 1
        %s369 = scalar_lea.vmem %s8, %s368
        %p370 = scmp.lt.s32.totalorder %s22, 1
        %s371 = scalar_select %p370, %s22, 1
        %s372 = scalar_lea.vmem %s9, %s371
        %v373 = vld [vmem:[%s361] sm:$0xff]
        %v374 = vld [vmem:[%s361 + $0x8] sm:$0xff]
        %v375 = vld [vmem:[%s361 + $0x10] sm:$0xff]
        %v376 = vld [vmem:[%s361 + $0x18] sm:$0xff]
        %v377 = vld [vmem:[%s361 + $0x20] sm:$0xff]
        %v378 = vld [vmem:[%s361 + $0x28] sm:$0xff]
        %v379 = vld [vmem:[%s361 + $0x30] sm:$0xff]
        %v380 = vld [vmem:[%s361 + $0x38] sm:$0xff]
        %v381 = vld [vmem:[%s361 + $0x40] sm:$0xff]
        %v382 = vld [vmem:[%s361 + $0x48] sm:$0xff]
        %v383 = vld [vmem:[%s361 + $0x50] sm:$0xff]
        %v384 = vld [vmem:[%s361 + $0x58] sm:$0xff]
        %v385 = vld [vmem:[%s361 + $0x60] sm:$0xff]
        %v386 = vld [vmem:[%s361 + $0x68] sm:$0xff]
        %v387 = vld [vmem:[%s361 + $0x70] sm:$0xff]
        %v388 = vld [vmem:[%s361 + $0x78] sm:$0xff]
        %v389 = vld [vmem:[%s361 + $0x80] sm:$0xff]
        %v390 = vld [vmem:[%s361 + $0x88] sm:$0xff]
        %v391 = vld [vmem:[%s361 + $0x90] sm:$0xff]
        %v392 = vld [vmem:[%s361 + $0x98] sm:$0xff]
        %v393 = vld [vmem:[%s361 + $0xa0] sm:$0xff]
        %v394 = vld [vmem:[%s361 + $0xa8] sm:$0xff]
        %v395 = vld [vmem:[%s361 + $0xb0] sm:$0xff]
        %v396 = vld [vmem:[%s361 + $0xb8] sm:$0xff]
        %v397 = vld [vmem:[%s361 + $0xc0] sm:$0xff]
        %v398 = vld [vmem:[%s361 + $0xc8] sm:$0xff]
        %v399 = vld [vmem:[%s361 + $0xd0] sm:$0xff]
        %v400 = vld [vmem:[%s361 + $0xd8] sm:$0xff]
        %v401 = vld [vmem:[%s361 + $0xe0] sm:$0xff]
        %v402 = vld [vmem:[%s361 + $0xe8] sm:$0xff]
        %v403 = vld [vmem:[%s361 + $0xf0] sm:$0xff]
        %v404 = vld [vmem:[%s361 + $0xf8] sm:$0xff]
        %v405 = vld [vmem:[%s366] sm:$0xff]
        %v406 = vld [vmem:[%s366 + $0x8] sm:$0xff]
        %v407 = vld [vmem:[%s366 + $0x10] sm:$0xff]
        %v408 = vld [vmem:[%s366 + $0x18] sm:$0xff]
        %v409 = vld [vmem:[%s366 + $0x20] sm:$0xff]
        %v410 = vld [vmem:[%s366 + $0x28] sm:$0xff]
        %v411 = vld [vmem:[%s366 + $0x30] sm:$0xff]
        %v412 = vld [vmem:[%s366 + $0x38] sm:$0xff]
        %v413 = vld [vmem:[%s366 + $0x40] sm:$0xff]
        %v414 = vld [vmem:[%s366 + $0x48] sm:$0xff]
        %v415 = vld [vmem:[%s366 + $0x50] sm:$0xff]
        %v416 = vld [vmem:[%s366 + $0x58] sm:$0xff]
        %v417 = vld [vmem:[%s366 + $0x60] sm:$0xff]
        %v418 = vld [vmem:[%s366 + $0x68] sm:$0xff]
        %v419 = vld [vmem:[%s366 + $0x70] sm:$0xff]
        %v420 = vld [vmem:[%s366 + $0x78] sm:$0xff]
        %v421 = vld [vmem:[%s366 + $0x80] sm:$0xff]
        %v422 = vld [vmem:[%s366 + $0x88] sm:$0xff]
        %v423 = vld [vmem:[%s366 + $0x90] sm:$0xff]
        %v424 = vld [vmem:[%s366 + $0x98] sm:$0xff]
        %v425 = vld [vmem:[%s366 + $0xa0] sm:$0xff]
        %v426 = vld [vmem:[%s366 + $0xa8] sm:$0xff]
        %v427 = vld [vmem:[%s366 + $0xb0] sm:$0xff]
        %v428 = vld [vmem:[%s366 + $0xb8] sm:$0xff]
        %v429 = vld [vmem:[%s366 + $0xc0] sm:$0xff]
        %v430 = vld [vmem:[%s366 + $0xc8] sm:$0xff]
        %v431 = vld [vmem:[%s366 + $0xd0] sm:$0xff]
        %v432 = vld [vmem:[%s366 + $0xd8] sm:$0xff]
        %v433 = vld [vmem:[%s366 + $0xe0] sm:$0xff]
        %v434 = vld [vmem:[%s366 + $0xe8] sm:$0xff]
        %v435 = vld [vmem:[%s366 + $0xf0] sm:$0xff]
        %v436 = vld [vmem:[%s366 + $0xf8] sm:$0xff]
        %v437 = vld [vmem:[%s2] sm:$0x1]
        %v438 = vld [vmem:[%s3] sm:$0x1]
        %v439 = vsub.f32 %v373, %v405
        %v440 = vsub.f32 %v374, %v406
        %v441 = vsub.f32 %v375, %v407
        %v442 = vsub.f32 %v376, %v408
        %v443 = vsub.f32 %v377, %v409
        %v444 = vsub.f32 %v378, %v410
        %v445 = vsub.f32 %v379, %v411
        %v446 = vsub.f32 %v380, %v412
        %v447 = vsub.f32 %v381, %v413
        %v448 = vsub.f32 %v382, %v414
        %v449 = vsub.f32 %v383, %v415
        %v450 = vsub.f32 %v384, %v416
        %v451 = vsub.f32 %v385, %v417
        %v452 = vsub.f32 %v386, %v418
        %v453 = vsub.f32 %v387, %v419
        %v454 = vsub.f32 %v388, %v420
        %v455 = vsub.f32 %v389, %v421
        %v456 = vsub.f32 %v390, %v422
        %v457 = vsub.f32 %v391, %v423
        %v458 = vsub.f32 %v392, %v424
        %v459 = vsub.f32 %v393, %v425
        %v460 = vsub.f32 %v394, %v426
        %v461 = vsub.f32 %v395, %v427
        %v462 = vsub.f32 %v396, %v428
        %v463 = vsub.f32 %v397, %v429
        %v464 = vsub.f32 %v398, %v430
        %v465 = vsub.f32 %v399, %v431
        %v466 = vsub.f32 %v400, %v432
        %v467 = vsub.f32 %v401, %v433
        %v468 = vsub.f32 %v402, %v434
        %v469 = vsub.f32 %v403, %v435
        %v470 = vsub.f32 %v404, %v436
        %v471 = vand.u32 2147483647, %v439
        %v472 = vand.u32 2147483647, %v440
        %v473 = vand.u32 2147483647, %v441
        %v474 = vand.u32 2147483647, %v442
        %v475 = vand.u32 2147483647, %v443
        %v476 = vand.u32 2147483647, %v444
        %v477 = vand.u32 2147483647, %v445
        %v478 = vand.u32 2147483647, %v446
        %v479 = vand.u32 2147483647, %v447
        %v480 = vand.u32 2147483647, %v448
        %v481 = vand.u32 2147483647, %v449
        %v482 = vand.u32 2147483647, %v450
        %v483 = vand.u32 2147483647, %v451
        %v484 = vand.u32 2147483647, %v452
        %v485 = vand.u32 2147483647, %v453
        %v486 = vand.u32 2147483647, %v454
        %v487 = vand.u32 2147483647, %v455
        %v488 = vand.u32 2147483647, %v456
        %v489 = vand.u32 2147483647, %v457
        %v490 = vand.u32 2147483647, %v458
        %v491 = vand.u32 2147483647, %v459
        %v492 = vand.u32 2147483647, %v460
        %v493 = vand.u32 2147483647, %v461
        %v494 = vand.u32 2147483647, %v462
        %v495 = vand.u32 2147483647, %v463
        %v496 = vand.u32 2147483647, %v464
        %v497 = vand.u32 2147483647, %v465
        %v498 = vand.u32 2147483647, %v466
        %v499 = vand.u32 2147483647, %v467
        %v500 = vand.u32 2147483647, %v468
        %v501 = vand.u32 2147483647, %v469
        %v502 = vand.u32 2147483647, %v470
        %v504 = vlaneseq
        %v505 = vshrl.u32 %v504, 7
        %v506 = vsub.s32 0, %v505
        %v507 = vrot.slane %v438, %v506
        %v509 = vmul.f32 %v471, %v507
        %v510 = vmul.f32 %v472, %v507
        %v511 = vmul.f32 %v473, %v507
        %v512 = vmul.f32 %v474, %v507
        %v513 = vmul.f32 %v475, %v507
        %v514 = vmul.f32 %v476, %v507
        %v515 = vmul.f32 %v477, %v507
        %v516 = vmul.f32 %v478, %v507
        %v517 = vmul.f32 %v479, %v507
        %v518 = vmul.f32 %v480, %v507
        %v519 = vmul.f32 %v481, %v507
        %v520 = vmul.f32 %v482, %v507
        %v521 = vmul.f32 %v483, %v507
        %v522 = vmul.f32 %v484, %v507
        %v523 = vmul.f32 %v485, %v507
        %v524 = vmul.f32 %v486, %v507
        %v525 = vmul.f32 %v487, %v507
        %v526 = vmul.f32 %v488, %v507
        %v527 = vmul.f32 %v489, %v507
        %v528 = vmul.f32 %v490, %v507
        %v529 = vmul.f32 %v491, %v507
        %v530 = vmul.f32 %v492, %v507
        %v531 = vmul.f32 %v493, %v507
        %v532 = vmul.f32 %v494, %v507
        %v533 = vmul.f32 %v495, %v507
        %v534 = vmul.f32 %v496, %v507
        %v535 = vmul.f32 %v497, %v507
        %v536 = vmul.f32 %v498, %v507
        %v537 = vmul.f32 %v499, %v507
        %v538 = vmul.f32 %v500, %v507
        %v539 = vmul.f32 %v501, %v507
        %v540 = vmul.f32 %v502, %v507
        %vm541 = vcmask 23552
        %v542 = vsel %vm541, %v509, 0.0
        %v543 = vsel %vm541, %v510, 0.0
        %v544 = vadd.f32 %v542, %v543
        %v545 = vsel %vm541, %v511, 0.0
        %v546 = vadd.f32 %v544, %v545
        %v547 = vsel %vm541, %v512, 0.0
        %v548 = vadd.f32 %v546, %v547
        %v549 = vsel %vm541, %v513, 0.0
        %v550 = vadd.f32 %v548, %v549
        %v551 = vsel %vm541, %v514, 0.0
        %v552 = vadd.f32 %v550, %v551
        %v553 = vsel %vm541, %v515, 0.0
        %v554 = vadd.f32 %v552, %v553
        %v555 = vsel %vm541, %v516, 0.0
        %v556 = vadd.f32 %v554, %v555
        %v557 = vsel %vm541, %v517, 0.0
        %v558 = vadd.f32 %v556, %v557
        %v559 = vsel %vm541, %v518, 0.0
        %v560 = vadd.f32 %v558, %v559
        %v561 = vsel %vm541, %v519, 0.0
        %v562 = vadd.f32 %v560, %v561
        %v563 = vsel %vm541, %v520, 0.0
        %v564 = vadd.f32 %v562, %v563
        %v565 = vsel %vm541, %v521, 0.0
        %v566 = vadd.f32 %v564, %v565
        %v567 = vsel %vm541, %v522, 0.0
        %v568 = vadd.f32 %v566, %v567
        %v569 = vsel %vm541, %v523, 0.0
        %v570 = vadd.f32 %v568, %v569
        %v571 = vsel %vm541, %v524, 0.0
        %v572 = vadd.f32 %v570, %v571
        %v573 = vsel %vm541, %v525, 0.0
        %v574 = vadd.f32 %v572, %v573
        %v575 = vsel %vm541, %v526, 0.0
        %v576 = vadd.f32 %v574, %v575
        %v577 = vsel %vm541, %v527, 0.0
        %v578 = vadd.f32 %v576, %v577
        %v579 = vsel %vm541, %v528, 0.0
        %v580 = vadd.f32 %v578, %v579
        %v581 = vsel %vm541, %v529, 0.0
        %v582 = vadd.f32 %v580, %v581
        %v583 = vsel %vm541, %v530, 0.0
        %v584 = vadd.f32 %v582, %v583
        %v585 = vsel %vm541, %v531, 0.0
        %v586 = vadd.f32 %v584, %v585
        %v587 = vsel %vm541, %v532, 0.0
        %v588 = vadd.f32 %v586, %v587
        %v589 = vsel %vm541, %v533, 0.0
        %v590 = vadd.f32 %v588, %v589
        %v591 = vsel %vm541, %v534, 0.0
        %v592 = vadd.f32 %v590, %v591
        %v593 = vsel %vm541, %v535, 0.0
        %v594 = vadd.f32 %v592, %v593
        %v595 = vsel %vm541, %v536, 0.0
        %v596 = vadd.f32 %v594, %v595
        %v597 = vsel %vm541, %v537, 0.0
        %v598 = vadd.f32 %v596, %v597
        %v599 = vsel %vm541, %v538, 0.0
        %v600 = vadd.f32 %v598, %v599
        %v601 = vsel %vm541, %v539, 0.0
        %v602 = vadd.f32 %v600, %v601
        %v603 = vsel %vm541, %v540, 0.0
        %v604 = vadd.f32 %v602, %v603
        %605 = vadd.xlane.f32.xlu0 %v604
        %v606 = vpop.xlane.xlu0 %605
        %v607 = vrot.slane %v606, 4
        %v608 = vadd.f32 %v606, %v607
        %v609 = vrot.slane %v608, 2
        %v610 = vadd.f32 %v608, %v609
        %v611 = vrot.slane %v610, 1
        %v612 = vadd.f32 %v610, %v611
        %s613 = vtos %v612
        %v614 = vstv %s613
        %vm615 = vcmask 0
        %616 = vst.msk [vmem:[%s369] sm:$0x1] %vm615, %v614
        %617 = vst [vmem:[#allocation2] sm:$0xff] 0.0
        %618 = vst [vmem:[#allocation2 + $0x8] sm:$0xff] 0.0
        %619 = vst [vmem:[#allocation2 + $0x10] sm:$0x3] 0.0
        %620 = vst [vmem:[#allocation2 + $0x18] sm:$0xff] 0.0
        %621 = vst [vmem:[#allocation2 + $0x20] sm:$0xff] 0.0
        %622 = vst [vmem:[#allocation2 + $0x28] sm:$0x3] 0.0
        %623 = vst [vmem:[#allocation2 + $0x30] sm:$0xff] 0.0
        %624 = vst [vmem:[#allocation2 + $0x38] sm:$0xff] 0.0
        %625 = vst [vmem:[#allocation2 + $0x40] sm:$0x3] 0.0
        %626 = vst [vmem:[#allocation2 + $0x48] sm:$0xff] 0.0
        %627 = vst [vmem:[#allocation2 + $0x50] sm:$0xff] 0.0
        %628 = vst [vmem:[#allocation2 + $0x58] sm:$0x3] 0.0
        %629 = vst [vmem:[#allocation2 + $0x60] sm:$0xff] 0.0
        %630 = vst [vmem:[#allocation2 + $0x68] sm:$0xff] 0.0
        %631 = vst [vmem:[#allocation2 + $0x70] sm:$0x3] 0.0
        %632 = vst [vmem:[#allocation2 + $0x78] sm:$0xff] 0.0
        %633 = vst [vmem:[#allocation2 + $0x80] sm:$0xff] 0.0
        %634 = vst [vmem:[#allocation2 + $0x88] sm:$0x3] 0.0
        %635 = vst [vmem:[#allocation2 + $0x90] sm:$0xff] 0.0
        %636 = vst [vmem:[#allocation2 + $0x98] sm:$0xff] 0.0
        %637 = vst [vmem:[#allocation2 + $0xa0] sm:$0x3] 0.0
        %638 = vst [vmem:[#allocation2 + $0xa8] sm:$0xff] 0.0
        %639 = vst [vmem:[#allocation2 + $0xb0] sm:$0xff] 0.0
        %640 = vst [vmem:[#allocation2 + $0xb8] sm:$0x3] 0.0
        %641 = vst [vmem:[#allocation2 + $0xc0] sm:$0xff] 0.0
        %642 = vst [vmem:[#allocation2 + $0xc8] sm:$0xff] 0.0
        %643 = vst [vmem:[#allocation2 + $0xd0] sm:$0x3] 0.0
        %644 = vst [vmem:[#allocation2 + $0xd8] sm:$0xff] 0.0
        %645 = vst [vmem:[#allocation2 + $0xe0] sm:$0xff] 0.0
        %646 = vst [vmem:[#allocation2 + $0xe8] sm:$0x3] 0.0
        %647 = vst [vmem:[#allocation2 + $0xf0] sm:$0xff] 0.0
        %648 = vst [vmem:[#allocation2 + $0xf8] sm:$0xff] 0.0
        %649 = vst [vmem:[#allocation2 + $0x100] sm:$0x3] 0.0
        %650 = vst [vmem:[#allocation2 + $0x108] sm:$0xff] 0.0
        %651 = vst [vmem:[#allocation2 + $0x110] sm:$0xff] 0.0
        %652 = vst [vmem:[#allocation2 + $0x118] sm:$0x3] 0.0
        %653 = vst [vmem:[#allocation2 + $0x120] sm:$0xff] 0.0
        %654 = vst [vmem:[#allocation2 + $0x128] sm:$0xff] 0.0
        %655 = vst [vmem:[#allocation2 + $0x130] sm:$0x3] 0.0
        %656 = vst [vmem:[#allocation2 + $0x138] sm:$0xff] 0.0
        %657 = vst [vmem:[#allocation2 + $0x140] sm:$0xff] 0.0
        %658 = vst [vmem:[#allocation2 + $0x148] sm:$0x3] 0.0
        %659 = vst [vmem:[#allocation2 + $0x150] sm:$0xff] 0.0
        %660 = vst [vmem:[#allocation2 + $0x158] sm:$0xff] 0.0
        %661 = vst [vmem:[#allocation2 + $0x160] sm:$0x3] 0.0
        %662 = vst [vmem:[#allocation2 + $0x168] sm:$0xff] 0.0
        %663 = vst [vmem:[#allocation2 + $0x170] sm:$0xff] 0.0
        %664 = vst [vmem:[#allocation2 + $0x178] sm:$0x3] 0.0
        %665 = vst [vmem:[#allocation2 + $0x180] sm:$0xff] 0.0
        %666 = vst [vmem:[#allocation2 + $0x188] sm:$0xff] 0.0
        %667 = vst [vmem:[#allocation2 + $0x190] sm:$0x3] 0.0
        %668 = vst [vmem:[#allocation2 + $0x198] sm:$0xff] 0.0
        %669 = vst [vmem:[#allocation2 + $0x1a0] sm:$0xff] 0.0
        %670 = vst [vmem:[#allocation2 + $0x1a8] sm:$0x3] 0.0
        %v672 = vlaneseq
        %v673 = vshrl.u32 %v672, 7
        %v674 = vsub.s32 0, %v673
        %v675 = vrot.slane %v437, %v674
        %v677 = vsub.f32 %v373, %v675
        %v678 = vsub.f32 %v374, %v675
        %v679 = vsub.f32 %v375, %v675
        %v680 = vsub.f32 %v376, %v675
        %v681 = vsub.f32 %v377, %v675
        %v682 = vsub.f32 %v378, %v675
        %v683 = vsub.f32 %v379, %v675
        %v684 = vsub.f32 %v380, %v675
        %v685 = vsub.f32 %v381, %v675
        %v686 = vsub.f32 %v382, %v675
        %v687 = vsub.f32 %v383, %v675
        %v688 = vsub.f32 %v384, %v675
        %v689 = vsub.f32 %v385, %v675
        %v690 = vsub.f32 %v386, %v675
        %v691 = vsub.f32 %v387, %v675
        %v692 = vsub.f32 %v388, %v675
        %v693 = vsub.f32 %v389, %v675
        %v694 = vsub.f32 %v390, %v675
        %v695 = vsub.f32 %v391, %v675
        %v696 = vsub.f32 %v392, %v675
        %v697 = vsub.f32 %v393, %v675
        %v698 = vsub.f32 %v394, %v675
        %v699 = vsub.f32 %v395, %v675
        %v700 = vsub.f32 %v396, %v675
        %v701 = vsub.f32 %v397, %v675
        %v702 = vsub.f32 %v398, %v675
        %v703 = vsub.f32 %v399, %v675
        %v704 = vsub.f32 %v400, %v675
        %v705 = vsub.f32 %v401, %v675
        %v706 = vsub.f32 %v402, %v675
        %v707 = vsub.f32 %v403, %v675
        %v708 = vsub.f32 %v404, %v675
        %s709 = scalar_lea.vmem [#allocation2], 24
        %710 = vst.msk [vmem:[%s709 + $0x1] sm:$0xff] %vm541, %v677
        %711 = vst.msk [vmem:[%s709 + $0x9] sm:$0xff] %vm541, %v678
        %712 = vst.msk [vmem:[%s709 + $0x19] sm:$0xff] %vm541, %v679
        %713 = vst.msk [vmem:[%s709 + $0x21] sm:$0xff] %vm541, %v680
        %714 = vst.msk [vmem:[%s709 + $0x31] sm:$0xff] %vm541, %v681
        %715 = vst.msk [vmem:[%s709 + $0x39] sm:$0xff] %vm541, %v682
        %716 = vst.msk [vmem:[%s709 + $0x49] sm:$0xff] %vm541, %v683
        %717 = vst.msk [vmem:[%s709 + $0x51] sm:$0xff] %vm541, %v684
        %718 = vst.msk [vmem:[%s709 + $0x61] sm:$0xff] %vm541, %v685
        %719 = vst.msk [vmem:[%s709 + $0x69] sm:$0xff] %vm541, %v686
        %720 = vst.msk [vmem:[%s709 + $0x79] sm:$0xff] %vm541, %v687
        %721 = vst.msk [vmem:[%s709 + $0x81] sm:$0xff] %vm541, %v688
        %722 = vst.msk [vmem:[%s709 + $0x91] sm:$0xff] %vm541, %v689
        %723 = vst.msk [vmem:[%s709 + $0x99] sm:$0xff] %vm541, %v690
        %724 = vst.msk [vmem:[%s709 + $0xa9] sm:$0xff] %vm541, %v691
        %725 = vst.msk [vmem:[%s709 + $0xb1] sm:$0xff] %vm541, %v692
        %726 = vst.msk [vmem:[%s709 + $0xc1] sm:$0xff] %vm541, %v693
        %727 = vst.msk [vmem:[%s709 + $0xc9] sm:$0xff] %vm541, %v694
        %728 = vst.msk [vmem:[%s709 + $0xd9] sm:$0xff] %vm541, %v695
        %729 = vst.msk [vmem:[%s709 + $0xe1] sm:$0xff] %vm541, %v696
        %730 = vst.msk [vmem:[%s709 + $0xf1] sm:$0xff] %vm541, %v697
        %731 = vst.msk [vmem:[%s709 + $0xf9] sm:$0xff] %vm541, %v698
        %732 = vst.msk [vmem:[%s709 + $0x109] sm:$0xff] %vm541, %v699
        %733 = vst.msk [vmem:[%s709 + $0x111] sm:$0xff] %vm541, %v700
        %734 = vst.msk [vmem:[%s709 + $0x121] sm:$0xff] %vm541, %v701
        %735 = vst.msk [vmem:[%s709 + $0x129] sm:$0xff] %vm541, %v702
        %736 = vst.msk [vmem:[%s709 + $0x139] sm:$0xff] %vm541, %v703
        %737 = vst.msk [vmem:[%s709 + $0x141] sm:$0xff] %vm541, %v704
        %738 = vst.msk [vmem:[%s709 + $0x151] sm:$0xff] %vm541, %v705
        %739 = vst.msk [vmem:[%s709 + $0x159] sm:$0xff] %vm541, %v706
        %740 = vst.msk [vmem:[%s709 + $0x169] sm:$0xff] %vm541, %v707
        %741 = vst.msk [vmem:[%s709 + $0x171] sm:$0xff] %vm541, %v708
        %v742 = vsub.f32 %v405, %v675
        %v743 = vsub.f32 %v406, %v675
        %v744 = vsub.f32 %v407, %v675
        %v745 = vsub.f32 %v408, %v675
        %v746 = vsub.f32 %v409, %v675
        %v747 = vsub.f32 %v410, %v675
        %v748 = vsub.f32 %v411, %v675
        %v749 = vsub.f32 %v412, %v675
        %v750 = vsub.f32 %v413, %v675
        %v751 = vsub.f32 %v414, %v675
        %v752 = vsub.f32 %v415, %v675
        %v753 = vsub.f32 %v416, %v675
        %v754 = vsub.f32 %v417, %v675
        %v755 = vsub.f32 %v418, %v675
        %v756 = vsub.f32 %v419, %v675
        %v757 = vsub.f32 %v420, %v675
        %v758 = vsub.f32 %v421, %v675
        %v759 = vsub.f32 %v422, %v675
        %v760 = vsub.f32 %v423, %v675
        %v761 = vsub.f32 %v424, %v675
        %v762 = vsub.f32 %v425, %v675
        %v763 = vsub.f32 %v426, %v675
        %v764 = vsub.f32 %v427, %v675
        %v765 = vsub.f32 %v428, %v675
        %v766 = vsub.f32 %v429, %v675
        %v767 = vsub.f32 %v430, %v675
        %v768 = vsub.f32 %v431, %v675
        %v769 = vsub.f32 %v432, %v675
        %v770 = vsub.f32 %v433, %v675
        %v771 = vsub.f32 %v434, %v675
        %v772 = vsub.f32 %v435, %v675
        %v773 = vsub.f32 %v436, %v675
        %806 = vrot.lane.b32.xlu0 %v742, 3
        %v807 = vpop.permute.xlu0 %806
        %808 = vrot.lane.b32.xlu0 %v743, 3
        %v809 = vpop.permute.xlu0 %808
        %810 = vrot.lane.b32.xlu0 %v744, 3
        %v811 = vpop.permute.xlu0 %810
        %812 = vrot.lane.b32.xlu0 %v745, 3
        %v813 = vpop.permute.xlu0 %812
        %814 = vrot.lane.b32.xlu0 %v746, 3
        %v815 = vpop.permute.xlu0 %814
        %816 = vrot.lane.b32.xlu0 %v747, 3
        %v817 = vpop.permute.xlu0 %816
        %818 = vrot.lane.b32.xlu0 %v748, 3
        %v819 = vpop.permute.xlu0 %818
        %820 = vrot.lane.b32.xlu0 %v749, 3
        %v821 = vpop.permute.xlu0 %820
        %822 = vrot.lane.b32.xlu0 %v750, 3
        %v823 = vpop.permute.xlu0 %822
        %824 = vrot.lane.b32.xlu0 %v751, 3
        %v825 = vpop.permute.xlu0 %824
        %826 = vrot.lane.b32.xlu0 %v752, 3
        %v827 = vpop.permute.xlu0 %826
        %828 = vrot.lane.b32.xlu0 %v753, 3
        %v829 = vpop.permute.xlu0 %828
        %830 = vrot.lane.b32.xlu0 %v754, 3
        %v831 = vpop.permute.xlu0 %830
        %832 = vrot.lane.b32.xlu0 %v755, 3
        %v833 = vpop.permute.xlu0 %832
        %834 = vrot.lane.b32.xlu0 %v756, 3
        %v835 = vpop.permute.xlu0 %834
        %836 = vrot.lane.b32.xlu0 %v757, 3
        %v837 = vpop.permute.xlu0 %836
        %838 = vrot.lane.b32.xlu0 %v758, 3
        %v839 = vpop.permute.xlu0 %838
        %840 = vrot.lane.b32.xlu0 %v759, 3
        %v841 = vpop.permute.xlu0 %840
        %842 = vrot.lane.b32.xlu0 %v760, 3
        %v843 = vpop.permute.xlu0 %842
        %844 = vrot.lane.b32.xlu0 %v761, 3
        %v845 = vpop.permute.xlu0 %844
        %846 = vrot.lane.b32.xlu0 %v762, 3
        %v847 = vpop.permute.xlu0 %846
        %848 = vrot.lane.b32.xlu0 %v763, 3
        %v849 = vpop.permute.xlu0 %848
        %850 = vrot.lane.b32.xlu0 %v764, 3
        %v851 = vpop.permute.xlu0 %850
        %852 = vrot.lane.b32.xlu0 %v765, 3
        %v853 = vpop.permute.xlu0 %852
        %854 = vrot.lane.b32.xlu0 %v766, 3
        %v855 = vpop.permute.xlu0 %854
        %856 = vrot.lane.b32.xlu0 %v767, 3
        %v857 = vpop.permute.xlu0 %856
        %858 = vrot.lane.b32.xlu0 %v768, 3
        %v859 = vpop.permute.xlu0 %858
        %860 = vrot.lane.b32.xlu0 %v769, 3
        %v861 = vpop.permute.xlu0 %860
        %862 = vrot.lane.b32.xlu0 %v770, 3
        %v863 = vpop.permute.xlu0 %862
        %864 = vrot.lane.b32.xlu0 %v771, 3
        %v865 = vpop.permute.xlu0 %864
        %866 = vrot.lane.b32.xlu0 %v772, 3
        %v867 = vpop.permute.xlu0 %866
        %868 = vrot.lane.b32.xlu0 %v773, 3
        %v869 = vpop.permute.xlu0 %868
        %vm902 = vcmask 48152
        %903 = vst.msk [vmem:[%s709 + $0x1] sm:$0xff] %vm902, %v807
        %904 = vst.msk [vmem:[%s709 + $0x9] sm:$0xff] %vm902, %v809
        %905 = vst.msk [vmem:[%s709 + $0x19] sm:$0xff] %vm902, %v811
        %906 = vst.msk [vmem:[%s709 + $0x21] sm:$0xff] %vm902, %v813
        %907 = vst.msk [vmem:[%s709 + $0x31] sm:$0xff] %vm902, %v815
        %908 = vst.msk [vmem:[%s709 + $0x39] sm:$0xff] %vm902, %v817
        %909 = vst.msk [vmem:[%s709 + $0x49] sm:$0xff] %vm902, %v819
        %910 = vst.msk [vmem:[%s709 + $0x51] sm:$0xff] %vm902, %v821
        %911 = vst.msk [vmem:[%s709 + $0x61] sm:$0xff] %vm902, %v823
        %912 = vst.msk [vmem:[%s709 + $0x69] sm:$0xff] %vm902, %v825
        %913 = vst.msk [vmem:[%s709 + $0x79] sm:$0xff] %vm902, %v827
        %914 = vst.msk [vmem:[%s709 + $0x81] sm:$0xff] %vm902, %v829
        %915 = vst.msk [vmem:[%s709 + $0x91] sm:$0xff] %vm902, %v831
        %916 = vst.msk [vmem:[%s709 + $0x99] sm:$0xff] %vm902, %v833
        %917 = vst.msk [vmem:[%s709 + $0xa9] sm:$0xff] %vm902, %v835
        %918 = vst.msk [vmem:[%s709 + $0xb1] sm:$0xff] %vm902, %v837
        %919 = vst.msk [vmem:[%s709 + $0xc1] sm:$0xff] %vm902, %v839
        %920 = vst.msk [vmem:[%s709 + $0xc9] sm:$0xff] %vm902, %v841
        %921 = vst.msk [vmem:[%s709 + $0xd9] sm:$0xff] %vm902, %v843
        %922 = vst.msk [vmem:[%s709 + $0xe1] sm:$0xff] %vm902, %v845
        %923 = vst.msk [vmem:[%s709 + $0xf1] sm:$0xff] %vm902, %v847
        %924 = vst.msk [vmem:[%s709 + $0xf9] sm:$0xff] %vm902, %v849
        %925 = vst.msk [vmem:[%s709 + $0x109] sm:$0xff] %vm902, %v851
        %926 = vst.msk [vmem:[%s709 + $0x111] sm:$0xff] %vm902, %v853
        %927 = vst.msk [vmem:[%s709 + $0x121] sm:$0xff] %vm902, %v855
        %928 = vst.msk [vmem:[%s709 + $0x129] sm:$0xff] %vm902, %v857
        %929 = vst.msk [vmem:[%s709 + $0x139] sm:$0xff] %vm902, %v859
        %930 = vst.msk [vmem:[%s709 + $0x141] sm:$0xff] %vm902, %v861
        %931 = vst.msk [vmem:[%s709 + $0x151] sm:$0xff] %vm902, %v863
        %932 = vst.msk [vmem:[%s709 + $0x159] sm:$0xff] %vm902, %v865
        %933 = vst.msk [vmem:[%s709 + $0x169] sm:$0xff] %vm902, %v867
        %934 = vst.msk [vmem:[%s709 + $0x171] sm:$0xff] %vm902, %v869
        %v935 = vld [vmem:[#allocation2] sm:$0xff]
        %v936 = vld [vmem:[#allocation2 + $0x8] sm:$0xff]
        %v937 = vld [vmem:[#allocation2 + $0x18] sm:$0xff]
        %v938 = vld [vmem:[#allocation2 + $0x20] sm:$0xff]
        %v939 = vld [vmem:[#allocation2 + $0x30] sm:$0xff]
        %v940 = vld [vmem:[#allocation2 + $0x38] sm:$0xff]
        %v941 = vld [vmem:[#allocation2 + $0x48] sm:$0xff]
        %v942 = vld [vmem:[#allocation2 + $0x50] sm:$0xff]
        %v943 = vld [vmem:[#allocation2 + $0x60] sm:$0xff]
        %v944 = vld [vmem:[#allocation2 + $0x68] sm:$0xff]
        %v945 = vld [vmem:[#allocation2 + $0x78] sm:$0xff]
        %v946 = vld [vmem:[#allocation2 + $0x80] sm:$0xff]
        %v947 = vld [vmem:[#allocation2 + $0x90] sm:$0xff]
        %v948 = vld [vmem:[#allocation2 + $0x98] sm:$0xff]
        %v949 = vld [vmem:[#allocation2 + $0xa8] sm:$0xff]
        %v950 = vld [vmem:[#allocation2 + $0xb0] sm:$0xff]
        %v951 = vld [vmem:[#allocation2 + $0xc0] sm:$0xff]
        %v952 = vld [vmem:[#allocation2 + $0xc8] sm:$0xff]
        %v953 = vld [vmem:[#allocation2 + $0xd8] sm:$0xff]
        %v954 = vld [vmem:[#allocation2 + $0xe0] sm:$0xff]
        %v955 = vld [vmem:[#allocation2 + $0xf0] sm:$0xff]
        %v956 = vld [vmem:[#allocation2 + $0xf8] sm:$0xff]
        %v957 = vld [vmem:[#allocation2 + $0x108] sm:$0xff]
        %v958 = vld [vmem:[#allocation2 + $0x110] sm:$0xff]
        %v959 = vld [vmem:[#allocation2 + $0x120] sm:$0xff]
        %v960 = vld [vmem:[#allocation2 + $0x128] sm:$0xff]
        %v961 = vld [vmem:[#allocation2 + $0x138] sm:$0xff]
        %v962 = vld [vmem:[#allocation2 + $0x140] sm:$0xff]
        %v963 = vld [vmem:[#allocation2 + $0x150] sm:$0xff]
        %v964 = vld [vmem:[#allocation2 + $0x158] sm:$0xff]
        %v965 = vld [vmem:[#allocation2 + $0x168] sm:$0xff]
        %v966 = vld [vmem:[#allocation2 + $0x170] sm:$0xff]
        %967 = vst [vmem:[#allocation3] sm:$0xff] %v935
        %968 = vst [vmem:[#allocation3 + $0x48] sm:$0xff] %v936
        %969 = vst [vmem:[#allocation3 + $0x90] sm:$0xff] %v937
        %970 = vst [vmem:[#allocation3 + $0xd8] sm:$0xff] %v938
        %971 = vst [vmem:[#allocation3 + $0x120] sm:$0xff] %v939
        %972 = vst [vmem:[#allocation3 + $0x168] sm:$0xff] %v940
        %973 = vst [vmem:[#allocation3 + $0x1b0] sm:$0xff] %v941
        %974 = vst [vmem:[#allocation3 + $0x1f8] sm:$0xff] %v942
        %975 = vst [vmem:[#allocation3 + $0x240] sm:$0xff] %v943
        %976 = vst [vmem:[#allocation3 + $0x288] sm:$0xff] %v944
        %977 = vst [vmem:[#allocation3 + $0x2d0] sm:$0xff] %v945
        %978 = vst [vmem:[#allocation3 + $0x318] sm:$0xff] %v946
        %979 = vst [vmem:[#allocation3 + $0x360] sm:$0xff] %v947
        %980 = vst [vmem:[#allocation3 + $0x3a8] sm:$0xff] %v948
        %981 = vst [vmem:[#allocation3 + $0x3f0] sm:$0xff] %v949
        %982 = vst [vmem:[#allocation3 + $0x438] sm:$0xff] %v950
        %983 = vst [vmem:[#allocation3 + $0x480] sm:$0xff] %v951
        %984 = vst [vmem:[#allocation3 + $0x4c8] sm:$0xff] %v952
        %985 = vst [vmem:[#allocation3 + $0x510] sm:$0xff] %v953
        %986 = vst [vmem:[#allocation3 + $0x558] sm:$0xff] %v954
        %987 = vst [vmem:[#allocation3 + $0x5a0] sm:$0xff] %v955
        %988 = vst [vmem:[#allocation3 + $0x5e8] sm:$0xff] %v956
        %989 = vst [vmem:[#allocation3 + $0x630] sm:$0xff] %v957
        %990 = vst [vmem:[#allocation3 + $0x678] sm:$0xff] %v958
        %991 = vst [vmem:[#allocation3 + $0x6c0] sm:$0xff] %v959
        %992 = vst [vmem:[#allocation3 + $0x708] sm:$0xff] %v960
        %993 = vst [vmem:[#allocation3 + $0x750] sm:$0xff] %v961
        %994 = vst [vmem:[#allocation3 + $0x798] sm:$0xff] %v962
        %995 = vst [vmem:[#allocation3 + $0x7e0] sm:$0xff] %v963
        %996 = vst [vmem:[#allocation3 + $0x828] sm:$0xff] %v964
        %997 = vst [vmem:[#allocation3 + $0x870] sm:$0xff] %v965
        %998 = vst [vmem:[#allocation3 + $0x8b8] sm:$0xff] %v966
        %v999 = vld [vmem:[#allocation2 + $0x1] sm:$0xff]
        %v1000 = vld [vmem:[#allocation2 + $0x9] sm:$0xff]
        %v1001 = vld [vmem:[#allocation2 + $0x19] sm:$0xff]
        %v1002 = vld [vmem:[#allocation2 + $0x21] sm:$0xff]
        %v1003 = vld [vmem:[#allocation2 + $0x31] sm:$0xff]
        %v1004 = vld [vmem:[#allocation2 + $0x39] sm:$0xff]
        %v1005 = vld [vmem:[#allocation2 + $0x49] sm:$0xff]
        %v1006 = vld [vmem:[#allocation2 + $0x51] sm:$0xff]
        %v1007 = vld [vmem:[#allocation2 + $0x61] sm:$0xff]
        %v1008 = vld [vmem:[#allocation2 + $0x69] sm:$0xff]
        %v1009 = vld [vmem:[#allocation2 + $0x79] sm:$0xff]
        %v1010 = vld [vmem:[#allocation2 + $0x81] sm:$0xff]
        %v1011 = vld [vmem:[#allocation2 + $0x91] sm:$0xff]
        %v1012 = vld [vmem:[#allocation2 + $0x99] sm:$0xff]
        %v1013 = vld [vmem:[#allocation2 + $0xa9] sm:$0xff]
        %v1014 = vld [vmem:[#allocation2 + $0xb1] sm:$0xff]
        %v1015 = vld [vmem:[#allocation2 + $0xc1] sm:$0xff]
        %v1016 = vld [vmem:[#allocation2 + $0xc9] sm:$0xff]
        %v1017 = vld [vmem:[#allocation2 + $0xd9] sm:$0xff]
        %v1018 = vld [vmem:[#allocation2 + $0xe1] sm:$0xff]
        %v1019 = vld [vmem:[#allocation2 + $0xf1] sm:$0xff]
        %v1020 = vld [vmem:[#allocation2 + $0xf9] sm:$0xff]
        %v1021 = vld [vmem:[#allocation2 + $0x109] sm:$0xff]
        %v1022 = vld [vmem:[#allocation2 + $0x111] sm:$0xff]
        %v1023 = vld [vmem:[#allocation2 + $0x121] sm:$0xff]
        %v1024 = vld [vmem:[#allocation2 + $0x129] sm:$0xff]
        %v1025 = vld [vmem:[#allocation2 + $0x139] sm:$0xff]
        %v1026 = vld [vmem:[#allocation2 + $0x141] sm:$0xff]
        %v1027 = vld [vmem:[#allocation2 + $0x151] sm:$0xff]
        %v1028 = vld [vmem:[#allocation2 + $0x159] sm:$0xff]
        %v1029 = vld [vmem:[#allocation2 + $0x169] sm:$0xff]
        %v1030 = vld [vmem:[#allocation2 + $0x171] sm:$0xff]
        %1031 = vst [vmem:[#allocation3 + $0x8] sm:$0xff] %v999
        %1032 = vst [vmem:[#allocation3 + $0x50] sm:$0xff] %v1000
        %1033 = vst [vmem:[#allocation3 + $0x98] sm:$0xff] %v1001
        %1034 = vst [vmem:[#allocation3 + $0xe0] sm:$0xff] %v1002
        %1035 = vst [vmem:[#allocation3 + $0x128] sm:$0xff] %v1003
        %1036 = vst [vmem:[#allocation3 + $0x170] sm:$0xff] %v1004
        %1037 = vst [vmem:[#allocation3 + $0x1b8] sm:$0xff] %v1005
        %1038 = vst [vmem:[#allocation3 + $0x200] sm:$0xff] %v1006
        %1039 = vst [vmem:[#allocation3 + $0x248] sm:$0xff] %v1007
        %1040 = vst [vmem:[#allocation3 + $0x290] sm:$0xff] %v1008
        %1041 = vst [vmem:[#allocation3 + $0x2d8] sm:$0xff] %v1009
        %1042 = vst [vmem:[#allocation3 + $0x320] sm:$0xff] %v1010
        %1043 = vst [vmem:[#allocation3 + $0x368] sm:$0xff] %v1011
        %1044 = vst [vmem:[#allocation3 + $0x3b0] sm:$0xff] %v1012
        %1045 = vst [vmem:[#allocation3 + $0x3f8] sm:$0xff] %v1013
        %1046 = vst [vmem:[#allocation3 + $0x440] sm:$0xff] %v1014
        %1047 = vst [vmem:[#allocation3 + $0x488] sm:$0xff] %v1015
        %1048 = vst [vmem:[#allocation3 + $0x4d0] sm:$0xff] %v1016
        %1049 = vst [vmem:[#allocation3 + $0x518] sm:$0xff] %v1017
        %1050 = vst [vmem:[#allocation3 + $0x560] sm:$0xff] %v1018
        %1051 = vst [vmem:[#allocation3 + $0x5a8] sm:$0xff] %v1019
        %1052 = vst [vmem:[#allocation3 + $0x5f0] sm:$0xff] %v1020
        %1053 = vst [vmem:[#allocation3 + $0x638] sm:$0xff] %v1021
        %1054 = vst [vmem:[#allocation3 + $0x680] sm:$0xff] %v1022
        %1055 = vst [vmem:[#allocation3 + $0x6c8] sm:$0xff] %v1023
        %1056 = vst [vmem:[#allocation3 + $0x710] sm:$0xff] %v1024
        %1057 = vst [vmem:[#allocation3 + $0x758] sm:$0xff] %v1025
        %1058 = vst [vmem:[#allocation3 + $0x7a0] sm:$0xff] %v1026
        %1059 = vst [vmem:[#allocation3 + $0x7e8] sm:$0xff] %v1027
        %1060 = vst [vmem:[#allocation3 + $0x830] sm:$0xff] %v1028
        %1061 = vst [vmem:[#allocation3 + $0x878] sm:$0xff] %v1029
        %1062 = vst [vmem:[#allocation3 + $0x8c0] sm:$0xff] %v1030
        %v1063 = vld [vmem:[#allocation2 + $0x2] sm:$0xff]
        %v1064 = vld [vmem:[#allocation2 + $0xa] sm:$0xff]
        %v1065 = vld [vmem:[#allocation2 + $0x1a] sm:$0xff]
        %v1066 = vld [vmem:[#allocation2 + $0x22] sm:$0xff]
        %v1067 = vld [vmem:[#allocation2 + $0x32] sm:$0xff]
        %v1068 = vld [vmem:[#allocation2 + $0x3a] sm:$0xff]
        %v1069 = vld [vmem:[#allocation2 + $0x4a] sm:$0xff]
        %v1070 = vld [vmem:[#allocation2 + $0x52] sm:$0xff]
        %v1071 = vld [vmem:[#allocation2 + $0x62] sm:$0xff]
        %v1072 = vld [vmem:[#allocation2 + $0x6a] sm:$0xff]
        %v1073 = vld [vmem:[#allocation2 + $0x7a] sm:$0xff]
        %v1074 = vld [vmem:[#allocation2 + $0x82] sm:$0xff]
        %v1075 = vld [vmem:[#allocation2 + $0x92] sm:$0xff]
        %v1076 = vld [vmem:[#allocation2 + $0x9a] sm:$0xff]
        %v1077 = vld [vmem:[#allocation2 + $0xaa] sm:$0xff]
        %v1078 = vld [vmem:[#allocation2 + $0xb2] sm:$0xff]
        %v1079 = vld [vmem:[#allocation2 + $0xc2] sm:$0xff]
        %v1080 = vld [vmem:[#allocation2 + $0xca] sm:$0xff]
        %v1081 = vld [vmem:[#allocation2 + $0xda] sm:$0xff]
        %v1082 = vld [vmem:[#allocation2 + $0xe2] sm:$0xff]
        %v1083 = vld [vmem:[#allocation2 + $0xf2] sm:$0xff]
        %v1084 = vld [vmem:[#allocation2 + $0xfa] sm:$0xff]
        %v1085 = vld [vmem:[#allocation2 + $0x10a] sm:$0xff]
        %v1086 = vld [vmem:[#allocation2 + $0x112] sm:$0xff]
        %v1087 = vld [vmem:[#allocation2 + $0x122] sm:$0xff]
        %v1088 = vld [vmem:[#allocation2 + $0x12a] sm:$0xff]
        %v1089 = vld [vmem:[#allocation2 + $0x13a] sm:$0xff]
        %v1090 = vld [vmem:[#allocation2 + $0x142] sm:$0xff]
        %v1091 = vld [vmem:[#allocation2 + $0x152] sm:$0xff]
        %v1092 = vld [vmem:[#allocation2 + $0x15a] sm:$0xff]
        %v1093 = vld [vmem:[#allocation2 + $0x16a] sm:$0xff]
        %v1094 = vld [vmem:[#allocation2 + $0x172] sm:$0xff]
        %1095 = vst [vmem:[#allocation3 + $0x10] sm:$0xff] %v1063
        %1096 = vst [vmem:[#allocation3 + $0x58] sm:$0xff] %v1064
        %1097 = vst [vmem:[#allocation3 + $0xa0] sm:$0xff] %v1065
        %1098 = vst [vmem:[#allocation3 + $0xe8] sm:$0xff] %v1066
        %1099 = vst [vmem:[#allocation3 + $0x130] sm:$0xff] %v1067
        %1100 = vst [vmem:[#allocation3 + $0x178] sm:$0xff] %v1068
        %1101 = vst [vmem:[#allocation3 + $0x1c0] sm:$0xff] %v1069
        %1102 = vst [vmem:[#allocation3 + $0x208] sm:$0xff] %v1070
        %1103 = vst [vmem:[#allocation3 + $0x250] sm:$0xff] %v1071
        %1104 = vst [vmem:[#allocation3 + $0x298] sm:$0xff] %v1072
        %1105 = vst [vmem:[#allocation3 + $0x2e0] sm:$0xff] %v1073
        %1106 = vst [vmem:[#allocation3 + $0x328] sm:$0xff] %v1074
        %1107 = vst [vmem:[#allocation3 + $0x370] sm:$0xff] %v1075
        %1108 = vst [vmem:[#allocation3 + $0x3b8] sm:$0xff] %v1076
        %1109 = vst [vmem:[#allocation3 + $0x400] sm:$0xff] %v1077
        %1110 = vst [vmem:[#allocation3 + $0x448] sm:$0xff] %v1078
        %1111 = vst [vmem:[#allocation3 + $0x490] sm:$0xff] %v1079
        %1112 = vst [vmem:[#allocation3 + $0x4d8] sm:$0xff] %v1080
        %1113 = vst [vmem:[#allocation3 + $0x520] sm:$0xff] %v1081
        %1114 = vst [vmem:[#allocation3 + $0x568] sm:$0xff] %v1082
        %1115 = vst [vmem:[#allocation3 + $0x5b0] sm:$0xff] %v1083
        %1116 = vst [vmem:[#allocation3 + $0x5f8] sm:$0xff] %v1084
        %1117 = vst [vmem:[#allocation3 + $0x640] sm:$0xff] %v1085
        %1118 = vst [vmem:[#allocation3 + $0x688] sm:$0xff] %v1086
        %1119 = vst [vmem:[#allocation3 + $0x6d0] sm:$0xff] %v1087
        %1120 = vst [vmem:[#allocation3 + $0x718] sm:$0xff] %v1088
        %1121 = vst [vmem:[#allocation3 + $0x760] sm:$0xff] %v1089
        %1122 = vst [vmem:[#allocation3 + $0x7a8] sm:$0xff] %v1090
        %1123 = vst [vmem:[#allocation3 + $0x7f0] sm:$0xff] %v1091
        %1124 = vst [vmem:[#allocation3 + $0x838] sm:$0xff] %v1092
        %1125 = vst [vmem:[#allocation3 + $0x880] sm:$0xff] %v1093
        %1126 = vst [vmem:[#allocation3 + $0x8c8] sm:$0xff] %v1094
        %v1127 = vld [vmem:[%s709] sm:$0xff]
        %v1128 = vld [vmem:[%s709 + $0x8] sm:$0xff]
        %v1129 = vld [vmem:[%s709 + $0x18] sm:$0xff]
        %v1130 = vld [vmem:[%s709 + $0x20] sm:$0xff]
        %v1131 = vld [vmem:[%s709 + $0x30] sm:$0xff]
        %v1132 = vld [vmem:[%s709 + $0x38] sm:$0xff]
        %v1133 = vld [vmem:[%s709 + $0x48] sm:$0xff]
        %v1134 = vld [vmem:[%s709 + $0x50] sm:$0xff]
        %v1135 = vld [vmem:[%s709 + $0x60] sm:$0xff]
        %v1136 = vld [vmem:[%s709 + $0x68] sm:$0xff]
        %v1137 = vld [vmem:[%s709 + $0x78] sm:$0xff]
        %v1138 = vld [vmem:[%s709 + $0x80] sm:$0xff]
        %v1139 = vld [vmem:[%s709 + $0x90] sm:$0xff]
        %v1140 = vld [vmem:[%s709 + $0x98] sm:$0xff]
        %v1141 = vld [vmem:[%s709 + $0xa8] sm:$0xff]
        %v1142 = vld [vmem:[%s709 + $0xb0] sm:$0xff]
        %v1143 = vld [vmem:[%s709 + $0xc0] sm:$0xff]
        %v1144 = vld [vmem:[%s709 + $0xc8] sm:$0xff]
        %v1145 = vld [vmem:[%s709 + $0xd8] sm:$0xff]
        %v1146 = vld [vmem:[%s709 + $0xe0] sm:$0xff]
        %v1147 = vld [vmem:[%s709 + $0xf0] sm:$0xff]
        %v1148 = vld [vmem:[%s709 + $0xf8] sm:$0xff]
        %v1149 = vld [vmem:[%s709 + $0x108] sm:$0xff]
        %v1150 = vld [vmem:[%s709 + $0x110] sm:$0xff]
        %v1151 = vld [vmem:[%s709 + $0x120] sm:$0xff]
        %v1152 = vld [vmem:[%s709 + $0x128] sm:$0xff]
        %v1153 = vld [vmem:[%s709 + $0x138] sm:$0xff]
        %v1154 = vld [vmem:[%s709 + $0x140] sm:$0xff]
        %v1155 = vld [vmem:[%s709 + $0x150] sm:$0xff]
        %v1156 = vld [vmem:[%s709 + $0x158] sm:$0xff]
        %v1157 = vld [vmem:[%s709 + $0x168] sm:$0xff]
        %v1158 = vld [vmem:[%s709 + $0x170] sm:$0xff]
        %1159 = vst [vmem:[#allocation3 + $0x18] sm:$0xff] %v1127
        %1160 = vst [vmem:[#allocation3 + $0x60] sm:$0xff] %v1128
        %1161 = vst [vmem:[#allocation3 + $0xa8] sm:$0xff] %v1129
        %1162 = vst [vmem:[#allocation3 + $0xf0] sm:$0xff] %v1130
        %1163 = vst [vmem:[#allocation3 + $0x138] sm:$0xff] %v1131
        %1164 = vst [vmem:[#allocation3 + $0x180] sm:$0xff] %v1132
        %1165 = vst [vmem:[#allocation3 + $0x1c8] sm:$0xff] %v1133
        %1166 = vst [vmem:[#allocation3 + $0x210] sm:$0xff] %v1134
        %1167 = vst [vmem:[#allocation3 + $0x258] sm:$0xff] %v1135
        %1168 = vst [vmem:[#allocation3 + $0x2a0] sm:$0xff] %v1136
        %1169 = vst [vmem:[#allocation3 + $0x2e8] sm:$0xff] %v1137
        %1170 = vst [vmem:[#allocation3 + $0x330] sm:$0xff] %v1138
        %1171 = vst [vmem:[#allocation3 + $0x378] sm:$0xff] %v1139
        %1172 = vst [vmem:[#allocation3 + $0x3c0] sm:$0xff] %v1140
        %1173 = vst [vmem:[#allocation3 + $0x408] sm:$0xff] %v1141
        %1174 = vst [vmem:[#allocation3 + $0x450] sm:$0xff] %v1142
        %1175 = vst [vmem:[#allocation3 + $0x498] sm:$0xff] %v1143
        %1176 = vst [vmem:[#allocation3 + $0x4e0] sm:$0xff] %v1144
        %1177 = vst [vmem:[#allocation3 + $0x528] sm:$0xff] %v1145
        %1178 = vst [vmem:[#allocation3 + $0x570] sm:$0xff] %v1146
        %1179 = vst [vmem:[#allocation3 + $0x5b8] sm:$0xff] %v1147
        %1180 = vst [vmem:[#allocation3 + $0x600] sm:$0xff] %v1148
        %1181 = vst [vmem:[#allocation3 + $0x648] sm:$0xff] %v1149
        %1182 = vst [vmem:[#allocation3 + $0x690] sm:$0xff] %v1150
        %1183 = vst [vmem:[#allocation3 + $0x6d8] sm:$0xff] %v1151
        %1184 = vst [vmem:[#allocation3 + $0x720] sm:$0xff] %v1152
        %1185 = vst [vmem:[#allocation3 + $0x768] sm:$0xff] %v1153
        %1186 = vst [vmem:[#allocation3 + $0x7b0] sm:$0xff] %v1154
        %1187 = vst [vmem:[#allocation3 + $0x7f8] sm:$0xff] %v1155
        %1188 = vst [vmem:[#allocation3 + $0x840] sm:$0xff] %v1156
        %1189 = vst [vmem:[#allocation3 + $0x888] sm:$0xff] %v1157
        %1190 = vst [vmem:[#allocation3 + $0x8d0] sm:$0xff] %v1158
        %v1191 = vld [vmem:[%s709 + $0x1] sm:$0xff]
        %v1192 = vld [vmem:[%s709 + $0x9] sm:$0xff]
        %v1193 = vld [vmem:[%s709 + $0x19] sm:$0xff]
        %v1194 = vld [vmem:[%s709 + $0x21] sm:$0xff]
        %v1195 = vld [vmem:[%s709 + $0x31] sm:$0xff]
        %v1196 = vld [vmem:[%s709 + $0x39] sm:$0xff]
        %v1197 = vld [vmem:[%s709 + $0x49] sm:$0xff]
        %v1198 = vld [vmem:[%s709 + $0x51] sm:$0xff]
        %v1199 = vld [vmem:[%s709 + $0x61] sm:$0xff]
        %v1200 = vld [vmem:[%s709 + $0x69] sm:$0xff]
        %v1201 = vld [vmem:[%s709 + $0x79] sm:$0xff]
        %v1202 = vld [vmem:[%s709 + $0x81] sm:$0xff]
        %v1203 = vld [vmem:[%s709 + $0x91] sm:$0xff]
        %v1204 = vld [vmem:[%s709 + $0x99] sm:$0xff]
        %v1205 = vld [vmem:[%s709 + $0xa9] sm:$0xff]
        %v1206 = vld [vmem:[%s709 + $0xb1] sm:$0xff]
        %v1207 = vld [vmem:[%s709 + $0xc1] sm:$0xff]
        %v1208 = vld [vmem:[%s709 + $0xc9] sm:$0xff]
        %v1209 = vld [vmem:[%s709 + $0xd9] sm:$0xff]
        %v1210 = vld [vmem:[%s709 + $0xe1] sm:$0xff]
        %v1211 = vld [vmem:[%s709 + $0xf1] sm:$0xff]
        %v1212 = vld [vmem:[%s709 + $0xf9] sm:$0xff]
        %v1213 = vld [vmem:[%s709 + $0x109] sm:$0xff]
        %v1214 = vld [vmem:[%s709 + $0x111] sm:$0xff]
        %v1215 = vld [vmem:[%s709 + $0x121] sm:$0xff]
        %v1216 = vld [vmem:[%s709 + $0x129] sm:$0xff]
        %v1217 = vld [vmem:[%s709 + $0x139] sm:$0xff]
        %v1218 = vld [vmem:[%s709 + $0x141] sm:$0xff]
        %v1219 = vld [vmem:[%s709 + $0x151] sm:$0xff]
        %v1220 = vld [vmem:[%s709 + $0x159] sm:$0xff]
        %v1221 = vld [vmem:[%s709 + $0x169] sm:$0xff]
        %v1222 = vld [vmem:[%s709 + $0x171] sm:$0xff]
        %1223 = vst [vmem:[#allocation3 + $0x20] sm:$0xff] %v1191
        %1224 = vst [vmem:[#allocation3 + $0x68] sm:$0xff] %v1192
        %1225 = vst [vmem:[#allocation3 + $0xb0] sm:$0xff] %v1193
        %1226 = vst [vmem:[#allocation3 + $0xf8] sm:$0xff] %v1194
        %1227 = vst [vmem:[#allocation3 + $0x140] sm:$0xff] %v1195
        %1228 = vst [vmem:[#allocation3 + $0x188] sm:$0xff] %v1196
        %1229 = vst [vmem:[#allocation3 + $0x1d0] sm:$0xff] %v1197
        %1230 = vst [vmem:[#allocation3 + $0x218] sm:$0xff] %v1198
        %1231 = vst [vmem:[#allocation3 + $0x260] sm:$0xff] %v1199
        %1232 = vst [vmem:[#allocation3 + $0x2a8] sm:$0xff] %v1200
        %1233 = vst [vmem:[#allocation3 + $0x2f0] sm:$0xff] %v1201
        %1234 = vst [vmem:[#allocation3 + $0x338] sm:$0xff] %v1202
        %1235 = vst [vmem:[#allocation3 + $0x380] sm:$0xff] %v1203
        %1236 = vst [vmem:[#allocation3 + $0x3c8] sm:$0xff] %v1204
        %1237 = vst [vmem:[#allocation3 + $0x410] sm:$0xff] %v1205
        %1238 = vst [vmem:[#allocation3 + $0x458] sm:$0xff] %v1206
        %1239 = vst [vmem:[#allocation3 + $0x4a0] sm:$0xff] %v1207
        %1240 = vst [vmem:[#allocation3 + $0x4e8] sm:$0xff] %v1208
        %1241 = vst [vmem:[#allocation3 + $0x530] sm:$0xff] %v1209
        %1242 = vst [vmem:[#allocation3 + $0x578] sm:$0xff] %v1210
        %1243 = vst [vmem:[#allocation3 + $0x5c0] sm:$0xff] %v1211
        %1244 = vst [vmem:[#allocation3 + $0x608] sm:$0xff] %v1212
        %1245 = vst [vmem:[#allocation3 + $0x650] sm:$0xff] %v1213
        %1246 = vst [vmem:[#allocation3 + $0x698] sm:$0xff] %v1214
        %1247 = vst [vmem:[#allocation3 + $0x6e0] sm:$0xff] %v1215
        %1248 = vst [vmem:[#allocation3 + $0x728] sm:$0xff] %v1216
        %1249 = vst [vmem:[#allocation3 + $0x770] sm:$0xff] %v1217
        %1250 = vst [vmem:[#allocation3 + $0x7b8] sm:$0xff] %v1218
        %1251 = vst [vmem:[#allocation3 + $0x800] sm:$0xff] %v1219
        %1252 = vst [vmem:[#allocation3 + $0x848] sm:$0xff] %v1220
        %1253 = vst [vmem:[#allocation3 + $0x890] sm:$0xff] %v1221
        %1254 = vst [vmem:[#allocation3 + $0x8d8] sm:$0xff] %v1222
        %v1255 = vld [vmem:[%s709 + $0x2] sm:$0xff]
        %v1256 = vld [vmem:[%s709 + $0xa] sm:$0xff]
        %v1257 = vld [vmem:[%s709 + $0x1a] sm:$0xff]
        %v1258 = vld [vmem:[%s709 + $0x22] sm:$0xff]
        %v1259 = vld [vmem:[%s709 + $0x32] sm:$0xff]
        %v1260 = vld [vmem:[%s709 + $0x3a] sm:$0xff]
        %v1261 = vld [vmem:[%s709 + $0x4a] sm:$0xff]
        %v1262 = vld [vmem:[%s709 + $0x52] sm:$0xff]
        %v1263 = vld [vmem:[%s709 + $0x62] sm:$0xff]
        %v1264 = vld [vmem:[%s709 + $0x6a] sm:$0xff]
        %v1265 = vld [vmem:[%s709 + $0x7a] sm:$0xff]
        %v1266 = vld [vmem:[%s709 + $0x82] sm:$0xff]
        %v1267 = vld [vmem:[%s709 + $0x92] sm:$0xff]
        %v1268 = vld [vmem:[%s709 + $0x9a] sm:$0xff]
        %v1269 = vld [vmem:[%s709 + $0xaa] sm:$0xff]
        %v1270 = vld [vmem:[%s709 + $0xb2] sm:$0xff]
        %v1271 = vld [vmem:[%s709 + $0xc2] sm:$0xff]
        %v1272 = vld [vmem:[%s709 + $0xca] sm:$0xff]
        %v1273 = vld [vmem:[%s709 + $0xda] sm:$0xff]
        %v1274 = vld [vmem:[%s709 + $0xe2] sm:$0xff]
        %v1275 = vld [vmem:[%s709 + $0xf2] sm:$0xff]
        %v1276 = vld [vmem:[%s709 + $0xfa] sm:$0xff]
        %v1277 = vld [vmem:[%s709 + $0x10a] sm:$0xff]
        %v1278 = vld [vmem:[%s709 + $0x112] sm:$0xff]
        %v1279 = vld [vmem:[%s709 + $0x122] sm:$0xff]
        %v1280 = vld [vmem:[%s709 + $0x12a] sm:$0xff]
        %v1281 = vld [vmem:[%s709 + $0x13a] sm:$0xff]
        %v1282 = vld [vmem:[%s709 + $0x142] sm:$0xff]
        %v1283 = vld [vmem:[%s709 + $0x152] sm:$0xff]
        %v1284 = vld [vmem:[%s709 + $0x15a] sm:$0xff]
        %v1285 = vld [vmem:[%s709 + $0x16a] sm:$0xff]
        %v1286 = vld [vmem:[%s709 + $0x172] sm:$0xff]
        %1287 = vst [vmem:[#allocation3 + $0x28] sm:$0xff] %v1255
        %1288 = vst [vmem:[#allocation3 + $0x70] sm:$0xff] %v1256
        %1289 = vst [vmem:[#allocation3 + $0xb8] sm:$0xff] %v1257
        %1290 = vst [vmem:[#allocation3 + $0x100] sm:$0xff] %v1258
        %1291 = vst [vmem:[#allocation3 + $0x148] sm:$0xff] %v1259
        %1292 = vst [vmem:[#allocation3 + $0x190] sm:$0xff] %v1260
        %1293 = vst [vmem:[#allocation3 + $0x1d8] sm:$0xff] %v1261
        %1294 = vst [vmem:[#allocation3 + $0x220] sm:$0xff] %v1262
        %1295 = vst [vmem:[#allocation3 + $0x268] sm:$0xff] %v1263
        %1296 = vst [vmem:[#allocation3 + $0x2b0] sm:$0xff] %v1264
        %1297 = vst [vmem:[#allocation3 + $0x2f8] sm:$0xff] %v1265
        %1298 = vst [vmem:[#allocation3 + $0x340] sm:$0xff] %v1266
        %1299 = vst [vmem:[#allocation3 + $0x388] sm:$0xff] %v1267
        %1300 = vst [vmem:[#allocation3 + $0x3d0] sm:$0xff] %v1268
        %1301 = vst [vmem:[#allocation3 + $0x418] sm:$0xff] %v1269
        %1302 = vst [vmem:[#allocation3 + $0x460] sm:$0xff] %v1270
        %1303 = vst [vmem:[#allocation3 + $0x4a8] sm:$0xff] %v1271
        %1304 = vst [vmem:[#allocation3 + $0x4f0] sm:$0xff] %v1272
        %1305 = vst [vmem:[#allocation3 + $0x538] sm:$0xff] %v1273
        %1306 = vst [vmem:[#allocation3 + $0x580] sm:$0xff] %v1274
        %1307 = vst [vmem:[#allocation3 + $0x5c8] sm:$0xff] %v1275
        %1308 = vst [vmem:[#allocation3 + $0x610] sm:$0xff] %v1276
        %1309 = vst [vmem:[#allocation3 + $0x658] sm:$0xff] %v1277
        %1310 = vst [vmem:[#allocation3 + $0x6a0] sm:$0xff] %v1278
        %1311 = vst [vmem:[#allocation3 + $0x6e8] sm:$0xff] %v1279
        %1312 = vst [vmem:[#allocation3 + $0x730] sm:$0xff] %v1280
        %1313 = vst [vmem:[#allocation3 + $0x778] sm:$0xff] %v1281
        %1314 = vst [vmem:[#allocation3 + $0x7c0] sm:$0xff] %v1282
        %1315 = vst [vmem:[#allocation3 + $0x808] sm:$0xff] %v1283
        %1316 = vst [vmem:[#allocation3 + $0x850] sm:$0xff] %v1284
        %1317 = vst [vmem:[#allocation3 + $0x898] sm:$0xff] %v1285
        %1318 = vst [vmem:[#allocation3 + $0x8e0] sm:$0xff] %v1286
        %s1319 = scalar_lea.vmem [#allocation2], 48
        %v1320 = vld [vmem:[%s1319] sm:$0xff]
        %v1321 = vld [vmem:[%s1319 + $0x8] sm:$0xff]
        %v1322 = vld [vmem:[%s1319 + $0x18] sm:$0xff]
        %v1323 = vld [vmem:[%s1319 + $0x20] sm:$0xff]
        %v1324 = vld [vmem:[%s1319 + $0x30] sm:$0xff]
        %v1325 = vld [vmem:[%s1319 + $0x38] sm:$0xff]
        %v1326 = vld [vmem:[%s1319 + $0x48] sm:$0xff]
        %v1327 = vld [vmem:[%s1319 + $0x50] sm:$0xff]
        %v1328 = vld [vmem:[%s1319 + $0x60] sm:$0xff]
        %v1329 = vld [vmem:[%s1319 + $0x68] sm:$0xff]
        %v1330 = vld [vmem:[%s1319 + $0x78] sm:$0xff]
        %v1331 = vld [vmem:[%s1319 + $0x80] sm:$0xff]
        %v1332 = vld [vmem:[%s1319 + $0x90] sm:$0xff]
        %v1333 = vld [vmem:[%s1319 + $0x98] sm:$0xff]
        %v1334 = vld [vmem:[%s1319 + $0xa8] sm:$0xff]
        %v1335 = vld [vmem:[%s1319 + $0xb0] sm:$0xff]
        %v1336 = vld [vmem:[%s1319 + $0xc0] sm:$0xff]
        %v1337 = vld [vmem:[%s1319 + $0xc8] sm:$0xff]
        %v1338 = vld [vmem:[%s1319 + $0xd8] sm:$0xff]
        %v1339 = vld [vmem:[%s1319 + $0xe0] sm:$0xff]
        %v1340 = vld [vmem:[%s1319 + $0xf0] sm:$0xff]
        %v1341 = vld [vmem:[%s1319 + $0xf8] sm:$0xff]
        %v1342 = vld [vmem:[%s1319 + $0x108] sm:$0xff]
        %v1343 = vld [vmem:[%s1319 + $0x110] sm:$0xff]
        %v1344 = vld [vmem:[%s1319 + $0x120] sm:$0xff]
        %v1345 = vld [vmem:[%s1319 + $0x128] sm:$0xff]
        %v1346 = vld [vmem:[%s1319 + $0x138] sm:$0xff]
        %v1347 = vld [vmem:[%s1319 + $0x140] sm:$0xff]
        %v1348 = vld [vmem:[%s1319 + $0x150] sm:$0xff]
        %v1349 = vld [vmem:[%s1319 + $0x158] sm:$0xff]
        %v1350 = vld [vmem:[%s1319 + $0x168] sm:$0xff]
        %v1351 = vld [vmem:[%s1319 + $0x170] sm:$0xff]
        %1352 = vst [vmem:[#allocation3 + $0x30] sm:$0xff] %v1320
        %1353 = vst [vmem:[#allocation3 + $0x78] sm:$0xff] %v1321
        %1354 = vst [vmem:[#allocation3 + $0xc0] sm:$0xff] %v1322
        %1355 = vst [vmem:[#allocation3 + $0x108] sm:$0xff] %v1323
        %1356 = vst [vmem:[#allocation3 + $0x150] sm:$0xff] %v1324
        %1357 = vst [vmem:[#allocation3 + $0x198] sm:$0xff] %v1325
        %1358 = vst [vmem:[#allocation3 + $0x1e0] sm:$0xff] %v1326
        %1359 = vst [vmem:[#allocation3 + $0x228] sm:$0xff] %v1327
        %1360 = vst [vmem:[#allocation3 + $0x270] sm:$0xff] %v1328
        %1361 = vst [vmem:[#allocation3 + $0x2b8] sm:$0xff] %v1329
        %1362 = vst [vmem:[#allocation3 + $0x300] sm:$0xff] %v1330
        %1363 = vst [vmem:[#allocation3 + $0x348] sm:$0xff] %v1331
        %1364 = vst [vmem:[#allocation3 + $0x390] sm:$0xff] %v1332
        %1365 = vst [vmem:[#allocation3 + $0x3d8] sm:$0xff] %v1333
        %1366 = vst [vmem:[#allocation3 + $0x420] sm:$0xff] %v1334
        %1367 = vst [vmem:[#allocation3 + $0x468] sm:$0xff] %v1335
        %1368 = vst [vmem:[#allocation3 + $0x4b0] sm:$0xff] %v1336
        %1369 = vst [vmem:[#allocation3 + $0x4f8] sm:$0xff] %v1337
        %1370 = vst [vmem:[#allocation3 + $0x540] sm:$0xff] %v1338
        %1371 = vst [vmem:[#allocation3 + $0x588] sm:$0xff] %v1339
        %1372 = vst [vmem:[#allocation3 + $0x5d0] sm:$0xff] %v1340
        %1373 = vst [vmem:[#allocation3 + $0x618] sm:$0xff] %v1341
        %1374 = vst [vmem:[#allocation3 + $0x660] sm:$0xff] %v1342
        %1375 = vst [vmem:[#allocation3 + $0x6a8] sm:$0xff] %v1343
        %1376 = vst [vmem:[#allocation3 + $0x6f0] sm:$0xff] %v1344
        %1377 = vst [vmem:[#allocation3 + $0x738] sm:$0xff] %v1345
        %1378 = vst [vmem:[#allocation3 + $0x780] sm:$0xff] %v1346
        %1379 = vst [vmem:[#allocation3 + $0x7c8] sm:$0xff] %v1347
        %1380 = vst [vmem:[#allocation3 + $0x810] sm:$0xff] %v1348
        %1381 = vst [vmem:[#allocation3 + $0x858] sm:$0xff] %v1349
        %1382 = vst [vmem:[#allocation3 + $0x8a0] sm:$0xff] %v1350
        %1383 = vst [vmem:[#allocation3 + $0x8e8] sm:$0xff] %v1351
        %v1384 = vld [vmem:[%s1319 + $0x1] sm:$0xff]
        %v1385 = vld [vmem:[%s1319 + $0x9] sm:$0xff]
        %v1386 = vld [vmem:[%s1319 + $0x19] sm:$0xff]
        %v1387 = vld [vmem:[%s1319 + $0x21] sm:$0xff]
        %v1388 = vld [vmem:[%s1319 + $0x31] sm:$0xff]
        %v1389 = vld [vmem:[%s1319 + $0x39] sm:$0xff]
        %v1390 = vld [vmem:[%s1319 + $0x49] sm:$0xff]
        %v1391 = vld [vmem:[%s1319 + $0x51] sm:$0xff]
        %v1392 = vld [vmem:[%s1319 + $0x61] sm:$0xff]
        %v1393 = vld [vmem:[%s1319 + $0x69] sm:$0xff]
        %v1394 = vld [vmem:[%s1319 + $0x79] sm:$0xff]
        %v1395 = vld [vmem:[%s1319 + $0x81] sm:$0xff]
        %v1396 = vld [vmem:[%s1319 + $0x91] sm:$0xff]
        %v1397 = vld [vmem:[%s1319 + $0x99] sm:$0xff]
        %v1398 = vld [vmem:[%s1319 + $0xa9] sm:$0xff]
        %v1399 = vld [vmem:[%s1319 + $0xb1] sm:$0xff]
        %v1400 = vld [vmem:[%s1319 + $0xc1] sm:$0xff]
        %v1401 = vld [vmem:[%s1319 + $0xc9] sm:$0xff]
        %v1402 = vld [vmem:[%s1319 + $0xd9] sm:$0xff]
        %v1403 = vld [vmem:[%s1319 + $0xe1] sm:$0xff]
        %v1404 = vld [vmem:[%s1319 + $0xf1] sm:$0xff]
        %v1405 = vld [vmem:[%s1319 + $0xf9] sm:$0xff]
        %v1406 = vld [vmem:[%s1319 + $0x109] sm:$0xff]
        %v1407 = vld [vmem:[%s1319 + $0x111] sm:$0xff]
        %v1408 = vld [vmem:[%s1319 + $0x121] sm:$0xff]
        %v1409 = vld [vmem:[%s1319 + $0x129] sm:$0xff]
        %v1410 = vld [vmem:[%s1319 + $0x139] sm:$0xff]
        %v1411 = vld [vmem:[%s1319 + $0x141] sm:$0xff]
        %v1412 = vld [vmem:[%s1319 + $0x151] sm:$0xff]
        %v1413 = vld [vmem:[%s1319 + $0x159] sm:$0xff]
        %v1414 = vld [vmem:[%s1319 + $0x169] sm:$0xff]
        %v1415 = vld [vmem:[%s1319 + $0x171] sm:$0xff]
        %1416 = vst [vmem:[#allocation3 + $0x38] sm:$0xff] %v1384
        %1417 = vst [vmem:[#allocation3 + $0x80] sm:$0xff] %v1385
        %1418 = vst [vmem:[#allocation3 + $0xc8] sm:$0xff] %v1386
        %1419 = vst [vmem:[#allocation3 + $0x110] sm:$0xff] %v1387
        %1420 = vst [vmem:[#allocation3 + $0x158] sm:$0xff] %v1388
        %1421 = vst [vmem:[#allocation3 + $0x1a0] sm:$0xff] %v1389
        %1422 = vst [vmem:[#allocation3 + $0x1e8] sm:$0xff] %v1390
        %1423 = vst [vmem:[#allocation3 + $0x230] sm:$0xff] %v1391
        %1424 = vst [vmem:[#allocation3 + $0x278] sm:$0xff] %v1392
        %1425 = vst [vmem:[#allocation3 + $0x2c0] sm:$0xff] %v1393
        %1426 = vst [vmem:[#allocation3 + $0x308] sm:$0xff] %v1394
        %1427 = vst [vmem:[#allocation3 + $0x350] sm:$0xff] %v1395
        %1428 = vst [vmem:[#allocation3 + $0x398] sm:$0xff] %v1396
        %1429 = vst [vmem:[#allocation3 + $0x3e0] sm:$0xff] %v1397
        %1430 = vst [vmem:[#allocation3 + $0x428] sm:$0xff] %v1398
        %1431 = vst [vmem:[#allocation3 + $0x470] sm:$0xff] %v1399
        %1432 = vst [vmem:[#allocation3 + $0x4b8] sm:$0xff] %v1400
        %1433 = vst [vmem:[#allocation3 + $0x500] sm:$0xff] %v1401
        %1434 = vst [vmem:[#allocation3 + $0x548] sm:$0xff] %v1402
        %1435 = vst [vmem:[#allocation3 + $0x590] sm:$0xff] %v1403
        %1436 = vst [vmem:[#allocation3 + $0x5d8] sm:$0xff] %v1404
        %1437 = vst [vmem:[#allocation3 + $0x620] sm:$0xff] %v1405
        %1438 = vst [vmem:[#allocation3 + $0x668] sm:$0xff] %v1406
        %1439 = vst [vmem:[#allocation3 + $0x6b0] sm:$0xff] %v1407
        %1440 = vst [vmem:[#allocation3 + $0x6f8] sm:$0xff] %v1408
        %1441 = vst [vmem:[#allocation3 + $0x740] sm:$0xff] %v1409
        %1442 = vst [vmem:[#allocation3 + $0x788] sm:$0xff] %v1410
        %1443 = vst [vmem:[#allocation3 + $0x7d0] sm:$0xff] %v1411
        %1444 = vst [vmem:[#allocation3 + $0x818] sm:$0xff] %v1412
        %1445 = vst [vmem:[#allocation3 + $0x860] sm:$0xff] %v1413
        %1446 = vst [vmem:[#allocation3 + $0x8a8] sm:$0xff] %v1414
        %1447 = vst [vmem:[#allocation3 + $0x8f0] sm:$0xff] %v1415
        %v1448 = vld [vmem:[%s1319 + $0x2] sm:$0xff]
        %v1449 = vld [vmem:[%s1319 + $0xa] sm:$0xff]
        %v1450 = vld [vmem:[%s1319 + $0x1a] sm:$0xff]
        %v1451 = vld [vmem:[%s1319 + $0x22] sm:$0xff]
        %v1452 = vld [vmem:[%s1319 + $0x32] sm:$0xff]
        %v1453 = vld [vmem:[%s1319 + $0x3a] sm:$0xff]
        %v1454 = vld [vmem:[%s1319 + $0x4a] sm:$0xff]
        %v1455 = vld [vmem:[%s1319 + $0x52] sm:$0xff]
        %v1456 = vld [vmem:[%s1319 + $0x62] sm:$0xff]
        %v1457 = vld [vmem:[%s1319 + $0x6a] sm:$0xff]
        %v1458 = vld [vmem:[%s1319 + $0x7a] sm:$0xff]
        %v1459 = vld [vmem:[%s1319 + $0x82] sm:$0xff]
        %v1460 = vld [vmem:[%s1319 + $0x92] sm:$0xff]
        %v1461 = vld [vmem:[%s1319 + $0x9a] sm:$0xff]
        %v1462 = vld [vmem:[%s1319 + $0xaa] sm:$0xff]
        %v1463 = vld [vmem:[%s1319 + $0xb2] sm:$0xff]
        %v1464 = vld [vmem:[%s1319 + $0xc2] sm:$0xff]
        %v1465 = vld [vmem:[%s1319 + $0xca] sm:$0xff]
        %v1466 = vld [vmem:[%s1319 + $0xda] sm:$0xff]
        %v1467 = vld [vmem:[%s1319 + $0xe2] sm:$0xff]
        %v1468 = vld [vmem:[%s1319 + $0xf2] sm:$0xff]
        %v1469 = vld [vmem:[%s1319 + $0xfa] sm:$0xff]
        %v1470 = vld [vmem:[%s1319 + $0x10a] sm:$0xff]
        %v1471 = vld [vmem:[%s1319 + $0x112] sm:$0xff]
        %v1472 = vld [vmem:[%s1319 + $0x122] sm:$0xff]
        %v1473 = vld [vmem:[%s1319 + $0x12a] sm:$0xff]
        %v1474 = vld [vmem:[%s1319 + $0x13a] sm:$0xff]
        %v1475 = vld [vmem:[%s1319 + $0x142] sm:$0xff]
        %v1476 = vld [vmem:[%s1319 + $0x152] sm:$0xff]
        %v1477 = vld [vmem:[%s1319 + $0x15a] sm:$0xff]
        %v1478 = vld [vmem:[%s1319 + $0x16a] sm:$0xff]
        %v1479 = vld [vmem:[%s1319 + $0x172] sm:$0xff]
        %1480 = vst [vmem:[#allocation3 + $0x40] sm:$0xff] %v1448
        %1481 = vst [vmem:[#allocation3 + $0x88] sm:$0xff] %v1449
        %1482 = vst [vmem:[#allocation3 + $0xd0] sm:$0xff] %v1450
        %1483 = vst [vmem:[#allocation3 + $0x118] sm:$0xff] %v1451
        %1484 = vst [vmem:[#allocation3 + $0x160] sm:$0xff] %v1452
        %1485 = vst [vmem:[#allocation3 + $0x1a8] sm:$0xff] %v1453
        %1486 = vst [vmem:[#allocation3 + $0x1f0] sm:$0xff] %v1454
        %1487 = vst [vmem:[#allocation3 + $0x238] sm:$0xff] %v1455
        %1488 = vst [vmem:[#allocation3 + $0x280] sm:$0xff] %v1456
        %1489 = vst [vmem:[#allocation3 + $0x2c8] sm:$0xff] %v1457
        %1490 = vst [vmem:[#allocation3 + $0x310] sm:$0xff] %v1458
        %1491 = vst [vmem:[#allocation3 + $0x358] sm:$0xff] %v1459
        %1492 = vst [vmem:[#allocation3 + $0x3a0] sm:$0xff] %v1460
        %1493 = vst [vmem:[#allocation3 + $0x3e8] sm:$0xff] %v1461
        %1494 = vst [vmem:[#allocation3 + $0x430] sm:$0xff] %v1462
        %1495 = vst [vmem:[#allocation3 + $0x478] sm:$0xff] %v1463
        %1496 = vst [vmem:[#allocation3 + $0x4c0] sm:$0xff] %v1464
        %1497 = vst [vmem:[#allocation3 + $0x508] sm:$0xff] %v1465
        %1498 = vst [vmem:[#allocation3 + $0x550] sm:$0xff] %v1466
        %1499 = vst [vmem:[#allocation3 + $0x598] sm:$0xff] %v1467
        %1500 = vst [vmem:[#allocation3 + $0x5e0] sm:$0xff] %v1468
        %1501 = vst [vmem:[#allocation3 + $0x628] sm:$0xff] %v1469
        %1502 = vst [vmem:[#allocation3 + $0x670] sm:$0xff] %v1470
        %1503 = vst [vmem:[#allocation3 + $0x6b8] sm:$0xff] %v1471
        %1504 = vst [vmem:[#allocation3 + $0x700] sm:$0xff] %v1472
        %1505 = vst [vmem:[#allocation3 + $0x748] sm:$0xff] %v1473
        %1506 = vst [vmem:[#allocation3 + $0x790] sm:$0xff] %v1474
        %1507 = vst [vmem:[#allocation3 + $0x7d8] sm:$0xff] %v1475
        %1508 = vst [vmem:[#allocation3 + $0x820] sm:$0xff] %v1476
        %1509 = vst [vmem:[#allocation3 + $0x868] sm:$0xff] %v1477
        %1510 = vst [vmem:[#allocation3 + $0x8b0] sm:$0xff] %v1478
        %1511 = vst [vmem:[#allocation3 + $0x8f8] sm:$0xff] %v1479
        %v1512 = vld [vmem:[#allocation3] sm:$0xff]
        %v1513 = vld [vmem:[#allocation3 + $0x8] sm:$0xff]
        %v1514 = vld [vmem:[#allocation3 + $0x10] sm:$0xff]
        %v1515 = vld [vmem:[#allocation3 + $0x18] sm:$0xff]
        %v1516 = vld [vmem:[#allocation3 + $0x20] sm:$0xff]
        %v1517 = vld [vmem:[#allocation3 + $0x28] sm:$0xff]
        %v1518 = vld [vmem:[#allocation3 + $0x30] sm:$0xff]
        %v1519 = vld [vmem:[#allocation3 + $0x38] sm:$0xff]
        %v1520 = vld [vmem:[#allocation3 + $0x40] sm:$0xff]
        %v1521 = vld [vmem:[#allocation3 + $0x48] sm:$0xff]
        %v1522 = vld [vmem:[#allocation3 + $0x50] sm:$0xff]
        %v1523 = vld [vmem:[#allocation3 + $0x58] sm:$0xff]
        %v1524 = vld [vmem:[#allocation3 + $0x60] sm:$0xff]
        %v1525 = vld [vmem:[#allocation3 + $0x68] sm:$0xff]
        %v1526 = vld [vmem:[#allocation3 + $0x70] sm:$0xff]
        %v1527 = vld [vmem:[#allocation3 + $0x78] sm:$0xff]
        %v1528 = vld [vmem:[#allocation3 + $0x80] sm:$0xff]
        %v1529 = vld [vmem:[#allocation3 + $0x88] sm:$0xff]
        %v1530 = vld [vmem:[#allocation3 + $0x90] sm:$0xff]
        %v1531 = vld [vmem:[#allocation3 + $0x98] sm:$0xff]
        %v1532 = vld [vmem:[#allocation3 + $0xa0] sm:$0xff]
        %v1533 = vld [vmem:[#allocation3 + $0xa8] sm:$0xff]
        %v1534 = vld [vmem:[#allocation3 + $0xb0] sm:$0xff]
        %v1535 = vld [vmem:[#allocation3 + $0xb8] sm:$0xff]
        %v1536 = vld [vmem:[#allocation3 + $0xc0] sm:$0xff]
        %v1537 = vld [vmem:[#allocation3 + $0xc8] sm:$0xff]
        %v1538 = vld [vmem:[#allocation3 + $0xd0] sm:$0xff]
        %v1539 = vld [vmem:[#allocation3 + $0xd8] sm:$0xff]
        %v1540 = vld [vmem:[#allocation3 + $0xe0] sm:$0xff]
        %v1541 = vld [vmem:[#allocation3 + $0xe8] sm:$0xff]
        %v1542 = vld [vmem:[#allocation3 + $0xf0] sm:$0xff]
        %v1543 = vld [vmem:[#allocation3 + $0xf8] sm:$0xff]
        %v1544 = vld [vmem:[#allocation3 + $0x100] sm:$0xff]
        %v1545 = vld [vmem:[#allocation3 + $0x108] sm:$0xff]
        %v1546 = vld [vmem:[#allocation3 + $0x110] sm:$0xff]
        %v1547 = vld [vmem:[#allocation3 + $0x118] sm:$0xff]
        %v1548 = vld [vmem:[#allocation3 + $0x120] sm:$0xff]
        %v1549 = vld [vmem:[#allocation3 + $0x128] sm:$0xff]
        %v1550 = vld [vmem:[#allocation3 + $0x130] sm:$0xff]
        %v1551 = vld [vmem:[#allocation3 + $0x138] sm:$0xff]
        %v1552 = vld [vmem:[#allocation3 + $0x140] sm:$0xff]
        %v1553 = vld [vmem:[#allocation3 + $0x148] sm:$0xff]
        %v1554 = vld [vmem:[#allocation3 + $0x150] sm:$0xff]
        %v1555 = vld [vmem:[#allocation3 + $0x158] sm:$0xff]
        %v1556 = vld [vmem:[#allocation3 + $0x160] sm:$0xff]
        %v1557 = vld [vmem:[#allocation3 + $0x168] sm:$0xff]
        %v1558 = vld [vmem:[#allocation3 + $0x170] sm:$0xff]
        %v1559 = vld [vmem:[#allocation3 + $0x178] sm:$0xff]
        %v1560 = vld [vmem:[#allocation3 + $0x180] sm:$0xff]
        %v1561 = vld [vmem:[#allocation3 + $0x188] sm:$0xff]
        %v1562 = vld [vmem:[#allocation3 + $0x190] sm:$0xff]
        %v1563 = vld [vmem:[#allocation3 + $0x198] sm:$0xff]
        %v1564 = vld [vmem:[#allocation3 + $0x1a0] sm:$0xff]
        %v1565 = vld [vmem:[#allocation3 + $0x1a8] sm:$0xff]
        %v1566 = vld [vmem:[#allocation3 + $0x1b0] sm:$0xff]
        %v1567 = vld [vmem:[#allocation3 + $0x1b8] sm:$0xff]
        %v1568 = vld [vmem:[#allocation3 + $0x1c0] sm:$0xff]
        %v1569 = vld [vmem:[#allocation3 + $0x1c8] sm:$0xff]
        %v1570 = vld [vmem:[#allocation3 + $0x1d0] sm:$0xff]
        %v1571 = vld [vmem:[#allocation3 + $0x1d8] sm:$0xff]
        %v1572 = vld [vmem:[#allocation3 + $0x1e0] sm:$0xff]
        %v1573 = vld [vmem:[#allocation3 + $0x1e8] sm:$0xff]
        %v1574 = vld [vmem:[#allocation3 + $0x1f0] sm:$0xff]
        %v1575 = vld [vmem:[#allocation3 + $0x1f8] sm:$0xff]
        %v1576 = vld [vmem:[#allocation3 + $0x200] sm:$0xff]
        %v1577 = vld [vmem:[#allocation3 + $0x208] sm:$0xff]
        %v1578 = vld [vmem:[#allocation3 + $0x210] sm:$0xff]
        %v1579 = vld [vmem:[#allocation3 + $0x218] sm:$0xff]
        %v1580 = vld [vmem:[#allocation3 + $0x220] sm:$0xff]
        %v1581 = vld [vmem:[#allocation3 + $0x228] sm:$0xff]
        %v1582 = vld [vmem:[#allocation3 + $0x230] sm:$0xff]
        %v1583 = vld [vmem:[#allocation3 + $0x238] sm:$0xff]
        %v1584 = vld [vmem:[#allocation3 + $0x240] sm:$0xff]
        %v1585 = vld [vmem:[#allocation3 + $0x248] sm:$0xff]
        %v1586 = vld [vmem:[#allocation3 + $0x250] sm:$0xff]
        %v1587 = vld [vmem:[#allocation3 + $0x258] sm:$0xff]
        %v1588 = vld [vmem:[#allocation3 + $0x260] sm:$0xff]
        %v1589 = vld [vmem:[#allocation3 + $0x268] sm:$0xff]
        %v1590 = vld [vmem:[#allocation3 + $0x270] sm:$0xff]
        %v1591 = vld [vmem:[#allocation3 + $0x278] sm:$0xff]
        %v1592 = vld [vmem:[#allocation3 + $0x280] sm:$0xff]
        %v1593 = vld [vmem:[#allocation3 + $0x288] sm:$0xff]
        %v1594 = vld [vmem:[#allocation3 + $0x290] sm:$0xff]
        %v1595 = vld [vmem:[#allocation3 + $0x298] sm:$0xff]
        %v1596 = vld [vmem:[#allocation3 + $0x2a0] sm:$0xff]
        %v1597 = vld [vmem:[#allocation3 + $0x2a8] sm:$0xff]
        %v1598 = vld [vmem:[#allocation3 + $0x2b0] sm:$0xff]
        %v1599 = vld [vmem:[#allocation3 + $0x2b8] sm:$0xff]
        %v1600 = vld [vmem:[#allocation3 + $0x2c0] sm:$0xff]
        %v1601 = vld [vmem:[#allocation3 + $0x2c8] sm:$0xff]
        %v1602 = vld [vmem:[#allocation3 + $0x2d0] sm:$0xff]
        %v1603 = vld [vmem:[#allocation3 + $0x2d8] sm:$0xff]
        %v1604 = vld [vmem:[#allocation3 + $0x2e0] sm:$0xff]
        %v1605 = vld [vmem:[#allocation3 + $0x2e8] sm:$0xff]
        %v1606 = vld [vmem:[#allocation3 + $0x2f0] sm:$0xff]
        %v1607 = vld [vmem:[#allocation3 + $0x2f8] sm:$0xff]
        %v1608 = vld [vmem:[#allocation3 + $0x300] sm:$0xff]
        %v1609 = vld [vmem:[#allocation3 + $0x308] sm:$0xff]
        %v1610 = vld [vmem:[#allocation3 + $0x310] sm:$0xff]
        %v1611 = vld [vmem:[#allocation3 + $0x318] sm:$0xff]
        %v1612 = vld [vmem:[#allocation3 + $0x320] sm:$0xff]
        %v1613 = vld [vmem:[#allocation3 + $0x328] sm:$0xff]
        %v1614 = vld [vmem:[#allocation3 + $0x330] sm:$0xff]
        %v1615 = vld [vmem:[#allocation3 + $0x338] sm:$0xff]
        %v1616 = vld [vmem:[#allocation3 + $0x340] sm:$0xff]
        %v1617 = vld [vmem:[#allocation3 + $0x348] sm:$0xff]
        %v1618 = vld [vmem:[#allocation3 + $0x350] sm:$0xff]
        %v1619 = vld [vmem:[#allocation3 + $0x358] sm:$0xff]
        %v1620 = vld [vmem:[#allocation3 + $0x360] sm:$0xff]
        %v1621 = vld [vmem:[#allocation3 + $0x368] sm:$0xff]
        %v1622 = vld [vmem:[#allocation3 + $0x370] sm:$0xff]
        %v1623 = vld [vmem:[#allocation3 + $0x378] sm:$0xff]
        %v1624 = vld [vmem:[#allocation3 + $0x380] sm:$0xff]
        %v1625 = vld [vmem:[#allocation3 + $0x388] sm:$0xff]
        %v1626 = vld [vmem:[#allocation3 + $0x390] sm:$0xff]
        %v1627 = vld [vmem:[#allocation3 + $0x398] sm:$0xff]
        %v1628 = vld [vmem:[#allocation3 + $0x3a0] sm:$0xff]
        %v1629 = vld [vmem:[#allocation3 + $0x3a8] sm:$0xff]
        %v1630 = vld [vmem:[#allocation3 + $0x3b0] sm:$0xff]
        %v1631 = vld [vmem:[#allocation3 + $0x3b8] sm:$0xff]
        %v1632 = vld [vmem:[#allocation3 + $0x3c0] sm:$0xff]
        %v1633 = vld [vmem:[#allocation3 + $0x3c8] sm:$0xff]
        %v1634 = vld [vmem:[#allocation3 + $0x3d0] sm:$0xff]
        %v1635 = vld [vmem:[#allocation3 + $0x3d8] sm:$0xff]
        %v1636 = vld [vmem:[#allocation3 + $0x3e0] sm:$0xff]
        %v1637 = vld [vmem:[#allocation3 + $0x3e8] sm:$0xff]
        %v1638 = vld [vmem:[#allocation3 + $0x3f0] sm:$0xff]
        %v1639 = vld [vmem:[#allocation3 + $0x3f8] sm:$0xff]
        %v1640 = vld [vmem:[#allocation3 + $0x400] sm:$0xff]
        %v1641 = vld [vmem:[#allocation3 + $0x408] sm:$0xff]
        %v1642 = vld [vmem:[#allocation3 + $0x410] sm:$0xff]
        %v1643 = vld [vmem:[#allocation3 + $0x418] sm:$0xff]
        %v1644 = vld [vmem:[#allocation3 + $0x420] sm:$0xff]
        %v1645 = vld [vmem:[#allocation3 + $0x428] sm:$0xff]
        %v1646 = vld [vmem:[#allocation3 + $0x430] sm:$0xff]
        %v1647 = vld [vmem:[#allocation3 + $0x438] sm:$0xff]
        %v1648 = vld [vmem:[#allocation3 + $0x440] sm:$0xff]
        %v1649 = vld [vmem:[#allocation3 + $0x448] sm:$0xff]
        %v1650 = vld [vmem:[#allocation3 + $0x450] sm:$0xff]
        %v1651 = vld [vmem:[#allocation3 + $0x458] sm:$0xff]
        %v1652 = vld [vmem:[#allocation3 + $0x460] sm:$0xff]
        %v1653 = vld [vmem:[#allocation3 + $0x468] sm:$0xff]
        %v1654 = vld [vmem:[#allocation3 + $0x470] sm:$0xff]
        %v1655 = vld [vmem:[#allocation3 + $0x478] sm:$0xff]
        %v1656 = vld [vmem:[#allocation3 + $0x480] sm:$0xff]
        %v1657 = vld [vmem:[#allocation3 + $0x488] sm:$0xff]
        %v1658 = vld [vmem:[#allocation3 + $0x490] sm:$0xff]
        %v1659 = vld [vmem:[#allocation3 + $0x498] sm:$0xff]
        %v1660 = vld [vmem:[#allocation3 + $0x4a0] sm:$0xff]
        %v1661 = vld [vmem:[#allocation3 + $0x4a8] sm:$0xff]
        %v1662 = vld [vmem:[#allocation3 + $0x4b0] sm:$0xff]
        %v1663 = vld [vmem:[#allocation3 + $0x4b8] sm:$0xff]
        %v1664 = vld [vmem:[#allocation3 + $0x4c0] sm:$0xff]
        %v1665 = vld [vmem:[#allocation3 + $0x4c8] sm:$0xff]
        %v1666 = vld [vmem:[#allocation3 + $0x4d0] sm:$0xff]
        %v1667 = vld [vmem:[#allocation3 + $0x4d8] sm:$0xff]
        %v1668 = vld [vmem:[#allocation3 + $0x4e0] sm:$0xff]
        %v1669 = vld [vmem:[#allocation3 + $0x4e8] sm:$0xff]
        %v1670 = vld [vmem:[#allocation3 + $0x4f0] sm:$0xff]
        %v1671 = vld [vmem:[#allocation3 + $0x4f8] sm:$0xff]
        %v1672 = vld [vmem:[#allocation3 + $0x500] sm:$0xff]
        %v1673 = vld [vmem:[#allocation3 + $0x508] sm:$0xff]
        %v1674 = vld [vmem:[#allocation3 + $0x510] sm:$0xff]
        %v1675 = vld [vmem:[#allocation3 + $0x518] sm:$0xff]
        %v1676 = vld [vmem:[#allocation3 + $0x520] sm:$0xff]
        %v1677 = vld [vmem:[#allocation3 + $0x528] sm:$0xff]
        %v1678 = vld [vmem:[#allocation3 + $0x530] sm:$0xff]
        %v1679 = vld [vmem:[#allocation3 + $0x538] sm:$0xff]
        %v1680 = vld [vmem:[#allocation3 + $0x540] sm:$0xff]
        %v1681 = vld [vmem:[#allocation3 + $0x548] sm:$0xff]
        %v1682 = vld [vmem:[#allocation3 + $0x550] sm:$0xff]
        %v1683 = vld [vmem:[#allocation3 + $0x558] sm:$0xff]
        %v1684 = vld [vmem:[#allocation3 + $0x560] sm:$0xff]
        %v1685 = vld [vmem:[#allocation3 + $0x568] sm:$0xff]
        %v1686 = vld [vmem:[#allocation3 + $0x570] sm:$0xff]
        %v1687 = vld [vmem:[#allocation3 + $0x578] sm:$0xff]
        %v1688 = vld [vmem:[#allocation3 + $0x580] sm:$0xff]
        %v1689 = vld [vmem:[#allocation3 + $0x588] sm:$0xff]
        %v1690 = vld [vmem:[#allocation3 + $0x590] sm:$0xff]
        %v1691 = vld [vmem:[#allocation3 + $0x598] sm:$0xff]
        %v1692 = vld [vmem:[#allocation3 + $0x5a0] sm:$0xff]
        %v1693 = vld [vmem:[#allocation3 + $0x5a8] sm:$0xff]
        %v1694 = vld [vmem:[#allocation3 + $0x5b0] sm:$0xff]
        %v1695 = vld [vmem:[#allocation3 + $0x5b8] sm:$0xff]
        %v1696 = vld [vmem:[#allocation3 + $0x5c0] sm:$0xff]
        %v1697 = vld [vmem:[#allocation3 + $0x5c8] sm:$0xff]
        %v1698 = vld [vmem:[#allocation3 + $0x5d0] sm:$0xff]
        %v1699 = vld [vmem:[#allocation3 + $0x5d8] sm:$0xff]
        %v1700 = vld [vmem:[#allocation3 + $0x5e0] sm:$0xff]
        %v1701 = vld [vmem:[#allocation3 + $0x5e8] sm:$0xff]
        %v1702 = vld [vmem:[#allocation3 + $0x5f0] sm:$0xff]
        %v1703 = vld [vmem:[#allocation3 + $0x5f8] sm:$0xff]
        %v1704 = vld [vmem:[#allocation3 + $0x600] sm:$0xff]
        %v1705 = vld [vmem:[#allocation3 + $0x608] sm:$0xff]
        %v1706 = vld [vmem:[#allocation3 + $0x610] sm:$0xff]
        %v1707 = vld [vmem:[#allocation3 + $0x618] sm:$0xff]
        %v1708 = vld [vmem:[#allocation3 + $0x620] sm:$0xff]
        %v1709 = vld [vmem:[#allocation3 + $0x628] sm:$0xff]
        %v1710 = vld [vmem:[#allocation3 + $0x630] sm:$0xff]
        %v1711 = vld [vmem:[#allocation3 + $0x638] sm:$0xff]
        %v1712 = vld [vmem:[#allocation3 + $0x640] sm:$0xff]
        %v1713 = vld [vmem:[#allocation3 + $0x648] sm:$0xff]
        %v1714 = vld [vmem:[#allocation3 + $0x650] sm:$0xff]
        %v1715 = vld [vmem:[#allocation3 + $0x658] sm:$0xff]
        %v1716 = vld [vmem:[#allocation3 + $0x660] sm:$0xff]
        %v1717 = vld [vmem:[#allocation3 + $0x668] sm:$0xff]
        %v1718 = vld [vmem:[#allocation3 + $0x670] sm:$0xff]
        %v1719 = vld [vmem:[#allocation3 + $0x678] sm:$0xff]
        %v1720 = vld [vmem:[#allocation3 + $0x680] sm:$0xff]
        %v1721 = vld [vmem:[#allocation3 + $0x688] sm:$0xff]
        %v1722 = vld [vmem:[#allocation3 + $0x690] sm:$0xff]
        %v1723 = vld [vmem:[#allocation3 + $0x698] sm:$0xff]
        %v1724 = vld [vmem:[#allocation3 + $0x6a0] sm:$0xff]
        %v1725 = vld [vmem:[#allocation3 + $0x6a8] sm:$0xff]
        %v1726 = vld [vmem:[#allocation3 + $0x6b0] sm:$0xff]
        %v1727 = vld [vmem:[#allocation3 + $0x6b8] sm:$0xff]
        %v1728 = vld [vmem:[#allocation3 + $0x6c0] sm:$0xff]
        %v1729 = vld [vmem:[#allocation3 + $0x6c8] sm:$0xff]
        %v1730 = vld [vmem:[#allocation3 + $0x6d0] sm:$0xff]
        %v1731 = vld [vmem:[#allocation3 + $0x6d8] sm:$0xff]
        %v1732 = vld [vmem:[#allocation3 + $0x6e0] sm:$0xff]
        %v1733 = vld [vmem:[#allocation3 + $0x6e8] sm:$0xff]
        %v1734 = vld [vmem:[#allocation3 + $0x6f0] sm:$0xff]
        %v1735 = vld [vmem:[#allocation3 + $0x6f8] sm:$0xff]
        %v1736 = vld [vmem:[#allocation3 + $0x700] sm:$0xff]
        %v1737 = vld [vmem:[#allocation3 + $0x708] sm:$0xff]
        %v1738 = vld [vmem:[#allocation3 + $0x710] sm:$0xff]
        %v1739 = vld [vmem:[#allocation3 + $0x718] sm:$0xff]
        %v1740 = vld [vmem:[#allocation3 + $0x720] sm:$0xff]
        %v1741 = vld [vmem:[#allocation3 + $0x728] sm:$0xff]
        %v1742 = vld [vmem:[#allocation3 + $0x730] sm:$0xff]
        %v1743 = vld [vmem:[#allocation3 + $0x738] sm:$0xff]
        %v1744 = vld [vmem:[#allocation3 + $0x740] sm:$0xff]
        %v1745 = vld [vmem:[#allocation3 + $0x748] sm:$0xff]
        %v1746 = vld [vmem:[#allocation3 + $0x750] sm:$0xff]
        %v1747 = vld [vmem:[#allocation3 + $0x758] sm:$0xff]
        %v1748 = vld [vmem:[#allocation3 + $0x760] sm:$0xff]
        %v1749 = vld [vmem:[#allocation3 + $0x768] sm:$0xff]
        %v1750 = vld [vmem:[#allocation3 + $0x770] sm:$0xff]
        %v1751 = vld [vmem:[#allocation3 + $0x778] sm:$0xff]
        %v1752 = vld [vmem:[#allocation3 + $0x780] sm:$0xff]
        %v1753 = vld [vmem:[#allocation3 + $0x788] sm:$0xff]
        %v1754 = vld [vmem:[#allocation3 + $0x790] sm:$0xff]
        %v1755 = vld [vmem:[#allocation3 + $0x798] sm:$0xff]
        %v1756 = vld [vmem:[#allocation3 + $0x7a0] sm:$0xff]
        %v1757 = vld [vmem:[#allocation3 + $0x7a8] sm:$0xff]
        %v1758 = vld [vmem:[#allocation3 + $0x7b0] sm:$0xff]
        %v1759 = vld [vmem:[#allocation3 + $0x7b8] sm:$0xff]
        %v1760 = vld [vmem:[#allocation3 + $0x7c0] sm:$0xff]
        %v1761 = vld [vmem:[#allocation3 + $0x7c8] sm:$0xff]
        %v1762 = vld [vmem:[#allocation3 + $0x7d0] sm:$0xff]
        %v1763 = vld [vmem:[#allocation3 + $0x7d8] sm:$0xff]
        %v1764 = vld [vmem:[#allocation3 + $0x7e0] sm:$0xff]
        %v1765 = vld [vmem:[#allocation3 + $0x7e8] sm:$0xff]
        %v1766 = vld [vmem:[#allocation3 + $0x7f0] sm:$0xff]
        %v1767 = vld [vmem:[#allocation3 + $0x7f8] sm:$0xff]
        %v1768 = vld [vmem:[#allocation3 + $0x800] sm:$0xff]
        %v1769 = vld [vmem:[#allocation3 + $0x808] sm:$0xff]
        %v1770 = vld [vmem:[#allocation3 + $0x810] sm:$0xff]
        %v1771 = vld [vmem:[#allocation3 + $0x818] sm:$0xff]
        %v1772 = vld [vmem:[#allocation3 + $0x820] sm:$0xff]
        %v1773 = vld [vmem:[#allocation3 + $0x828] sm:$0xff]
        %v1774 = vld [vmem:[#allocation3 + $0x830] sm:$0xff]
        %v1775 = vld [vmem:[#allocation3 + $0x838] sm:$0xff]
        %v1776 = vld [vmem:[#allocation3 + $0x840] sm:$0xff]
        %v1777 = vld [vmem:[#allocation3 + $0x848] sm:$0xff]
        %v1778 = vld [vmem:[#allocation3 + $0x850] sm:$0xff]
        %v1779 = vld [vmem:[#allocation3 + $0x858] sm:$0xff]
        %v1780 = vld [vmem:[#allocation3 + $0x860] sm:$0xff]
        %v1781 = vld [vmem:[#allocation3 + $0x868] sm:$0xff]
        %v1782 = vld [vmem:[#allocation3 + $0x870] sm:$0xff]
        %v1783 = vld [vmem:[#allocation3 + $0x878] sm:$0xff]
        %v1784 = vld [vmem:[#allocation3 + $0x880] sm:$0xff]
        %v1785 = vld [vmem:[#allocation3 + $0x888] sm:$0xff]
        %v1786 = vld [vmem:[#allocation3 + $0x890] sm:$0xff]
        %v1787 = vld [vmem:[#allocation3 + $0x898] sm:$0xff]
        %v1788 = vld [vmem:[#allocation3 + $0x8a0] sm:$0xff]
        %v1789 = vld [vmem:[#allocation3 + $0x8a8] sm:$0xff]
        %v1790 = vld [vmem:[#allocation3 + $0x8b0] sm:$0xff]
        %v1791 = vld [vmem:[#allocation3 + $0x8b8] sm:$0xff]
        %v1792 = vld [vmem:[#allocation3 + $0x8c0] sm:$0xff]
        %v1793 = vld [vmem:[#allocation3 + $0x8c8] sm:$0xff]
        %v1794 = vld [vmem:[#allocation3 + $0x8d0] sm:$0xff]
        %v1795 = vld [vmem:[#allocation3 + $0x8d8] sm:$0xff]
        %v1796 = vld [vmem:[#allocation3 + $0x8e0] sm:$0xff]
        %v1797 = vld [vmem:[#allocation3 + $0x8e8] sm:$0xff]
        %v1798 = vld [vmem:[#allocation3 + $0x8f0] sm:$0xff]
        %v1799 = vld [vmem:[#allocation3 + $0x8f8] sm:$0xff]
        %v1800 = vld [vmem:[%s4] sm:$0xff]
        %v1801 = vld [vmem:[%s4 + $0x8] sm:$0xff]
        %v1802 = vld [vmem:[%s4 + $0x10] sm:$0xff]
        %v1803 = vld [vmem:[%s4 + $0x18] sm:$0xff]
        %v1804 = vld [vmem:[%s4 + $0x20] sm:$0xff]
        %v1805 = vld [vmem:[%s4 + $0x28] sm:$0xff]
        %v1806 = vld [vmem:[%s4 + $0x30] sm:$0xff]
        %v1807 = vld [vmem:[%s4 + $0x38] sm:$0xff]
        %v1808 = vld [vmem:[%s4 + $0x40] sm:$0xff]
        %v1809 = vld [vmem:[%s4 + $0x48] sm:$0xff]
        %v1810 = vld [vmem:[%s4 + $0x50] sm:$0xff]
        %v1811 = vld [vmem:[%s4 + $0x58] sm:$0xff]
        %v1812 = vld [vmem:[%s4 + $0x60] sm:$0xff]
        %v1813 = vld [vmem:[%s4 + $0x68] sm:$0xff]
        %v1814 = vld [vmem:[%s4 + $0x70] sm:$0xff]
        %v1815 = vld [vmem:[%s4 + $0x78] sm:$0xff]
        %v1816 = vld [vmem:[%s4 + $0x80] sm:$0xff]
        %v1817 = vld [vmem:[%s4 + $0x88] sm:$0xff]
        %v1818 = vld [vmem:[%s4 + $0x90] sm:$0xff]
        %v1819 = vld [vmem:[%s4 + $0x98] sm:$0xff]
        %v1820 = vld [vmem:[%s4 + $0xa0] sm:$0xff]
        %v1821 = vld [vmem:[%s4 + $0xa8] sm:$0xff]
        %v1822 = vld [vmem:[%s4 + $0xb0] sm:$0xff]
        %v1823 = vld [vmem:[%s4 + $0xb8] sm:$0xff]
        %v1824 = vld [vmem:[%s4 + $0xc0] sm:$0xff]
        %v1825 = vld [vmem:[%s4 + $0xc8] sm:$0xff]
        %v1826 = vld [vmem:[%s4 + $0xd0] sm:$0xff]
        %v1827 = vld [vmem:[%s4 + $0xd8] sm:$0xff]
        %v1828 = vld [vmem:[%s4 + $0xe0] sm:$0xff]
        %v1829 = vld [vmem:[%s4 + $0xe8] sm:$0xff]
        %v1830 = vld [vmem:[%s4 + $0xf0] sm:$0xff]
        %v1831 = vld [vmem:[%s4 + $0xf8] sm:$0xff]
        %v1832 = vld [vmem:[%s4 + $0x100] sm:$0xff]
        %v1833 = vld [vmem:[%s4 + $0x108] sm:$0xff]
        %v1834 = vld [vmem:[%s4 + $0x110] sm:$0xff]
        %v1835 = vld [vmem:[%s4 + $0x118] sm:$0xff]
        %v1836 = vld [vmem:[%s4 + $0x120] sm:$0xff]
        %v1837 = vld [vmem:[%s4 + $0x128] sm:$0xff]
        %v1838 = vld [vmem:[%s4 + $0x130] sm:$0xff]
        %v1839 = vld [vmem:[%s4 + $0x138] sm:$0xff]
        %v1840 = vld [vmem:[%s4 + $0x140] sm:$0xff]
        %v1841 = vld [vmem:[%s4 + $0x148] sm:$0xff]
        %v1842 = vld [vmem:[%s4 + $0x150] sm:$0xff]
        %v1843 = vld [vmem:[%s4 + $0x158] sm:$0xff]
        %v1844 = vld [vmem:[%s4 + $0x160] sm:$0xff]
        %v1845 = vld [vmem:[%s4 + $0x168] sm:$0xff]
        %v1846 = vld [vmem:[%s4 + $0x170] sm:$0xff]
        %v1847 = vld [vmem:[%s4 + $0x178] sm:$0xff]
        %v1848 = vld [vmem:[%s4 + $0x180] sm:$0xff]
        %v1849 = vld [vmem:[%s4 + $0x188] sm:$0xff]
        %v1850 = vld [vmem:[%s4 + $0x190] sm:$0xff]
        %v1851 = vld [vmem:[%s4 + $0x198] sm:$0xff]
        %v1852 = vld [vmem:[%s4 + $0x1a0] sm:$0xff]
        %v1853 = vld [vmem:[%s4 + $0x1a8] sm:$0xff]
        %v1854 = vld [vmem:[%s4 + $0x1b0] sm:$0xff]
        %v1855 = vld [vmem:[%s4 + $0x1b8] sm:$0xff]
        %v1856 = vld [vmem:[%s4 + $0x1c0] sm:$0xff]
        %v1857 = vld [vmem:[%s4 + $0x1c8] sm:$0xff]
        %v1858 = vld [vmem:[%s4 + $0x1d0] sm:$0xff]
        %v1859 = vld [vmem:[%s4 + $0x1d8] sm:$0xff]
        %v1860 = vld [vmem:[%s4 + $0x1e0] sm:$0xff]
        %v1861 = vld [vmem:[%s4 + $0x1e8] sm:$0xff]
        %v1862 = vld [vmem:[%s4 + $0x1f0] sm:$0xff]
        %v1863 = vld [vmem:[%s4 + $0x1f8] sm:$0xff]
        %v1864 = vld [vmem:[%s4 + $0x200] sm:$0xff]
        %v1865 = vld [vmem:[%s4 + $0x208] sm:$0xff]
        %v1866 = vld [vmem:[%s4 + $0x210] sm:$0xff]
        %v1867 = vld [vmem:[%s4 + $0x218] sm:$0xff]
        %v1868 = vld [vmem:[%s4 + $0x220] sm:$0xff]
        %v1869 = vld [vmem:[%s4 + $0x228] sm:$0xff]
        %v1870 = vld [vmem:[%s4 + $0x230] sm:$0xff]
        %v1871 = vld [vmem:[%s4 + $0x238] sm:$0xff]
        %v1872 = vld [vmem:[%s4 + $0x240] sm:$0xff]
        %v1873 = vld [vmem:[%s4 + $0x248] sm:$0xff]
        %v1874 = vld [vmem:[%s4 + $0x250] sm:$0xff]
        %v1875 = vld [vmem:[%s4 + $0x258] sm:$0xff]
        %v1876 = vld [vmem:[%s4 + $0x260] sm:$0xff]
        %v1877 = vld [vmem:[%s4 + $0x268] sm:$0xff]
        %v1878 = vld [vmem:[%s4 + $0x270] sm:$0xff]
        %v1879 = vld [vmem:[%s4 + $0x278] sm:$0xff]
        %v1880 = vld [vmem:[%s4 + $0x280] sm:$0xff]
        %v1881 = vld [vmem:[%s4 + $0x288] sm:$0xff]
        %v1882 = vld [vmem:[%s4 + $0x290] sm:$0xff]
        %v1883 = vld [vmem:[%s4 + $0x298] sm:$0xff]
        %v1884 = vld [vmem:[%s4 + $0x2a0] sm:$0xff]
        %v1885 = vld [vmem:[%s4 + $0x2a8] sm:$0xff]
        %v1886 = vld [vmem:[%s4 + $0x2b0] sm:$0xff]
        %v1887 = vld [vmem:[%s4 + $0x2b8] sm:$0xff]
        %v1888 = vld [vmem:[%s4 + $0x2c0] sm:$0xff]
        %v1889 = vld [vmem:[%s4 + $0x2c8] sm:$0xff]
        %v1890 = vld [vmem:[%s4 + $0x2d0] sm:$0xff]
        %v1891 = vld [vmem:[%s4 + $0x2d8] sm:$0xff]
        %v1892 = vld [vmem:[%s4 + $0x2e0] sm:$0xff]
        %v1893 = vld [vmem:[%s4 + $0x2e8] sm:$0xff]
        %v1894 = vld [vmem:[%s4 + $0x2f0] sm:$0xff]
        %v1895 = vld [vmem:[%s4 + $0x2f8] sm:$0xff]
        %v1896 = vld [vmem:[%s4 + $0x300] sm:$0xff]
        %v1897 = vld [vmem:[%s4 + $0x308] sm:$0xff]
        %v1898 = vld [vmem:[%s4 + $0x310] sm:$0xff]
        %v1899 = vld [vmem:[%s4 + $0x318] sm:$0xff]
        %v1900 = vld [vmem:[%s4 + $0x320] sm:$0xff]
        %v1901 = vld [vmem:[%s4 + $0x328] sm:$0xff]
        %v1902 = vld [vmem:[%s4 + $0x330] sm:$0xff]
        %v1903 = vld [vmem:[%s4 + $0x338] sm:$0xff]
        %v1904 = vld [vmem:[%s4 + $0x340] sm:$0xff]
        %v1905 = vld [vmem:[%s4 + $0x348] sm:$0xff]
        %v1906 = vld [vmem:[%s4 + $0x350] sm:$0xff]
        %v1907 = vld [vmem:[%s4 + $0x358] sm:$0xff]
        %v1908 = vld [vmem:[%s4 + $0x360] sm:$0xff]
        %v1909 = vld [vmem:[%s4 + $0x368] sm:$0xff]
        %v1910 = vld [vmem:[%s4 + $0x370] sm:$0xff]
        %v1911 = vld [vmem:[%s4 + $0x378] sm:$0xff]
        %v1912 = vld [vmem:[%s4 + $0x380] sm:$0xff]
        %v1913 = vld [vmem:[%s4 + $0x388] sm:$0xff]
        %v1914 = vld [vmem:[%s4 + $0x390] sm:$0xff]
        %v1915 = vld [vmem:[%s4 + $0x398] sm:$0xff]
        %v1916 = vld [vmem:[%s4 + $0x3a0] sm:$0xff]
        %v1917 = vld [vmem:[%s4 + $0x3a8] sm:$0xff]
        %v1918 = vld [vmem:[%s4 + $0x3b0] sm:$0xff]
        %v1919 = vld [vmem:[%s4 + $0x3b8] sm:$0xff]
        %v1920 = vld [vmem:[%s4 + $0x3c0] sm:$0xff]
        %v1921 = vld [vmem:[%s4 + $0x3c8] sm:$0xff]
        %v1922 = vld [vmem:[%s4 + $0x3d0] sm:$0xff]
        %v1923 = vld [vmem:[%s4 + $0x3d8] sm:$0xff]
        %v1924 = vld [vmem:[%s4 + $0x3e0] sm:$0xff]
        %v1925 = vld [vmem:[%s4 + $0x3e8] sm:$0xff]
        %v1926 = vld [vmem:[%s4 + $0x3f0] sm:$0xff]
        %v1927 = vld [vmem:[%s4 + $0x3f8] sm:$0xff]
        %v1928 = vld [vmem:[%s4 + $0x400] sm:$0xff]
        %v1929 = vld [vmem:[%s4 + $0x408] sm:$0xff]
        %v1930 = vld [vmem:[%s4 + $0x410] sm:$0xff]
        %v1931 = vld [vmem:[%s4 + $0x418] sm:$0xff]
        %v1932 = vld [vmem:[%s4 + $0x420] sm:$0xff]
        %v1933 = vld [vmem:[%s4 + $0x428] sm:$0xff]
        %v1934 = vld [vmem:[%s4 + $0x430] sm:$0xff]
        %v1935 = vld [vmem:[%s4 + $0x438] sm:$0xff]
        %v1936 = vld [vmem:[%s4 + $0x440] sm:$0xff]
        %v1937 = vld [vmem:[%s4 + $0x448] sm:$0xff]
        %v1938 = vld [vmem:[%s4 + $0x450] sm:$0xff]
        %v1939 = vld [vmem:[%s4 + $0x458] sm:$0xff]
        %v1940 = vld [vmem:[%s4 + $0x460] sm:$0xff]
        %v1941 = vld [vmem:[%s4 + $0x468] sm:$0xff]
        %v1942 = vld [vmem:[%s4 + $0x470] sm:$0xff]
        %v1943 = vld [vmem:[%s4 + $0x478] sm:$0xff]
        %v1944 = vld [vmem:[%s5] sm:$0x1]
        %v1946 = vlaneseq
        %v1947 = vshrl.u32 %v1946, 7
        %v1948 = vsub.s32 0, %v1947
        %v1949 = vrot.slane %v1944, %v1948
        %1951 = vmatprep.subr.mxu0 0.0
        %1952 = vmatpush1.msra.mxu0 %v1800
        %1953 = vmatprep.subr.mxu0 0.0
        %1954 = vmatpush1.msra.mxu0 %v1801
        %1955 = vmatprep.subr.mxu0 0.0
        %1956 = vmatpush1.msra.mxu0 %v1802
        %1957 = vmatprep.subr.mxu0 0.0
        %1958 = vmatpush1.msra.mxu0 %v1803
        %1959 = vmatprep.subr.mxu0 0.0
        %1960 = vmatpush1.msra.mxu0 %v1804
        %1961 = vmatprep.subr.mxu0 0.0
        %1962 = vmatpush1.msra.mxu0 %v1805
        %1963 = vmatprep.subr.mxu0 0.0
        %1964 = vmatpush1.msra.mxu0 %v1806
        %1965 = vmatprep.subr.mxu0 0.0
        %1966 = vmatpush1.msra.mxu0 %v1807
        %1967 = vmatprep.subr.mxu0 0.0
        %1968 = vmatpush1.msra.mxu0 %v1808
        %1969 = vmatprep.subr.mxu0 0.0
        %1970 = vmatpush1.msra.mxu0 %v1809
        %1971 = vmatprep.subr.mxu0 0.0
        %1972 = vmatpush1.msra.mxu0 %v1810
        %1973 = vmatprep.subr.mxu0 0.0
        %1974 = vmatpush1.msra.mxu0 %v1811
        %1975 = vmatprep.subr.mxu0 0.0
        %1976 = vmatpush1.msra.mxu0 %v1812
        %1977 = vmatprep.subr.mxu0 0.0
        %1978 = vmatpush1.msra.mxu0 %v1813
        %1979 = vmatprep.subr.mxu0 0.0
        %1980 = vmatpush1.msra.mxu0 %v1814
        %1981 = vmatprep.subr.mxu0 0.0
        %1982 = vmatpush1.msra.mxu0 %v1815
        %1983 = vmatprep.subr.mxu0 0.0
        %1984 = vmatpush1.msra.mxu0 %v1816
        %1985 = vmatprep.subr.mxu0 0.0
        %1986 = vmatpush1.msra.mxu0 %v1817
        %1987 = vmatprep.subr.mxu0 0.0
        %1988 = vmatpush1.msra.mxu0 %v1818
        %1989 = vmatprep.subr.mxu0 0.0
        %1990 = vmatpush1.msra.mxu0 %v1819
        %1991 = vmatprep.subr.mxu0 0.0
        %1992 = vmatpush1.msra.mxu0 %v1820
        %1993 = vmatprep.subr.mxu0 0.0
        %1994 = vmatpush1.msra.mxu0 %v1821
        %1995 = vmatprep.subr.mxu0 0.0
        %1996 = vmatpush1.msra.mxu0 %v1822
        %1997 = vmatprep.subr.mxu0 0.0
        %1998 = vmatpush1.msra.mxu0 %v1823
        %1999 = vmatprep.subr.mxu0 0.0
        %2000 = vmatpush1.msra.mxu0 %v1824
        %2001 = vmatprep.subr.mxu0 0.0
        %2002 = vmatpush1.msra.mxu0 %v1825
        %2003 = vmatprep.subr.mxu0 0.0
        %2004 = vmatpush1.msra.mxu0 %v1826
        %2005 = vmatprep.subr.mxu0 0.0
        %2006 = vmatpush1.msra.mxu0 %v1827
        %2007 = vmatprep.subr.mxu0 0.0
        %2008 = vmatpush1.msra.mxu0 %v1828
        %2009 = vmatprep.subr.mxu0 0.0
        %2010 = vmatpush1.msra.mxu0 %v1829
        %2011 = vmatprep.subr.mxu0 0.0
        %2012 = vmatpush1.msra.mxu0 %v1830
        %2013 = vmatprep.subr.mxu0 0.0
        %2014 = vmatpush1.msra.mxu0 %v1831
        %2015 = vmatprep.mubr.f32.mxu0 %v1513
        %2016 = vmatmul.mubr.f32.gmra.mrb[0].mxu0 %v1512
        %v2017 = vpop.f32.mrb[0].mxu0
        %v2018 = vadd.f32 %v1949, %v2017
        %v2019 = vpop.f32.mrb[0].mxu0
        %2020 = vmatprep.mubr.f32.mxu0 %v1522
        %2021 = vmatmul.mubr.f32.gmra.mrb[0].mxu0 %v1521
        %v2022 = vpop.f32.mrb[0].mxu0
        %v2023 = vadd.f32 %v1949, %v2022
        %v2024 = vpop.f32.mrb[0].mxu0
        %2025 = vmatprep.mubr.f32.mxu0 %v1531
        %2026 = vmatmul.mubr.f32.gmra.mrb[0].mxu0 %v1530
        %v2027 = vpop.f32.mrb[0].mxu0
        %v2028 = vadd.f32 %v1949, %v2027
        %v2029 = vpop.f32.mrb[0].mxu0
        %2030 = vmatprep.mubr.f32.mxu0 %v1540
        %2031 = vmatmul.mubr.f32.gmra.mrb[0].mxu0 %v1539
        %v2032 = vpop.f32.mrb[0].mxu0
        %v2033 = vadd.f32 %v1949, %v2032
        %v2034 = vpop.f32.mrb[0].mxu0
        %2035 = vmatprep.mubr.f32.mxu0 %v1549
        %2036 = vmatmul.mubr.f32.gmra.mrb[0].mxu0 %v1548
        %v2037 = vpop.f32.mrb[0].mxu0
        %v2038 = vadd.f32 %v1949, %v2037
        %v2039 = vpop.f32.mrb[0].mxu0
        %2040 = vmatprep.mubr.f32.mxu0 %v1558
        %2041 = vmatmul.mubr.f32.gmra.mrb[0].mxu0 %v1557
        %v2042 = vpop.f32.mrb[0].mxu0
        %v2043 = vadd.f32 %v1949, %v2042
        %v2044 = vpop.f32.mrb[0].mxu0
        %2045 = vmatprep.mubr.f32.mxu0 %v1567
        %2046 = vmatmul.mubr.f32.gmra.mrb[0].mxu0 %v1566
        %v2047 = vpop.f32.mrb[0].mxu0
        %v2048 = vadd.f32 %v1949, %v2047
        %v2049 = vpop.f32.mrb[0].mxu0
        %2050 = vmatprep.mubr.f32.mxu0 %v1576
        %2051 = vmatmul.mubr.f32.gmra.mrb[0].mxu0 %v1575
        %v2052 = vpop.f32.mrb[0].mxu0
        %v2053 = vadd.f32 %v1949, %v2052
        %v2054 = vpop.f32.mrb[0].mxu0
        %2055 = vmatprep.mubr.f32.mxu0 %v1585
        %2056 = vmatmul.mubr.f32.gmra.mrb[0].mxu0 %v1584
        %v2057 = vpop.f32.mrb[0].mxu0
        %v2058 = vadd.f32 %v1949, %v2057
        %v2059 = vpop.f32.mrb[0].mxu0
        %2060 = vmatprep.mubr.f32.mxu0 %v1594
        %2061 = vmatmul.mubr.f32.gmra.mrb[0].mxu0 %v1593
        %v2062 = vpop.f32.mrb[0].mxu0
        %v2063 = vadd.f32 %v1949, %v2062
        %v2064 = vpop.f32.mrb[0].mxu0
        %2065 = vmatprep.mubr.f32.mxu0 %v1603
        %2066 = vmatmul.mubr.f32.gmra.mrb[0].mxu0 %v1602
        %v2067 = vpop.f32.mrb[0].mxu0
        %v2068 = vadd.f32 %v1949, %v2067
        %v2069 = vpop.f32.mrb[0].mxu0
        %2070 = vmatprep.mubr.f32.mxu0 %v1612
        %2071 = vmatmul.mubr.f32.gmra.mrb[0].mxu0 %v1611
        %v2072 = vpop.f32.mrb[0].mxu0
        %v2073 = vadd.f32 %v1949, %v2072
        %v2074 = vpop.f32.mrb[0].mxu0
        %2075 = vmatprep.mubr.f32.mxu0 %v1621
        %2076 = vmatmul.mubr.f32.gmra.mrb[0].mxu0 %v1620
        %v2077 = vpop.f32.mrb[0].mxu0
        %v2078 = vadd.f32 %v1949, %v2077
        %v2079 = vpop.f32.mrb[0].mxu0
        %2080 = vmatprep.mubr.f32.mxu0 %v1630
        %2081 = vmatmul.mubr.f32.gmra.mrb[0].mxu0 %v1629
        %v2082 = vpop.f32.mrb[0].mxu0
        %v2083 = vadd.f32 %v1949, %v2082
        %v2084 = vpop.f32.mrb[0].mxu0
        %2085 = vmatprep.mubr.f32.mxu0 %v1639
        %2086 = vmatmul.mubr.f32.gmra.mrb[0].mxu0 %v1638
        %v2087 = vpop.f32.mrb[0].mxu0
        %v2088 = vadd.f32 %v1949, %v2087
        %v2089 = vpop.f32.mrb[0].mxu0
        %2090 = vmatprep.mubr.f32.mxu0 %v1648
        %2091 = vmatmul.mubr.f32.gmra.mrb[0].mxu0 %v1647
        %v2092 = vpop.f32.mrb[0].mxu0
        %v2093 = vadd.f32 %v1949, %v2092
        %v2094 = vpop.f32.mrb[0].mxu0
        %2095 = vmatprep.mubr.f32.mxu0 %v1657
        %2096 = vmatmul.mubr.f32.gmra.mrb[0].mxu0 %v1656
        %v2097 = vpop.f32.mrb[0].mxu0
        %v2098 = vadd.f32 %v1949, %v2097
        %v2099 = vpop.f32.mrb[0].mxu0
        %2100 = vmatprep.mubr.f32.mxu0 %v1666
        %2101 = vmatmul.mubr.f32.gmra.mrb[0].mxu0 %v1665
        %v2102 = vpop.f32.mrb[0].mxu0
        %v2103 = vadd.f32 %v1949, %v2102
        %v2104 = vpop.f32.mrb[0].mxu0
        %2105 = vmatprep.mubr.f32.mxu0 %v1675
        %2106 = vmatmul.mubr.f32.gmra.mrb[0].mxu0 %v1674
        %v2107 = vpop.f32.mrb[0].mxu0
        %v2108 = vadd.f32 %v1949, %v2107
        %v2109 = vpop.f32.mrb[0].mxu0
        %2110 = vmatprep.mubr.f32.mxu0 %v1684
        %2111 = vmatmul.mubr.f32.gmra.mrb[0].mxu0 %v1683
        %v2112 = vpop.f32.mrb[0].mxu0
        %v2113 = vadd.f32 %v1949, %v2112
        %v2114 = vpop.f32.mrb[0].mxu0
        %2115 = vmatprep.mubr.f32.mxu0 %v1693
        %2116 = vmatmul.mubr.f32.gmra.mrb[0].mxu0 %v1692
        %v2117 = vpop.f32.mrb[0].mxu0
        %v2118 = vadd.f32 %v1949, %v2117
        %v2119 = vpop.f32.mrb[0].mxu0
        %2120 = vmatprep.mubr.f32.mxu0 %v1702
        %2121 = vmatmul.mubr.f32.gmra.mrb[0].mxu0 %v1701
        %v2122 = vpop.f32.mrb[0].mxu0
        %v2123 = vadd.f32 %v1949, %v2122
        %v2124 = vpop.f32.mrb[0].mxu0
        %2125 = vmatprep.mubr.f32.mxu0 %v1711
        %2126 = vmatmul.mubr.f32.gmra.mrb[0].mxu0 %v1710
        %v2127 = vpop.f32.mrb[0].mxu0
        %v2128 = vadd.f32 %v1949, %v2127
        %v2129 = vpop.f32.mrb[0].mxu0
        %2130 = vmatprep.mubr.f32.mxu0 %v1720
        %2131 = vmatmul.mubr.f32.gmra.mrb[0].mxu0 %v1719
        %v2132 = vpop.f32.mrb[0].mxu0
        %v2133 = vadd.f32 %v1949, %v2132
        %v2134 = vpop.f32.mrb[0].mxu0
        %2135 = vmatprep.mubr.f32.mxu0 %v1729
        %2136 = vmatmul.mubr.f32.gmra.mrb[0].mxu0 %v1728
        %v2137 = vpop.f32.mrb[0].mxu0
        %v2138 = vadd.f32 %v1949, %v2137
        %v2139 = vpop.f32.mrb[0].mxu0
        %2140 = vmatprep.mubr.f32.mxu0 %v1738
        %2141 = vmatmul.mubr.f32.gmra.mrb[0].mxu0 %v1737
        %v2142 = vpop.f32.mrb[0].mxu0
        %v2143 = vadd.f32 %v1949, %v2142
        %v2144 = vpop.f32.mrb[0].mxu0
        %2145 = vmatprep.mubr.f32.mxu0 %v1747
        %2146 = vmatmul.mubr.f32.gmra.mrb[0].mxu0 %v1746
        %v2147 = vpop.f32.mrb[0].mxu0
        %v2148 = vadd.f32 %v1949, %v2147
        %v2149 = vpop.f32.mrb[0].mxu0
        %2150 = vmatprep.mubr.f32.mxu0 %v1756
        %2151 = vmatmul.mubr.f32.gmra.mrb[0].mxu0 %v1755
        %v2152 = vpop.f32.mrb[0].mxu0
        %v2153 = vadd.f32 %v1949, %v2152
        %v2154 = vpop.f32.mrb[0].mxu0
        %2155 = vmatprep.mubr.f32.mxu0 %v1765
        %2156 = vmatmul.mubr.f32.gmra.mrb[0].mxu0 %v1764
        %v2157 = vpop.f32.mrb[0].mxu0
        %v2158 = vadd.f32 %v1949, %v2157
        %v2159 = vpop.f32.mrb[0].mxu0
        %2160 = vmatprep.mubr.f32.mxu0 %v1774
        %2161 = vmatmul.mubr.f32.gmra.mrb[0].mxu0 %v1773
        %v2162 = vpop.f32.mrb[0].mxu0
        %v2163 = vadd.f32 %v1949, %v2162
        %v2164 = vpop.f32.mrb[0].mxu0
        %2165 = vmatprep.mubr.f32.mxu0 %v1783
        %2166 = vmatmul.mubr.f32.gmra.mrb[0].mxu0 %v1782
        %v2167 = vpop.f32.mrb[0].mxu0
        %v2168 = vadd.f32 %v1949, %v2167
        %v2169 = vpop.f32.mrb[0].mxu0
        %2170 = vmatprep.mubr.f32.mxu0 %v1792
        %2171 = vmatmul.mubr.f32.gmra.mrb[0].mxu0 %v1791
        %v2172 = vpop.f32.mrb[0].mxu0
        %v2173 = vadd.f32 %v1949, %v2172
        %v2174 = vpop.f32.mrb[0].mxu0
        %2175 = vdwg.mxu0
        %2176 = vmatprep.subr.mxu0 0.0
        %2177 = vmatpush1.msra.mxu0 %v1832
        %2178 = vmatprep.subr.mxu0 0.0
        %2179 = vmatpush1.msra.mxu0 %v1833
        %2180 = vmatprep.subr.mxu0 0.0
        %2181 = vmatpush1.msra.mxu0 %v1834
        %2182 = vmatprep.subr.mxu0 0.0
        %2183 = vmatpush1.msra.mxu0 %v1835
        %2184 = vmatprep.subr.mxu0 0.0
        %2185 = vmatpush1.msra.mxu0 %v1836
        %2186 = vmatprep.subr.mxu0 0.0
        %2187 = vmatpush1.msra.mxu0 %v1837
        %2188 = vmatprep.subr.mxu0 0.0
        %2189 = vmatpush1.msra.mxu0 %v1838
        %2190 = vmatprep.subr.mxu0 0.0
        %2191 = vmatpush1.msra.mxu0 %v1839
        %2192 = vmatprep.subr.mxu0 0.0
        %2193 = vmatpush1.msra.mxu0 %v1840
        %2194 = vmatprep.subr.mxu0 0.0
        %2195 = vmatpush1.msra.mxu0 %v1841
        %2196 = vmatprep.subr.mxu0 0.0
        %2197 = vmatpush1.msra.mxu0 %v1842
        %2198 = vmatprep.subr.mxu0 0.0
        %2199 = vmatpush1.msra.mxu0 %v1843
        %2200 = vmatprep.subr.mxu0 0.0
        %2201 = vmatpush1.msra.mxu0 %v1844
        %2202 = vmatprep.subr.mxu0 0.0
        %2203 = vmatpush1.msra.mxu0 %v1845
        %2204 = vmatprep.subr.mxu0 0.0
        %2205 = vmatpush1.msra.mxu0 %v1846
        %2206 = vmatprep.subr.mxu0 0.0
        %2207 = vmatpush1.msra.mxu0 %v1847
        %2208 = vmatprep.subr.mxu0 0.0
        %2209 = vmatpush1.msra.mxu0 %v1848
        %2210 = vmatprep.subr.mxu0 0.0
        %2211 = vmatpush1.msra.mxu0 %v1849
        %2212 = vmatprep.subr.mxu0 0.0
        %2213 = vmatpush1.msra.mxu0 %v1850
        %2214 = vmatprep.subr.mxu0 0.0
        %2215 = vmatpush1.msra.mxu0 %v1851
        %2216 = vmatprep.subr.mxu0 0.0
        %2217 = vmatpush1.msra.mxu0 %v1852
        %2218 = vmatprep.subr.mxu0 0.0
        %2219 = vmatpush1.msra.mxu0 %v1853
        %2220 = vmatprep.subr.mxu0 0.0
        %2221 = vmatpush1.msra.mxu0 %v1854
        %2222 = vmatprep.subr.mxu0 0.0
        %2223 = vmatpush1.msra.mxu0 %v1855
        %2224 = vmatprep.subr.mxu0 0.0
        %2225 = vmatpush1.msra.mxu0 %v1856
        %2226 = vmatprep.subr.mxu0 0.0
        %2227 = vmatpush1.msra.mxu0 %v1857
        %2228 = vmatprep.subr.mxu0 0.0
        %2229 = vmatpush1.msra.mxu0 %v1858
        %2230 = vmatprep.subr.mxu0 0.0
        %2231 = vmatpush1.msra.mxu0 %v1859
        %2232 = vmatprep.subr.mxu0 0.0
        %2233 = vmatpush1.msra.mxu0 %v1860
        %2234 = vmatprep.subr.mxu0 0.0
        %2235 = vmatpush1.msra.mxu0 %v1861
        %2236 = vmatprep.subr.mxu0 0.0
        %2237 = vmatpush1.msra.mxu0 %v1862
        %2238 = vmatprep.subr.mxu0 0.0
        %2239 = vmatpush1.msra.mxu0 %v1863
        %2240 = vmatprep.mubr.f32.mxu0 %v1515
        %2241 = vmatmul.mubr.f32.gmra.mrb[0].mxu0 %v1514
        %v2242 = vpop.f32.mrb[0].mxu0
        %v2243 = vadd.f32 %v2018, %v2242
        %v2244 = vpop.f32.mrb[0].mxu0
        %2245 = vmatprep.mubr.f32.mxu0 %v1524
        %2246 = vmatmul.mubr.f32.gmra.mrb[0].mxu0 %v1523
        %v2247 = vpop.f32.mrb[0].mxu0
        %v2248 = vadd.f32 %v2023, %v2247
        %v2249 = vpop.f32.mrb[0].mxu0
        %2250 = vmatprep.mubr.f32.mxu0 %v1533
        %2251 = vmatmul.mubr.f32.gmra.mrb[0].mxu0 %v1532
        %v2252 = vpop.f32.mrb[0].mxu0
        %v2253 = vadd.f32 %v2028, %v2252
        %v2254 = vpop.f32.mrb[0].mxu0
        %2255 = vmatprep.mubr.f32.mxu0 %v1542
        %2256 = vmatmul.mubr.f32.gmra.mrb[0].mxu0 %v1541
        %v2257 = vpop.f32.mrb[0].mxu0
        %v2258 = vadd.f32 %v2033, %v2257
        %v2259 = vpop.f32.mrb[0].mxu0
        %2260 = vmatprep.mubr.f32.mxu0 %v1551
        %2261 = vmatmul.mubr.f32.gmra.mrb[0].mxu0 %v1550
        %v2262 = vpop.f32.mrb[0].mxu0
        %v2263 = vadd.f32 %v2038, %v2262
        %v2264 = vpop.f32.mrb[0].mxu0
        %2265 = vmatprep.mubr.f32.mxu0 %v1560
        %2266 = vmatmul.mubr.f32.gmra.mrb[0].mxu0 %v1559
        %v2267 = vpop.f32.mrb[0].mxu0
        %v2268 = vadd.f32 %v2043, %v2267
        %v2269 = vpop.f32.mrb[0].mxu0
        %2270 = vmatprep.mubr.f32.mxu0 %v1569
        %2271 = vmatmul.mubr.f32.gmra.mrb[0].mxu0 %v1568
        %v2272 = vpop.f32.mrb[0].mxu0
        %v2273 = vadd.f32 %v2048, %v2272
        %v2274 = vpop.f32.mrb[0].mxu0
        %2275 = vmatprep.mubr.f32.mxu0 %v1578
        %2276 = vmatmul.mubr.f32.gmra.mrb[0].mxu0 %v1577
        %v2277 = vpop.f32.mrb[0].mxu0
        %v2278 = vadd.f32 %v2053, %v2277
        %v2279 = vpop.f32.mrb[0].mxu0
        %2280 = vmatprep.mubr.f32.mxu0 %v1587
        %2281 = vmatmul.mubr.f32.gmra.mrb[0].mxu0 %v1586
        %v2282 = vpop.f32.mrb[0].mxu0
        %v2283 = vadd.f32 %v2058, %v2282
        %v2284 = vpop.f32.mrb[0].mxu0
        %2285 = vmatprep.mubr.f32.mxu0 %v1596
        %2286 = vmatmul.mubr.f32.gmra.mrb[0].mxu0 %v1595
        %v2287 = vpop.f32.mrb[0].mxu0
        %v2288 = vadd.f32 %v2063, %v2287
        %v2289 = vpop.f32.mrb[0].mxu0
        %2290 = vmatprep.mubr.f32.mxu0 %v1605
        %2291 = vmatmul.mubr.f32.gmra.mrb[0].mxu0 %v1604
        %v2292 = vpop.f32.mrb[0].mxu0
        %v2293 = vadd.f32 %v2068, %v2292
        %v2294 = vpop.f32.mrb[0].mxu0
        %2295 = vmatprep.mubr.f32.mxu0 %v1614
        %2296 = vmatmul.mubr.f32.gmra.mrb[0].mxu0 %v1613
        %v2297 = vpop.f32.mrb[0].mxu0
        %v2298 = vadd.f32 %v2073, %v2297
        %v2299 = vpop.f32.mrb[0].mxu0
        %2300 = vmatprep.mubr.f32.mxu0 %v1623
        %2301 = vmatmul.mubr.f32.gmra.mrb[0].mxu0 %v1622
        %v2302 = vpop.f32.mrb[0].mxu0
        %v2303 = vadd.f32 %v2078, %v2302
        %v2304 = vpop.f32.mrb[0].mxu0
        %2305 = vmatprep.mubr.f32.mxu0 %v1632
        %2306 = vmatmul.mubr.f32.gmra.mrb[0].mxu0 %v1631
        %v2307 = vpop.f32.mrb[0].mxu0
        %v2308 = vadd.f32 %v2083, %v2307
        %v2309 = vpop.f32.mrb[0].mxu0
        %2310 = vmatprep.mubr.f32.mxu0 %v1641
        %2311 = vmatmul.mubr.f32.gmra.mrb[0].mxu0 %v1640
        %v2312 = vpop.f32.mrb[0].mxu0
        %v2313 = vadd.f32 %v2088, %v2312
        %v2314 = vpop.f32.mrb[0].mxu0
        %2315 = vmatprep.mubr.f32.mxu0 %v1650
        %2316 = vmatmul.mubr.f32.gmra.mrb[0].mxu0 %v1649
        %v2317 = vpop.f32.mrb[0].mxu0
        %v2318 = vadd.f32 %v2093, %v2317
        %v2319 = vpop.f32.mrb[0].mxu0
        %2320 = vmatprep.mubr.f32.mxu0 %v1659
        %2321 = vmatmul.mubr.f32.gmra.mrb[0].mxu0 %v1658
        %v2322 = vpop.f32.mrb[0].mxu0
        %v2323 = vadd.f32 %v2098, %v2322
        %v2324 = vpop.f32.mrb[0].mxu0
        %2325 = vmatprep.mubr.f32.mxu0 %v1668
        %2326 = vmatmul.mubr.f32.gmra.mrb[0].mxu0 %v1667
        %v2327 = vpop.f32.mrb[0].mxu0
        %v2328 = vadd.f32 %v2103, %v2327
        %v2329 = vpop.f32.mrb[0].mxu0
        %2330 = vmatprep.mubr.f32.mxu0 %v1677
        %2331 = vmatmul.mubr.f32.gmra.mrb[0].mxu0 %v1676
        %v2332 = vpop.f32.mrb[0].mxu0
        %v2333 = vadd.f32 %v2108, %v2332
        %v2334 = vpop.f32.mrb[0].mxu0
        %2335 = vmatprep.mubr.f32.mxu0 %v1686
        %2336 = vmatmul.mubr.f32.gmra.mrb[0].mxu0 %v1685
        %v2337 = vpop.f32.mrb[0].mxu0
        %v2338 = vadd.f32 %v2113, %v2337
        %v2339 = vpop.f32.mrb[0].mxu0
        %2340 = vmatprep.mubr.f32.mxu0 %v1695
        %2341 = vmatmul.mubr.f32.gmra.mrb[0].mxu0 %v1694
        %v2342 = vpop.f32.mrb[0].mxu0
        %v2343 = vadd.f32 %v2118, %v2342
        %v2344 = vpop.f32.mrb[0].mxu0
        %2345 = vmatprep.mubr.f32.mxu0 %v1704
        %2346 = vmatmul.mubr.f32.gmra.mrb[0].mxu0 %v1703
        %v2347 = vpop.f32.mrb[0].mxu0
        %v2348 = vadd.f32 %v2123, %v2347
        %v2349 = vpop.f32.mrb[0].mxu0
        %2350 = vmatprep.mubr.f32.mxu0 %v1713
        %2351 = vmatmul.mubr.f32.gmra.mrb[0].mxu0 %v1712
        %v2352 = vpop.f32.mrb[0].mxu0
        %v2353 = vadd.f32 %v2128, %v2352
        %v2354 = vpop.f32.mrb[0].mxu0
        %2355 = vmatprep.mubr.f32.mxu0 %v1722
        %2356 = vmatmul.mubr.f32.gmra.mrb[0].mxu0 %v1721
        %v2357 = vpop.f32.mrb[0].mxu0
        %v2358 = vadd.f32 %v2133, %v2357
        %v2359 = vpop.f32.mrb[0].mxu0
        %2360 = vmatprep.mubr.f32.mxu0 %v1731
        %2361 = vmatmul.mubr.f32.gmra.mrb[0].mxu0 %v1730
        %v2362 = vpop.f32.mrb[0].mxu0
        %v2363 = vadd.f32 %v2138, %v2362
        %v2364 = vpop.f32.mrb[0].mxu0
        %2365 = vmatprep.mubr.f32.mxu0 %v1740
        %2366 = vmatmul.mubr.f32.gmra.mrb[0].mxu0 %v1739
        %v2367 = vpop.f32.mrb[0].mxu0
        %v2368 = vadd.f32 %v2143, %v2367
        %v2369 = vpop.f32.mrb[0].mxu0
        %2370 = vmatprep.mubr.f32.mxu0 %v1749
        %2371 = vmatmul.mubr.f32.gmra.mrb[0].mxu0 %v1748
        %v2372 = vpop.f32.mrb[0].mxu0
        %v2373 = vadd.f32 %v2148, %v2372
        %v2374 = vpop.f32.mrb[0].mxu0
        %2375 = vmatprep.mubr.f32.mxu0 %v1758
        %2376 = vmatmul.mubr.f32.gmra.mrb[0].mxu0 %v1757
        %v2377 = vpop.f32.mrb[0].mxu0
        %v2378 = vadd.f32 %v2153, %v2377
        %v2379 = vpop.f32.mrb[0].mxu0
        %2380 = vmatprep.mubr.f32.mxu0 %v1767
        %2381 = vmatmul.mubr.f32.gmra.mrb[0].mxu0 %v1766
        %v2382 = vpop.f32.mrb[0].mxu0
        %v2383 = vadd.f32 %v2158, %v2382
        %v2384 = vpop.f32.mrb[0].mxu0
        %2385 = vmatprep.mubr.f32.mxu0 %v1776
        %2386 = vmatmul.mubr.f32.gmra.mrb[0].mxu0 %v1775
        %v2387 = vpop.f32.mrb[0].mxu0
        %v2388 = vadd.f32 %v2163, %v2387
        %v2389 = vpop.f32.mrb[0].mxu0
        %2390 = vmatprep.mubr.f32.mxu0 %v1785
        %2391 = vmatmul.mubr.f32.gmra.mrb[0].mxu0 %v1784
        %v2392 = vpop.f32.mrb[0].mxu0
        %v2393 = vadd.f32 %v2168, %v2392
        %v2394 = vpop.f32.mrb[0].mxu0
        %2395 = vmatprep.mubr.f32.mxu0 %v1794
        %2396 = vmatmul.mubr.f32.gmra.mrb[0].mxu0 %v1793
        %v2397 = vpop.f32.mrb[0].mxu0
        %v2398 = vadd.f32 %v2173, %v2397
        %v2399 = vpop.f32.mrb[0].mxu0
        %2400 = vdwg.mxu0
        %2401 = vmatprep.subr.mxu0 0.0
        %2402 = vmatpush1.msra.mxu0 %v1864
        %2403 = vmatprep.subr.mxu0 0.0
        %2404 = vmatpush1.msra.mxu0 %v1865
        %2405 = vmatprep.subr.mxu0 0.0
        %2406 = vmatpush1.msra.mxu0 %v1866
        %2407 = vmatprep.subr.mxu0 0.0
        %2408 = vmatpush1.msra.mxu0 %v1867
        %2409 = vmatprep.subr.mxu0 0.0
        %2410 = vmatpush1.msra.mxu0 %v1868
        %2411 = vmatprep.subr.mxu0 0.0
        %2412 = vmatpush1.msra.mxu0 %v1869
        %2413 = vmatprep.subr.mxu0 0.0
        %2414 = vmatpush1.msra.mxu0 %v1870
        %2415 = vmatprep.subr.mxu0 0.0
        %2416 = vmatpush1.msra.mxu0 %v1871
        %2417 = vmatprep.subr.mxu0 0.0
        %2418 = vmatpush1.msra.mxu0 %v1872
        %2419 = vmatprep.subr.mxu0 0.0
        %2420 = vmatpush1.msra.mxu0 %v1873
        %2421 = vmatprep.subr.mxu0 0.0
        %2422 = vmatpush1.msra.mxu0 %v1874
        %2423 = vmatprep.subr.mxu0 0.0
        %2424 = vmatpush1.msra.mxu0 %v1875
        %2425 = vmatprep.subr.mxu0 0.0
        %2426 = vmatpush1.msra.mxu0 %v1876
        %2427 = vmatprep.subr.mxu0 0.0
        %2428 = vmatpush1.msra.mxu0 %v1877
        %2429 = vmatprep.subr.mxu0 0.0
        %2430 = vmatpush1.msra.mxu0 %v1878
        %2431 = vmatprep.subr.mxu0 0.0
        %2432 = vmatpush1.msra.mxu0 %v1879
        %2433 = vmatprep.subr.mxu0 0.0
        %2434 = vmatpush1.msra.mxu0 %v1880
        %2435 = vmatprep.subr.mxu0 0.0
        %2436 = vmatpush1.msra.mxu0 %v1881
        %2437 = vmatprep.subr.mxu0 0.0
        %2438 = vmatpush1.msra.mxu0 %v1882
        %2439 = vmatprep.subr.mxu0 0.0
        %2440 = vmatpush1.msra.mxu0 %v1883
        %2441 = vmatprep.subr.mxu0 0.0
        %2442 = vmatpush1.msra.mxu0 %v1884
        %2443 = vmatprep.subr.mxu0 0.0
        %2444 = vmatpush1.msra.mxu0 %v1885
        %2445 = vmatprep.subr.mxu0 0.0
        %2446 = vmatpush1.msra.mxu0 %v1886
        %2447 = vmatprep.subr.mxu0 0.0
        %2448 = vmatpush1.msra.mxu0 %v1887
        %2449 = vmatprep.subr.mxu0 0.0
        %2450 = vmatpush1.msra.mxu0 %v1888
        %2451 = vmatprep.subr.mxu0 0.0
        %2452 = vmatpush1.msra.mxu0 %v1889
        %2453 = vmatprep.subr.mxu0 0.0
        %2454 = vmatpush1.msra.mxu0 %v1890
        %2455 = vmatprep.subr.mxu0 0.0
        %2456 = vmatpush1.msra.mxu0 %v1891
        %2457 = vmatprep.subr.mxu0 0.0
        %2458 = vmatpush1.msra.mxu0 %v1892
        %2459 = vmatprep.subr.mxu0 0.0
        %2460 = vmatpush1.msra.mxu0 %v1893
        %2461 = vmatprep.subr.mxu0 0.0
        %2462 = vmatpush1.msra.mxu0 %v1894
        %2463 = vmatprep.subr.mxu0 0.0
        %2464 = vmatpush1.msra.mxu0 %v1895
        %2465 = vmatprep.mubr.f32.mxu0 %v1517
        %2466 = vmatmul.mubr.f32.gmra.mrb[0].mxu0 %v1516
        %v2467 = vpop.f32.mrb[0].mxu0
        %v2468 = vadd.f32 %v2243, %v2467
        %v2469 = vpop.f32.mrb[0].mxu0
        %2470 = vmatprep.mubr.f32.mxu0 %v1526
        %2471 = vmatmul.mubr.f32.gmra.mrb[0].mxu0 %v1525
        %v2472 = vpop.f32.mrb[0].mxu0
        %v2473 = vadd.f32 %v2248, %v2472
        %v2474 = vpop.f32.mrb[0].mxu0
        %2475 = vmatprep.mubr.f32.mxu0 %v1535
        %2476 = vmatmul.mubr.f32.gmra.mrb[0].mxu0 %v1534
        %v2477 = vpop.f32.mrb[0].mxu0
        %v2478 = vadd.f32 %v2253, %v2477
        %v2479 = vpop.f32.mrb[0].mxu0
        %2480 = vmatprep.mubr.f32.mxu0 %v1544
        %2481 = vmatmul.mubr.f32.gmra.mrb[0].mxu0 %v1543
        %v2482 = vpop.f32.mrb[0].mxu0
        %v2483 = vadd.f32 %v2258, %v2482
        %v2484 = vpop.f32.mrb[0].mxu0
        %2485 = vmatprep.mubr.f32.mxu0 %v1553
        %2486 = vmatmul.mubr.f32.gmra.mrb[0].mxu0 %v1552
        %v2487 = vpop.f32.mrb[0].mxu0
        %v2488 = vadd.f32 %v2263, %v2487
        %v2489 = vpop.f32.mrb[0].mxu0
        %2490 = vmatprep.mubr.f32.mxu0 %v1562
        %2491 = vmatmul.mubr.f32.gmra.mrb[0].mxu0 %v1561
        %v2492 = vpop.f32.mrb[0].mxu0
        %v2493 = vadd.f32 %v2268, %v2492
        %v2494 = vpop.f32.mrb[0].mxu0
        %2495 = vmatprep.mubr.f32.mxu0 %v1571
        %2496 = vmatmul.mubr.f32.gmra.mrb[0].mxu0 %v1570
        %v2497 = vpop.f32.mrb[0].mxu0
        %v2498 = vadd.f32 %v2273, %v2497
        %v2499 = vpop.f32.mrb[0].mxu0
        %2500 = vmatprep.mubr.f32.mxu0 %v1580
        %2501 = vmatmul.mubr.f32.gmra.mrb[0].mxu0 %v1579
        %v2502 = vpop.f32.mrb[0].mxu0
        %v2503 = vadd.f32 %v2278, %v2502
        %v2504 = vpop.f32.mrb[0].mxu0
        %2505 = vmatprep.mubr.f32.mxu0 %v1589
        %2506 = vmatmul.mubr.f32.gmra.mrb[0].mxu0 %v1588
        %v2507 = vpop.f32.mrb[0].mxu0
        %v2508 = vadd.f32 %v2283, %v2507
        %v2509 = vpop.f32.mrb[0].mxu0
        %2510 = vmatprep.mubr.f32.mxu0 %v1598
        %2511 = vmatmul.mubr.f32.gmra.mrb[0].mxu0 %v1597
        %v2512 = vpop.f32.mrb[0].mxu0
        %v2513 = vadd.f32 %v2288, %v2512
        %v2514 = vpop.f32.mrb[0].mxu0
        %2515 = vmatprep.mubr.f32.mxu0 %v1607
        %2516 = vmatmul.mubr.f32.gmra.mrb[0].mxu0 %v1606
        %v2517 = vpop.f32.mrb[0].mxu0
        %v2518 = vadd.f32 %v2293, %v2517
        %v2519 = vpop.f32.mrb[0].mxu0
        %2520 = vmatprep.mubr.f32.mxu0 %v1616
        %2521 = vmatmul.mubr.f32.gmra.mrb[0].mxu0 %v1615
        %v2522 = vpop.f32.mrb[0].mxu0
        %v2523 = vadd.f32 %v2298, %v2522
        %v2524 = vpop.f32.mrb[0].mxu0
        %2525 = vmatprep.mubr.f32.mxu0 %v1625
        %2526 = vmatmul.mubr.f32.gmra.mrb[0].mxu0 %v1624
        %v2527 = vpop.f32.mrb[0].mxu0
        %v2528 = vadd.f32 %v2303, %v2527
        %v2529 = vpop.f32.mrb[0].mxu0
        %2530 = vmatprep.mubr.f32.mxu0 %v1634
        %2531 = vmatmul.mubr.f32.gmra.mrb[0].mxu0 %v1633
        %v2532 = vpop.f32.mrb[0].mxu0
        %v2533 = vadd.f32 %v2308, %v2532
        %v2534 = vpop.f32.mrb[0].mxu0
        %2535 = vmatprep.mubr.f32.mxu0 %v1643
        %2536 = vmatmul.mubr.f32.gmra.mrb[0].mxu0 %v1642
        %v2537 = vpop.f32.mrb[0].mxu0
        %v2538 = vadd.f32 %v2313, %v2537
        %v2539 = vpop.f32.mrb[0].mxu0
        %2540 = vmatprep.mubr.f32.mxu0 %v1652
        %2541 = vmatmul.mubr.f32.gmra.mrb[0].mxu0 %v1651
        %v2542 = vpop.f32.mrb[0].mxu0
        %v2543 = vadd.f32 %v2318, %v2542
        %v2544 = vpop.f32.mrb[0].mxu0
        %2545 = vmatprep.mubr.f32.mxu0 %v1661
        %2546 = vmatmul.mubr.f32.gmra.mrb[0].mxu0 %v1660
        %v2547 = vpop.f32.mrb[0].mxu0
        %v2548 = vadd.f32 %v2323, %v2547
        %v2549 = vpop.f32.mrb[0].mxu0
        %2550 = vmatprep.mubr.f32.mxu0 %v1670
        %2551 = vmatmul.mubr.f32.gmra.mrb[0].mxu0 %v1669
        %v2552 = vpop.f32.mrb[0].mxu0
        %v2553 = vadd.f32 %v2328, %v2552
        %v2554 = vpop.f32.mrb[0].mxu0
        %2555 = vmatprep.mubr.f32.mxu0 %v1679
        %2556 = vmatmul.mubr.f32.gmra.mrb[0].mxu0 %v1678
        %v2557 = vpop.f32.mrb[0].mxu0
        %v2558 = vadd.f32 %v2333, %v2557
        %v2559 = vpop.f32.mrb[0].mxu0
        %2560 = vmatprep.mubr.f32.mxu0 %v1688
        %2561 = vmatmul.mubr.f32.gmra.mrb[0].mxu0 %v1687
        %v2562 = vpop.f32.mrb[0].mxu0
        %v2563 = vadd.f32 %v2338, %v2562
        %v2564 = vpop.f32.mrb[0].mxu0
        %2565 = vmatprep.mubr.f32.mxu0 %v1697
        %2566 = vmatmul.mubr.f32.gmra.mrb[0].mxu0 %v1696
        %v2567 = vpop.f32.mrb[0].mxu0
        %v2568 = vadd.f32 %v2343, %v2567
        %v2569 = vpop.f32.mrb[0].mxu0
        %2570 = vmatprep.mubr.f32.mxu0 %v1706
        %2571 = vmatmul.mubr.f32.gmra.mrb[0].mxu0 %v1705
        %v2572 = vpop.f32.mrb[0].mxu0
        %v2573 = vadd.f32 %v2348, %v2572
        %v2574 = vpop.f32.mrb[0].mxu0
        %2575 = vmatprep.mubr.f32.mxu0 %v1715
        %2576 = vmatmul.mubr.f32.gmra.mrb[0].mxu0 %v1714
        %v2577 = vpop.f32.mrb[0].mxu0
        %v2578 = vadd.f32 %v2353, %v2577
        %v2579 = vpop.f32.mrb[0].mxu0
        %2580 = vmatprep.mubr.f32.mxu0 %v1724
        %2581 = vmatmul.mubr.f32.gmra.mrb[0].mxu0 %v1723
        %v2582 = vpop.f32.mrb[0].mxu0
        %v2583 = vadd.f32 %v2358, %v2582
        %v2584 = vpop.f32.mrb[0].mxu0
        %2585 = vmatprep.mubr.f32.mxu0 %v1733
        %2586 = vmatmul.mubr.f32.gmra.mrb[0].mxu0 %v1732
        %v2587 = vpop.f32.mrb[0].mxu0
        %v2588 = vadd.f32 %v2363, %v2587
        %v2589 = vpop.f32.mrb[0].mxu0
        %2590 = vmatprep.mubr.f32.mxu0 %v1742
        %2591 = vmatmul.mubr.f32.gmra.mrb[0].mxu0 %v1741
        %v2592 = vpop.f32.mrb[0].mxu0
        %v2593 = vadd.f32 %v2368, %v2592
        %v2594 = vpop.f32.mrb[0].mxu0
        %2595 = vmatprep.mubr.f32.mxu0 %v1751
        %2596 = vmatmul.mubr.f32.gmra.mrb[0].mxu0 %v1750
        %v2597 = vpop.f32.mrb[0].mxu0
        %v2598 = vadd.f32 %v2373, %v2597
        %v2599 = vpop.f32.mrb[0].mxu0
        %2600 = vmatprep.mubr.f32.mxu0 %v1760
        %2601 = vmatmul.mubr.f32.gmra.mrb[0].mxu0 %v1759
        %v2602 = vpop.f32.mrb[0].mxu0
        %v2603 = vadd.f32 %v2378, %v2602
        %v2604 = vpop.f32.mrb[0].mxu0
        %2605 = vmatprep.mubr.f32.mxu0 %v1769
        %2606 = vmatmul.mubr.f32.gmra.mrb[0].mxu0 %v1768
        %v2607 = vpop.f32.mrb[0].mxu0
        %v2608 = vadd.f32 %v2383, %v2607
        %v2609 = vpop.f32.mrb[0].mxu0
        %2610 = vmatprep.mubr.f32.mxu0 %v1778
        %2611 = vmatmul.mubr.f32.gmra.mrb[0].mxu0 %v1777
        %v2612 = vpop.f32.mrb[0].mxu0
        %v2613 = vadd.f32 %v2388, %v2612
        %v2614 = vpop.f32.mrb[0].mxu0
        %2615 = vmatprep.mubr.f32.mxu0 %v1787
        %2616 = vmatmul.mubr.f32.gmra.mrb[0].mxu0 %v1786
        %v2617 = vpop.f32.mrb[0].mxu0
        %v2618 = vadd.f32 %v2393, %v2617
        %v2619 = vpop.f32.mrb[0].mxu0
        %2620 = vmatprep.mubr.f32.mxu0 %v1796
        %2621 = vmatmul.mubr.f32.gmra.mrb[0].mxu0 %v1795
        %v2622 = vpop.f32.mrb[0].mxu0
        %v2623 = vadd.f32 %v2398, %v2622
        %v2624 = vpop.f32.mrb[0].mxu0
        %2625 = vdwg.mxu0
        %2626 = vmatprep.subr.mxu0 0.0
        %2627 = vmatpush1.msra.mxu0 %v1896
        %2628 = vmatprep.subr.mxu0 0.0
        %2629 = vmatpush1.msra.mxu0 %v1897
        %2630 = vmatprep.subr.mxu0 0.0
        %2631 = vmatpush1.msra.mxu0 %v1898
        %2632 = vmatprep.subr.mxu0 0.0
        %2633 = vmatpush1.msra.mxu0 %v1899
        %2634 = vmatprep.subr.mxu0 0.0
        %2635 = vmatpush1.msra.mxu0 %v1900
        %2636 = vmatprep.subr.mxu0 0.0
        %2637 = vmatpush1.msra.mxu0 %v1901
        %2638 = vmatprep.subr.mxu0 0.0
        %2639 = vmatpush1.msra.mxu0 %v1902
        %2640 = vmatprep.subr.mxu0 0.0
        %2641 = vmatpush1.msra.mxu0 %v1903
        %2642 = vmatprep.subr.mxu0 0.0
        %2643 = vmatpush1.msra.mxu0 %v1904
        %2644 = vmatprep.subr.mxu0 0.0
        %2645 = vmatpush1.msra.mxu0 %v1905
        %2646 = vmatprep.subr.mxu0 0.0
        %2647 = vmatpush1.msra.mxu0 %v1906
        %2648 = vmatprep.subr.mxu0 0.0
        %2649 = vmatpush1.msra.mxu0 %v1907
        %2650 = vmatprep.subr.mxu0 0.0
        %2651 = vmatpush1.msra.mxu0 %v1908
        %2652 = vmatprep.subr.mxu0 0.0
        %2653 = vmatpush1.msra.mxu0 %v1909
        %2654 = vmatprep.subr.mxu0 0.0
        %2655 = vmatpush1.msra.mxu0 %v1910
        %2656 = vmatprep.subr.mxu0 0.0
        %2657 = vmatpush1.msra.mxu0 %v1911
        %2658 = vmatprep.subr.mxu0 0.0
        %2659 = vmatpush1.msra.mxu0 %v1912
        %2660 = vmatprep.subr.mxu0 0.0
        %2661 = vmatpush1.msra.mxu0 %v1913
        %2662 = vmatprep.subr.mxu0 0.0
        %2663 = vmatpush1.msra.mxu0 %v1914
        %2664 = vmatprep.subr.mxu0 0.0
        %2665 = vmatpush1.msra.mxu0 %v1915
        %2666 = vmatprep.subr.mxu0 0.0
        %2667 = vmatpush1.msra.mxu0 %v1916
        %2668 = vmatprep.subr.mxu0 0.0
        %2669 = vmatpush1.msra.mxu0 %v1917
        %2670 = vmatprep.subr.mxu0 0.0
        %2671 = vmatpush1.msra.mxu0 %v1918
        %2672 = vmatprep.subr.mxu0 0.0
        %2673 = vmatpush1.msra.mxu0 %v1919
        %2674 = vmatprep.subr.mxu0 0.0
        %2675 = vmatpush1.msra.mxu0 %v1920
        %2676 = vmatprep.subr.mxu0 0.0
        %2677 = vmatpush1.msra.mxu0 %v1921
        %2678 = vmatprep.subr.mxu0 0.0
        %2679 = vmatpush1.msra.mxu0 %v1922
        %2680 = vmatprep.subr.mxu0 0.0
        %2681 = vmatpush1.msra.mxu0 %v1923
        %2682 = vmatprep.subr.mxu0 0.0
        %2683 = vmatpush1.msra.mxu0 %v1924
        %2684 = vmatprep.subr.mxu0 0.0
        %2685 = vmatpush1.msra.mxu0 %v1925
        %2686 = vmatprep.subr.mxu0 0.0
        %2687 = vmatpush1.msra.mxu0 %v1926
        %2688 = vmatprep.subr.mxu0 0.0
        %2689 = vmatpush1.msra.mxu0 %v1927
        %2690 = vmatprep.mubr.f32.mxu0 %v1519
        %2691 = vmatmul.mubr.f32.gmra.mrb[0].mxu0 %v1518
        %v2692 = vpop.f32.mrb[0].mxu0
        %v2693 = vadd.f32 %v2468, %v2692
        %v2694 = vpop.f32.mrb[0].mxu0
        %2695 = vmatprep.mubr.f32.mxu0 %v1528
        %2696 = vmatmul.mubr.f32.gmra.mrb[0].mxu0 %v1527
        %v2697 = vpop.f32.mrb[0].mxu0
        %v2698 = vadd.f32 %v2473, %v2697
        %v2699 = vpop.f32.mrb[0].mxu0
        %2700 = vmatprep.mubr.f32.mxu0 %v1537
        %2701 = vmatmul.mubr.f32.gmra.mrb[0].mxu0 %v1536
        %v2702 = vpop.f32.mrb[0].mxu0
        %v2703 = vadd.f32 %v2478, %v2702
        %v2704 = vpop.f32.mrb[0].mxu0
        %2705 = vmatprep.mubr.f32.mxu0 %v1546
        %2706 = vmatmul.mubr.f32.gmra.mrb[0].mxu0 %v1545
        %v2707 = vpop.f32.mrb[0].mxu0
        %v2708 = vadd.f32 %v2483, %v2707
        %v2709 = vpop.f32.mrb[0].mxu0
        %2710 = vmatprep.mubr.f32.mxu0 %v1555
        %2711 = vmatmul.mubr.f32.gmra.mrb[0].mxu0 %v1554
        %v2712 = vpop.f32.mrb[0].mxu0
        %v2713 = vadd.f32 %v2488, %v2712
        %v2714 = vpop.f32.mrb[0].mxu0
        %2715 = vmatprep.mubr.f32.mxu0 %v1564
        %2716 = vmatmul.mubr.f32.gmra.mrb[0].mxu0 %v1563
        %v2717 = vpop.f32.mrb[0].mxu0
        %v2718 = vadd.f32 %v2493, %v2717
        %v2719 = vpop.f32.mrb[0].mxu0
        %2720 = vmatprep.mubr.f32.mxu0 %v1573
        %2721 = vmatmul.mubr.f32.gmra.mrb[0].mxu0 %v1572
        %v2722 = vpop.f32.mrb[0].mxu0
        %v2723 = vadd.f32 %v2498, %v2722
        %v2724 = vpop.f32.mrb[0].mxu0
        %2725 = vmatprep.mubr.f32.mxu0 %v1582
        %2726 = vmatmul.mubr.f32.gmra.mrb[0].mxu0 %v1581
        %v2727 = vpop.f32.mrb[0].mxu0
        %v2728 = vadd.f32 %v2503, %v2727
        %v2729 = vpop.f32.mrb[0].mxu0
        %2730 = vmatprep.mubr.f32.mxu0 %v1591
        %2731 = vmatmul.mubr.f32.gmra.mrb[0].mxu0 %v1590
        %v2732 = vpop.f32.mrb[0].mxu0
        %v2733 = vadd.f32 %v2508, %v2732
        %v2734 = vpop.f32.mrb[0].mxu0
        %2735 = vmatprep.mubr.f32.mxu0 %v1600
        %2736 = vmatmul.mubr.f32.gmra.mrb[0].mxu0 %v1599
        %v2737 = vpop.f32.mrb[0].mxu0
        %v2738 = vadd.f32 %v2513, %v2737
        %v2739 = vpop.f32.mrb[0].mxu0
        %2740 = vmatprep.mubr.f32.mxu0 %v1609
        %2741 = vmatmul.mubr.f32.gmra.mrb[0].mxu0 %v1608
        %v2742 = vpop.f32.mrb[0].mxu0
        %v2743 = vadd.f32 %v2518, %v2742
        %v2744 = vpop.f32.mrb[0].mxu0
        %2745 = vmatprep.mubr.f32.mxu0 %v1618
        %2746 = vmatmul.mubr.f32.gmra.mrb[0].mxu0 %v1617
        %v2747 = vpop.f32.mrb[0].mxu0
        %v2748 = vadd.f32 %v2523, %v2747
        %v2749 = vpop.f32.mrb[0].mxu0
        %2750 = vmatprep.mubr.f32.mxu0 %v1627
        %2751 = vmatmul.mubr.f32.gmra.mrb[0].mxu0 %v1626
        %v2752 = vpop.f32.mrb[0].mxu0
        %v2753 = vadd.f32 %v2528, %v2752
        %v2754 = vpop.f32.mrb[0].mxu0
        %2755 = vmatprep.mubr.f32.mxu0 %v1636
        %2756 = vmatmul.mubr.f32.gmra.mrb[0].mxu0 %v1635
        %v2757 = vpop.f32.mrb[0].mxu0
        %v2758 = vadd.f32 %v2533, %v2757
        %v2759 = vpop.f32.mrb[0].mxu0
        %2760 = vmatprep.mubr.f32.mxu0 %v1645
        %2761 = vmatmul.mubr.f32.gmra.mrb[0].mxu0 %v1644
        %v2762 = vpop.f32.mrb[0].mxu0
        %v2763 = vadd.f32 %v2538, %v2762
        %v2764 = vpop.f32.mrb[0].mxu0
        %2765 = vmatprep.mubr.f32.mxu0 %v1654
        %2766 = vmatmul.mubr.f32.gmra.mrb[0].mxu0 %v1653
        %v2767 = vpop.f32.mrb[0].mxu0
        %v2768 = vadd.f32 %v2543, %v2767
        %v2769 = vpop.f32.mrb[0].mxu0
        %2770 = vmatprep.mubr.f32.mxu0 %v1663
        %2771 = vmatmul.mubr.f32.gmra.mrb[0].mxu0 %v1662
        %v2772 = vpop.f32.mrb[0].mxu0
        %v2773 = vadd.f32 %v2548, %v2772
        %v2774 = vpop.f32.mrb[0].mxu0
        %2775 = vmatprep.mubr.f32.mxu0 %v1672
        %2776 = vmatmul.mubr.f32.gmra.mrb[0].mxu0 %v1671
        %v2777 = vpop.f32.mrb[0].mxu0
        %v2778 = vadd.f32 %v2553, %v2777
        %v2779 = vpop.f32.mrb[0].mxu0
        %2780 = vmatprep.mubr.f32.mxu0 %v1681
        %2781 = vmatmul.mubr.f32.gmra.mrb[0].mxu0 %v1680
        %v2782 = vpop.f32.mrb[0].mxu0
        %v2783 = vadd.f32 %v2558, %v2782
        %v2784 = vpop.f32.mrb[0].mxu0
        %2785 = vmatprep.mubr.f32.mxu0 %v1690
        %2786 = vmatmul.mubr.f32.gmra.mrb[0].mxu0 %v1689
        %v2787 = vpop.f32.mrb[0].mxu0
        %v2788 = vadd.f32 %v2563, %v2787
        %v2789 = vpop.f32.mrb[0].mxu0
        %2790 = vmatprep.mubr.f32.mxu0 %v1699
        %2791 = vmatmul.mubr.f32.gmra.mrb[0].mxu0 %v1698
        %v2792 = vpop.f32.mrb[0].mxu0
        %v2793 = vadd.f32 %v2568, %v2792
        %v2794 = vpop.f32.mrb[0].mxu0
        %2795 = vmatprep.mubr.f32.mxu0 %v1708
        %2796 = vmatmul.mubr.f32.gmra.mrb[0].mxu0 %v1707
        %v2797 = vpop.f32.mrb[0].mxu0
        %v2798 = vadd.f32 %v2573, %v2797
        %v2799 = vpop.f32.mrb[0].mxu0
        %2800 = vmatprep.mubr.f32.mxu0 %v1717
        %2801 = vmatmul.mubr.f32.gmra.mrb[0].mxu0 %v1716
        %v2802 = vpop.f32.mrb[0].mxu0
        %v2803 = vadd.f32 %v2578, %v2802
        %v2804 = vpop.f32.mrb[0].mxu0
        %2805 = vmatprep.mubr.f32.mxu0 %v1726
        %2806 = vmatmul.mubr.f32.gmra.mrb[0].mxu0 %v1725
        %v2807 = vpop.f32.mrb[0].mxu0
        %v2808 = vadd.f32 %v2583, %v2807
        %v2809 = vpop.f32.mrb[0].mxu0
        %2810 = vmatprep.mubr.f32.mxu0 %v1735
        %2811 = vmatmul.mubr.f32.gmra.mrb[0].mxu0 %v1734
        %v2812 = vpop.f32.mrb[0].mxu0
        %v2813 = vadd.f32 %v2588, %v2812
        %v2814 = vpop.f32.mrb[0].mxu0
        %2815 = vmatprep.mubr.f32.mxu0 %v1744
        %2816 = vmatmul.mubr.f32.gmra.mrb[0].mxu0 %v1743
        %v2817 = vpop.f32.mrb[0].mxu0
        %v2818 = vadd.f32 %v2593, %v2817
        %v2819 = vpop.f32.mrb[0].mxu0
        %2820 = vmatprep.mubr.f32.mxu0 %v1753
        %2821 = vmatmul.mubr.f32.gmra.mrb[0].mxu0 %v1752
        %v2822 = vpop.f32.mrb[0].mxu0
        %v2823 = vadd.f32 %v2598, %v2822
        %v2824 = vpop.f32.mrb[0].mxu0
        %2825 = vmatprep.mubr.f32.mxu0 %v1762
        %2826 = vmatmul.mubr.f32.gmra.mrb[0].mxu0 %v1761
        %v2827 = vpop.f32.mrb[0].mxu0
        %v2828 = vadd.f32 %v2603, %v2827
        %v2829 = vpop.f32.mrb[0].mxu0
        %2830 = vmatprep.mubr.f32.mxu0 %v1771
        %2831 = vmatmul.mubr.f32.gmra.mrb[0].mxu0 %v1770
        %v2832 = vpop.f32.mrb[0].mxu0
        %v2833 = vadd.f32 %v2608, %v2832
        %v2834 = vpop.f32.mrb[0].mxu0
        %2835 = vmatprep.mubr.f32.mxu0 %v1780
        %2836 = vmatmul.mubr.f32.gmra.mrb[0].mxu0 %v1779
        %v2837 = vpop.f32.mrb[0].mxu0
        %v2838 = vadd.f32 %v2613, %v2837
        %v2839 = vpop.f32.mrb[0].mxu0
        %2840 = vmatprep.mubr.f32.mxu0 %v1789
        %2841 = vmatmul.mubr.f32.gmra.mrb[0].mxu0 %v1788
        %v2842 = vpop.f32.mrb[0].mxu0
        %v2843 = vadd.f32 %v2618, %v2842
        %v2844 = vpop.f32.mrb[0].mxu0
        %2845 = vmatprep.mubr.f32.mxu0 %v1798
        %2846 = vmatmul.mubr.f32.gmra.mrb[0].mxu0 %v1797
        %v2847 = vpop.f32.mrb[0].mxu0
        %v2848 = vadd.f32 %v2623, %v2847
        %v2849 = vpop.f32.mrb[0].mxu0
        %2850 = vdwg.mxu0
        %2851 = vmatprep.subr.mxu0 0.0
        %2852 = vmatpush1.msra.mxu0 %v1928
        %2853 = vmatprep.subr.mxu0 0.0
        %2854 = vmatpush1.msra.mxu0 %v1929
        %2855 = vmatprep.subr.mxu0 0.0
        %2856 = vmatpush1.msra.mxu0 %v1930
        %2857 = vmatprep.subr.mxu0 0.0
        %2858 = vmatpush1.msra.mxu0 %v1931
        %2859 = vmatprep.subr.mxu0 0.0
        %2860 = vmatpush1.msra.mxu0 %v1932
        %2861 = vmatprep.subr.mxu0 0.0
        %2862 = vmatpush1.msra.mxu0 %v1933
        %2863 = vmatprep.subr.mxu0 0.0
        %2864 = vmatpush1.msra.mxu0 %v1934
        %2865 = vmatprep.subr.mxu0 0.0
        %2866 = vmatpush1.msra.mxu0 %v1935
        %2867 = vmatprep.subr.mxu0 0.0
        %2868 = vmatpush1.msra.mxu0 %v1936
        %2869 = vmatprep.subr.mxu0 0.0
        %2870 = vmatpush1.msra.mxu0 %v1937
        %2871 = vmatprep.subr.mxu0 0.0
        %2872 = vmatpush1.msra.mxu0 %v1938
        %2873 = vmatprep.subr.mxu0 0.0
        %2874 = vmatpush1.msra.mxu0 %v1939
        %2875 = vmatprep.subr.mxu0 0.0
        %2876 = vmatpush1.msra.mxu0 %v1940
        %2877 = vmatprep.subr.mxu0 0.0
        %2878 = vmatpush1.msra.mxu0 %v1941
        %2879 = vmatprep.subr.mxu0 0.0
        %2880 = vmatpush1.msra.mxu0 %v1942
        %2881 = vmatprep.subr.mxu0 0.0
        %2882 = vmatpush1.msra.mxu0 %v1943
        %2883 = vmatprep.subr.mxu0 0.0
        %2884 = vmatpush1.msra.mxu0 0.0
        %2885 = vmatprep.subr.mxu0 0.0
        %2886 = vmatpush1.msra.mxu0 0.0
        %2887 = vmatprep.subr.mxu0 0.0
        %2888 = vmatpush1.msra.mxu0 0.0
        %2889 = vmatprep.subr.mxu0 0.0
        %2890 = vmatpush1.msra.mxu0 0.0
        %2891 = vmatprep.subr.mxu0 0.0
        %2892 = vmatpush1.msra.mxu0 0.0
        %2893 = vmatprep.subr.mxu0 0.0
        %2894 = vmatpush1.msra.mxu0 0.0
        %2895 = vmatprep.subr.mxu0 0.0
        %2896 = vmatpush1.msra.mxu0 0.0
        %2897 = vmatprep.subr.mxu0 0.0
        %2898 = vmatpush1.msra.mxu0 0.0
        %2899 = vmatprep.subr.mxu0 0.0
        %2900 = vmatpush1.msra.mxu0 0.0
        %2901 = vmatprep.subr.mxu0 0.0
        %2902 = vmatpush1.msra.mxu0 0.0
        %2903 = vmatprep.subr.mxu0 0.0
        %2904 = vmatpush1.msra.mxu0 0.0
        %2905 = vmatprep.subr.mxu0 0.0
        %2906 = vmatpush1.msra.mxu0 0.0
        %2907 = vmatprep.subr.mxu0 0.0
        %2908 = vmatpush1.msra.mxu0 0.0
        %2909 = vmatprep.subr.mxu0 0.0
        %2910 = vmatpush1.msra.mxu0 0.0
        %2911 = vmatprep.subr.mxu0 0.0
        %2912 = vmatpush1.msra.mxu0 0.0
        %2913 = vmatprep.subr.mxu0 0.0
        %2914 = vmatpush1.msra.mxu0 0.0
        %2915 = vmatprep.mubr.f32.mxu0 0.0
        %2916 = vmatmul.mubr.f32.gmra.mrb[0].mxu0 %v1520
        %v2917 = vpop.f32.mrb[0].mxu0
        %v2918 = vadd.f32 %v2693, %v2917
        %v2919 = vpop.f32.mrb[0].mxu0
        %2920 = vmatprep.mubr.f32.mxu0 0.0
        %2921 = vmatmul.mubr.f32.gmra.mrb[0].mxu0 %v1529
        %v2922 = vpop.f32.mrb[0].mxu0
        %v2923 = vadd.f32 %v2698, %v2922
        %v2924 = vpop.f32.mrb[0].mxu0
        %2925 = vmatprep.mubr.f32.mxu0 0.0
        %2926 = vmatmul.mubr.f32.gmra.mrb[0].mxu0 %v1538
        %v2927 = vpop.f32.mrb[0].mxu0
        %v2928 = vadd.f32 %v2703, %v2927
        %v2929 = vpop.f32.mrb[0].mxu0
        %2930 = vmatprep.mubr.f32.mxu0 0.0
        %2931 = vmatmul.mubr.f32.gmra.mrb[0].mxu0 %v1547
        %v2932 = vpop.f32.mrb[0].mxu0
        %v2933 = vadd.f32 %v2708, %v2932
        %v2934 = vpop.f32.mrb[0].mxu0
        %2935 = vmatprep.mubr.f32.mxu0 0.0
        %2936 = vmatmul.mubr.f32.gmra.mrb[0].mxu0 %v1556
        %v2937 = vpop.f32.mrb[0].mxu0
        %v2938 = vadd.f32 %v2713, %v2937
        %v2939 = vpop.f32.mrb[0].mxu0
        %2940 = vmatprep.mubr.f32.mxu0 0.0
        %2941 = vmatmul.mubr.f32.gmra.mrb[0].mxu0 %v1565
        %v2942 = vpop.f32.mrb[0].mxu0
        %v2943 = vadd.f32 %v2718, %v2942
        %v2944 = vpop.f32.mrb[0].mxu0
        %2945 = vmatprep.mubr.f32.mxu0 0.0
        %2946 = vmatmul.mubr.f32.gmra.mrb[0].mxu0 %v1574
        %v2947 = vpop.f32.mrb[0].mxu0
        %v2948 = vadd.f32 %v2723, %v2947
        %v2949 = vpop.f32.mrb[0].mxu0
        %2950 = vmatprep.mubr.f32.mxu0 0.0
        %2951 = vmatmul.mubr.f32.gmra.mrb[0].mxu0 %v1583
        %v2952 = vpop.f32.mrb[0].mxu0
        %v2953 = vadd.f32 %v2728, %v2952
        %v2954 = vpop.f32.mrb[0].mxu0
        %2955 = vmatprep.mubr.f32.mxu0 0.0
        %2956 = vmatmul.mubr.f32.gmra.mrb[0].mxu0 %v1592
        %v2957 = vpop.f32.mrb[0].mxu0
        %v2958 = vadd.f32 %v2733, %v2957
        %v2959 = vpop.f32.mrb[0].mxu0
        %2960 = vmatprep.mubr.f32.mxu0 0.0
        %2961 = vmatmul.mubr.f32.gmra.mrb[0].mxu0 %v1601
        %v2962 = vpop.f32.mrb[0].mxu0
        %v2963 = vadd.f32 %v2738, %v2962
        %v2964 = vpop.f32.mrb[0].mxu0
        %2965 = vmatprep.mubr.f32.mxu0 0.0
        %2966 = vmatmul.mubr.f32.gmra.mrb[0].mxu0 %v1610
        %v2967 = vpop.f32.mrb[0].mxu0
        %v2968 = vadd.f32 %v2743, %v2967
        %v2969 = vpop.f32.mrb[0].mxu0
        %2970 = vmatprep.mubr.f32.mxu0 0.0
        %2971 = vmatmul.mubr.f32.gmra.mrb[0].mxu0 %v1619
        %v2972 = vpop.f32.mrb[0].mxu0
        %v2973 = vadd.f32 %v2748, %v2972
        %v2974 = vpop.f32.mrb[0].mxu0
        %2975 = vmatprep.mubr.f32.mxu0 0.0
        %2976 = vmatmul.mubr.f32.gmra.mrb[0].mxu0 %v1628
        %v2977 = vpop.f32.mrb[0].mxu0
        %v2978 = vadd.f32 %v2753, %v2977
        %v2979 = vpop.f32.mrb[0].mxu0
        %2980 = vmatprep.mubr.f32.mxu0 0.0
        %2981 = vmatmul.mubr.f32.gmra.mrb[0].mxu0 %v1637
        %v2982 = vpop.f32.mrb[0].mxu0
        %v2983 = vadd.f32 %v2758, %v2982
        %v2984 = vpop.f32.mrb[0].mxu0
        %2985 = vmatprep.mubr.f32.mxu0 0.0
        %2986 = vmatmul.mubr.f32.gmra.mrb[0].mxu0 %v1646
        %v2987 = vpop.f32.mrb[0].mxu0
        %v2988 = vadd.f32 %v2763, %v2987
        %v2989 = vpop.f32.mrb[0].mxu0
        %2990 = vmatprep.mubr.f32.mxu0 0.0
        %2991 = vmatmul.mubr.f32.gmra.mrb[0].mxu0 %v1655
        %v2992 = vpop.f32.mrb[0].mxu0
        %v2993 = vadd.f32 %v2768, %v2992
        %v2994 = vpop.f32.mrb[0].mxu0
        %2995 = vmatprep.mubr.f32.mxu0 0.0
        %2996 = vmatmul.mubr.f32.gmra.mrb[0].mxu0 %v1664
        %v2997 = vpop.f32.mrb[0].mxu0
        %v2998 = vadd.f32 %v2773, %v2997
        %v2999 = vpop.f32.mrb[0].mxu0
        %3000 = vmatprep.mubr.f32.mxu0 0.0
        %3001 = vmatmul.mubr.f32.gmra.mrb[0].mxu0 %v1673
        %v3002 = vpop.f32.mrb[0].mxu0
        %v3003 = vadd.f32 %v2778, %v3002
        %v3004 = vpop.f32.mrb[0].mxu0
        %3005 = vmatprep.mubr.f32.mxu0 0.0
        %3006 = vmatmul.mubr.f32.gmra.mrb[0].mxu0 %v1682
        %v3007 = vpop.f32.mrb[0].mxu0
        %v3008 = vadd.f32 %v2783, %v3007
        %v3009 = vpop.f32.mrb[0].mxu0
        %3010 = vmatprep.mubr.f32.mxu0 0.0
        %3011 = vmatmul.mubr.f32.gmra.mrb[0].mxu0 %v1691
        %v3012 = vpop.f32.mrb[0].mxu0
        %v3013 = vadd.f32 %v2788, %v3012
        %v3014 = vpop.f32.mrb[0].mxu0
        %3015 = vmatprep.mubr.f32.mxu0 0.0
        %3016 = vmatmul.mubr.f32.gmra.mrb[0].mxu0 %v1700
        %v3017 = vpop.f32.mrb[0].mxu0
        %v3018 = vadd.f32 %v2793, %v3017
        %v3019 = vpop.f32.mrb[0].mxu0
        %3020 = vmatprep.mubr.f32.mxu0 0.0
        %3021 = vmatmul.mubr.f32.gmra.mrb[0].mxu0 %v1709
        %v3022 = vpop.f32.mrb[0].mxu0
        %v3023 = vadd.f32 %v2798, %v3022
        %v3024 = vpop.f32.mrb[0].mxu0
        %3025 = vmatprep.mubr.f32.mxu0 0.0
        %3026 = vmatmul.mubr.f32.gmra.mrb[0].mxu0 %v1718
        %v3027 = vpop.f32.mrb[0].mxu0
        %v3028 = vadd.f32 %v2803, %v3027
        %v3029 = vpop.f32.mrb[0].mxu0
        %3030 = vmatprep.mubr.f32.mxu0 0.0
        %3031 = vmatmul.mubr.f32.gmra.mrb[0].mxu0 %v1727
        %v3032 = vpop.f32.mrb[0].mxu0
        %v3033 = vadd.f32 %v2808, %v3032
        %v3034 = vpop.f32.mrb[0].mxu0
        %3035 = vmatprep.mubr.f32.mxu0 0.0
        %3036 = vmatmul.mubr.f32.gmra.mrb[0].mxu0 %v1736
        %v3037 = vpop.f32.mrb[0].mxu0
        %v3038 = vadd.f32 %v2813, %v3037
        %v3039 = vpop.f32.mrb[0].mxu0
        %3040 = vmatprep.mubr.f32.mxu0 0.0
        %3041 = vmatmul.mubr.f32.gmra.mrb[0].mxu0 %v1745
        %v3042 = vpop.f32.mrb[0].mxu0
        %v3043 = vadd.f32 %v2818, %v3042
        %v3044 = vpop.f32.mrb[0].mxu0
        %3045 = vmatprep.mubr.f32.mxu0 0.0
        %3046 = vmatmul.mubr.f32.gmra.mrb[0].mxu0 %v1754
        %v3047 = vpop.f32.mrb[0].mxu0
        %v3048 = vadd.f32 %v2823, %v3047
        %v3049 = vpop.f32.mrb[0].mxu0
        %3050 = vmatprep.mubr.f32.mxu0 0.0
        %3051 = vmatmul.mubr.f32.gmra.mrb[0].mxu0 %v1763
        %v3052 = vpop.f32.mrb[0].mxu0
        %v3053 = vadd.f32 %v2828, %v3052
        %v3054 = vpop.f32.mrb[0].mxu0
        %3055 = vmatprep.mubr.f32.mxu0 0.0
        %3056 = vmatmul.mubr.f32.gmra.mrb[0].mxu0 %v1772
        %v3057 = vpop.f32.mrb[0].mxu0
        %v3058 = vadd.f32 %v2833, %v3057
        %v3059 = vpop.f32.mrb[0].mxu0
        %3060 = vmatprep.mubr.f32.mxu0 0.0
        %3061 = vmatmul.mubr.f32.gmra.mrb[0].mxu0 %v1781
        %v3062 = vpop.f32.mrb[0].mxu0
        %v3063 = vadd.f32 %v2838, %v3062
        %v3064 = vpop.f32.mrb[0].mxu0
        %3065 = vmatprep.mubr.f32.mxu0 0.0
        %3066 = vmatmul.mubr.f32.gmra.mrb[0].mxu0 %v1790
        %v3067 = vpop.f32.mrb[0].mxu0
        %v3068 = vadd.f32 %v2843, %v3067
        %v3069 = vpop.f32.mrb[0].mxu0
        %3070 = vmatprep.mubr.f32.mxu0 0.0
        %3071 = vmatmul.mubr.f32.gmra.mrb[0].mxu0 %v1799
        %v3072 = vpop.f32.mrb[0].mxu0
        %v3073 = vadd.f32 %v2848, %v3072
        %v3074 = vpop.f32.mrb[0].mxu0
        %3075 = vdwg.mxu0
        %v3076 = vmax.f32 %v2918, 0.0
        %v3077 = vmax.f32 %v2923, 0.0
        %v3078 = vmax.f32 %v2928, 0.0
        %v3079 = vmax.f32 %v2933, 0.0
        %v3080 = vmax.f32 %v2938, 0.0
        %v3081 = vmax.f32 %v2943, 0.0
        %v3082 = vmax.f32 %v2948, 0.0
        %v3083 = vmax.f32 %v2953, 0.0
        %v3084 = vmax.f32 %v2958, 0.0
        %v3085 = vmax.f32 %v2963, 0.0
        %v3086 = vmax.f32 %v2968, 0.0
        %v3087 = vmax.f32 %v2973, 0.0
        %v3088 = vmax.f32 %v2978, 0.0
        %v3089 = vmax.f32 %v2983, 0.0
        %v3090 = vmax.f32 %v2988, 0.0
        %v3091 = vmax.f32 %v2993, 0.0
        %v3092 = vmax.f32 %v2998, 0.0
        %v3093 = vmax.f32 %v3003, 0.0
        %v3094 = vmax.f32 %v3008, 0.0
        %v3095 = vmax.f32 %v3013, 0.0
        %v3096 = vmax.f32 %v3018, 0.0
        %v3097 = vmax.f32 %v3023, 0.0
        %v3098 = vmax.f32 %v3028, 0.0
        %v3099 = vmax.f32 %v3033, 0.0
        %v3100 = vmax.f32 %v3038, 0.0
        %v3101 = vmax.f32 %v3043, 0.0
        %v3102 = vmax.f32 %v3048, 0.0
        %v3103 = vmax.f32 %v3053, 0.0
        %v3104 = vmax.f32 %v3058, 0.0
        %v3105 = vmax.f32 %v3063, 0.0
        %v3106 = vmax.f32 %v3068, 0.0
        %v3107 = vmax.f32 %v3073, 0.0
        %3108 = vst [vmem:[#allocation4] sm:$0xff] 0.0
        %3109 = vst [vmem:[#allocation4 + $0x8] sm:$0xff] 0.0
        %3110 = vst [vmem:[#allocation4 + $0x10] sm:$0x3] 0.0
        %s3111 = scalar_lea.vmem [#allocation4], 408
        %3112 = vst [vmem:[%s3111] sm:$0xff] 0.0
        %3113 = vst [vmem:[%s3111 + $0x8] sm:$0xff] 0.0
        %3114 = vst [vmem:[%s3111 + $0x10] sm:$0x3] 0.0
        %3115 = vst [vmem:[#allocation4] sm:$0x1] 0.0
        %3116 = vst [vmem:[#allocation4 + $0x18] sm:$0x1] 0.0
        %3117 = vst [vmem:[#allocation4 + $0x30] sm:$0x1] 0.0
        %3118 = vst [vmem:[#allocation4 + $0x48] sm:$0x1] 0.0
        %3119 = vst [vmem:[#allocation4 + $0x60] sm:$0x1] 0.0
        %3120 = vst [vmem:[#allocation4 + $0x78] sm:$0x1] 0.0
        %3121 = vst [vmem:[#allocation4 + $0x90] sm:$0x1] 0.0
        %3122 = vst [vmem:[#allocation4 + $0xa8] sm:$0x1] 0.0
        %3123 = vst [vmem:[#allocation4 + $0xc0] sm:$0x1] 0.0
        %3124 = vst [vmem:[#allocation4 + $0xd8] sm:$0x1] 0.0
        %3125 = vst [vmem:[#allocation4 + $0xf0] sm:$0x1] 0.0
        %3126 = vst [vmem:[#allocation4 + $0x108] sm:$0x1] 0.0
        %3127 = vst [vmem:[#allocation4 + $0x120] sm:$0x1] 0.0
        %3128 = vst [vmem:[#allocation4 + $0x138] sm:$0x1] 0.0
        %3129 = vst [vmem:[#allocation4 + $0x150] sm:$0x1] 0.0
        %3130 = vst [vmem:[#allocation4 + $0x168] sm:$0x1] 0.0
        %3131 = vst [vmem:[#allocation4 + $0x180] sm:$0x1] 0.0
        %3132 = vst [vmem:[#allocation4 + $0x198] sm:$0x1] 0.0
        %3133 = vst [vmem:[#allocation4 + $0x11] sm:$0x1] 0.0
        %3134 = vst [vmem:[#allocation4 + $0x29] sm:$0x1] 0.0
        %3135 = vst [vmem:[#allocation4 + $0x41] sm:$0x1] 0.0
        %3136 = vst [vmem:[#allocation4 + $0x59] sm:$0x1] 0.0
        %3137 = vst [vmem:[#allocation4 + $0x71] sm:$0x1] 0.0
        %3138 = vst [vmem:[#allocation4 + $0x89] sm:$0x1] 0.0
        %3139 = vst [vmem:[#allocation4 + $0xa1] sm:$0x1] 0.0
        %3140 = vst [vmem:[#allocation4 + $0xb9] sm:$0x1] 0.0
        %3141 = vst [vmem:[#allocation4 + $0xd1] sm:$0x1] 0.0
        %3142 = vst [vmem:[#allocation4 + $0xe9] sm:$0x1] 0.0
        %3143 = vst [vmem:[#allocation4 + $0x101] sm:$0x1] 0.0
        %3144 = vst [vmem:[#allocation4 + $0x119] sm:$0x1] 0.0
        %3145 = vst [vmem:[#allocation4 + $0x131] sm:$0x1] 0.0
        %3146 = vst [vmem:[#allocation4 + $0x149] sm:$0x1] 0.0
        %3147 = vst [vmem:[#allocation4 + $0x161] sm:$0x1] 0.0
        %3148 = vst [vmem:[#allocation4 + $0x179] sm:$0x1] 0.0
        %3149 = vst [vmem:[#allocation4 + $0x191] sm:$0x1] 0.0
        %3150 = vst [vmem:[#allocation4 + $0x1a9] sm:$0x1] 0.0
        %s3151 = scalar_lea.vmem [#allocation4], 24
        %3152 = vst [vmem:[%s3151 + $0x1] sm:$0xff] %v3076
        %3153 = vst [vmem:[%s3151 + $0x9] sm:$0xff] %v3077
        %3154 = vst [vmem:[%s3151 + $0x19] sm:$0xff] %v3078
        %3155 = vst [vmem:[%s3151 + $0x21] sm:$0xff] %v3079
        %3156 = vst [vmem:[%s3151 + $0x31] sm:$0xff] %v3080
        %3157 = vst [vmem:[%s3151 + $0x39] sm:$0xff] %v3081
        %3158 = vst [vmem:[%s3151 + $0x49] sm:$0xff] %v3082
        %3159 = vst [vmem:[%s3151 + $0x51] sm:$0xff] %v3083
        %3160 = vst [vmem:[%s3151 + $0x61] sm:$0xff] %v3084
        %3161 = vst [vmem:[%s3151 + $0x69] sm:$0xff] %v3085
        %3162 = vst [vmem:[%s3151 + $0x79] sm:$0xff] %v3086
        %3163 = vst [vmem:[%s3151 + $0x81] sm:$0xff] %v3087
        %3164 = vst [vmem:[%s3151 + $0x91] sm:$0xff] %v3088
        %3165 = vst [vmem:[%s3151 + $0x99] sm:$0xff] %v3089
        %3166 = vst [vmem:[%s3151 + $0xa9] sm:$0xff] %v3090
        %3167 = vst [vmem:[%s3151 + $0xb1] sm:$0xff] %v3091
        %3168 = vst [vmem:[%s3151 + $0xc1] sm:$0xff] %v3092
        %3169 = vst [vmem:[%s3151 + $0xc9] sm:$0xff] %v3093
        %3170 = vst [vmem:[%s3151 + $0xd9] sm:$0xff] %v3094
        %3171 = vst [vmem:[%s3151 + $0xe1] sm:$0xff] %v3095
        %3172 = vst [vmem:[%s3151 + $0xf1] sm:$0xff] %v3096
        %3173 = vst [vmem:[%s3151 + $0xf9] sm:$0xff] %v3097
        %3174 = vst [vmem:[%s3151 + $0x109] sm:$0xff] %v3098
        %3175 = vst [vmem:[%s3151 + $0x111] sm:$0xff] %v3099
        %3176 = vst [vmem:[%s3151 + $0x121] sm:$0xff] %v3100
        %3177 = vst [vmem:[%s3151 + $0x129] sm:$0xff] %v3101
        %3178 = vst [vmem:[%s3151 + $0x139] sm:$0xff] %v3102
        %3179 = vst [vmem:[%s3151 + $0x141] sm:$0xff] %v3103
        %3180 = vst [vmem:[%s3151 + $0x151] sm:$0xff] %v3104
        %3181 = vst [vmem:[%s3151 + $0x159] sm:$0xff] %v3105
        %3182 = vst [vmem:[%s3151 + $0x169] sm:$0xff] %v3106
        %3183 = vst [vmem:[%s3151 + $0x171] sm:$0xff] %v3107
        %v3184 = vld [vmem:[#allocation4] sm:$0xff]
        %v3185 = vld [vmem:[#allocation4 + $0x8] sm:$0xff]
        %v3186 = vld [vmem:[#allocation4 + $0x18] sm:$0xff]
        %v3187 = vld [vmem:[#allocation4 + $0x20] sm:$0xff]
        %v3188 = vld [vmem:[#allocation4 + $0x30] sm:$0xff]
        %v3189 = vld [vmem:[#allocation4 + $0x38] sm:$0xff]
        %v3190 = vld [vmem:[#allocation4 + $0x48] sm:$0xff]
        %v3191 = vld [vmem:[#allocation4 + $0x50] sm:$0xff]
        %v3192 = vld [vmem:[#allocation4 + $0x60] sm:$0xff]
        %v3193 = vld [vmem:[#allocation4 + $0x68] sm:$0xff]
        %v3194 = vld [vmem:[#allocation4 + $0x78] sm:$0xff]
        %v3195 = vld [vmem:[#allocation4 + $0x80] sm:$0xff]
        %v3196 = vld [vmem:[#allocation4 + $0x90] sm:$0xff]
        %v3197 = vld [vmem:[#allocation4 + $0x98] sm:$0xff]
        %v3198 = vld [vmem:[#allocation4 + $0xa8] sm:$0xff]
        %v3199 = vld [vmem:[#allocation4 + $0xb0] sm:$0xff]
        %v3200 = vld [vmem:[#allocation4 + $0xc0] sm:$0xff]
        %v3201 = vld [vmem:[#allocation4 + $0xc8] sm:$0xff]
        %v3202 = vld [vmem:[#allocation4 + $0xd8] sm:$0xff]
        %v3203 = vld [vmem:[#allocation4 + $0xe0] sm:$0xff]
        %v3204 = vld [vmem:[#allocation4 + $0xf0] sm:$0xff]
        %v3205 = vld [vmem:[#allocation4 + $0xf8] sm:$0xff]
        %v3206 = vld [vmem:[#allocation4 + $0x108] sm:$0xff]
        %v3207 = vld [vmem:[#allocation4 + $0x110] sm:$0xff]
        %v3208 = vld [vmem:[#allocation4 + $0x120] sm:$0xff]
        %v3209 = vld [vmem:[#allocation4 + $0x128] sm:$0xff]
        %v3210 = vld [vmem:[#allocation4 + $0x138] sm:$0xff]
        %v3211 = vld [vmem:[#allocation4 + $0x140] sm:$0xff]
        %v3212 = vld [vmem:[#allocation4 + $0x150] sm:$0xff]
        %v3213 = vld [vmem:[#allocation4 + $0x158] sm:$0xff]
        %v3214 = vld [vmem:[#allocation4 + $0x168] sm:$0xff]
        %v3215 = vld [vmem:[#allocation4 + $0x170] sm:$0xff]
        %3216 = vst [vmem:[#allocation3] sm:$0xff] %v3184
        %3217 = vst [vmem:[#allocation3 + $0x48] sm:$0xff] %v3185
        %3218 = vst [vmem:[#allocation3 + $0x90] sm:$0xff] %v3186
        %3219 = vst [vmem:[#allocation3 + $0xd8] sm:$0xff] %v3187
        %3220 = vst [vmem:[#allocation3 + $0x120] sm:$0xff] %v3188
        %3221 = vst [vmem:[#allocation3 + $0x168] sm:$0xff] %v3189
        %3222 = vst [vmem:[#allocation3 + $0x1b0] sm:$0xff] %v3190
        %3223 = vst [vmem:[#allocation3 + $0x1f8] sm:$0xff] %v3191
        %3224 = vst [vmem:[#allocation3 + $0x240] sm:$0xff] %v3192
        %3225 = vst [vmem:[#allocation3 + $0x288] sm:$0xff] %v3193
        %3226 = vst [vmem:[#allocation3 + $0x2d0] sm:$0xff] %v3194
        %3227 = vst [vmem:[#allocation3 + $0x318] sm:$0xff] %v3195
        %3228 = vst [vmem:[#allocation3 + $0x360] sm:$0xff] %v3196
        %3229 = vst [vmem:[#allocation3 + $0x3a8] sm:$0xff] %v3197
        %3230 = vst [vmem:[#allocation3 + $0x3f0] sm:$0xff] %v3198
        %3231 = vst [vmem:[#allocation3 + $0x438] sm:$0xff] %v3199
        %3232 = vst [vmem:[#allocation3 + $0x480] sm:$0xff] %v3200
        %3233 = vst [vmem:[#allocation3 + $0x4c8] sm:$0xff] %v3201
        %3234 = vst [vmem:[#allocation3 + $0x510] sm:$0xff] %v3202
        %3235 = vst [vmem:[#allocation3 + $0x558] sm:$0xff] %v3203
        %3236 = vst [vmem:[#allocation3 + $0x5a0] sm:$0xff] %v3204
        %3237 = vst [vmem:[#allocation3 + $0x5e8] sm:$0xff] %v3205
        %3238 = vst [vmem:[#allocation3 + $0x630] sm:$0xff] %v3206
        %3239 = vst [vmem:[#allocation3 + $0x678] sm:$0xff] %v3207
        %3240 = vst [vmem:[#allocation3 + $0x6c0] sm:$0xff] %v3208
        %3241 = vst [vmem:[#allocation3 + $0x708] sm:$0xff] %v3209
        %3242 = vst [vmem:[#allocation3 + $0x750] sm:$0xff] %v3210
        %3243 = vst [vmem:[#allocation3 + $0x798] sm:$0xff] %v3211
        %3244 = vst [vmem:[#allocation3 + $0x7e0] sm:$0xff] %v3212
        %3245 = vst [vmem:[#allocation3 + $0x828] sm:$0xff] %v3213
        %3246 = vst [vmem:[#allocation3 + $0x870] sm:$0xff] %v3214
        %3247 = vst [vmem:[#allocation3 + $0x8b8] sm:$0xff] %v3215
        %v3248 = vld [vmem:[#allocation4 + $0x1] sm:$0xff]
        %v3249 = vld [vmem:[#allocation4 + $0x9] sm:$0xff]
        %v3250 = vld [vmem:[#allocation4 + $0x19] sm:$0xff]
        %v3251 = vld [vmem:[#allocation4 + $0x21] sm:$0xff]
        %v3252 = vld [vmem:[#allocation4 + $0x31] sm:$0xff]
        %v3253 = vld [vmem:[#allocation4 + $0x39] sm:$0xff]
        %v3254 = vld [vmem:[#allocation4 + $0x49] sm:$0xff]
        %v3255 = vld [vmem:[#allocation4 + $0x51] sm:$0xff]
        %v3256 = vld [vmem:[#allocation4 + $0x61] sm:$0xff]
        %v3257 = vld [vmem:[#allocation4 + $0x69] sm:$0xff]
        %v3258 = vld [vmem:[#allocation4 + $0x79] sm:$0xff]
        %v3259 = vld [vmem:[#allocation4 + $0x81] sm:$0xff]
        %v3260 = vld [vmem:[#allocation4 + $0x91] sm:$0xff]
        %v3261 = vld [vmem:[#allocation4 + $0x99] sm:$0xff]
        %v3262 = vld [vmem:[#allocation4 + $0xa9] sm:$0xff]
        %v3263 = vld [vmem:[#allocation4 + $0xb1] sm:$0xff]
        %v3264 = vld [vmem:[#allocation4 + $0xc1] sm:$0xff]
        %v3265 = vld [vmem:[#allocation4 + $0xc9] sm:$0xff]
        %v3266 = vld [vmem:[#allocation4 + $0xd9] sm:$0xff]
        %v3267 = vld [vmem:[#allocation4 + $0xe1] sm:$0xff]
        %v3268 = vld [vmem:[#allocation4 + $0xf1] sm:$0xff]
        %v3269 = vld [vmem:[#allocation4 + $0xf9] sm:$0xff]
        %v3270 = vld [vmem:[#allocation4 + $0x109] sm:$0xff]
        %v3271 = vld [vmem:[#allocation4 + $0x111] sm:$0xff]
        %v3272 = vld [vmem:[#allocation4 + $0x121] sm:$0xff]
        %v3273 = vld [vmem:[#allocation4 + $0x129] sm:$0xff]
        %v3274 = vld [vmem:[#allocation4 + $0x139] sm:$0xff]
        %v3275 = vld [vmem:[#allocation4 + $0x141] sm:$0xff]
        %v3276 = vld [vmem:[#allocation4 + $0x151] sm:$0xff]
        %v3277 = vld [vmem:[#allocation4 + $0x159] sm:$0xff]
        %v3278 = vld [vmem:[#allocation4 + $0x169] sm:$0xff]
        %v3279 = vld [vmem:[#allocation4 + $0x171] sm:$0xff]
        %3280 = vst [vmem:[#allocation3 + $0x8] sm:$0xff] %v3248
        %3281 = vst [vmem:[#allocation3 + $0x50] sm:$0xff] %v3249
        %3282 = vst [vmem:[#allocation3 + $0x98] sm:$0xff] %v3250
        %3283 = vst [vmem:[#allocation3 + $0xe0] sm:$0xff] %v3251
        %3284 = vst [vmem:[#allocation3 + $0x128] sm:$0xff] %v3252
        %3285 = vst [vmem:[#allocation3 + $0x170] sm:$0xff] %v3253
        %3286 = vst [vmem:[#allocation3 + $0x1b8] sm:$0xff] %v3254
        %3287 = vst [vmem:[#allocation3 + $0x200] sm:$0xff] %v3255
        %3288 = vst [vmem:[#allocation3 + $0x248] sm:$0xff] %v3256
        %3289 = vst [vmem:[#allocation3 + $0x290] sm:$0xff] %v3257
        %3290 = vst [vmem:[#allocation3 + $0x2d8] sm:$0xff] %v3258
        %3291 = vst [vmem:[#allocation3 + $0x320] sm:$0xff] %v3259
        %3292 = vst [vmem:[#allocation3 + $0x368] sm:$0xff] %v3260
        %3293 = vst [vmem:[#allocation3 + $0x3b0] sm:$0xff] %v3261
        %3294 = vst [vmem:[#allocation3 + $0x3f8] sm:$0xff] %v3262
        %3295 = vst [vmem:[#allocation3 + $0x440] sm:$0xff] %v3263
        %3296 = vst [vmem:[#allocation3 + $0x488] sm:$0xff] %v3264
        %3297 = vst [vmem:[#allocation3 + $0x4d0] sm:$0xff] %v3265
        %3298 = vst [vmem:[#allocation3 + $0x518] sm:$0xff] %v3266
        %3299 = vst [vmem:[#allocation3 + $0x560] sm:$0xff] %v3267
        %3300 = vst [vmem:[#allocation3 + $0x5a8] sm:$0xff] %v3268
        %3301 = vst [vmem:[#allocation3 + $0x5f0] sm:$0xff] %v3269
        %3302 = vst [vmem:[#allocation3 + $0x638] sm:$0xff] %v3270
        %3303 = vst [vmem:[#allocation3 + $0x680] sm:$0xff] %v3271
        %3304 = vst [vmem:[#allocation3 + $0x6c8] sm:$0xff] %v3272
        %3305 = vst [vmem:[#allocation3 + $0x710] sm:$0xff] %v3273
        %3306 = vst [vmem:[#allocation3 + $0x758] sm:$0xff] %v3274
        %3307 = vst [vmem:[#allocation3 + $0x7a0] sm:$0xff] %v3275
        %3308 = vst [vmem:[#allocation3 + $0x7e8] sm:$0xff] %v3276
        %3309 = vst [vmem:[#allocation3 + $0x830] sm:$0xff] %v3277
        %3310 = vst [vmem:[#allocation3 + $0x878] sm:$0xff] %v3278
        %3311 = vst [vmem:[#allocation3 + $0x8c0] sm:$0xff] %v3279
        %v3312 = vld [vmem:[#allocation4 + $0x2] sm:$0xff]
        %v3313 = vld [vmem:[#allocation4 + $0xa] sm:$0xff]
        %v3314 = vld [vmem:[#allocation4 + $0x1a] sm:$0xff]
        %v3315 = vld [vmem:[#allocation4 + $0x22] sm:$0xff]
        %v3316 = vld [vmem:[#allocation4 + $0x32] sm:$0xff]
        %v3317 = vld [vmem:[#allocation4 + $0x3a] sm:$0xff]
        %v3318 = vld [vmem:[#allocation4 + $0x4a] sm:$0xff]
        %v3319 = vld [vmem:[#allocation4 + $0x52] sm:$0xff]
        %v3320 = vld [vmem:[#allocation4 + $0x62] sm:$0xff]
        %v3321 = vld [vmem:[#allocation4 + $0x6a] sm:$0xff]
        %v3322 = vld [vmem:[#allocation4 + $0x7a] sm:$0xff]
        %v3323 = vld [vmem:[#allocation4 + $0x82] sm:$0xff]
        %v3324 = vld [vmem:[#allocation4 + $0x92] sm:$0xff]
        %v3325 = vld [vmem:[#allocation4 + $0x9a] sm:$0xff]
        %v3326 = vld [vmem:[#allocation4 + $0xaa] sm:$0xff]
        %v3327 = vld [vmem:[#allocation4 + $0xb2] sm:$0xff]
        %v3328 = vld [vmem:[#allocation4 + $0xc2] sm:$0xff]
        %v3329 = vld [vmem:[#allocation4 + $0xca] sm:$0xff]
        %v3330 = vld [vmem:[#allocation4 + $0xda] sm:$0xff]
        %v3331 = vld [vmem:[#allocation4 + $0xe2] sm:$0xff]
        %v3332 = vld [vmem:[#allocation4 + $0xf2] sm:$0xff]
        %v3333 = vld [vmem:[#allocation4 + $0xfa] sm:$0xff]
        %v3334 = vld [vmem:[#allocation4 + $0x10a] sm:$0xff]
        %v3335 = vld [vmem:[#allocation4 + $0x112] sm:$0xff]
        %v3336 = vld [vmem:[#allocation4 + $0x122] sm:$0xff]
        %v3337 = vld [vmem:[#allocation4 + $0x12a] sm:$0xff]
        %v3338 = vld [vmem:[#allocation4 + $0x13a] sm:$0xff]
        %v3339 = vld [vmem:[#allocation4 + $0x142] sm:$0xff]
        %v3340 = vld [vmem:[#allocation4 + $0x152] sm:$0xff]
        %v3341 = vld [vmem:[#allocation4 + $0x15a] sm:$0xff]
        %v3342 = vld [vmem:[#allocation4 + $0x16a] sm:$0xff]
        %v3343 = vld [vmem:[#allocation4 + $0x172] sm:$0xff]
        %3344 = vst [vmem:[#allocation3 + $0x10] sm:$0xff] %v3312
        %3345 = vst [vmem:[#allocation3 + $0x58] sm:$0xff] %v3313
        %3346 = vst [vmem:[#allocation3 + $0xa0] sm:$0xff] %v3314
        %3347 = vst [vmem:[#allocation3 + $0xe8] sm:$0xff] %v3315
        %3348 = vst [vmem:[#allocation3 + $0x130] sm:$0xff] %v3316
        %3349 = vst [vmem:[#allocation3 + $0x178] sm:$0xff] %v3317
        %3350 = vst [vmem:[#allocation3 + $0x1c0] sm:$0xff] %v3318
        %3351 = vst [vmem:[#allocation3 + $0x208] sm:$0xff] %v3319
        %3352 = vst [vmem:[#allocation3 + $0x250] sm:$0xff] %v3320
        %3353 = vst [vmem:[#allocation3 + $0x298] sm:$0xff] %v3321
        %3354 = vst [vmem:[#allocation3 + $0x2e0] sm:$0xff] %v3322
        %3355 = vst [vmem:[#allocation3 + $0x328] sm:$0xff] %v3323
        %3356 = vst [vmem:[#allocation3 + $0x370] sm:$0xff] %v3324
        %3357 = vst [vmem:[#allocation3 + $0x3b8] sm:$0xff] %v3325
        %3358 = vst [vmem:[#allocation3 + $0x400] sm:$0xff] %v3326
        %3359 = vst [vmem:[#allocation3 + $0x448] sm:$0xff] %v3327
        %3360 = vst [vmem:[#allocation3 + $0x490] sm:$0xff] %v3328
        %3361 = vst [vmem:[#allocation3 + $0x4d8] sm:$0xff] %v3329
        %3362 = vst [vmem:[#allocation3 + $0x520] sm:$0xff] %v3330
        %3363 = vst [vmem:[#allocation3 + $0x568] sm:$0xff] %v3331
        %3364 = vst [vmem:[#allocation3 + $0x5b0] sm:$0xff] %v3332
        %3365 = vst [vmem:[#allocation3 + $0x5f8] sm:$0xff] %v3333
        %3366 = vst [vmem:[#allocation3 + $0x640] sm:$0xff] %v3334
        %3367 = vst [vmem:[#allocation3 + $0x688] sm:$0xff] %v3335
        %3368 = vst [vmem:[#allocation3 + $0x6d0] sm:$0xff] %v3336
        %3369 = vst [vmem:[#allocation3 + $0x718] sm:$0xff] %v3337
        %3370 = vst [vmem:[#allocation3 + $0x760] sm:$0xff] %v3338
        %3371 = vst [vmem:[#allocation3 + $0x7a8] sm:$0xff] %v3339
        %3372 = vst [vmem:[#allocation3 + $0x7f0] sm:$0xff] %v3340
        %3373 = vst [vmem:[#allocation3 + $0x838] sm:$0xff] %v3341
        %3374 = vst [vmem:[#allocation3 + $0x880] sm:$0xff] %v3342
        %3375 = vst [vmem:[#allocation3 + $0x8c8] sm:$0xff] %v3343
        %v3376 = vld [vmem:[%s3151] sm:$0xff]
        %v3377 = vld [vmem:[%s3151 + $0x8] sm:$0xff]
        %v3378 = vld [vmem:[%s3151 + $0x18] sm:$0xff]
        %v3379 = vld [vmem:[%s3151 + $0x20] sm:$0xff]
        %v3380 = vld [vmem:[%s3151 + $0x30] sm:$0xff]
        %v3381 = vld [vmem:[%s3151 + $0x38] sm:$0xff]
        %v3382 = vld [vmem:[%s3151 + $0x48] sm:$0xff]
        %v3383 = vld [vmem:[%s3151 + $0x50] sm:$0xff]
        %v3384 = vld [vmem:[%s3151 + $0x60] sm:$0xff]
        %v3385 = vld [vmem:[%s3151 + $0x68] sm:$0xff]
        %v3386 = vld [vmem:[%s3151 + $0x78] sm:$0xff]
        %v3387 = vld [vmem:[%s3151 + $0x80] sm:$0xff]
        %v3388 = vld [vmem:[%s3151 + $0x90] sm:$0xff]
        %v3389 = vld [vmem:[%s3151 + $0x98] sm:$0xff]
        %v3390 = vld [vmem:[%s3151 + $0xa8] sm:$0xff]
        %v3391 = vld [vmem:[%s3151 + $0xb0] sm:$0xff]
        %v3392 = vld [vmem:[%s3151 + $0xc0] sm:$0xff]
        %v3393 = vld [vmem:[%s3151 + $0xc8] sm:$0xff]
        %v3394 = vld [vmem:[%s3151 + $0xd8] sm:$0xff]
        %v3395 = vld [vmem:[%s3151 + $0xe0] sm:$0xff]
        %v3396 = vld [vmem:[%s3151 + $0xf0] sm:$0xff]
        %v3397 = vld [vmem:[%s3151 + $0xf8] sm:$0xff]
        %v3398 = vld [vmem:[%s3151 + $0x108] sm:$0xff]
        %v3399 = vld [vmem:[%s3151 + $0x110] sm:$0xff]
        %v3400 = vld [vmem:[%s3151 + $0x120] sm:$0xff]
        %v3401 = vld [vmem:[%s3151 + $0x128] sm:$0xff]
        %v3402 = vld [vmem:[%s3151 + $0x138] sm:$0xff]
        %v3403 = vld [vmem:[%s3151 + $0x140] sm:$0xff]
        %v3404 = vld [vmem:[%s3151 + $0x150] sm:$0xff]
        %v3405 = vld [vmem:[%s3151 + $0x158] sm:$0xff]
        %v3406 = vld [vmem:[%s3151 + $0x168] sm:$0xff]
        %v3407 = vld [vmem:[%s3151 + $0x170] sm:$0xff]
        %3408 = vst [vmem:[#allocation3 + $0x18] sm:$0xff] %v3376
        %3409 = vst [vmem:[#allocation3 + $0x60] sm:$0xff] %v3377
        %3410 = vst [vmem:[#allocation3 + $0xa8] sm:$0xff] %v3378
        %3411 = vst [vmem:[#allocation3 + $0xf0] sm:$0xff] %v3379
        %3412 = vst [vmem:[#allocation3 + $0x138] sm:$0xff] %v3380
        %3413 = vst [vmem:[#allocation3 + $0x180] sm:$0xff] %v3381
        %3414 = vst [vmem:[#allocation3 + $0x1c8] sm:$0xff] %v3382
        %3415 = vst [vmem:[#allocation3 + $0x210] sm:$0xff] %v3383
        %3416 = vst [vmem:[#allocation3 + $0x258] sm:$0xff] %v3384
        %3417 = vst [vmem:[#allocation3 + $0x2a0] sm:$0xff] %v3385
        %3418 = vst [vmem:[#allocation3 + $0x2e8] sm:$0xff] %v3386
        %3419 = vst [vmem:[#allocation3 + $0x330] sm:$0xff] %v3387
        %3420 = vst [vmem:[#allocation3 + $0x378] sm:$0xff] %v3388
        %3421 = vst [vmem:[#allocation3 + $0x3c0] sm:$0xff] %v3389
        %3422 = vst [vmem:[#allocation3 + $0x408] sm:$0xff] %v3390
        %3423 = vst [vmem:[#allocation3 + $0x450] sm:$0xff] %v3391
        %3424 = vst [vmem:[#allocation3 + $0x498] sm:$0xff] %v3392
        %3425 = vst [vmem:[#allocation3 + $0x4e0] sm:$0xff] %v3393
        %3426 = vst [vmem:[#allocation3 + $0x528] sm:$0xff] %v3394
        %3427 = vst [vmem:[#allocation3 + $0x570] sm:$0xff] %v3395
        %3428 = vst [vmem:[#allocation3 + $0x5b8] sm:$0xff] %v3396
        %3429 = vst [vmem:[#allocation3 + $0x600] sm:$0xff] %v3397
        %3430 = vst [vmem:[#allocation3 + $0x648] sm:$0xff] %v3398
        %3431 = vst [vmem:[#allocation3 + $0x690] sm:$0xff] %v3399
        %3432 = vst [vmem:[#allocation3 + $0x6d8] sm:$0xff] %v3400
        %3433 = vst [vmem:[#allocation3 + $0x720] sm:$0xff] %v3401
        %3434 = vst [vmem:[#allocation3 + $0x768] sm:$0xff] %v3402
        %3435 = vst [vmem:[#allocation3 + $0x7b0] sm:$0xff] %v3403
        %3436 = vst [vmem:[#allocation3 + $0x7f8] sm:$0xff] %v3404
        %3437 = vst [vmem:[#allocation3 + $0x840] sm:$0xff] %v3405
        %3438 = vst [vmem:[#allocation3 + $0x888] sm:$0xff] %v3406
        %3439 = vst [vmem:[#allocation3 + $0x8d0] sm:$0xff] %v3407
        %v3440 = vld [vmem:[%s3151 + $0x1] sm:$0xff]
        %v3441 = vld [vmem:[%s3151 + $0x9] sm:$0xff]
        %v3442 = vld [vmem:[%s3151 + $0x19] sm:$0xff]
        %v3443 = vld [vmem:[%s3151 + $0x21] sm:$0xff]
        %v3444 = vld [vmem:[%s3151 + $0x31] sm:$0xff]
        %v3445 = vld [vmem:[%s3151 + $0x39] sm:$0xff]
        %v3446 = vld [vmem:[%s3151 + $0x49] sm:$0xff]
        %v3447 = vld [vmem:[%s3151 + $0x51] sm:$0xff]
        %v3448 = vld [vmem:[%s3151 + $0x61] sm:$0xff]
        %v3449 = vld [vmem:[%s3151 + $0x69] sm:$0xff]
        %v3450 = vld [vmem:[%s3151 + $0x79] sm:$0xff]
        %v3451 = vld [vmem:[%s3151 + $0x81] sm:$0xff]
        %v3452 = vld [vmem:[%s3151 + $0x91] sm:$0xff]
        %v3453 = vld [vmem:[%s3151 + $0x99] sm:$0xff]
        %v3454 = vld [vmem:[%s3151 + $0xa9] sm:$0xff]
        %v3455 = vld [vmem:[%s3151 + $0xb1] sm:$0xff]
        %v3456 = vld [vmem:[%s3151 + $0xc1] sm:$0xff]
        %v3457 = vld [vmem:[%s3151 + $0xc9] sm:$0xff]
        %v3458 = vld [vmem:[%s3151 + $0xd9] sm:$0xff]
        %v3459 = vld [vmem:[%s3151 + $0xe1] sm:$0xff]
        %v3460 = vld [vmem:[%s3151 + $0xf1] sm:$0xff]
        %v3461 = vld [vmem:[%s3151 + $0xf9] sm:$0xff]
        %v3462 = vld [vmem:[%s3151 + $0x109] sm:$0xff]
        %v3463 = vld [vmem:[%s3151 + $0x111] sm:$0xff]
        %v3464 = vld [vmem:[%s3151 + $0x121] sm:$0xff]
        %v3465 = vld [vmem:[%s3151 + $0x129] sm:$0xff]
        %v3466 = vld [vmem:[%s3151 + $0x139] sm:$0xff]
        %v3467 = vld [vmem:[%s3151 + $0x141] sm:$0xff]
        %v3468 = vld [vmem:[%s3151 + $0x151] sm:$0xff]
        %v3469 = vld [vmem:[%s3151 + $0x159] sm:$0xff]
        %v3470 = vld [vmem:[%s3151 + $0x169] sm:$0xff]
        %v3471 = vld [vmem:[%s3151 + $0x171] sm:$0xff]
        %3472 = vst [vmem:[#allocation3 + $0x20] sm:$0xff] %v3440
        %3473 = vst [vmem:[#allocation3 + $0x68] sm:$0xff] %v3441
        %3474 = vst [vmem:[#allocation3 + $0xb0] sm:$0xff] %v3442
        %3475 = vst [vmem:[#allocation3 + $0xf8] sm:$0xff] %v3443
        %3476 = vst [vmem:[#allocation3 + $0x140] sm:$0xff] %v3444
        %3477 = vst [vmem:[#allocation3 + $0x188] sm:$0xff] %v3445
        %3478 = vst [vmem:[#allocation3 + $0x1d0] sm:$0xff] %v3446
        %3479 = vst [vmem:[#allocation3 + $0x218] sm:$0xff] %v3447
        %3480 = vst [vmem:[#allocation3 + $0x260] sm:$0xff] %v3448
        %3481 = vst [vmem:[#allocation3 + $0x2a8] sm:$0xff] %v3449
        %3482 = vst [vmem:[#allocation3 + $0x2f0] sm:$0xff] %v3450
        %3483 = vst [vmem:[#allocation3 + $0x338] sm:$0xff] %v3451
        %3484 = vst [vmem:[#allocation3 + $0x380] sm:$0xff] %v3452
        %3485 = vst [vmem:[#allocation3 + $0x3c8] sm:$0xff] %v3453
        %3486 = vst [vmem:[#allocation3 + $0x410] sm:$0xff] %v3454
        %3487 = vst [vmem:[#allocation3 + $0x458] sm:$0xff] %v3455
        %3488 = vst [vmem:[#allocation3 + $0x4a0] sm:$0xff] %v3456
        %3489 = vst [vmem:[#allocation3 + $0x4e8] sm:$0xff] %v3457
        %3490 = vst [vmem:[#allocation3 + $0x530] sm:$0xff] %v3458
        %3491 = vst [vmem:[#allocation3 + $0x578] sm:$0xff] %v3459
        %3492 = vst [vmem:[#allocation3 + $0x5c0] sm:$0xff] %v3460
        %3493 = vst [vmem:[#allocation3 + $0x608] sm:$0xff] %v3461
        %3494 = vst [vmem:[#allocation3 + $0x650] sm:$0xff] %v3462
        %3495 = vst [vmem:[#allocation3 + $0x698] sm:$0xff] %v3463
        %3496 = vst [vmem:[#allocation3 + $0x6e0] sm:$0xff] %v3464
        %3497 = vst [vmem:[#allocation3 + $0x728] sm:$0xff] %v3465
        %3498 = vst [vmem:[#allocation3 + $0x770] sm:$0xff] %v3466
        %3499 = vst [vmem:[#allocation3 + $0x7b8] sm:$0xff] %v3467
        %3500 = vst [vmem:[#allocation3 + $0x800] sm:$0xff] %v3468
        %3501 = vst [vmem:[#allocation3 + $0x848] sm:$0xff] %v3469
        %3502 = vst [vmem:[#allocation3 + $0x890] sm:$0xff] %v3470
        %3503 = vst [vmem:[#allocation3 + $0x8d8] sm:$0xff] %v3471
        %v3504 = vld [vmem:[%s3151 + $0x2] sm:$0xff]
        %v3505 = vld [vmem:[%s3151 + $0xa] sm:$0xff]
        %v3506 = vld [vmem:[%s3151 + $0x1a] sm:$0xff]
        %v3507 = vld [vmem:[%s3151 + $0x22] sm:$0xff]
        %v3508 = vld [vmem:[%s3151 + $0x32] sm:$0xff]
        %v3509 = vld [vmem:[%s3151 + $0x3a] sm:$0xff]
        %v3510 = vld [vmem:[%s3151 + $0x4a] sm:$0xff]
        %v3511 = vld [vmem:[%s3151 + $0x52] sm:$0xff]
        %v3512 = vld [vmem:[%s3151 + $0x62] sm:$0xff]
        %v3513 = vld [vmem:[%s3151 + $0x6a] sm:$0xff]
        %v3514 = vld [vmem:[%s3151 + $0x7a] sm:$0xff]
        %v3515 = vld [vmem:[%s3151 + $0x82] sm:$0xff]
        %v3516 = vld [vmem:[%s3151 + $0x92] sm:$0xff]
        %v3517 = vld [vmem:[%s3151 + $0x9a] sm:$0xff]
        %v3518 = vld [vmem:[%s3151 + $0xaa] sm:$0xff]
        %v3519 = vld [vmem:[%s3151 + $0xb2] sm:$0xff]
        %v3520 = vld [vmem:[%s3151 + $0xc2] sm:$0xff]
        %v3521 = vld [vmem:[%s3151 + $0xca] sm:$0xff]
        %v3522 = vld [vmem:[%s3151 + $0xda] sm:$0xff]
        %v3523 = vld [vmem:[%s3151 + $0xe2] sm:$0xff]
        %v3524 = vld [vmem:[%s3151 + $0xf2] sm:$0xff]
        %v3525 = vld [vmem:[%s3151 + $0xfa] sm:$0xff]
        %v3526 = vld [vmem:[%s3151 + $0x10a] sm:$0xff]
        %v3527 = vld [vmem:[%s3151 + $0x112] sm:$0xff]
        %v3528 = vld [vmem:[%s3151 + $0x122] sm:$0xff]
        %v3529 = vld [vmem:[%s3151 + $0x12a] sm:$0xff]
        %v3530 = vld [vmem:[%s3151 + $0x13a] sm:$0xff]
        %v3531 = vld [vmem:[%s3151 + $0x142] sm:$0xff]
        %v3532 = vld [vmem:[%s3151 + $0x152] sm:$0xff]
        %v3533 = vld [vmem:[%s3151 + $0x15a] sm:$0xff]
        %v3534 = vld [vmem:[%s3151 + $0x16a] sm:$0xff]
        %v3535 = vld [vmem:[%s3151 + $0x172] sm:$0xff]
        %3536 = vst [vmem:[#allocation3 + $0x28] sm:$0xff] %v3504
        %3537 = vst [vmem:[#allocation3 + $0x70] sm:$0xff] %v3505
        %3538 = vst [vmem:[#allocation3 + $0xb8] sm:$0xff] %v3506
        %3539 = vst [vmem:[#allocation3 + $0x100] sm:$0xff] %v3507
        %3540 = vst [vmem:[#allocation3 + $0x148] sm:$0xff] %v3508
        %3541 = vst [vmem:[#allocation3 + $0x190] sm:$0xff] %v3509
        %3542 = vst [vmem:[#allocation3 + $0x1d8] sm:$0xff] %v3510
        %3543 = vst [vmem:[#allocation3 + $0x220] sm:$0xff] %v3511
        %3544 = vst [vmem:[#allocation3 + $0x268] sm:$0xff] %v3512
        %3545 = vst [vmem:[#allocation3 + $0x2b0] sm:$0xff] %v3513
        %3546 = vst [vmem:[#allocation3 + $0x2f8] sm:$0xff] %v3514
        %3547 = vst [vmem:[#allocation3 + $0x340] sm:$0xff] %v3515
        %3548 = vst [vmem:[#allocation3 + $0x388] sm:$0xff] %v3516
        %3549 = vst [vmem:[#allocation3 + $0x3d0] sm:$0xff] %v3517
        %3550 = vst [vmem:[#allocation3 + $0x418] sm:$0xff] %v3518
        %3551 = vst [vmem:[#allocation3 + $0x460] sm:$0xff] %v3519
        %3552 = vst [vmem:[#allocation3 + $0x4a8] sm:$0xff] %v3520
        %3553 = vst [vmem:[#allocation3 + $0x4f0] sm:$0xff] %v3521
        %3554 = vst [vmem:[#allocation3 + $0x538] sm:$0xff] %v3522
        %3555 = vst [vmem:[#allocation3 + $0x580] sm:$0xff] %v3523
        %3556 = vst [vmem:[#allocation3 + $0x5c8] sm:$0xff] %v3524
        %3557 = vst [vmem:[#allocation3 + $0x610] sm:$0xff] %v3525
        %3558 = vst [vmem:[#allocation3 + $0x658] sm:$0xff] %v3526
        %3559 = vst [vmem:[#allocation3 + $0x6a0] sm:$0xff] %v3527
        %3560 = vst [vmem:[#allocation3 + $0x6e8] sm:$0xff] %v3528
        %3561 = vst [vmem:[#allocation3 + $0x730] sm:$0xff] %v3529
        %3562 = vst [vmem:[#allocation3 + $0x778] sm:$0xff] %v3530
        %3563 = vst [vmem:[#allocation3 + $0x7c0] sm:$0xff] %v3531
        %3564 = vst [vmem:[#allocation3 + $0x808] sm:$0xff] %v3532
        %3565 = vst [vmem:[#allocation3 + $0x850] sm:$0xff] %v3533
        %3566 = vst [vmem:[#allocation3 + $0x898] sm:$0xff] %v3534
        %3567 = vst [vmem:[#allocation3 + $0x8e0] sm:$0xff] %v3535
        %s3568 = scalar_lea.vmem [#allocation4], 48
        %v3569 = vld [vmem:[%s3568] sm:$0xff]
        %v3570 = vld [vmem:[%s3568 + $0x8] sm:$0xff]
        %v3571 = vld [vmem:[%s3568 + $0x18] sm:$0xff]
        %v3572 = vld [vmem:[%s3568 + $0x20] sm:$0xff]
        %v3573 = vld [vmem:[%s3568 + $0x30] sm:$0xff]
        %v3574 = vld [vmem:[%s3568 + $0x38] sm:$0xff]
        %v3575 = vld [vmem:[%s3568 + $0x48] sm:$0xff]
        %v3576 = vld [vmem:[%s3568 + $0x50] sm:$0xff]
        %v3577 = vld [vmem:[%s3568 + $0x60] sm:$0xff]
        %v3578 = vld [vmem:[%s3568 + $0x68] sm:$0xff]
        %v3579 = vld [vmem:[%s3568 + $0x78] sm:$0xff]
        %v3580 = vld [vmem:[%s3568 + $0x80] sm:$0xff]
        %v3581 = vld [vmem:[%s3568 + $0x90] sm:$0xff]
        %v3582 = vld [vmem:[%s3568 + $0x98] sm:$0xff]
        %v3583 = vld [vmem:[%s3568 + $0xa8] sm:$0xff]
        %v3584 = vld [vmem:[%s3568 + $0xb0] sm:$0xff]
        %v3585 = vld [vmem:[%s3568 + $0xc0] sm:$0xff]
        %v3586 = vld [vmem:[%s3568 + $0xc8] sm:$0xff]
        %v3587 = vld [vmem:[%s3568 + $0xd8] sm:$0xff]
        %v3588 = vld [vmem:[%s3568 + $0xe0] sm:$0xff]
        %v3589 = vld [vmem:[%s3568 + $0xf0] sm:$0xff]
        %v3590 = vld [vmem:[%s3568 + $0xf8] sm:$0xff]
        %v3591 = vld [vmem:[%s3568 + $0x108] sm:$0xff]
        %v3592 = vld [vmem:[%s3568 + $0x110] sm:$0xff]
        %v3593 = vld [vmem:[%s3568 + $0x120] sm:$0xff]
        %v3594 = vld [vmem:[%s3568 + $0x128] sm:$0xff]
        %v3595 = vld [vmem:[%s3568 + $0x138] sm:$0xff]
        %v3596 = vld [vmem:[%s3568 + $0x140] sm:$0xff]
        %v3597 = vld [vmem:[%s3568 + $0x150] sm:$0xff]
        %v3598 = vld [vmem:[%s3568 + $0x158] sm:$0xff]
        %v3599 = vld [vmem:[%s3568 + $0x168] sm:$0xff]
        %v3600 = vld [vmem:[%s3568 + $0x170] sm:$0xff]
        %3601 = vst [vmem:[#allocation3 + $0x30] sm:$0xff] %v3569
        %3602 = vst [vmem:[#allocation3 + $0x78] sm:$0xff] %v3570
        %3603 = vst [vmem:[#allocation3 + $0xc0] sm:$0xff] %v3571
        %3604 = vst [vmem:[#allocation3 + $0x108] sm:$0xff] %v3572
        %3605 = vst [vmem:[#allocation3 + $0x150] sm:$0xff] %v3573
        %3606 = vst [vmem:[#allocation3 + $0x198] sm:$0xff] %v3574
        %3607 = vst [vmem:[#allocation3 + $0x1e0] sm:$0xff] %v3575
        %3608 = vst [vmem:[#allocation3 + $0x228] sm:$0xff] %v3576
        %3609 = vst [vmem:[#allocation3 + $0x270] sm:$0xff] %v3577
        %3610 = vst [vmem:[#allocation3 + $0x2b8] sm:$0xff] %v3578
        %3611 = vst [vmem:[#allocation3 + $0x300] sm:$0xff] %v3579
        %3612 = vst [vmem:[#allocation3 + $0x348] sm:$0xff] %v3580
        %3613 = vst [vmem:[#allocation3 + $0x390] sm:$0xff] %v3581
        %3614 = vst [vmem:[#allocation3 + $0x3d8] sm:$0xff] %v3582
        %3615 = vst [vmem:[#allocation3 + $0x420] sm:$0xff] %v3583
        %3616 = vst [vmem:[#allocation3 + $0x468] sm:$0xff] %v3584
        %3617 = vst [vmem:[#allocation3 + $0x4b0] sm:$0xff] %v3585
        %3618 = vst [vmem:[#allocation3 + $0x4f8] sm:$0xff] %v3586
        %3619 = vst [vmem:[#allocation3 + $0x540] sm:$0xff] %v3587
        %3620 = vst [vmem:[#allocation3 + $0x588] sm:$0xff] %v3588
        %3621 = vst [vmem:[#allocation3 + $0x5d0] sm:$0xff] %v3589
        %3622 = vst [vmem:[#allocation3 + $0x618] sm:$0xff] %v3590
        %3623 = vst [vmem:[#allocation3 + $0x660] sm:$0xff] %v3591
        %3624 = vst [vmem:[#allocation3 + $0x6a8] sm:$0xff] %v3592
        %3625 = vst [vmem:[#allocation3 + $0x6f0] sm:$0xff] %v3593
        %3626 = vst [vmem:[#allocation3 + $0x738] sm:$0xff] %v3594
        %3627 = vst [vmem:[#allocation3 + $0x780] sm:$0xff] %v3595
        %3628 = vst [vmem:[#allocation3 + $0x7c8] sm:$0xff] %v3596
        %3629 = vst [vmem:[#allocation3 + $0x810] sm:$0xff] %v3597
        %3630 = vst [vmem:[#allocation3 + $0x858] sm:$0xff] %v3598
        %3631 = vst [vmem:[#allocation3 + $0x8a0] sm:$0xff] %v3599
        %3632 = vst [vmem:[#allocation3 + $0x8e8] sm:$0xff] %v3600
        %v3633 = vld [vmem:[%s3568 + $0x1] sm:$0xff]
        %v3634 = vld [vmem:[%s3568 + $0x9] sm:$0xff]
        %v3635 = vld [vmem:[%s3568 + $0x19] sm:$0xff]
        %v3636 = vld [vmem:[%s3568 + $0x21] sm:$0xff]
        %v3637 = vld [vmem:[%s3568 + $0x31] sm:$0xff]
        %v3638 = vld [vmem:[%s3568 + $0x39] sm:$0xff]
        %v3639 = vld [vmem:[%s3568 + $0x49] sm:$0xff]
        %v3640 = vld [vmem:[%s3568 + $0x51] sm:$0xff]
        %v3641 = vld [vmem:[%s3568 + $0x61] sm:$0xff]
        %v3642 = vld [vmem:[%s3568 + $0x69] sm:$0xff]
        %v3643 = vld [vmem:[%s3568 + $0x79] sm:$0xff]
        %v3644 = vld [vmem:[%s3568 + $0x81] sm:$0xff]
        %v3645 = vld [vmem:[%s3568 + $0x91] sm:$0xff]
        %v3646 = vld [vmem:[%s3568 + $0x99] sm:$0xff]
        %v3647 = vld [vmem:[%s3568 + $0xa9] sm:$0xff]
        %v3648 = vld [vmem:[%s3568 + $0xb1] sm:$0xff]
        %v3649 = vld [vmem:[%s3568 + $0xc1] sm:$0xff]
        %v3650 = vld [vmem:[%s3568 + $0xc9] sm:$0xff]
        %v3651 = vld [vmem:[%s3568 + $0xd9] sm:$0xff]
        %v3652 = vld [vmem:[%s3568 + $0xe1] sm:$0xff]
        %v3653 = vld [vmem:[%s3568 + $0xf1] sm:$0xff]
        %v3654 = vld [vmem:[%s3568 + $0xf9] sm:$0xff]
        %v3655 = vld [vmem:[%s3568 + $0x109] sm:$0xff]
        %v3656 = vld [vmem:[%s3568 + $0x111] sm:$0xff]
        %v3657 = vld [vmem:[%s3568 + $0x121] sm:$0xff]
        %v3658 = vld [vmem:[%s3568 + $0x129] sm:$0xff]
        %v3659 = vld [vmem:[%s3568 + $0x139] sm:$0xff]
        %v3660 = vld [vmem:[%s3568 + $0x141] sm:$0xff]
        %v3661 = vld [vmem:[%s3568 + $0x151] sm:$0xff]
        %v3662 = vld [vmem:[%s3568 + $0x159] sm:$0xff]
        %v3663 = vld [vmem:[%s3568 + $0x169] sm:$0xff]
        %v3664 = vld [vmem:[%s3568 + $0x171] sm:$0xff]
        %3665 = vst [vmem:[#allocation3 + $0x38] sm:$0xff] %v3633
        %3666 = vst [vmem:[#allocation3 + $0x80] sm:$0xff] %v3634
        %3667 = vst [vmem:[#allocation3 + $0xc8] sm:$0xff] %v3635
        %3668 = vst [vmem:[#allocation3 + $0x110] sm:$0xff] %v3636
        %3669 = vst [vmem:[#allocation3 + $0x158] sm:$0xff] %v3637
        %3670 = vst [vmem:[#allocation3 + $0x1a0] sm:$0xff] %v3638
        %3671 = vst [vmem:[#allocation3 + $0x1e8] sm:$0xff] %v3639
        %3672 = vst [vmem:[#allocation3 + $0x230] sm:$0xff] %v3640
        %3673 = vst [vmem:[#allocation3 + $0x278] sm:$0xff] %v3641
        %3674 = vst [vmem:[#allocation3 + $0x2c0] sm:$0xff] %v3642
        %3675 = vst [vmem:[#allocation3 + $0x308] sm:$0xff] %v3643
        %3676 = vst [vmem:[#allocation3 + $0x350] sm:$0xff] %v3644
        %3677 = vst [vmem:[#allocation3 + $0x398] sm:$0xff] %v3645
        %3678 = vst [vmem:[#allocation3 + $0x3e0] sm:$0xff] %v3646
        %3679 = vst [vmem:[#allocation3 + $0x428] sm:$0xff] %v3647
        %3680 = vst [vmem:[#allocation3 + $0x470] sm:$0xff] %v3648
        %3681 = vst [vmem:[#allocation3 + $0x4b8] sm:$0xff] %v3649
        %3682 = vst [vmem:[#allocation3 + $0x500] sm:$0xff] %v3650
        %3683 = vst [vmem:[#allocation3 + $0x548] sm:$0xff] %v3651
        %3684 = vst [vmem:[#allocation3 + $0x590] sm:$0xff] %v3652
        %3685 = vst [vmem:[#allocation3 + $0x5d8] sm:$0xff] %v3653
        %3686 = vst [vmem:[#allocation3 + $0x620] sm:$0xff] %v3654
        %3687 = vst [vmem:[#allocation3 + $0x668] sm:$0xff] %v3655
        %3688 = vst [vmem:[#allocation3 + $0x6b0] sm:$0xff] %v3656
        %3689 = vst [vmem:[#allocation3 + $0x6f8] sm:$0xff] %v3657
        %3690 = vst [vmem:[#allocation3 + $0x740] sm:$0xff] %v3658
        %3691 = vst [vmem:[#allocation3 + $0x788] sm:$0xff] %v3659
        %3692 = vst [vmem:[#allocation3 + $0x7d0] sm:$0xff] %v3660
        %3693 = vst [vmem:[#allocation3 + $0x818] sm:$0xff] %v3661
        %3694 = vst [vmem:[#allocation3 + $0x860] sm:$0xff] %v3662
        %3695 = vst [vmem:[#allocation3 + $0x8a8] sm:$0xff] %v3663
        %3696 = vst [vmem:[#allocation3 + $0x8f0] sm:$0xff] %v3664
        %v3697 = vld [vmem:[%s3568 + $0x2] sm:$0xff]
        %v3698 = vld [vmem:[%s3568 + $0xa] sm:$0xff]
        %v3699 = vld [vmem:[%s3568 + $0x1a] sm:$0xff]
        %v3700 = vld [vmem:[%s3568 + $0x22] sm:$0xff]
        %v3701 = vld [vmem:[%s3568 + $0x32] sm:$0xff]
        %v3702 = vld [vmem:[%s3568 + $0x3a] sm:$0xff]
        %v3703 = vld [vmem:[%s3568 + $0x4a] sm:$0xff]
        %v3704 = vld [vmem:[%s3568 + $0x52] sm:$0xff]
        %v3705 = vld [vmem:[%s3568 + $0x62] sm:$0xff]
        %v3706 = vld [vmem:[%s3568 + $0x6a] sm:$0xff]
        %v3707 = vld [vmem:[%s3568 + $0x7a] sm:$0xff]
        %v3708 = vld [vmem:[%s3568 + $0x82] sm:$0xff]
        %v3709 = vld [vmem:[%s3568 + $0x92] sm:$0xff]
        %v3710 = vld [vmem:[%s3568 + $0x9a] sm:$0xff]
        %v3711 = vld [vmem:[%s3568 + $0xaa] sm:$0xff]
        %v3712 = vld [vmem:[%s3568 + $0xb2] sm:$0xff]
        %v3713 = vld [vmem:[%s3568 + $0xc2] sm:$0xff]
        %v3714 = vld [vmem:[%s3568 + $0xca] sm:$0xff]
        %v3715 = vld [vmem:[%s3568 + $0xda] sm:$0xff]
        %v3716 = vld [vmem:[%s3568 + $0xe2] sm:$0xff]
        %v3717 = vld [vmem:[%s3568 + $0xf2] sm:$0xff]
        %v3718 = vld [vmem:[%s3568 + $0xfa] sm:$0xff]
        %v3719 = vld [vmem:[%s3568 + $0x10a] sm:$0xff]
        %v3720 = vld [vmem:[%s3568 + $0x112] sm:$0xff]
        %v3721 = vld [vmem:[%s3568 + $0x122] sm:$0xff]
        %v3722 = vld [vmem:[%s3568 + $0x12a] sm:$0xff]
        %v3723 = vld [vmem:[%s3568 + $0x13a] sm:$0xff]
        %v3724 = vld [vmem:[%s3568 + $0x142] sm:$0xff]
        %v3725 = vld [vmem:[%s3568 + $0x152] sm:$0xff]
        %v3726 = vld [vmem:[%s3568 + $0x15a] sm:$0xff]
        %v3727 = vld [vmem:[%s3568 + $0x16a] sm:$0xff]
        %v3728 = vld [vmem:[%s3568 + $0x172] sm:$0xff]
        %3729 = vst [vmem:[#allocation3 + $0x40] sm:$0xff] %v3697
        %3730 = vst [vmem:[#allocation3 + $0x88] sm:$0xff] %v3698
        %3731 = vst [vmem:[#allocation3 + $0xd0] sm:$0xff] %v3699
        %3732 = vst [vmem:[#allocation3 + $0x118] sm:$0xff] %v3700
        %3733 = vst [vmem:[#allocation3 + $0x160] sm:$0xff] %v3701
        %3734 = vst [vmem:[#allocation3 + $0x1a8] sm:$0xff] %v3702
        %3735 = vst [vmem:[#allocation3 + $0x1f0] sm:$0xff] %v3703
        %3736 = vst [vmem:[#allocation3 + $0x238] sm:$0xff] %v3704
        %3737 = vst [vmem:[#allocation3 + $0x280] sm:$0xff] %v3705
        %3738 = vst [vmem:[#allocation3 + $0x2c8] sm:$0xff] %v3706
        %3739 = vst [vmem:[#allocation3 + $0x310] sm:$0xff] %v3707
        %3740 = vst [vmem:[#allocation3 + $0x358] sm:$0xff] %v3708
        %3741 = vst [vmem:[#allocation3 + $0x3a0] sm:$0xff] %v3709
        %3742 = vst [vmem:[#allocation3 + $0x3e8] sm:$0xff] %v3710
        %3743 = vst [vmem:[#allocation3 + $0x430] sm:$0xff] %v3711
        %3744 = vst [vmem:[#allocation3 + $0x478] sm:$0xff] %v3712
        %3745 = vst [vmem:[#allocation3 + $0x4c0] sm:$0xff] %v3713
        %3746 = vst [vmem:[#allocation3 + $0x508] sm:$0xff] %v3714
        %3747 = vst [vmem:[#allocation3 + $0x550] sm:$0xff] %v3715
        %3748 = vst [vmem:[#allocation3 + $0x598] sm:$0xff] %v3716
        %3749 = vst [vmem:[#allocation3 + $0x5e0] sm:$0xff] %v3717
        %3750 = vst [vmem:[#allocation3 + $0x628] sm:$0xff] %v3718
        %3751 = vst [vmem:[#allocation3 + $0x670] sm:$0xff] %v3719
        %3752 = vst [vmem:[#allocation3 + $0x6b8] sm:$0xff] %v3720
        %3753 = vst [vmem:[#allocation3 + $0x700] sm:$0xff] %v3721
        %3754 = vst [vmem:[#allocation3 + $0x748] sm:$0xff] %v3722
        %3755 = vst [vmem:[#allocation3 + $0x790] sm:$0xff] %v3723
        %3756 = vst [vmem:[#allocation3 + $0x7d8] sm:$0xff] %v3724
        %3757 = vst [vmem:[#allocation3 + $0x820] sm:$0xff] %v3725
        %3758 = vst [vmem:[#allocation3 + $0x868] sm:$0xff] %v3726
        %3759 = vst [vmem:[#allocation3 + $0x8b0] sm:$0xff] %v3727
        %3760 = vst [vmem:[#allocation3 + $0x8f8] sm:$0xff] %v3728
        %v3761 = vld [vmem:[#allocation3] sm:$0xff]
        %v3762 = vld [vmem:[#allocation3 + $0x8] sm:$0xff]
        %v3763 = vld [vmem:[#allocation3 + $0x10] sm:$0xff]
        %v3764 = vld [vmem:[#allocation3 + $0x18] sm:$0xff]
        %v3765 = vld [vmem:[#allocation3 + $0x20] sm:$0xff]
        %v3766 = vld [vmem:[#allocation3 + $0x28] sm:$0xff]
        %v3767 = vld [vmem:[#allocation3 + $0x30] sm:$0xff]
        %v3768 = vld [vmem:[#allocation3 + $0x38] sm:$0xff]
        %v3769 = vld [vmem:[#allocation3 + $0x40] sm:$0xff]
        %v3770 = vld [vmem:[#allocation3 + $0x48] sm:$0xff]
        %v3771 = vld [vmem:[#allocation3 + $0x50] sm:$0xff]
        %v3772 = vld [vmem:[#allocation3 + $0x58] sm:$0xff]
        %v3773 = vld [vmem:[#allocation3 + $0x60] sm:$0xff]
        %v3774 = vld [vmem:[#allocation3 + $0x68] sm:$0xff]
        %v3775 = vld [vmem:[#allocation3 + $0x70] sm:$0xff]
        %v3776 = vld [vmem:[#allocation3 + $0x78] sm:$0xff]
        %v3777 = vld [vmem:[#allocation3 + $0x80] sm:$0xff]
        %v3778 = vld [vmem:[#allocation3 + $0x88] sm:$0xff]
        %v3779 = vld [vmem:[#allocation3 + $0x90] sm:$0xff]
        %v3780 = vld [vmem:[#allocation3 + $0x98] sm:$0xff]
        %v3781 = vld [vmem:[#allocation3 + $0xa0] sm:$0xff]
        %v3782 = vld [vmem:[#allocation3 + $0xa8] sm:$0xff]
        %v3783 = vld [vmem:[#allocation3 + $0xb0] sm:$0xff]
        %v3784 = vld [vmem:[#allocation3 + $0xb8] sm:$0xff]
        %v3785 = vld [vmem:[#allocation3 + $0xc0] sm:$0xff]
        %v3786 = vld [vmem:[#allocation3 + $0xc8] sm:$0xff]
        %v3787 = vld [vmem:[#allocation3 + $0xd0] sm:$0xff]
        %v3788 = vld [vmem:[#allocation3 + $0xd8] sm:$0xff]
        %v3789 = vld [vmem:[#allocation3 + $0xe0] sm:$0xff]
        %v3790 = vld [vmem:[#allocation3 + $0xe8] sm:$0xff]
        %v3791 = vld [vmem:[#allocation3 + $0xf0] sm:$0xff]
        %v3792 = vld [vmem:[#allocation3 + $0xf8] sm:$0xff]
        %v3793 = vld [vmem:[#allocation3 + $0x100] sm:$0xff]
        %v3794 = vld [vmem:[#allocation3 + $0x108] sm:$0xff]
        %v3795 = vld [vmem:[#allocation3 + $0x110] sm:$0xff]
        %v3796 = vld [vmem:[#allocation3 + $0x118] sm:$0xff]
        %v3797 = vld [vmem:[#allocation3 + $0x120] sm:$0xff]
        %v3798 = vld [vmem:[#allocation3 + $0x128] sm:$0xff]
        %v3799 = vld [vmem:[#allocation3 + $0x130] sm:$0xff]
        %v3800 = vld [vmem:[#allocation3 + $0x138] sm:$0xff]
        %v3801 = vld [vmem:[#allocation3 + $0x140] sm:$0xff]
        %v3802 = vld [vmem:[#allocation3 + $0x148] sm:$0xff]
        %v3803 = vld [vmem:[#allocation3 + $0x150] sm:$0xff]
        %v3804 = vld [vmem:[#allocation3 + $0x158] sm:$0xff]
        %v3805 = vld [vmem:[#allocation3 + $0x160] sm:$0xff]
        %v3806 = vld [vmem:[#allocation3 + $0x168] sm:$0xff]
        %v3807 = vld [vmem:[#allocation3 + $0x170] sm:$0xff]
        %v3808 = vld [vmem:[#allocation3 + $0x178] sm:$0xff]
        %v3809 = vld [vmem:[#allocation3 + $0x180] sm:$0xff]
        %v3810 = vld [vmem:[#allocation3 + $0x188] sm:$0xff]
        %v3811 = vld [vmem:[#allocation3 + $0x190] sm:$0xff]
        %v3812 = vld [vmem:[#allocation3 + $0x198] sm:$0xff]
        %v3813 = vld [vmem:[#allocation3 + $0x1a0] sm:$0xff]
        %v3814 = vld [vmem:[#allocation3 + $0x1a8] sm:$0xff]
        %v3815 = vld [vmem:[#allocation3 + $0x1b0] sm:$0xff]
        %v3816 = vld [vmem:[#allocation3 + $0x1b8] sm:$0xff]
        %v3817 = vld [vmem:[#allocation3 + $0x1c0] sm:$0xff]
        %v3818 = vld [vmem:[#allocation3 + $0x1c8] sm:$0xff]
        %v3819 = vld [vmem:[#allocation3 + $0x1d0] sm:$0xff]
        %v3820 = vld [vmem:[#allocation3 + $0x1d8] sm:$0xff]
        %v3821 = vld [vmem:[#allocation3 + $0x1e0] sm:$0xff]
        %v3822 = vld [vmem:[#allocation3 + $0x1e8] sm:$0xff]
        %v3823 = vld [vmem:[#allocation3 + $0x1f0] sm:$0xff]
        %v3824 = vld [vmem:[#allocation3 + $0x1f8] sm:$0xff]
        %v3825 = vld [vmem:[#allocation3 + $0x200] sm:$0xff]
        %v3826 = vld [vmem:[#allocation3 + $0x208] sm:$0xff]
        %v3827 = vld [vmem:[#allocation3 + $0x210] sm:$0xff]
        %v3828 = vld [vmem:[#allocation3 + $0x218] sm:$0xff]
        %v3829 = vld [vmem:[#allocation3 + $0x220] sm:$0xff]
        %v3830 = vld [vmem:[#allocation3 + $0x228] sm:$0xff]
        %v3831 = vld [vmem:[#allocation3 + $0x230] sm:$0xff]
        %v3832 = vld [vmem:[#allocation3 + $0x238] sm:$0xff]
        %v3833 = vld [vmem:[#allocation3 + $0x240] sm:$0xff]
        %v3834 = vld [vmem:[#allocation3 + $0x248] sm:$0xff]
        %v3835 = vld [vmem:[#allocation3 + $0x250] sm:$0xff]
        %v3836 = vld [vmem:[#allocation3 + $0x258] sm:$0xff]
        %v3837 = vld [vmem:[#allocation3 + $0x260] sm:$0xff]
        %v3838 = vld [vmem:[#allocation3 + $0x268] sm:$0xff]
        %v3839 = vld [vmem:[#allocation3 + $0x270] sm:$0xff]
        %v3840 = vld [vmem:[#allocation3 + $0x278] sm:$0xff]
        %v3841 = vld [vmem:[#allocation3 + $0x280] sm:$0xff]
        %v3842 = vld [vmem:[#allocation3 + $0x288] sm:$0xff]
        %v3843 = vld [vmem:[#allocation3 + $0x290] sm:$0xff]
        %v3844 = vld [vmem:[#allocation3 + $0x298] sm:$0xff]
        %v3845 = vld [vmem:[#allocation3 + $0x2a0] sm:$0xff]
        %v3846 = vld [vmem:[#allocation3 + $0x2a8] sm:$0xff]
        %v3847 = vld [vmem:[#allocation3 + $0x2b0] sm:$0xff]
        %v3848 = vld [vmem:[#allocation3 + $0x2b8] sm:$0xff]
        %v3849 = vld [vmem:[#allocation3 + $0x2c0] sm:$0xff]
        %v3850 = vld [vmem:[#allocation3 + $0x2c8] sm:$0xff]
        %v3851 = vld [vmem:[#allocation3 + $0x2d0] sm:$0xff]
        %v3852 = vld [vmem:[#allocation3 + $0x2d8] sm:$0xff]
        %v3853 = vld [vmem:[#allocation3 + $0x2e0] sm:$0xff]
        %v3854 = vld [vmem:[#allocation3 + $0x2e8] sm:$0xff]
        %v3855 = vld [vmem:[#allocation3 + $0x2f0] sm:$0xff]
        %v3856 = vld [vmem:[#allocation3 + $0x2f8] sm:$0xff]
        %v3857 = vld [vmem:[#allocation3 + $0x300] sm:$0xff]
        %v3858 = vld [vmem:[#allocation3 + $0x308] sm:$0xff]
        %v3859 = vld [vmem:[#allocation3 + $0x310] sm:$0xff]
        %v3860 = vld [vmem:[#allocation3 + $0x318] sm:$0xff]
        %v3861 = vld [vmem:[#allocation3 + $0x320] sm:$0xff]
        %v3862 = vld [vmem:[#allocation3 + $0x328] sm:$0xff]
        %v3863 = vld [vmem:[#allocation3 + $0x330] sm:$0xff]
        %v3864 = vld [vmem:[#allocation3 + $0x338] sm:$0xff]
        %v3865 = vld [vmem:[#allocation3 + $0x340] sm:$0xff]
        %v3866 = vld [vmem:[#allocation3 + $0x348] sm:$0xff]
        %v3867 = vld [vmem:[#allocation3 + $0x350] sm:$0xff]
        %v3868 = vld [vmem:[#allocation3 + $0x358] sm:$0xff]
        %v3869 = vld [vmem:[#allocation3 + $0x360] sm:$0xff]
        %v3870 = vld [vmem:[#allocation3 + $0x368] sm:$0xff]
        %v3871 = vld [vmem:[#allocation3 + $0x370] sm:$0xff]
        %v3872 = vld [vmem:[#allocation3 + $0x378] sm:$0xff]
        %v3873 = vld [vmem:[#allocation3 + $0x380] sm:$0xff]
        %v3874 = vld [vmem:[#allocation3 + $0x388] sm:$0xff]
        %v3875 = vld [vmem:[#allocation3 + $0x390] sm:$0xff]
        %v3876 = vld [vmem:[#allocation3 + $0x398] sm:$0xff]
        %v3877 = vld [vmem:[#allocation3 + $0x3a0] sm:$0xff]
        %v3878 = vld [vmem:[#allocation3 + $0x3a8] sm:$0xff]
        %v3879 = vld [vmem:[#allocation3 + $0x3b0] sm:$0xff]
        %v3880 = vld [vmem:[#allocation3 + $0x3b8] sm:$0xff]
        %v3881 = vld [vmem:[#allocation3 + $0x3c0] sm:$0xff]
        %v3882 = vld [vmem:[#allocation3 + $0x3c8] sm:$0xff]
        %v3883 = vld [vmem:[#allocation3 + $0x3d0] sm:$0xff]
        %v3884 = vld [vmem:[#allocation3 + $0x3d8] sm:$0xff]
        %v3885 = vld [vmem:[#allocation3 + $0x3e0] sm:$0xff]
        %v3886 = vld [vmem:[#allocation3 + $0x3e8] sm:$0xff]
        %v3887 = vld [vmem:[#allocation3 + $0x3f0] sm:$0xff]
        %v3888 = vld [vmem:[#allocation3 + $0x3f8] sm:$0xff]
        %v3889 = vld [vmem:[#allocation3 + $0x400] sm:$0xff]
        %v3890 = vld [vmem:[#allocation3 + $0x408] sm:$0xff]
        %v3891 = vld [vmem:[#allocation3 + $0x410] sm:$0xff]
        %v3892 = vld [vmem:[#allocation3 + $0x418] sm:$0xff]
        %v3893 = vld [vmem:[#allocation3 + $0x420] sm:$0xff]
        %v3894 = vld [vmem:[#allocation3 + $0x428] sm:$0xff]
        %v3895 = vld [vmem:[#allocation3 + $0x430] sm:$0xff]
        %v3896 = vld [vmem:[#allocation3 + $0x438] sm:$0xff]
        %v3897 = vld [vmem:[#allocation3 + $0x440] sm:$0xff]
        %v3898 = vld [vmem:[#allocation3 + $0x448] sm:$0xff]
        %v3899 = vld [vmem:[#allocation3 + $0x450] sm:$0xff]
        %v3900 = vld [vmem:[#allocation3 + $0x458] sm:$0xff]
        %v3901 = vld [vmem:[#allocation3 + $0x460] sm:$0xff]
        %v3902 = vld [vmem:[#allocation3 + $0x468] sm:$0xff]
        %v3903 = vld [vmem:[#allocation3 + $0x470] sm:$0xff]
        %v3904 = vld [vmem:[#allocation3 + $0x478] sm:$0xff]
        %v3905 = vld [vmem:[#allocation3 + $0x480] sm:$0xff]
        %v3906 = vld [vmem:[#allocation3 + $0x488] sm:$0xff]
        %v3907 = vld [vmem:[#allocation3 + $0x490] sm:$0xff]
        %v3908 = vld [vmem:[#allocation3 + $0x498] sm:$0xff]
        %v3909 = vld [vmem:[#allocation3 + $0x4a0] sm:$0xff]
        %v3910 = vld [vmem:[#allocation3 + $0x4a8] sm:$0xff]
        %v3911 = vld [vmem:[#allocation3 + $0x4b0] sm:$0xff]
        %v3912 = vld [vmem:[#allocation3 + $0x4b8] sm:$0xff]
        %v3913 = vld [vmem:[#allocation3 + $0x4c0] sm:$0xff]
        %v3914 = vld [vmem:[#allocation3 + $0x4c8] sm:$0xff]
        %v3915 = vld [vmem:[#allocation3 + $0x4d0] sm:$0xff]
        %v3916 = vld [vmem:[#allocation3 + $0x4d8] sm:$0xff]
        %v3917 = vld [vmem:[#allocation3 + $0x4e0] sm:$0xff]
        %v3918 = vld [vmem:[#allocation3 + $0x4e8] sm:$0xff]
        %v3919 = vld [vmem:[#allocation3 + $0x4f0] sm:$0xff]
        %v3920 = vld [vmem:[#allocation3 + $0x4f8] sm:$0xff]
        %v3921 = vld [vmem:[#allocation3 + $0x500] sm:$0xff]
        %v3922 = vld [vmem:[#allocation3 + $0x508] sm:$0xff]
        %v3923 = vld [vmem:[#allocation3 + $0x510] sm:$0xff]
        %v3924 = vld [vmem:[#allocation3 + $0x518] sm:$0xff]
        %v3925 = vld [vmem:[#allocation3 + $0x520] sm:$0xff]
        %v3926 = vld [vmem:[#allocation3 + $0x528] sm:$0xff]
        %v3927 = vld [vmem:[#allocation3 + $0x530] sm:$0xff]
        %v3928 = vld [vmem:[#allocation3 + $0x538] sm:$0xff]
        %v3929 = vld [vmem:[#allocation3 + $0x540] sm:$0xff]
        %v3930 = vld [vmem:[#allocation3 + $0x548] sm:$0xff]
        %v3931 = vld [vmem:[#allocation3 + $0x550] sm:$0xff]
        %v3932 = vld [vmem:[#allocation3 + $0x558] sm:$0xff]
        %v3933 = vld [vmem:[#allocation3 + $0x560] sm:$0xff]
        %v3934 = vld [vmem:[#allocation3 + $0x568] sm:$0xff]
        %v3935 = vld [vmem:[#allocation3 + $0x570] sm:$0xff]
        %v3936 = vld [vmem:[#allocation3 + $0x578] sm:$0xff]
        %v3937 = vld [vmem:[#allocation3 + $0x580] sm:$0xff]
        %v3938 = vld [vmem:[#allocation3 + $0x588] sm:$0xff]
        %v3939 = vld [vmem:[#allocation3 + $0x590] sm:$0xff]
        %v3940 = vld [vmem:[#allocation3 + $0x598] sm:$0xff]
        %v3941 = vld [vmem:[#allocation3 + $0x5a0] sm:$0xff]
        %v3942 = vld [vmem:[#allocation3 + $0x5a8] sm:$0xff]
        %v3943 = vld [vmem:[#allocation3 + $0x5b0] sm:$0xff]
        %v3944 = vld [vmem:[#allocation3 + $0x5b8] sm:$0xff]
        %v3945 = vld [vmem:[#allocation3 + $0x5c0] sm:$0xff]
        %v3946 = vld [vmem:[#allocation3 + $0x5c8] sm:$0xff]
        %v3947 = vld [vmem:[#allocation3 + $0x5d0] sm:$0xff]
        %v3948 = vld [vmem:[#allocation3 + $0x5d8] sm:$0xff]
        %v3949 = vld [vmem:[#allocation3 + $0x5e0] sm:$0xff]
        %v3950 = vld [vmem:[#allocation3 + $0x5e8] sm:$0xff]
        %v3951 = vld [vmem:[#allocation3 + $0x5f0] sm:$0xff]
        %v3952 = vld [vmem:[#allocation3 + $0x5f8] sm:$0xff]
        %v3953 = vld [vmem:[#allocation3 + $0x600] sm:$0xff]
        %v3954 = vld [vmem:[#allocation3 + $0x608] sm:$0xff]
        %v3955 = vld [vmem:[#allocation3 + $0x610] sm:$0xff]
        %v3956 = vld [vmem:[#allocation3 + $0x618] sm:$0xff]
        %v3957 = vld [vmem:[#allocation3 + $0x620] sm:$0xff]
        %v3958 = vld [vmem:[#allocation3 + $0x628] sm:$0xff]
        %v3959 = vld [vmem:[#allocation3 + $0x630] sm:$0xff]
        %v3960 = vld [vmem:[#allocation3 + $0x638] sm:$0xff]
        %v3961 = vld [vmem:[#allocation3 + $0x640] sm:$0xff]
        %v3962 = vld [vmem:[#allocation3 + $0x648] sm:$0xff]
        %v3963 = vld [vmem:[#allocation3 + $0x650] sm:$0xff]
        %v3964 = vld [vmem:[#allocation3 + $0x658] sm:$0xff]
        %v3965 = vld [vmem:[#allocation3 + $0x660] sm:$0xff]
        %v3966 = vld [vmem:[#allocation3 + $0x668] sm:$0xff]
        %v3967 = vld [vmem:[#allocation3 + $0x670] sm:$0xff]
        %v3968 = vld [vmem:[#allocation3 + $0x678] sm:$0xff]
        %v3969 = vld [vmem:[#allocation3 + $0x680] sm:$0xff]
        %v3970 = vld [vmem:[#allocation3 + $0x688] sm:$0xff]
        %v3971 = vld [vmem:[#allocation3 + $0x690] sm:$0xff]
        %v3972 = vld [vmem:[#allocation3 + $0x698] sm:$0xff]
        %v3973 = vld [vmem:[#allocation3 + $0x6a0] sm:$0xff]
        %v3974 = vld [vmem:[#allocation3 + $0x6a8] sm:$0xff]
        %v3975 = vld [vmem:[#allocation3 + $0x6b0] sm:$0xff]
        %v3976 = vld [vmem:[#allocation3 + $0x6b8] sm:$0xff]
        %v3977 = vld [vmem:[#allocation3 + $0x6c0] sm:$0xff]
        %v3978 = vld [vmem:[#allocation3 + $0x6c8] sm:$0xff]
        %v3979 = vld [vmem:[#allocation3 + $0x6d0] sm:$0xff]
        %v3980 = vld [vmem:[#allocation3 + $0x6d8] sm:$0xff]
        %v3981 = vld [vmem:[#allocation3 + $0x6e0] sm:$0xff]
        %v3982 = vld [vmem:[#allocation3 + $0x6e8] sm:$0xff]
        %v3983 = vld [vmem:[#allocation3 + $0x6f0] sm:$0xff]
        %v3984 = vld [vmem:[#allocation3 + $0x6f8] sm:$0xff]
        %v3985 = vld [vmem:[#allocation3 + $0x700] sm:$0xff]
        %v3986 = vld [vmem:[#allocation3 + $0x708] sm:$0xff]
        %v3987 = vld [vmem:[#allocation3 + $0x710] sm:$0xff]
        %v3988 = vld [vmem:[#allocation3 + $0x718] sm:$0xff]
        %v3989 = vld [vmem:[#allocation3 + $0x720] sm:$0xff]
        %v3990 = vld [vmem:[#allocation3 + $0x728] sm:$0xff]
        %v3991 = vld [vmem:[#allocation3 + $0x730] sm:$0xff]
        %v3992 = vld [vmem:[#allocation3 + $0x738] sm:$0xff]
        %v3993 = vld [vmem:[#allocation3 + $0x740] sm:$0xff]
        %v3994 = vld [vmem:[#allocation3 + $0x748] sm:$0xff]
        %v3995 = vld [vmem:[#allocation3 + $0x750] sm:$0xff]
        %v3996 = vld [vmem:[#allocation3 + $0x758] sm:$0xff]
        %v3997 = vld [vmem:[#allocation3 + $0x760] sm:$0xff]
        %v3998 = vld [vmem:[#allocation3 + $0x768] sm:$0xff]
        %v3999 = vld [vmem:[#allocation3 + $0x770] sm:$0xff]
        %v4000 = vld [vmem:[#allocation3 + $0x778] sm:$0xff]
        %v4001 = vld [vmem:[#allocation3 + $0x780] sm:$0xff]
        %v4002 = vld [vmem:[#allocation3 + $0x788] sm:$0xff]
        %v4003 = vld [vmem:[#allocation3 + $0x790] sm:$0xff]
        %v4004 = vld [vmem:[#allocation3 + $0x798] sm:$0xff]
        %v4005 = vld [vmem:[#allocation3 + $0x7a0] sm:$0xff]
        %v4006 = vld [vmem:[#allocation3 + $0x7a8] sm:$0xff]
        %v4007 = vld [vmem:[#allocation3 + $0x7b0] sm:$0xff]
        %v4008 = vld [vmem:[#allocation3 + $0x7b8] sm:$0xff]
        %v4009 = vld [vmem:[#allocation3 + $0x7c0] sm:$0xff]
        %v4010 = vld [vmem:[#allocation3 + $0x7c8] sm:$0xff]
        %v4011 = vld [vmem:[#allocation3 + $0x7d0] sm:$0xff]
        %v4012 = vld [vmem:[#allocation3 + $0x7d8] sm:$0xff]
        %v4013 = vld [vmem:[#allocation3 + $0x7e0] sm:$0xff]
        %v4014 = vld [vmem:[#allocation3 + $0x7e8] sm:$0xff]
        %v4015 = vld [vmem:[#allocation3 + $0x7f0] sm:$0xff]
        %v4016 = vld [vmem:[#allocation3 + $0x7f8] sm:$0xff]
        %v4017 = vld [vmem:[#allocation3 + $0x800] sm:$0xff]
        %v4018 = vld [vmem:[#allocation3 + $0x808] sm:$0xff]
        %v4019 = vld [vmem:[#allocation3 + $0x810] sm:$0xff]
        %v4020 = vld [vmem:[#allocation3 + $0x818] sm:$0xff]
        %v4021 = vld [vmem:[#allocation3 + $0x820] sm:$0xff]
        %v4022 = vld [vmem:[#allocation3 + $0x828] sm:$0xff]
        %v4023 = vld [vmem:[#allocation3 + $0x830] sm:$0xff]
        %v4024 = vld [vmem:[#allocation3 + $0x838] sm:$0xff]
        %v4025 = vld [vmem:[#allocation3 + $0x840] sm:$0xff]
        %v4026 = vld [vmem:[#allocation3 + $0x848] sm:$0xff]
        %v4027 = vld [vmem:[#allocation3 + $0x850] sm:$0xff]
        %v4028 = vld [vmem:[#allocation3 + $0x858] sm:$0xff]
        %v4029 = vld [vmem:[#allocation3 + $0x860] sm:$0xff]
        %v4030 = vld [vmem:[#allocation3 + $0x868] sm:$0xff]
        %v4031 = vld [vmem:[#allocation3 + $0x870] sm:$0xff]
        %v4032 = vld [vmem:[#allocation3 + $0x878] sm:$0xff]
        %v4033 = vld [vmem:[#allocation3 + $0x880] sm:$0xff]
        %v4034 = vld [vmem:[#allocation3 + $0x888] sm:$0xff]
        %v4035 = vld [vmem:[#allocation3 + $0x890] sm:$0xff]
        %v4036 = vld [vmem:[#allocation3 + $0x898] sm:$0xff]
        %v4037 = vld [vmem:[#allocation3 + $0x8a0] sm:$0xff]
        %v4038 = vld [vmem:[#allocation3 + $0x8a8] sm:$0xff]
        %v4039 = vld [vmem:[#allocation3 + $0x8b0] sm:$0xff]
        %v4040 = vld [vmem:[#allocation3 + $0x8b8] sm:$0xff]
        %v4041 = vld [vmem:[#allocation3 + $0x8c0] sm:$0xff]
        %v4042 = vld [vmem:[#allocation3 + $0x8c8] sm:$0xff]
        %v4043 = vld [vmem:[#allocation3 + $0x8d0] sm:$0xff]
        %v4044 = vld [vmem:[#allocation3 + $0x8d8] sm:$0xff]
        %v4045 = vld [vmem:[#allocation3 + $0x8e0] sm:$0xff]
        %v4046 = vld [vmem:[#allocation3 + $0x8e8] sm:$0xff]
        %v4047 = vld [vmem:[#allocation3 + $0x8f0] sm:$0xff]
        %v4048 = vld [vmem:[#allocation3 + $0x8f8] sm:$0xff]
        %v4049 = vld [vmem:[#allocation5] sm:$0xff]
        %v4050 = vld [vmem:[#allocation5 + $0x8] sm:$0xff]
        %v4051 = vld [vmem:[#allocation5 + $0x10] sm:$0xff]
        %v4052 = vld [vmem:[#allocation5 + $0x18] sm:$0xff]
        %v4053 = vld [vmem:[#allocation5 + $0x20] sm:$0xff]
        %v4054 = vld [vmem:[#allocation5 + $0x28] sm:$0xff]
        %v4055 = vld [vmem:[#allocation5 + $0x30] sm:$0xff]
        %v4056 = vld [vmem:[#allocation5 + $0x38] sm:$0xff]
        %v4057 = vld [vmem:[#allocation5 + $0x40] sm:$0xff]
        %v4058 = vld [vmem:[#allocation5 + $0x48] sm:$0xff]
        %v4059 = vld [vmem:[#allocation5 + $0x50] sm:$0xff]
        %v4060 = vld [vmem:[#allocation5 + $0x58] sm:$0xff]
        %v4061 = vld [vmem:[#allocation5 + $0x60] sm:$0xff]
        %v4062 = vld [vmem:[#allocation5 + $0x68] sm:$0xff]
        %v4063 = vld [vmem:[#allocation5 + $0x70] sm:$0xff]
        %v4064 = vld [vmem:[#allocation5 + $0x78] sm:$0xff]
        %v4065 = vld [vmem:[#allocation5 + $0x80] sm:$0xff]
        %v4066 = vld [vmem:[#allocation5 + $0x88] sm:$0xff]
        %v4067 = vld [vmem:[#allocation5 + $0x90] sm:$0xff]
        %v4068 = vld [vmem:[#allocation5 + $0x98] sm:$0xff]
        %v4069 = vld [vmem:[#allocation5 + $0xa0] sm:$0xff]
        %v4070 = vld [vmem:[#allocation5 + $0xa8] sm:$0xff]
        %v4071 = vld [vmem:[#allocation5 + $0xb0] sm:$0xff]
        %v4072 = vld [vmem:[#allocation5 + $0xb8] sm:$0xff]
        %v4073 = vld [vmem:[#allocation5 + $0xc0] sm:$0xff]
        %v4074 = vld [vmem:[#allocation5 + $0xc8] sm:$0xff]
        %v4075 = vld [vmem:[#allocation5 + $0xd0] sm:$0xff]
        %v4076 = vld [vmem:[#allocation5 + $0xd8] sm:$0xff]
        %v4077 = vld [vmem:[#allocation5 + $0xe0] sm:$0xff]
        %v4078 = vld [vmem:[#allocation5 + $0xe8] sm:$0xff]
        %v4079 = vld [vmem:[#allocation5 + $0xf0] sm:$0xff]
        %v4080 = vld [vmem:[#allocation5 + $0xf8] sm:$0xff]
        %v4081 = vld [vmem:[#allocation5 + $0x100] sm:$0xff]
        %v4082 = vld [vmem:[#allocation5 + $0x108] sm:$0xff]
        %v4083 = vld [vmem:[#allocation5 + $0x110] sm:$0xff]
        %v4084 = vld [vmem:[#allocation5 + $0x118] sm:$0xff]
        %v4085 = vld [vmem:[#allocation5 + $0x120] sm:$0xff]
        %v4086 = vld [vmem:[#allocation5 + $0x128] sm:$0xff]
        %v4087 = vld [vmem:[#allocation5 + $0x130] sm:$0xff]
        %v4088 = vld [vmem:[#allocation5 + $0x138] sm:$0xff]
        %v4089 = vld [vmem:[#allocation5 + $0x140] sm:$0xff]
        %v4090 = vld [vmem:[#allocation5 + $0x148] sm:$0xff]
        %v4091 = vld [vmem:[#allocation5 + $0x150] sm:$0xff]
        %v4092 = vld [vmem:[#allocation5 + $0x158] sm:$0xff]
        %v4093 = vld [vmem:[#allocation5 + $0x160] sm:$0xff]
        %v4094 = vld [vmem:[#allocation5 + $0x168] sm:$0xff]
        %v4095 = vld [vmem:[#allocation5 + $0x170] sm:$0xff]
        %v4096 = vld [vmem:[#allocation5 + $0x178] sm:$0xff]
        %v4097 = vld [vmem:[#allocation5 + $0x180] sm:$0xff]
        %v4098 = vld [vmem:[#allocation5 + $0x188] sm:$0xff]
        %v4099 = vld [vmem:[#allocation5 + $0x190] sm:$0xff]
        %v4100 = vld [vmem:[#allocation5 + $0x198] sm:$0xff]
        %v4101 = vld [vmem:[#allocation5 + $0x1a0] sm:$0xff]
        %v4102 = vld [vmem:[#allocation5 + $0x1a8] sm:$0xff]
        %v4103 = vld [vmem:[#allocation5 + $0x1b0] sm:$0xff]
        %v4104 = vld [vmem:[#allocation5 + $0x1b8] sm:$0xff]
        %v4105 = vld [vmem:[#allocation5 + $0x1c0] sm:$0xff]
        %v4106 = vld [vmem:[#allocation5 + $0x1c8] sm:$0xff]
        %v4107 = vld [vmem:[#allocation5 + $0x1d0] sm:$0xff]
        %v4108 = vld [vmem:[#allocation5 + $0x1d8] sm:$0xff]
        %v4109 = vld [vmem:[#allocation5 + $0x1e0] sm:$0xff]
        %v4110 = vld [vmem:[#allocation5 + $0x1e8] sm:$0xff]
        %v4111 = vld [vmem:[#allocation5 + $0x1f0] sm:$0xff]
        %v4112 = vld [vmem:[#allocation5 + $0x1f8] sm:$0xff]
        %v4113 = vld [vmem:[#allocation5 + $0x200] sm:$0xff]
        %v4114 = vld [vmem:[#allocation5 + $0x208] sm:$0xff]
        %v4115 = vld [vmem:[#allocation5 + $0x210] sm:$0xff]
        %v4116 = vld [vmem:[#allocation5 + $0x218] sm:$0xff]
        %v4117 = vld [vmem:[#allocation5 + $0x220] sm:$0xff]
        %v4118 = vld [vmem:[#allocation5 + $0x228] sm:$0xff]
        %v4119 = vld [vmem:[#allocation5 + $0x230] sm:$0xff]
        %v4120 = vld [vmem:[#allocation5 + $0x238] sm:$0xff]
        %v4121 = vld [vmem:[#allocation5 + $0x240] sm:$0xff]
        %v4122 = vld [vmem:[#allocation5 + $0x248] sm:$0xff]
        %v4123 = vld [vmem:[#allocation5 + $0x250] sm:$0xff]
        %v4124 = vld [vmem:[#allocation5 + $0x258] sm:$0xff]
        %v4125 = vld [vmem:[#allocation5 + $0x260] sm:$0xff]
        %v4126 = vld [vmem:[#allocation5 + $0x268] sm:$0xff]
        %v4127 = vld [vmem:[#allocation5 + $0x270] sm:$0xff]
        %v4128 = vld [vmem:[#allocation5 + $0x278] sm:$0xff]
        %v4129 = vld [vmem:[#allocation5 + $0x280] sm:$0xff]
        %v4130 = vld [vmem:[#allocation5 + $0x288] sm:$0xff]
        %v4131 = vld [vmem:[#allocation5 + $0x290] sm:$0xff]
        %v4132 = vld [vmem:[#allocation5 + $0x298] sm:$0xff]
        %v4133 = vld [vmem:[#allocation5 + $0x2a0] sm:$0xff]
        %v4134 = vld [vmem:[#allocation5 + $0x2a8] sm:$0xff]
        %v4135 = vld [vmem:[#allocation5 + $0x2b0] sm:$0xff]
        %v4136 = vld [vmem:[#allocation5 + $0x2b8] sm:$0xff]
        %v4137 = vld [vmem:[#allocation5 + $0x2c0] sm:$0xff]
        %v4138 = vld [vmem:[#allocation5 + $0x2c8] sm:$0xff]
        %v4139 = vld [vmem:[#allocation5 + $0x2d0] sm:$0xff]
        %v4140 = vld [vmem:[#allocation5 + $0x2d8] sm:$0xff]
        %v4141 = vld [vmem:[#allocation5 + $0x2e0] sm:$0xff]
        %v4142 = vld [vmem:[#allocation5 + $0x2e8] sm:$0xff]
        %v4143 = vld [vmem:[#allocation5 + $0x2f0] sm:$0xff]
        %v4144 = vld [vmem:[#allocation5 + $0x2f8] sm:$0xff]
        %v4145 = vld [vmem:[#allocation5 + $0x300] sm:$0xff]
        %v4146 = vld [vmem:[#allocation5 + $0x308] sm:$0xff]
        %v4147 = vld [vmem:[#allocation5 + $0x310] sm:$0xff]
        %v4148 = vld [vmem:[#allocation5 + $0x318] sm:$0xff]
        %v4149 = vld [vmem:[#allocation5 + $0x320] sm:$0xff]
        %v4150 = vld [vmem:[#allocation5 + $0x328] sm:$0xff]
        %v4151 = vld [vmem:[#allocation5 + $0x330] sm:$0xff]
        %v4152 = vld [vmem:[#allocation5 + $0x338] sm:$0xff]
        %v4153 = vld [vmem:[#allocation5 + $0x340] sm:$0xff]
        %v4154 = vld [vmem:[#allocation5 + $0x348] sm:$0xff]
        %v4155 = vld [vmem:[#allocation5 + $0x350] sm:$0xff]
        %v4156 = vld [vmem:[#allocation5 + $0x358] sm:$0xff]
        %v4157 = vld [vmem:[#allocation5 + $0x360] sm:$0xff]
        %v4158 = vld [vmem:[#allocation5 + $0x368] sm:$0xff]
        %v4159 = vld [vmem:[#allocation5 + $0x370] sm:$0xff]
        %v4160 = vld [vmem:[#allocation5 + $0x378] sm:$0xff]
        %v4161 = vld [vmem:[#allocation5 + $0x380] sm:$0xff]
        %v4162 = vld [vmem:[#allocation5 + $0x388] sm:$0xff]
        %v4163 = vld [vmem:[#allocation5 + $0x390] sm:$0xff]
        %v4164 = vld [vmem:[#allocation5 + $0x398] sm:$0xff]
        %v4165 = vld [vmem:[#allocation5 + $0x3a0] sm:$0xff]
        %v4166 = vld [vmem:[#allocation5 + $0x3a8] sm:$0xff]
        %v4167 = vld [vmem:[#allocation5 + $0x3b0] sm:$0xff]
        %v4168 = vld [vmem:[#allocation5 + $0x3b8] sm:$0xff]
        %v4169 = vld [vmem:[#allocation5 + $0x3c0] sm:$0xff]
        %v4170 = vld [vmem:[#allocation5 + $0x3c8] sm:$0xff]
        %v4171 = vld [vmem:[#allocation5 + $0x3d0] sm:$0xff]
        %v4172 = vld [vmem:[#allocation5 + $0x3d8] sm:$0xff]
        %v4173 = vld [vmem:[#allocation5 + $0x3e0] sm:$0xff]
        %v4174 = vld [vmem:[#allocation5 + $0x3e8] sm:$0xff]
        %v4175 = vld [vmem:[#allocation5 + $0x3f0] sm:$0xff]
        %v4176 = vld [vmem:[#allocation5 + $0x3f8] sm:$0xff]
        %v4177 = vld [vmem:[#allocation5 + $0x400] sm:$0xff]
        %v4178 = vld [vmem:[#allocation5 + $0x408] sm:$0xff]
        %v4179 = vld [vmem:[#allocation5 + $0x410] sm:$0xff]
        %v4180 = vld [vmem:[#allocation5 + $0x418] sm:$0xff]
        %v4181 = vld [vmem:[#allocation5 + $0x420] sm:$0xff]
        %v4182 = vld [vmem:[#allocation5 + $0x428] sm:$0xff]
        %v4183 = vld [vmem:[#allocation5 + $0x430] sm:$0xff]
        %v4184 = vld [vmem:[#allocation5 + $0x438] sm:$0xff]
        %v4185 = vld [vmem:[#allocation5 + $0x440] sm:$0xff]
        %v4186 = vld [vmem:[#allocation5 + $0x448] sm:$0xff]
        %v4187 = vld [vmem:[#allocation5 + $0x450] sm:$0xff]
        %v4188 = vld [vmem:[#allocation5 + $0x458] sm:$0xff]
        %v4189 = vld [vmem:[#allocation5 + $0x460] sm:$0xff]
        %v4190 = vld [vmem:[#allocation5 + $0x468] sm:$0xff]
        %v4191 = vld [vmem:[#allocation5 + $0x470] sm:$0xff]
        %v4192 = vld [vmem:[#allocation5 + $0x478] sm:$0xff]
        %v4193 = vld [vmem:[%s7] sm:$0x1]
        %v4195 = vlaneseq
        %v4196 = vshrl.u32 %v4195, 7
        %v4197 = vsub.s32 0, %v4196
        %v4198 = vrot.slane %v4193, %v4197
        %4200 = vmatprep.subr.mxu0 0.0
        %4201 = vmatpush1.msra.mxu0 %v4049
        %4202 = vmatprep.subr.mxu0 0.0
        %4203 = vmatpush1.msra.mxu0 %v4050
        %4204 = vmatprep.subr.mxu0 0.0
        %4205 = vmatpush1.msra.mxu0 %v4051
        %4206 = vmatprep.subr.mxu0 0.0
        %4207 = vmatpush1.msra.mxu0 %v4052
        %4208 = vmatprep.subr.mxu0 0.0
        %4209 = vmatpush1.msra.mxu0 %v4053
        %4210 = vmatprep.subr.mxu0 0.0
        %4211 = vmatpush1.msra.mxu0 %v4054
        %4212 = vmatprep.subr.mxu0 0.0
        %4213 = vmatpush1.msra.mxu0 %v4055
        %4214 = vmatprep.subr.mxu0 0.0
        %4215 = vmatpush1.msra.mxu0 %v4056
        %4216 = vmatprep.subr.mxu0 0.0
        %4217 = vmatpush1.msra.mxu0 %v4057
        %4218 = vmatprep.subr.mxu0 0.0
        %4219 = vmatpush1.msra.mxu0 %v4058
        %4220 = vmatprep.subr.mxu0 0.0
        %4221 = vmatpush1.msra.mxu0 %v4059
        %4222 = vmatprep.subr.mxu0 0.0
        %4223 = vmatpush1.msra.mxu0 %v4060
        %4224 = vmatprep.subr.mxu0 0.0
        %4225 = vmatpush1.msra.mxu0 %v4061
        %4226 = vmatprep.subr.mxu0 0.0
        %4227 = vmatpush1.msra.mxu0 %v4062
        %4228 = vmatprep.subr.mxu0 0.0
        %4229 = vmatpush1.msra.mxu0 %v4063
        %4230 = vmatprep.subr.mxu0 0.0
        %4231 = vmatpush1.msra.mxu0 %v4064
        %4232 = vmatprep.subr.mxu0 0.0
        %4233 = vmatpush1.msra.mxu0 %v4065
        %4234 = vmatprep.subr.mxu0 0.0
        %4235 = vmatpush1.msra.mxu0 %v4066
        %4236 = vmatprep.subr.mxu0 0.0
        %4237 = vmatpush1.msra.mxu0 %v4067
        %4238 = vmatprep.subr.mxu0 0.0
        %4239 = vmatpush1.msra.mxu0 %v4068
        %4240 = vmatprep.subr.mxu0 0.0
        %4241 = vmatpush1.msra.mxu0 %v4069
        %4242 = vmatprep.subr.mxu0 0.0
        %4243 = vmatpush1.msra.mxu0 %v4070
        %4244 = vmatprep.subr.mxu0 0.0
        %4245 = vmatpush1.msra.mxu0 %v4071
        %4246 = vmatprep.subr.mxu0 0.0
        %4247 = vmatpush1.msra.mxu0 %v4072
        %4248 = vmatprep.subr.mxu0 0.0
        %4249 = vmatpush1.msra.mxu0 %v4073
        %4250 = vmatprep.subr.mxu0 0.0
        %4251 = vmatpush1.msra.mxu0 %v4074
        %4252 = vmatprep.subr.mxu0 0.0
        %4253 = vmatpush1.msra.mxu0 %v4075
        %4254 = vmatprep.subr.mxu0 0.0
        %4255 = vmatpush1.msra.mxu0 %v4076
        %4256 = vmatprep.subr.mxu0 0.0
        %4257 = vmatpush1.msra.mxu0 %v4077
        %4258 = vmatprep.subr.mxu0 0.0
        %4259 = vmatpush1.msra.mxu0 %v4078
        %4260 = vmatprep.subr.mxu0 0.0
        %4261 = vmatpush1.msra.mxu0 %v4079
        %4262 = vmatprep.subr.mxu0 0.0
        %4263 = vmatpush1.msra.mxu0 %v4080
        %4264 = vmatprep.mubr.f32.mxu0 %v3762
        %4265 = vmatmul.mubr.f32.gmra.mrb[0].mxu0 %v3761
        %v4266 = vpop.f32.mrb[0].mxu0
        %v4267 = vadd.f32 %v4198, %v4266
        %v4268 = vpop.f32.mrb[0].mxu0
        %4269 = vmatprep.mubr.f32.mxu0 %v3771
        %4270 = vmatmul.mubr.f32.gmra.mrb[0].mxu0 %v3770
        %v4271 = vpop.f32.mrb[0].mxu0
        %v4272 = vadd.f32 %v4198, %v4271
        %v4273 = vpop.f32.mrb[0].mxu0
        %4274 = vmatprep.mubr.f32.mxu0 %v3780
        %4275 = vmatmul.mubr.f32.gmra.mrb[0].mxu0 %v3779
        %v4276 = vpop.f32.mrb[0].mxu0
        %v4277 = vadd.f32 %v4198, %v4276
        %v4278 = vpop.f32.mrb[0].mxu0
        %4279 = vmatprep.mubr.f32.mxu0 %v3789
        %4280 = vmatmul.mubr.f32.gmra.mrb[0].mxu0 %v3788
        %v4281 = vpop.f32.mrb[0].mxu0
        %v4282 = vadd.f32 %v4198, %v4281
        %v4283 = vpop.f32.mrb[0].mxu0
        %4284 = vmatprep.mubr.f32.mxu0 %v3798
        %4285 = vmatmul.mubr.f32.gmra.mrb[0].mxu0 %v3797
        %v4286 = vpop.f32.mrb[0].mxu0
        %v4287 = vadd.f32 %v4198, %v4286
        %v4288 = vpop.f32.mrb[0].mxu0
        %4289 = vmatprep.mubr.f32.mxu0 %v3807
        %4290 = vmatmul.mubr.f32.gmra.mrb[0].mxu0 %v3806
        %v4291 = vpop.f32.mrb[0].mxu0
        %v4292 = vadd.f32 %v4198, %v4291
        %v4293 = vpop.f32.mrb[0].mxu0
        %4294 = vmatprep.mubr.f32.mxu0 %v3816
        %4295 = vmatmul.mubr.f32.gmra.mrb[0].mxu0 %v3815
        %v4296 = vpop.f32.mrb[0].mxu0
        %v4297 = vadd.f32 %v4198, %v4296
        %v4298 = vpop.f32.mrb[0].mxu0
        %4299 = vmatprep.mubr.f32.mxu0 %v3825
        %4300 = vmatmul.mubr.f32.gmra.mrb[0].mxu0 %v3824
        %v4301 = vpop.f32.mrb[0].mxu0
        %v4302 = vadd.f32 %v4198, %v4301
        %v4303 = vpop.f32.mrb[0].mxu0
        %4304 = vmatprep.mubr.f32.mxu0 %v3834
        %4305 = vmatmul.mubr.f32.gmra.mrb[0].mxu0 %v3833
        %v4306 = vpop.f32.mrb[0].mxu0
        %v4307 = vadd.f32 %v4198, %v4306
        %v4308 = vpop.f32.mrb[0].mxu0
        %4309 = vmatprep.mubr.f32.mxu0 %v3843
        %4310 = vmatmul.mubr.f32.gmra.mrb[0].mxu0 %v3842
        %v4311 = vpop.f32.mrb[0].mxu0
        %v4312 = vadd.f32 %v4198, %v4311
        %v4313 = vpop.f32.mrb[0].mxu0
        %4314 = vmatprep.mubr.f32.mxu0 %v3852
        %4315 = vmatmul.mubr.f32.gmra.mrb[0].mxu0 %v3851
        %v4316 = vpop.f32.mrb[0].mxu0
        %v4317 = vadd.f32 %v4198, %v4316
        %v4318 = vpop.f32.mrb[0].mxu0
        %4319 = vmatprep.mubr.f32.mxu0 %v3861
        %4320 = vmatmul.mubr.f32.gmra.mrb[0].mxu0 %v3860
        %v4321 = vpop.f32.mrb[0].mxu0
        %v4322 = vadd.f32 %v4198, %v4321
        %v4323 = vpop.f32.mrb[0].mxu0
        %4324 = vmatprep.mubr.f32.mxu0 %v3870
        %4325 = vmatmul.mubr.f32.gmra.mrb[0].mxu0 %v3869
        %v4326 = vpop.f32.mrb[0].mxu0
        %v4327 = vadd.f32 %v4198, %v4326
        %v4328 = vpop.f32.mrb[0].mxu0
        %4329 = vmatprep.mubr.f32.mxu0 %v3879
        %4330 = vmatmul.mubr.f32.gmra.mrb[0].mxu0 %v3878
        %v4331 = vpop.f32.mrb[0].mxu0
        %v4332 = vadd.f32 %v4198, %v4331
        %v4333 = vpop.f32.mrb[0].mxu0
        %4334 = vmatprep.mubr.f32.mxu0 %v3888
        %4335 = vmatmul.mubr.f32.gmra.mrb[0].mxu0 %v3887
        %v4336 = vpop.f32.mrb[0].mxu0
        %v4337 = vadd.f32 %v4198, %v4336
        %v4338 = vpop.f32.mrb[0].mxu0
        %4339 = vmatprep.mubr.f32.mxu0 %v3897
        %4340 = vmatmul.mubr.f32.gmra.mrb[0].mxu0 %v3896
        %v4341 = vpop.f32.mrb[0].mxu0
        %v4342 = vadd.f32 %v4198, %v4341
        %v4343 = vpop.f32.mrb[0].mxu0
        %4344 = vmatprep.mubr.f32.mxu0 %v3906
        %4345 = vmatmul.mubr.f32.gmra.mrb[0].mxu0 %v3905
        %v4346 = vpop.f32.mrb[0].mxu0
        %v4347 = vadd.f32 %v4198, %v4346
        %v4348 = vpop.f32.mrb[0].mxu0
        %4349 = vmatprep.mubr.f32.mxu0 %v3915
        %4350 = vmatmul.mubr.f32.gmra.mrb[0].mxu0 %v3914
        %v4351 = vpop.f32.mrb[0].mxu0
        %v4352 = vadd.f32 %v4198, %v4351
        %v4353 = vpop.f32.mrb[0].mxu0
        %4354 = vmatprep.mubr.f32.mxu0 %v3924
        %4355 = vmatmul.mubr.f32.gmra.mrb[0].mxu0 %v3923
        %v4356 = vpop.f32.mrb[0].mxu0
        %v4357 = vadd.f32 %v4198, %v4356
        %v4358 = vpop.f32.mrb[0].mxu0
        %4359 = vmatprep.mubr.f32.mxu0 %v3933
        %4360 = vmatmul.mubr.f32.gmra.mrb[0].mxu0 %v3932
        %v4361 = vpop.f32.mrb[0].mxu0
        %v4362 = vadd.f32 %v4198, %v4361
        %v4363 = vpop.f32.mrb[0].mxu0
        %4364 = vmatprep.mubr.f32.mxu0 %v3942
        %4365 = vmatmul.mubr.f32.gmra.mrb[0].mxu0 %v3941
        %v4366 = vpop.f32.mrb[0].mxu0
        %v4367 = vadd.f32 %v4198, %v4366
        %v4368 = vpop.f32.mrb[0].mxu0
        %4369 = vmatprep.mubr.f32.mxu0 %v3951
        %4370 = vmatmul.mubr.f32.gmra.mrb[0].mxu0 %v3950
        %v4371 = vpop.f32.mrb[0].mxu0
        %v4372 = vadd.f32 %v4198, %v4371
        %v4373 = vpop.f32.mrb[0].mxu0
        %4374 = vmatprep.mubr.f32.mxu0 %v3960
        %4375 = vmatmul.mubr.f32.gmra.mrb[0].mxu0 %v3959
        %v4376 = vpop.f32.mrb[0].mxu0
        %v4377 = vadd.f32 %v4198, %v4376
        %v4378 = vpop.f32.mrb[0].mxu0
        %4379 = vmatprep.mubr.f32.mxu0 %v3969
        %4380 = vmatmul.mubr.f32.gmra.mrb[0].mxu0 %v3968
        %v4381 = vpop.f32.mrb[0].mxu0
        %v4382 = vadd.f32 %v4198, %v4381
        %v4383 = vpop.f32.mrb[0].mxu0
        %4384 = vmatprep.mubr.f32.mxu0 %v3978
        %4385 = vmatmul.mubr.f32.gmra.mrb[0].mxu0 %v3977
        %v4386 = vpop.f32.mrb[0].mxu0
        %v4387 = vadd.f32 %v4198, %v4386
        %v4388 = vpop.f32.mrb[0].mxu0
        %4389 = vmatprep.mubr.f32.mxu0 %v3987
        %4390 = vmatmul.mubr.f32.gmra.mrb[0].mxu0 %v3986
        %v4391 = vpop.f32.mrb[0].mxu0
        %v4392 = vadd.f32 %v4198, %v4391
        %v4393 = vpop.f32.mrb[0].mxu0
        %4394 = vmatprep.mubr.f32.mxu0 %v3996
        %4395 = vmatmul.mubr.f32.gmra.mrb[0].mxu0 %v3995
        %v4396 = vpop.f32.mrb[0].mxu0
        %v4397 = vadd.f32 %v4198, %v4396
        %v4398 = vpop.f32.mrb[0].mxu0
        %4399 = vmatprep.mubr.f32.mxu0 %v4005
        %4400 = vmatmul.mubr.f32.gmra.mrb[0].mxu0 %v4004
        %v4401 = vpop.f32.mrb[0].mxu0
        %v4402 = vadd.f32 %v4198, %v4401
        %v4403 = vpop.f32.mrb[0].mxu0
        %4404 = vmatprep.mubr.f32.mxu0 %v4014
        %4405 = vmatmul.mubr.f32.gmra.mrb[0].mxu0 %v4013
        %v4406 = vpop.f32.mrb[0].mxu0
        %v4407 = vadd.f32 %v4198, %v4406
        %v4408 = vpop.f32.mrb[0].mxu0
        %4409 = vmatprep.mubr.f32.mxu0 %v4023
        %4410 = vmatmul.mubr.f32.gmra.mrb[0].mxu0 %v4022
        %v4411 = vpop.f32.mrb[0].mxu0
        %v4412 = vadd.f32 %v4198, %v4411
        %v4413 = vpop.f32.mrb[0].mxu0
        %4414 = vmatprep.mubr.f32.mxu0 %v4032
        %4415 = vmatmul.mubr.f32.gmra.mrb[0].mxu0 %v4031
        %v4416 = vpop.f32.mrb[0].mxu0
        %v4417 = vadd.f32 %v4198, %v4416
        %v4418 = vpop.f32.mrb[0].mxu0
        %4419 = vmatprep.mubr.f32.mxu0 %v4041
        %4420 = vmatmul.mubr.f32.gmra.mrb[0].mxu0 %v4040
        %v4421 = vpop.f32.mrb[0].mxu0
        %v4422 = vadd.f32 %v4198, %v4421
        %v4423 = vpop.f32.mrb[0].mxu0
        %4424 = vdwg.mxu0
        %4425 = vmatprep.subr.mxu0 0.0
        %4426 = vmatpush1.msra.mxu0 %v4081
        %4427 = vmatprep.subr.mxu0 0.0
        %4428 = vmatpush1.msra.mxu0 %v4082
        %4429 = vmatprep.subr.mxu0 0.0
        %4430 = vmatpush1.msra.mxu0 %v4083
        %4431 = vmatprep.subr.mxu0 0.0
        %4432 = vmatpush1.msra.mxu0 %v4084
        %4433 = vmatprep.subr.mxu0 0.0
        %4434 = vmatpush1.msra.mxu0 %v4085
        %4435 = vmatprep.subr.mxu0 0.0
        %4436 = vmatpush1.msra.mxu0 %v4086
        %4437 = vmatprep.subr.mxu0 0.0
        %4438 = vmatpush1.msra.mxu0 %v4087
        %4439 = vmatprep.subr.mxu0 0.0
        %4440 = vmatpush1.msra.mxu0 %v4088
        %4441 = vmatprep.subr.mxu0 0.0
        %4442 = vmatpush1.msra.mxu0 %v4089
        %4443 = vmatprep.subr.mxu0 0.0
        %4444 = vmatpush1.msra.mxu0 %v4090
        %4445 = vmatprep.subr.mxu0 0.0
        %4446 = vmatpush1.msra.mxu0 %v4091
        %4447 = vmatprep.subr.mxu0 0.0
        %4448 = vmatpush1.msra.mxu0 %v4092
        %4449 = vmatprep.subr.mxu0 0.0
        %4450 = vmatpush1.msra.mxu0 %v4093
        %4451 = vmatprep.subr.mxu0 0.0
        %4452 = vmatpush1.msra.mxu0 %v4094
        %4453 = vmatprep.subr.mxu0 0.0
        %4454 = vmatpush1.msra.mxu0 %v4095
        %4455 = vmatprep.subr.mxu0 0.0
        %4456 = vmatpush1.msra.mxu0 %v4096
        %4457 = vmatprep.subr.mxu0 0.0
        %4458 = vmatpush1.msra.mxu0 %v4097
        %4459 = vmatprep.subr.mxu0 0.0
        %4460 = vmatpush1.msra.mxu0 %v4098
        %4461 = vmatprep.subr.mxu0 0.0
        %4462 = vmatpush1.msra.mxu0 %v4099
        %4463 = vmatprep.subr.mxu0 0.0
        %4464 = vmatpush1.msra.mxu0 %v4100
        %4465 = vmatprep.subr.mxu0 0.0
        %4466 = vmatpush1.msra.mxu0 %v4101
        %4467 = vmatprep.subr.mxu0 0.0
        %4468 = vmatpush1.msra.mxu0 %v4102
        %4469 = vmatprep.subr.mxu0 0.0
        %4470 = vmatpush1.msra.mxu0 %v4103
        %4471 = vmatprep.subr.mxu0 0.0
        %4472 = vmatpush1.msra.mxu0 %v4104
        %4473 = vmatprep.subr.mxu0 0.0
        %4474 = vmatpush1.msra.mxu0 %v4105
        %4475 = vmatprep.subr.mxu0 0.0
        %4476 = vmatpush1.msra.mxu0 %v4106
        %4477 = vmatprep.subr.mxu0 0.0
        %4478 = vmatpush1.msra.mxu0 %v4107
        %4479 = vmatprep.subr.mxu0 0.0
        %4480 = vmatpush1.msra.mxu0 %v4108
        %4481 = vmatprep.subr.mxu0 0.0
        %4482 = vmatpush1.msra.mxu0 %v4109
        %4483 = vmatprep.subr.mxu0 0.0
        %4484 = vmatpush1.msra.mxu0 %v4110
        %4485 = vmatprep.subr.mxu0 0.0
        %4486 = vmatpush1.msra.mxu0 %v4111
        %4487 = vmatprep.subr.mxu0 0.0
        %4488 = vmatpush1.msra.mxu0 %v4112
        %4489 = vmatprep.mubr.f32.mxu0 %v3764
        %4490 = vmatmul.mubr.f32.gmra.mrb[0].mxu0 %v3763
        %v4491 = vpop.f32.mrb[0].mxu0
        %v4492 = vadd.f32 %v4267, %v4491
        %v4493 = vpop.f32.mrb[0].mxu0
        %4494 = vmatprep.mubr.f32.mxu0 %v3773
        %4495 = vmatmul.mubr.f32.gmra.mrb[0].mxu0 %v3772
        %v4496 = vpop.f32.mrb[0].mxu0
        %v4497 = vadd.f32 %v4272, %v4496
        %v4498 = vpop.f32.mrb[0].mxu0
        %4499 = vmatprep.mubr.f32.mxu0 %v3782
        %4500 = vmatmul.mubr.f32.gmra.mrb[0].mxu0 %v3781
        %v4501 = vpop.f32.mrb[0].mxu0
        %v4502 = vadd.f32 %v4277, %v4501
        %v4503 = vpop.f32.mrb[0].mxu0
        %4504 = vmatprep.mubr.f32.mxu0 %v3791
        %4505 = vmatmul.mubr.f32.gmra.mrb[0].mxu0 %v3790
        %v4506 = vpop.f32.mrb[0].mxu0
        %v4507 = vadd.f32 %v4282, %v4506
        %v4508 = vpop.f32.mrb[0].mxu0
        %4509 = vmatprep.mubr.f32.mxu0 %v3800
        %4510 = vmatmul.mubr.f32.gmra.mrb[0].mxu0 %v3799
        %v4511 = vpop.f32.mrb[0].mxu0
        %v4512 = vadd.f32 %v4287, %v4511
        %v4513 = vpop.f32.mrb[0].mxu0
        %4514 = vmatprep.mubr.f32.mxu0 %v3809
        %4515 = vmatmul.mubr.f32.gmra.mrb[0].mxu0 %v3808
        %v4516 = vpop.f32.mrb[0].mxu0
        %v4517 = vadd.f32 %v4292, %v4516
        %v4518 = vpop.f32.mrb[0].mxu0
        %4519 = vmatprep.mubr.f32.mxu0 %v3818
        %4520 = vmatmul.mubr.f32.gmra.mrb[0].mxu0 %v3817
        %v4521 = vpop.f32.mrb[0].mxu0
        %v4522 = vadd.f32 %v4297, %v4521
        %v4523 = vpop.f32.mrb[0].mxu0
        %4524 = vmatprep.mubr.f32.mxu0 %v3827
        %4525 = vmatmul.mubr.f32.gmra.mrb[0].mxu0 %v3826
        %v4526 = vpop.f32.mrb[0].mxu0
        %v4527 = vadd.f32 %v4302, %v4526
        %v4528 = vpop.f32.mrb[0].mxu0
        %4529 = vmatprep.mubr.f32.mxu0 %v3836
        %4530 = vmatmul.mubr.f32.gmra.mrb[0].mxu0 %v3835
        %v4531 = vpop.f32.mrb[0].mxu0
        %v4532 = vadd.f32 %v4307, %v4531
        %v4533 = vpop.f32.mrb[0].mxu0
        %4534 = vmatprep.mubr.f32.mxu0 %v3845
        %4535 = vmatmul.mubr.f32.gmra.mrb[0].mxu0 %v3844
        %v4536 = vpop.f32.mrb[0].mxu0
        %v4537 = vadd.f32 %v4312, %v4536
        %v4538 = vpop.f32.mrb[0].mxu0
        %4539 = vmatprep.mubr.f32.mxu0 %v3854
        %4540 = vmatmul.mubr.f32.gmra.mrb[0].mxu0 %v3853
        %v4541 = vpop.f32.mrb[0].mxu0
        %v4542 = vadd.f32 %v4317, %v4541
        %v4543 = vpop.f32.mrb[0].mxu0
        %4544 = vmatprep.mubr.f32.mxu0 %v3863
        %4545 = vmatmul.mubr.f32.gmra.mrb[0].mxu0 %v3862
        %v4546 = vpop.f32.mrb[0].mxu0
        %v4547 = vadd.f32 %v4322, %v4546
        %v4548 = vpop.f32.mrb[0].mxu0
        %4549 = vmatprep.mubr.f32.mxu0 %v3872
        %4550 = vmatmul.mubr.f32.gmra.mrb[0].mxu0 %v3871
        %v4551 = vpop.f32.mrb[0].mxu0
        %v4552 = vadd.f32 %v4327, %v4551
        %v4553 = vpop.f32.mrb[0].mxu0
        %4554 = vmatprep.mubr.f32.mxu0 %v3881
        %4555 = vmatmul.mubr.f32.gmra.mrb[0].mxu0 %v3880
        %v4556 = vpop.f32.mrb[0].mxu0
        %v4557 = vadd.f32 %v4332, %v4556
        %v4558 = vpop.f32.mrb[0].mxu0
        %4559 = vmatprep.mubr.f32.mxu0 %v3890
        %4560 = vmatmul.mubr.f32.gmra.mrb[0].mxu0 %v3889
        %v4561 = vpop.f32.mrb[0].mxu0
        %v4562 = vadd.f32 %v4337, %v4561
        %v4563 = vpop.f32.mrb[0].mxu0
        %4564 = vmatprep.mubr.f32.mxu0 %v3899
        %4565 = vmatmul.mubr.f32.gmra.mrb[0].mxu0 %v3898
        %v4566 = vpop.f32.mrb[0].mxu0
        %v4567 = vadd.f32 %v4342, %v4566
        %v4568 = vpop.f32.mrb[0].mxu0
        %4569 = vmatprep.mubr.f32.mxu0 %v3908
        %4570 = vmatmul.mubr.f32.gmra.mrb[0].mxu0 %v3907
        %v4571 = vpop.f32.mrb[0].mxu0
        %v4572 = vadd.f32 %v4347, %v4571
        %v4573 = vpop.f32.mrb[0].mxu0
        %4574 = vmatprep.mubr.f32.mxu0 %v3917
        %4575 = vmatmul.mubr.f32.gmra.mrb[0].mxu0 %v3916
        %v4576 = vpop.f32.mrb[0].mxu0
        %v4577 = vadd.f32 %v4352, %v4576
        %v4578 = vpop.f32.mrb[0].mxu0
        %4579 = vmatprep.mubr.f32.mxu0 %v3926
        %4580 = vmatmul.mubr.f32.gmra.mrb[0].mxu0 %v3925
        %v4581 = vpop.f32.mrb[0].mxu0
        %v4582 = vadd.f32 %v4357, %v4581
        %v4583 = vpop.f32.mrb[0].mxu0
        %4584 = vmatprep.mubr.f32.mxu0 %v3935
        %4585 = vmatmul.mubr.f32.gmra.mrb[0].mxu0 %v3934
        %v4586 = vpop.f32.mrb[0].mxu0
        %v4587 = vadd.f32 %v4362, %v4586
        %v4588 = vpop.f32.mrb[0].mxu0
        %4589 = vmatprep.mubr.f32.mxu0 %v3944
        %4590 = vmatmul.mubr.f32.gmra.mrb[0].mxu0 %v3943
        %v4591 = vpop.f32.mrb[0].mxu0
        %v4592 = vadd.f32 %v4367, %v4591
        %v4593 = vpop.f32.mrb[0].mxu0
        %4594 = vmatprep.mubr.f32.mxu0 %v3953
        %4595 = vmatmul.mubr.f32.gmra.mrb[0].mxu0 %v3952
        %v4596 = vpop.f32.mrb[0].mxu0
        %v4597 = vadd.f32 %v4372, %v4596
        %v4598 = vpop.f32.mrb[0].mxu0
        %4599 = vmatprep.mubr.f32.mxu0 %v3962
        %4600 = vmatmul.mubr.f32.gmra.mrb[0].mxu0 %v3961
        %v4601 = vpop.f32.mrb[0].mxu0
        %v4602 = vadd.f32 %v4377, %v4601
        %v4603 = vpop.f32.mrb[0].mxu0
        %4604 = vmatprep.mubr.f32.mxu0 %v3971
        %4605 = vmatmul.mubr.f32.gmra.mrb[0].mxu0 %v3970
        %v4606 = vpop.f32.mrb[0].mxu0
        %v4607 = vadd.f32 %v4382, %v4606
        %v4608 = vpop.f32.mrb[0].mxu0
        %4609 = vmatprep.mubr.f32.mxu0 %v3980
        %4610 = vmatmul.mubr.f32.gmra.mrb[0].mxu0 %v3979
        %v4611 = vpop.f32.mrb[0].mxu0
        %v4612 = vadd.f32 %v4387, %v4611
        %v4613 = vpop.f32.mrb[0].mxu0
        %4614 = vmatprep.mubr.f32.mxu0 %v3989
        %4615 = vmatmul.mubr.f32.gmra.mrb[0].mxu0 %v3988
        %v4616 = vpop.f32.mrb[0].mxu0
        %v4617 = vadd.f32 %v4392, %v4616
        %v4618 = vpop.f32.mrb[0].mxu0
        %4619 = vmatprep.mubr.f32.mxu0 %v3998
        %4620 = vmatmul.mubr.f32.gmra.mrb[0].mxu0 %v3997
        %v4621 = vpop.f32.mrb[0].mxu0
        %v4622 = vadd.f32 %v4397, %v4621
        %v4623 = vpop.f32.mrb[0].mxu0
        %4624 = vmatprep.mubr.f32.mxu0 %v4007
        %4625 = vmatmul.mubr.f32.gmra.mrb[0].mxu0 %v4006
        %v4626 = vpop.f32.mrb[0].mxu0
        %v4627 = vadd.f32 %v4402, %v4626
        %v4628 = vpop.f32.mrb[0].mxu0
        %4629 = vmatprep.mubr.f32.mxu0 %v4016
        %4630 = vmatmul.mubr.f32.gmra.mrb[0].mxu0 %v4015
        %v4631 = vpop.f32.mrb[0].mxu0
        %v4632 = vadd.f32 %v4407, %v4631
        %v4633 = vpop.f32.mrb[0].mxu0
        %4634 = vmatprep.mubr.f32.mxu0 %v4025
        %4635 = vmatmul.mubr.f32.gmra.mrb[0].mxu0 %v4024
        %v4636 = vpop.f32.mrb[0].mxu0
        %v4637 = vadd.f32 %v4412, %v4636
        %v4638 = vpop.f32.mrb[0].mxu0
        %4639 = vmatprep.mubr.f32.mxu0 %v4034
        %4640 = vmatmul.mubr.f32.gmra.mrb[0].mxu0 %v4033
        %v4641 = vpop.f32.mrb[0].mxu0
        %v4642 = vadd.f32 %v4417, %v4641
        %v4643 = vpop.f32.mrb[0].mxu0
        %4644 = vmatprep.mubr.f32.mxu0 %v4043
        %4645 = vmatmul.mubr.f32.gmra.mrb[0].mxu0 %v4042
        %v4646 = vpop.f32.mrb[0].mxu0
        %v4647 = vadd.f32 %v4422, %v4646
        %v4648 = vpop.f32.mrb[0].mxu0
        %4649 = vdwg.mxu0
        %4650 = vmatprep.subr.mxu0 0.0
        %4651 = vmatpush1.msra.mxu0 %v4113
        %4652 = vmatprep.subr.mxu0 0.0
        %4653 = vmatpush1.msra.mxu0 %v4114
        %4654 = vmatprep.subr.mxu0 0.0
        %4655 = vmatpush1.msra.mxu0 %v4115
        %4656 = vmatprep.subr.mxu0 0.0
        %4657 = vmatpush1.msra.mxu0 %v4116
        %4658 = vmatprep.subr.mxu0 0.0
        %4659 = vmatpush1.msra.mxu0 %v4117
        %4660 = vmatprep.subr.mxu0 0.0
        %4661 = vmatpush1.msra.mxu0 %v4118
        %4662 = vmatprep.subr.mxu0 0.0
        %4663 = vmatpush1.msra.mxu0 %v4119
        %4664 = vmatprep.subr.mxu0 0.0
        %4665 = vmatpush1.msra.mxu0 %v4120
        %4666 = vmatprep.subr.mxu0 0.0
        %4667 = vmatpush1.msra.mxu0 %v4121
        %4668 = vmatprep.subr.mxu0 0.0
        %4669 = vmatpush1.msra.mxu0 %v4122
        %4670 = vmatprep.subr.mxu0 0.0
        %4671 = vmatpush1.msra.mxu0 %v4123
        %4672 = vmatprep.subr.mxu0 0.0
        %4673 = vmatpush1.msra.mxu0 %v4124
        %4674 = vmatprep.subr.mxu0 0.0
        %4675 = vmatpush1.msra.mxu0 %v4125
        %4676 = vmatprep.subr.mxu0 0.0
        %4677 = vmatpush1.msra.mxu0 %v4126
        %4678 = vmatprep.subr.mxu0 0.0
        %4679 = vmatpush1.msra.mxu0 %v4127
        %4680 = vmatprep.subr.mxu0 0.0
        %4681 = vmatpush1.msra.mxu0 %v4128
        %4682 = vmatprep.subr.mxu0 0.0
        %4683 = vmatpush1.msra.mxu0 %v4129
        %4684 = vmatprep.subr.mxu0 0.0
        %4685 = vmatpush1.msra.mxu0 %v4130
        %4686 = vmatprep.subr.mxu0 0.0
        %4687 = vmatpush1.msra.mxu0 %v4131
        %4688 = vmatprep.subr.mxu0 0.0
        %4689 = vmatpush1.msra.mxu0 %v4132
        %4690 = vmatprep.subr.mxu0 0.0
        %4691 = vmatpush1.msra.mxu0 %v4133
        %4692 = vmatprep.subr.mxu0 0.0
        %4693 = vmatpush1.msra.mxu0 %v4134
        %4694 = vmatprep.subr.mxu0 0.0
        %4695 = vmatpush1.msra.mxu0 %v4135
        %4696 = vmatprep.subr.mxu0 0.0
        %4697 = vmatpush1.msra.mxu0 %v4136
        %4698 = vmatprep.subr.mxu0 0.0
        %4699 = vmatpush1.msra.mxu0 %v4137
        %4700 = vmatprep.subr.mxu0 0.0
        %4701 = vmatpush1.msra.mxu0 %v4138
        %4702 = vmatprep.subr.mxu0 0.0
        %4703 = vmatpush1.msra.mxu0 %v4139
        %4704 = vmatprep.subr.mxu0 0.0
        %4705 = vmatpush1.msra.mxu0 %v4140
        %4706 = vmatprep.subr.mxu0 0.0
        %4707 = vmatpush1.msra.mxu0 %v4141
        %4708 = vmatprep.subr.mxu0 0.0
        %4709 = vmatpush1.msra.mxu0 %v4142
        %4710 = vmatprep.subr.mxu0 0.0
        %4711 = vmatpush1.msra.mxu0 %v4143
        %4712 = vmatprep.subr.mxu0 0.0
        %4713 = vmatpush1.msra.mxu0 %v4144
        %4714 = vmatprep.mubr.f32.mxu0 %v3766
        %4715 = vmatmul.mubr.f32.gmra.mrb[0].mxu0 %v3765
        %v4716 = vpop.f32.mrb[0].mxu0
        %v4717 = vadd.f32 %v4492, %v4716
        %v4718 = vpop.f32.mrb[0].mxu0
        %4719 = vmatprep.mubr.f32.mxu0 %v3775
        %4720 = vmatmul.mubr.f32.gmra.mrb[0].mxu0 %v3774
        %v4721 = vpop.f32.mrb[0].mxu0
        %v4722 = vadd.f32 %v4497, %v4721
        %v4723 = vpop.f32.mrb[0].mxu0
        %4724 = vmatprep.mubr.f32.mxu0 %v3784
        %4725 = vmatmul.mubr.f32.gmra.mrb[0].mxu0 %v3783
        %v4726 = vpop.f32.mrb[0].mxu0
        %v4727 = vadd.f32 %v4502, %v4726
        %v4728 = vpop.f32.mrb[0].mxu0
        %4729 = vmatprep.mubr.f32.mxu0 %v3793
        %4730 = vmatmul.mubr.f32.gmra.mrb[0].mxu0 %v3792
        %v4731 = vpop.f32.mrb[0].mxu0
        %v4732 = vadd.f32 %v4507, %v4731
        %v4733 = vpop.f32.mrb[0].mxu0
        %4734 = vmatprep.mubr.f32.mxu0 %v3802
        %4735 = vmatmul.mubr.f32.gmra.mrb[0].mxu0 %v3801
        %v4736 = vpop.f32.mrb[0].mxu0
        %v4737 = vadd.f32 %v4512, %v4736
        %v4738 = vpop.f32.mrb[0].mxu0
        %4739 = vmatprep.mubr.f32.mxu0 %v3811
        %4740 = vmatmul.mubr.f32.gmra.mrb[0].mxu0 %v3810
        %v4741 = vpop.f32.mrb[0].mxu0
        %v4742 = vadd.f32 %v4517, %v4741
        %v4743 = vpop.f32.mrb[0].mxu0
        %4744 = vmatprep.mubr.f32.mxu0 %v3820
        %4745 = vmatmul.mubr.f32.gmra.mrb[0].mxu0 %v3819
        %v4746 = vpop.f32.mrb[0].mxu0
        %v4747 = vadd.f32 %v4522, %v4746
        %v4748 = vpop.f32.mrb[0].mxu0
        %4749 = vmatprep.mubr.f32.mxu0 %v3829
        %4750 = vmatmul.mubr.f32.gmra.mrb[0].mxu0 %v3828
        %v4751 = vpop.f32.mrb[0].mxu0
        %v4752 = vadd.f32 %v4527, %v4751
        %v4753 = vpop.f32.mrb[0].mxu0
        %4754 = vmatprep.mubr.f32.mxu0 %v3838
        %4755 = vmatmul.mubr.f32.gmra.mrb[0].mxu0 %v3837
        %v4756 = vpop.f32.mrb[0].mxu0
        %v4757 = vadd.f32 %v4532, %v4756
        %v4758 = vpop.f32.mrb[0].mxu0
        %4759 = vmatprep.mubr.f32.mxu0 %v3847
        %4760 = vmatmul.mubr.f32.gmra.mrb[0].mxu0 %v3846
        %v4761 = vpop.f32.mrb[0].mxu0
        %v4762 = vadd.f32 %v4537, %v4761
        %v4763 = vpop.f32.mrb[0].mxu0
        %4764 = vmatprep.mubr.f32.mxu0 %v3856
        %4765 = vmatmul.mubr.f32.gmra.mrb[0].mxu0 %v3855
        %v4766 = vpop.f32.mrb[0].mxu0
        %v4767 = vadd.f32 %v4542, %v4766
        %v4768 = vpop.f32.mrb[0].mxu0
        %4769 = vmatprep.mubr.f32.mxu0 %v3865
        %4770 = vmatmul.mubr.f32.gmra.mrb[0].mxu0 %v3864
        %v4771 = vpop.f32.mrb[0].mxu0
        %v4772 = vadd.f32 %v4547, %v4771
        %v4773 = vpop.f32.mrb[0].mxu0
        %4774 = vmatprep.mubr.f32.mxu0 %v3874
        %4775 = vmatmul.mubr.f32.gmra.mrb[0].mxu0 %v3873
        %v4776 = vpop.f32.mrb[0].mxu0
        %v4777 = vadd.f32 %v4552, %v4776
        %v4778 = vpop.f32.mrb[0].mxu0
        %4779 = vmatprep.mubr.f32.mxu0 %v3883
        %4780 = vmatmul.mubr.f32.gmra.mrb[0].mxu0 %v3882
        %v4781 = vpop.f32.mrb[0].mxu0
        %v4782 = vadd.f32 %v4557, %v4781
        %v4783 = vpop.f32.mrb[0].mxu0
        %4784 = vmatprep.mubr.f32.mxu0 %v3892
        %4785 = vmatmul.mubr.f32.gmra.mrb[0].mxu0 %v3891
        %v4786 = vpop.f32.mrb[0].mxu0
        %v4787 = vadd.f32 %v4562, %v4786
        %v4788 = vpop.f32.mrb[0].mxu0
        %4789 = vmatprep.mubr.f32.mxu0 %v3901
        %4790 = vmatmul.mubr.f32.gmra.mrb[0].mxu0 %v3900
        %v4791 = vpop.f32.mrb[0].mxu0
        %v4792 = vadd.f32 %v4567, %v4791
        %v4793 = vpop.f32.mrb[0].mxu0
        %4794 = vmatprep.mubr.f32.mxu0 %v3910
        %4795 = vmatmul.mubr.f32.gmra.mrb[0].mxu0 %v3909
        %v4796 = vpop.f32.mrb[0].mxu0
        %v4797 = vadd.f32 %v4572, %v4796
        %v4798 = vpop.f32.mrb[0].mxu0
        %4799 = vmatprep.mubr.f32.mxu0 %v3919
        %4800 = vmatmul.mubr.f32.gmra.mrb[0].mxu0 %v3918
        %v4801 = vpop.f32.mrb[0].mxu0
        %v4802 = vadd.f32 %v4577, %v4801
        %v4803 = vpop.f32.mrb[0].mxu0
        %4804 = vmatprep.mubr.f32.mxu0 %v3928
        %4805 = vmatmul.mubr.f32.gmra.mrb[0].mxu0 %v3927
        %v4806 = vpop.f32.mrb[0].mxu0
        %v4807 = vadd.f32 %v4582, %v4806
        %v4808 = vpop.f32.mrb[0].mxu0
        %4809 = vmatprep.mubr.f32.mxu0 %v3937
        %4810 = vmatmul.mubr.f32.gmra.mrb[0].mxu0 %v3936
        %v4811 = vpop.f32.mrb[0].mxu0
        %v4812 = vadd.f32 %v4587, %v4811
        %v4813 = vpop.f32.mrb[0].mxu0
        %4814 = vmatprep.mubr.f32.mxu0 %v3946
        %4815 = vmatmul.mubr.f32.gmra.mrb[0].mxu0 %v3945
        %v4816 = vpop.f32.mrb[0].mxu0
        %v4817 = vadd.f32 %v4592, %v4816
        %v4818 = vpop.f32.mrb[0].mxu0
        %4819 = vmatprep.mubr.f32.mxu0 %v3955
        %4820 = vmatmul.mubr.f32.gmra.mrb[0].mxu0 %v3954
        %v4821 = vpop.f32.mrb[0].mxu0
        %v4822 = vadd.f32 %v4597, %v4821
        %v4823 = vpop.f32.mrb[0].mxu0
        %4824 = vmatprep.mubr.f32.mxu0 %v3964
        %4825 = vmatmul.mubr.f32.gmra.mrb[0].mxu0 %v3963
        %v4826 = vpop.f32.mrb[0].mxu0
        %v4827 = vadd.f32 %v4602, %v4826
        %v4828 = vpop.f32.mrb[0].mxu0
        %4829 = vmatprep.mubr.f32.mxu0 %v3973
        %4830 = vmatmul.mubr.f32.gmra.mrb[0].mxu0 %v3972
        %v4831 = vpop.f32.mrb[0].mxu0
        %v4832 = vadd.f32 %v4607, %v4831
        %v4833 = vpop.f32.mrb[0].mxu0
        %4834 = vmatprep.mubr.f32.mxu0 %v3982
        %4835 = vmatmul.mubr.f32.gmra.mrb[0].mxu0 %v3981
        %v4836 = vpop.f32.mrb[0].mxu0
        %v4837 = vadd.f32 %v4612, %v4836
        %v4838 = vpop.f32.mrb[0].mxu0
        %4839 = vmatprep.mubr.f32.mxu0 %v3991
        %4840 = vmatmul.mubr.f32.gmra.mrb[0].mxu0 %v3990
        %v4841 = vpop.f32.mrb[0].mxu0
        %v4842 = vadd.f32 %v4617, %v4841
        %v4843 = vpop.f32.mrb[0].mxu0
        %4844 = vmatprep.mubr.f32.mxu0 %v4000
        %4845 = vmatmul.mubr.f32.gmra.mrb[0].mxu0 %v3999
        %v4846 = vpop.f32.mrb[0].mxu0
        %v4847 = vadd.f32 %v4622, %v4846
        %v4848 = vpop.f32.mrb[0].mxu0
        %4849 = vmatprep.mubr.f32.mxu0 %v4009
        %4850 = vmatmul.mubr.f32.gmra.mrb[0].mxu0 %v4008
        %v4851 = vpop.f32.mrb[0].mxu0
        %v4852 = vadd.f32 %v4627, %v4851
        %v4853 = vpop.f32.mrb[0].mxu0
        %4854 = vmatprep.mubr.f32.mxu0 %v4018
        %4855 = vmatmul.mubr.f32.gmra.mrb[0].mxu0 %v4017
        %v4856 = vpop.f32.mrb[0].mxu0
        %v4857 = vadd.f32 %v4632, %v4856
        %v4858 = vpop.f32.mrb[0].mxu0
        %4859 = vmatprep.mubr.f32.mxu0 %v4027
        %4860 = vmatmul.mubr.f32.gmra.mrb[0].mxu0 %v4026
        %v4861 = vpop.f32.mrb[0].mxu0
        %v4862 = vadd.f32 %v4637, %v4861
        %v4863 = vpop.f32.mrb[0].mxu0
        %4864 = vmatprep.mubr.f32.mxu0 %v4036
        %4865 = vmatmul.mubr.f32.gmra.mrb[0].mxu0 %v4035
        %v4866 = vpop.f32.mrb[0].mxu0
        %v4867 = vadd.f32 %v4642, %v4866
        %v4868 = vpop.f32.mrb[0].mxu0
        %4869 = vmatprep.mubr.f32.mxu0 %v4045
        %4870 = vmatmul.mubr.f32.gmra.mrb[0].mxu0 %v4044
        %v4871 = vpop.f32.mrb[0].mxu0
        %v4872 = vadd.f32 %v4647, %v4871
        %v4873 = vpop.f32.mrb[0].mxu0
        %4874 = vdwg.mxu0
        %4875 = vmatprep.subr.mxu0 0.0
        %4876 = vmatpush1.msra.mxu0 %v4145
        %4877 = vmatprep.subr.mxu0 0.0
        %4878 = vmatpush1.msra.mxu0 %v4146
        %4879 = vmatprep.subr.mxu0 0.0
        %4880 = vmatpush1.msra.mxu0 %v4147
        %4881 = vmatprep.subr.mxu0 0.0
        %4882 = vmatpush1.msra.mxu0 %v4148
        %4883 = vmatprep.subr.mxu0 0.0
        %4884 = vmatpush1.msra.mxu0 %v4149
        %4885 = vmatprep.subr.mxu0 0.0
        %4886 = vmatpush1.msra.mxu0 %v4150
        %4887 = vmatprep.subr.mxu0 0.0
        %4888 = vmatpush1.msra.mxu0 %v4151
        %4889 = vmatprep.subr.mxu0 0.0
        %4890 = vmatpush1.msra.mxu0 %v4152
        %4891 = vmatprep.subr.mxu0 0.0
        %4892 = vmatpush1.msra.mxu0 %v4153
        %4893 = vmatprep.subr.mxu0 0.0
        %4894 = vmatpush1.msra.mxu0 %v4154
        %4895 = vmatprep.subr.mxu0 0.0
        %4896 = vmatpush1.msra.mxu0 %v4155
        %4897 = vmatprep.subr.mxu0 0.0
        %4898 = vmatpush1.msra.mxu0 %v4156
        %4899 = vmatprep.subr.mxu0 0.0
        %4900 = vmatpush1.msra.mxu0 %v4157
        %4901 = vmatprep.subr.mxu0 0.0
        %4902 = vmatpush1.msra.mxu0 %v4158
        %4903 = vmatprep.subr.mxu0 0.0
        %4904 = vmatpush1.msra.mxu0 %v4159
        %4905 = vmatprep.subr.mxu0 0.0
        %4906 = vmatpush1.msra.mxu0 %v4160
        %4907 = vmatprep.subr.mxu0 0.0
        %4908 = vmatpush1.msra.mxu0 %v4161
        %4909 = vmatprep.subr.mxu0 0.0
        %4910 = vmatpush1.msra.mxu0 %v4162
        %4911 = vmatprep.subr.mxu0 0.0
        %4912 = vmatpush1.msra.mxu0 %v4163
        %4913 = vmatprep.subr.mxu0 0.0
        %4914 = vmatpush1.msra.mxu0 %v4164
        %4915 = vmatprep.subr.mxu0 0.0
        %4916 = vmatpush1.msra.mxu0 %v4165
        %4917 = vmatprep.subr.mxu0 0.0
        %4918 = vmatpush1.msra.mxu0 %v4166
        %4919 = vmatprep.subr.mxu0 0.0
        %4920 = vmatpush1.msra.mxu0 %v4167
        %4921 = vmatprep.subr.mxu0 0.0
        %4922 = vmatpush1.msra.mxu0 %v4168
        %4923 = vmatprep.subr.mxu0 0.0
        %4924 = vmatpush1.msra.mxu0 %v4169
        %4925 = vmatprep.subr.mxu0 0.0
        %4926 = vmatpush1.msra.mxu0 %v4170
        %4927 = vmatprep.subr.mxu0 0.0
        %4928 = vmatpush1.msra.mxu0 %v4171
        %4929 = vmatprep.subr.mxu0 0.0
        %4930 = vmatpush1.msra.mxu0 %v4172
        %4931 = vmatprep.subr.mxu0 0.0
        %4932 = vmatpush1.msra.mxu0 %v4173
        %4933 = vmatprep.subr.mxu0 0.0
        %4934 = vmatpush1.msra.mxu0 %v4174
        %4935 = vmatprep.subr.mxu0 0.0
        %4936 = vmatpush1.msra.mxu0 %v4175
        %4937 = vmatprep.subr.mxu0 0.0
        %4938 = vmatpush1.msra.mxu0 %v4176
        %4939 = vmatprep.mubr.f32.mxu0 %v3768
        %4940 = vmatmul.mubr.f32.gmra.mrb[0].mxu0 %v3767
        %v4941 = vpop.f32.mrb[0].mxu0
        %v4942 = vadd.f32 %v4717, %v4941
        %v4943 = vpop.f32.mrb[0].mxu0
        %4944 = vmatprep.mubr.f32.mxu0 %v3777
        %4945 = vmatmul.mubr.f32.gmra.mrb[0].mxu0 %v3776
        %v4946 = vpop.f32.mrb[0].mxu0
        %v4947 = vadd.f32 %v4722, %v4946
        %v4948 = vpop.f32.mrb[0].mxu0
        %4949 = vmatprep.mubr.f32.mxu0 %v3786
        %4950 = vmatmul.mubr.f32.gmra.mrb[0].mxu0 %v3785
        %v4951 = vpop.f32.mrb[0].mxu0
        %v4952 = vadd.f32 %v4727, %v4951
        %v4953 = vpop.f32.mrb[0].mxu0
        %4954 = vmatprep.mubr.f32.mxu0 %v3795
        %4955 = vmatmul.mubr.f32.gmra.mrb[0].mxu0 %v3794
        %v4956 = vpop.f32.mrb[0].mxu0
        %v4957 = vadd.f32 %v4732, %v4956
        %v4958 = vpop.f32.mrb[0].mxu0
        %4959 = vmatprep.mubr.f32.mxu0 %v3804
        %4960 = vmatmul.mubr.f32.gmra.mrb[0].mxu0 %v3803
        %v4961 = vpop.f32.mrb[0].mxu0
        %v4962 = vadd.f32 %v4737, %v4961
        %v4963 = vpop.f32.mrb[0].mxu0
        %4964 = vmatprep.mubr.f32.mxu0 %v3813
        %4965 = vmatmul.mubr.f32.gmra.mrb[0].mxu0 %v3812
        %v4966 = vpop.f32.mrb[0].mxu0
        %v4967 = vadd.f32 %v4742, %v4966
        %v4968 = vpop.f32.mrb[0].mxu0
        %4969 = vmatprep.mubr.f32.mxu0 %v3822
        %4970 = vmatmul.mubr.f32.gmra.mrb[0].mxu0 %v3821
        %v4971 = vpop.f32.mrb[0].mxu0
        %v4972 = vadd.f32 %v4747, %v4971
        %v4973 = vpop.f32.mrb[0].mxu0
        %4974 = vmatprep.mubr.f32.mxu0 %v3831
        %4975 = vmatmul.mubr.f32.gmra.mrb[0].mxu0 %v3830
        %v4976 = vpop.f32.mrb[0].mxu0
        %v4977 = vadd.f32 %v4752, %v4976
        %v4978 = vpop.f32.mrb[0].mxu0
        %4979 = vmatprep.mubr.f32.mxu0 %v3840
        %4980 = vmatmul.mubr.f32.gmra.mrb[0].mxu0 %v3839
        %v4981 = vpop.f32.mrb[0].mxu0
        %v4982 = vadd.f32 %v4757, %v4981
        %v4983 = vpop.f32.mrb[0].mxu0
        %4984 = vmatprep.mubr.f32.mxu0 %v3849
        %4985 = vmatmul.mubr.f32.gmra.mrb[0].mxu0 %v3848
        %v4986 = vpop.f32.mrb[0].mxu0
        %v4987 = vadd.f32 %v4762, %v4986
        %v4988 = vpop.f32.mrb[0].mxu0
        %4989 = vmatprep.mubr.f32.mxu0 %v3858
        %4990 = vmatmul.mubr.f32.gmra.mrb[0].mxu0 %v3857
        %v4991 = vpop.f32.mrb[0].mxu0
        %v4992 = vadd.f32 %v4767, %v4991
        %v4993 = vpop.f32.mrb[0].mxu0
        %4994 = vmatprep.mubr.f32.mxu0 %v3867
        %4995 = vmatmul.mubr.f32.gmra.mrb[0].mxu0 %v3866
        %v4996 = vpop.f32.mrb[0].mxu0
        %v4997 = vadd.f32 %v4772, %v4996
        %v4998 = vpop.f32.mrb[0].mxu0
        %4999 = vmatprep.mubr.f32.mxu0 %v3876
        %5000 = vmatmul.mubr.f32.gmra.mrb[0].mxu0 %v3875
        %v5001 = vpop.f32.mrb[0].mxu0
        %v5002 = vadd.f32 %v4777, %v5001
        %v5003 = vpop.f32.mrb[0].mxu0
        %5004 = vmatprep.mubr.f32.mxu0 %v3885
        %5005 = vmatmul.mubr.f32.gmra.mrb[0].mxu0 %v3884
        %v5006 = vpop.f32.mrb[0].mxu0
        %v5007 = vadd.f32 %v4782, %v5006
        %v5008 = vpop.f32.mrb[0].mxu0
        %5009 = vmatprep.mubr.f32.mxu0 %v3894
        %5010 = vmatmul.mubr.f32.gmra.mrb[0].mxu0 %v3893
        %v5011 = vpop.f32.mrb[0].mxu0
        %v5012 = vadd.f32 %v4787, %v5011
        %v5013 = vpop.f32.mrb[0].mxu0
        %5014 = vmatprep.mubr.f32.mxu0 %v3903
        %5015 = vmatmul.mubr.f32.gmra.mrb[0].mxu0 %v3902
        %v5016 = vpop.f32.mrb[0].mxu0
        %v5017 = vadd.f32 %v4792, %v5016
        %v5018 = vpop.f32.mrb[0].mxu0
        %5019 = vmatprep.mubr.f32.mxu0 %v3912
        %5020 = vmatmul.mubr.f32.gmra.mrb[0].mxu0 %v3911
        %v5021 = vpop.f32.mrb[0].mxu0
        %v5022 = vadd.f32 %v4797, %v5021
        %v5023 = vpop.f32.mrb[0].mxu0
        %5024 = vmatprep.mubr.f32.mxu0 %v3921
        %5025 = vmatmul.mubr.f32.gmra.mrb[0].mxu0 %v3920
        %v5026 = vpop.f32.mrb[0].mxu0
        %v5027 = vadd.f32 %v4802, %v5026
        %v5028 = vpop.f32.mrb[0].mxu0
        %5029 = vmatprep.mubr.f32.mxu0 %v3930
        %5030 = vmatmul.mubr.f32.gmra.mrb[0].mxu0 %v3929
        %v5031 = vpop.f32.mrb[0].mxu0
        %v5032 = vadd.f32 %v4807, %v5031
        %v5033 = vpop.f32.mrb[0].mxu0
        %5034 = vmatprep.mubr.f32.mxu0 %v3939
        %5035 = vmatmul.mubr.f32.gmra.mrb[0].mxu0 %v3938
        %v5036 = vpop.f32.mrb[0].mxu0
        %v5037 = vadd.f32 %v4812, %v5036
        %v5038 = vpop.f32.mrb[0].mxu0
        %5039 = vmatprep.mubr.f32.mxu0 %v3948
        %5040 = vmatmul.mubr.f32.gmra.mrb[0].mxu0 %v3947
        %v5041 = vpop.f32.mrb[0].mxu0
        %v5042 = vadd.f32 %v4817, %v5041
        %v5043 = vpop.f32.mrb[0].mxu0
        %5044 = vmatprep.mubr.f32.mxu0 %v3957
        %5045 = vmatmul.mubr.f32.gmra.mrb[0].mxu0 %v3956
        %v5046 = vpop.f32.mrb[0].mxu0
        %v5047 = vadd.f32 %v4822, %v5046
        %v5048 = vpop.f32.mrb[0].mxu0
        %5049 = vmatprep.mubr.f32.mxu0 %v3966
        %5050 = vmatmul.mubr.f32.gmra.mrb[0].mxu0 %v3965
        %v5051 = vpop.f32.mrb[0].mxu0
        %v5052 = vadd.f32 %v4827, %v5051
        %v5053 = vpop.f32.mrb[0].mxu0
        %5054 = vmatprep.mubr.f32.mxu0 %v3975
        %5055 = vmatmul.mubr.f32.gmra.mrb[0].mxu0 %v3974
        %v5056 = vpop.f32.mrb[0].mxu0
        %v5057 = vadd.f32 %v4832, %v5056
        %v5058 = vpop.f32.mrb[0].mxu0
        %5059 = vmatprep.mubr.f32.mxu0 %v3984
        %5060 = vmatmul.mubr.f32.gmra.mrb[0].mxu0 %v3983
        %v5061 = vpop.f32.mrb[0].mxu0
        %v5062 = vadd.f32 %v4837, %v5061
        %v5063 = vpop.f32.mrb[0].mxu0
        %5064 = vmatprep.mubr.f32.mxu0 %v3993
        %5065 = vmatmul.mubr.f32.gmra.mrb[0].mxu0 %v3992
        %v5066 = vpop.f32.mrb[0].mxu0
        %v5067 = vadd.f32 %v4842, %v5066
        %v5068 = vpop.f32.mrb[0].mxu0
        %5069 = vmatprep.mubr.f32.mxu0 %v4002
        %5070 = vmatmul.mubr.f32.gmra.mrb[0].mxu0 %v4001
        %v5071 = vpop.f32.mrb[0].mxu0
        %v5072 = vadd.f32 %v4847, %v5071
        %v5073 = vpop.f32.mrb[0].mxu0
        %5074 = vmatprep.mubr.f32.mxu0 %v4011
        %5075 = vmatmul.mubr.f32.gmra.mrb[0].mxu0 %v4010
        %v5076 = vpop.f32.mrb[0].mxu0
        %v5077 = vadd.f32 %v4852, %v5076
        %v5078 = vpop.f32.mrb[0].mxu0
        %5079 = vmatprep.mubr.f32.mxu0 %v4020
        %5080 = vmatmul.mubr.f32.gmra.mrb[0].mxu0 %v4019
        %v5081 = vpop.f32.mrb[0].mxu0
        %v5082 = vadd.f32 %v4857, %v5081
        %v5083 = vpop.f32.mrb[0].mxu0
        %5084 = vmatprep.mubr.f32.mxu0 %v4029
        %5085 = vmatmul.mubr.f32.gmra.mrb[0].mxu0 %v4028
        %v5086 = vpop.f32.mrb[0].mxu0
        %v5087 = vadd.f32 %v4862, %v5086
        %v5088 = vpop.f32.mrb[0].mxu0
        %5089 = vmatprep.mubr.f32.mxu0 %v4038
        %5090 = vmatmul.mubr.f32.gmra.mrb[0].mxu0 %v4037
        %v5091 = vpop.f32.mrb[0].mxu0
        %v5092 = vadd.f32 %v4867, %v5091
        %v5093 = vpop.f32.mrb[0].mxu0
        %5094 = vmatprep.mubr.f32.mxu0 %v4047
        %5095 = vmatmul.mubr.f32.gmra.mrb[0].mxu0 %v4046
        %v5096 = vpop.f32.mrb[0].mxu0
        %v5097 = vadd.f32 %v4872, %v5096
        %v5098 = vpop.f32.mrb[0].mxu0
        %5099 = vdwg.mxu0
        %5100 = vmatprep.subr.mxu0 0.0
        %5101 = vmatpush1.msra.mxu0 %v4177
        %5102 = vmatprep.subr.mxu0 0.0
        %5103 = vmatpush1.msra.mxu0 %v4178
        %5104 = vmatprep.subr.mxu0 0.0
        %5105 = vmatpush1.msra.mxu0 %v4179
        %5106 = vmatprep.subr.mxu0 0.0
        %5107 = vmatpush1.msra.mxu0 %v4180
        %5108 = vmatprep.subr.mxu0 0.0
        %5109 = vmatpush1.msra.mxu0 %v4181
        %5110 = vmatprep.subr.mxu0 0.0
        %5111 = vmatpush1.msra.mxu0 %v4182
        %5112 = vmatprep.subr.mxu0 0.0
        %5113 = vmatpush1.msra.mxu0 %v4183
        %5114 = vmatprep.subr.mxu0 0.0
        %5115 = vmatpush1.msra.mxu0 %v4184
        %5116 = vmatprep.subr.mxu0 0.0
        %5117 = vmatpush1.msra.mxu0 %v4185
        %5118 = vmatprep.subr.mxu0 0.0
        %5119 = vmatpush1.msra.mxu0 %v4186
        %5120 = vmatprep.subr.mxu0 0.0
        %5121 = vmatpush1.msra.mxu0 %v4187
        %5122 = vmatprep.subr.mxu0 0.0
        %5123 = vmatpush1.msra.mxu0 %v4188
        %5124 = vmatprep.subr.mxu0 0.0
        %5125 = vmatpush1.msra.mxu0 %v4189
        %5126 = vmatprep.subr.mxu0 0.0
        %5127 = vmatpush1.msra.mxu0 %v4190
        %5128 = vmatprep.subr.mxu0 0.0
        %5129 = vmatpush1.msra.mxu0 %v4191
        %5130 = vmatprep.subr.mxu0 0.0
        %5131 = vmatpush1.msra.mxu0 %v4192
        %5132 = vmatprep.subr.mxu0 0.0
        %5133 = vmatpush1.msra.mxu0 0.0
        %5134 = vmatprep.subr.mxu0 0.0
        %5135 = vmatpush1.msra.mxu0 0.0
        %5136 = vmatprep.subr.mxu0 0.0
        %5137 = vmatpush1.msra.mxu0 0.0
        %5138 = vmatprep.subr.mxu0 0.0
        %5139 = vmatpush1.msra.mxu0 0.0
        %5140 = vmatprep.subr.mxu0 0.0
        %5141 = vmatpush1.msra.mxu0 0.0
        %5142 = vmatprep.subr.mxu0 0.0
        %5143 = vmatpush1.msra.mxu0 0.0
        %5144 = vmatprep.subr.mxu0 0.0
        %5145 = vmatpush1.msra.mxu0 0.0
        %5146 = vmatprep.subr.mxu0 0.0
        %5147 = vmatpush1.msra.mxu0 0.0
        %5148 = vmatprep.subr.mxu0 0.0
        %5149 = vmatpush1.msra.mxu0 0.0
        %5150 = vmatprep.subr.mxu0 0.0
        %5151 = vmatpush1.msra.mxu0 0.0
        %5152 = vmatprep.subr.mxu0 0.0
        %5153 = vmatpush1.msra.mxu0 0.0
        %5154 = vmatprep.subr.mxu0 0.0
        %5155 = vmatpush1.msra.mxu0 0.0
        %5156 = vmatprep.subr.mxu0 0.0
        %5157 = vmatpush1.msra.mxu0 0.0
        %5158 = vmatprep.subr.mxu0 0.0
        %5159 = vmatpush1.msra.mxu0 0.0
        %5160 = vmatprep.subr.mxu0 0.0
        %5161 = vmatpush1.msra.mxu0 0.0
        %5162 = vmatprep.subr.mxu0 0.0
        %5163 = vmatpush1.msra.mxu0 0.0
        %5164 = vmatprep.mubr.f32.mxu0 0.0
        %5165 = vmatmul.mubr.f32.gmra.mrb[0].mxu0 %v3769
        %v5166 = vpop.f32.mrb[0].mxu0
        %v5167 = vadd.f32 %v4942, %v5166
        %v5168 = vpop.f32.mrb[0].mxu0
        %5169 = vmatprep.mubr.f32.mxu0 0.0
        %5170 = vmatmul.mubr.f32.gmra.mrb[0].mxu0 %v3778
        %v5171 = vpop.f32.mrb[0].mxu0
        %v5172 = vadd.f32 %v4947, %v5171
        %v5173 = vpop.f32.mrb[0].mxu0
        %5174 = vmatprep.mubr.f32.mxu0 0.0
        %5175 = vmatmul.mubr.f32.gmra.mrb[0].mxu0 %v3787
        %v5176 = vpop.f32.mrb[0].mxu0
        %v5177 = vadd.f32 %v4952, %v5176
        %v5178 = vpop.f32.mrb[0].mxu0
        %5179 = vmatprep.mubr.f32.mxu0 0.0
        %5180 = vmatmul.mubr.f32.gmra.mrb[0].mxu0 %v3796
        %v5181 = vpop.f32.mrb[0].mxu0
        %v5182 = vadd.f32 %v4957, %v5181
        %v5183 = vpop.f32.mrb[0].mxu0
        %5184 = vmatprep.mubr.f32.mxu0 0.0
        %5185 = vmatmul.mubr.f32.gmra.mrb[0].mxu0 %v3805
        %v5186 = vpop.f32.mrb[0].mxu0
        %v5187 = vadd.f32 %v4962, %v5186
        %v5188 = vpop.f32.mrb[0].mxu0
        %5189 = vmatprep.mubr.f32.mxu0 0.0
        %5190 = vmatmul.mubr.f32.gmra.mrb[0].mxu0 %v3814
        %v5191 = vpop.f32.mrb[0].mxu0
        %v5192 = vadd.f32 %v4967, %v5191
        %v5193 = vpop.f32.mrb[0].mxu0
        %5194 = vmatprep.mubr.f32.mxu0 0.0
        %5195 = vmatmul.mubr.f32.gmra.mrb[0].mxu0 %v3823
        %v5196 = vpop.f32.mrb[0].mxu0
        %v5197 = vadd.f32 %v4972, %v5196
        %v5198 = vpop.f32.mrb[0].mxu0
        %5199 = vmatprep.mubr.f32.mxu0 0.0
        %5200 = vmatmul.mubr.f32.gmra.mrb[0].mxu0 %v3832
        %v5201 = vpop.f32.mrb[0].mxu0
        %v5202 = vadd.f32 %v4977, %v5201
        %v5203 = vpop.f32.mrb[0].mxu0
        %5204 = vmatprep.mubr.f32.mxu0 0.0
        %5205 = vmatmul.mubr.f32.gmra.mrb[0].mxu0 %v3841
        %v5206 = vpop.f32.mrb[0].mxu0
        %v5207 = vadd.f32 %v4982, %v5206
        %v5208 = vpop.f32.mrb[0].mxu0
        %5209 = vmatprep.mubr.f32.mxu0 0.0
        %5210 = vmatmul.mubr.f32.gmra.mrb[0].mxu0 %v3850
        %v5211 = vpop.f32.mrb[0].mxu0
        %v5212 = vadd.f32 %v4987, %v5211
        %v5213 = vpop.f32.mrb[0].mxu0
        %5214 = vmatprep.mubr.f32.mxu0 0.0
        %5215 = vmatmul.mubr.f32.gmra.mrb[0].mxu0 %v3859
        %v5216 = vpop.f32.mrb[0].mxu0
        %v5217 = vadd.f32 %v4992, %v5216
        %v5218 = vpop.f32.mrb[0].mxu0
        %5219 = vmatprep.mubr.f32.mxu0 0.0
        %5220 = vmatmul.mubr.f32.gmra.mrb[0].mxu0 %v3868
        %v5221 = vpop.f32.mrb[0].mxu0
        %v5222 = vadd.f32 %v4997, %v5221
        %v5223 = vpop.f32.mrb[0].mxu0
        %5224 = vmatprep.mubr.f32.mxu0 0.0
        %5225 = vmatmul.mubr.f32.gmra.mrb[0].mxu0 %v3877
        %v5226 = vpop.f32.mrb[0].mxu0
        %v5227 = vadd.f32 %v5002, %v5226
        %v5228 = vpop.f32.mrb[0].mxu0
        %5229 = vmatprep.mubr.f32.mxu0 0.0
        %5230 = vmatmul.mubr.f32.gmra.mrb[0].mxu0 %v3886
        %v5231 = vpop.f32.mrb[0].mxu0
        %v5232 = vadd.f32 %v5007, %v5231
        %v5233 = vpop.f32.mrb[0].mxu0
        %5234 = vmatprep.mubr.f32.mxu0 0.0
        %5235 = vmatmul.mubr.f32.gmra.mrb[0].mxu0 %v3895
        %v5236 = vpop.f32.mrb[0].mxu0
        %v5237 = vadd.f32 %v5012, %v5236
        %v5238 = vpop.f32.mrb[0].mxu0
        %5239 = vmatprep.mubr.f32.mxu0 0.0
        %5240 = vmatmul.mubr.f32.gmra.mrb[0].mxu0 %v3904
        %v5241 = vpop.f32.mrb[0].mxu0
        %v5242 = vadd.f32 %v5017, %v5241
        %v5243 = vpop.f32.mrb[0].mxu0
        %5244 = vmatprep.mubr.f32.mxu0 0.0
        %5245 = vmatmul.mubr.f32.gmra.mrb[0].mxu0 %v3913
        %v5246 = vpop.f32.mrb[0].mxu0
        %v5247 = vadd.f32 %v5022, %v5246
        %v5248 = vpop.f32.mrb[0].mxu0
        %5249 = vmatprep.mubr.f32.mxu0 0.0
        %5250 = vmatmul.mubr.f32.gmra.mrb[0].mxu0 %v3922
        %v5251 = vpop.f32.mrb[0].mxu0
        %v5252 = vadd.f32 %v5027, %v5251
        %v5253 = vpop.f32.mrb[0].mxu0
        %5254 = vmatprep.mubr.f32.mxu0 0.0
        %5255 = vmatmul.mubr.f32.gmra.mrb[0].mxu0 %v3931
        %v5256 = vpop.f32.mrb[0].mxu0
        %v5257 = vadd.f32 %v5032, %v5256
        %v5258 = vpop.f32.mrb[0].mxu0
        %5259 = vmatprep.mubr.f32.mxu0 0.0
        %5260 = vmatmul.mubr.f32.gmra.mrb[0].mxu0 %v3940
        %v5261 = vpop.f32.mrb[0].mxu0
        %v5262 = vadd.f32 %v5037, %v5261
        %v5263 = vpop.f32.mrb[0].mxu0
        %5264 = vmatprep.mubr.f32.mxu0 0.0
        %5265 = vmatmul.mubr.f32.gmra.mrb[0].mxu0 %v3949
        %v5266 = vpop.f32.mrb[0].mxu0
        %v5267 = vadd.f32 %v5042, %v5266
        %v5268 = vpop.f32.mrb[0].mxu0
        %5269 = vmatprep.mubr.f32.mxu0 0.0
        %5270 = vmatmul.mubr.f32.gmra.mrb[0].mxu0 %v3958
        %v5271 = vpop.f32.mrb[0].mxu0
        %v5272 = vadd.f32 %v5047, %v5271
        %v5273 = vpop.f32.mrb[0].mxu0
        %5274 = vmatprep.mubr.f32.mxu0 0.0
        %5275 = vmatmul.mubr.f32.gmra.mrb[0].mxu0 %v3967
        %v5276 = vpop.f32.mrb[0].mxu0
        %v5277 = vadd.f32 %v5052, %v5276
        %v5278 = vpop.f32.mrb[0].mxu0
        %5279 = vmatprep.mubr.f32.mxu0 0.0
        %5280 = vmatmul.mubr.f32.gmra.mrb[0].mxu0 %v3976
        %v5281 = vpop.f32.mrb[0].mxu0
        %v5282 = vadd.f32 %v5057, %v5281
        %v5283 = vpop.f32.mrb[0].mxu0
        %5284 = vmatprep.mubr.f32.mxu0 0.0
        %5285 = vmatmul.mubr.f32.gmra.mrb[0].mxu0 %v3985
        %v5286 = vpop.f32.mrb[0].mxu0
        %v5287 = vadd.f32 %v5062, %v5286
        %v5288 = vpop.f32.mrb[0].mxu0
        %5289 = vmatprep.mubr.f32.mxu0 0.0
        %5290 = vmatmul.mubr.f32.gmra.mrb[0].mxu0 %v3994
        %v5291 = vpop.f32.mrb[0].mxu0
        %v5292 = vadd.f32 %v5067, %v5291
        %v5293 = vpop.f32.mrb[0].mxu0
        %5294 = vmatprep.mubr.f32.mxu0 0.0
        %5295 = vmatmul.mubr.f32.gmra.mrb[0].mxu0 %v4003
        %v5296 = vpop.f32.mrb[0].mxu0
        %v5297 = vadd.f32 %v5072, %v5296
        %v5298 = vpop.f32.mrb[0].mxu0
        %5299 = vmatprep.mubr.f32.mxu0 0.0
        %5300 = vmatmul.mubr.f32.gmra.mrb[0].mxu0 %v4012
        %v5301 = vpop.f32.mrb[0].mxu0
        %v5302 = vadd.f32 %v5077, %v5301
        %v5303 = vpop.f32.mrb[0].mxu0
        %5304 = vmatprep.mubr.f32.mxu0 0.0
        %5305 = vmatmul.mubr.f32.gmra.mrb[0].mxu0 %v4021
        %v5306 = vpop.f32.mrb[0].mxu0
        %v5307 = vadd.f32 %v5082, %v5306
        %v5308 = vpop.f32.mrb[0].mxu0
        %5309 = vmatprep.mubr.f32.mxu0 0.0
        %5310 = vmatmul.mubr.f32.gmra.mrb[0].mxu0 %v4030
        %v5311 = vpop.f32.mrb[0].mxu0
        %v5312 = vadd.f32 %v5087, %v5311
        %v5313 = vpop.f32.mrb[0].mxu0
        %5314 = vmatprep.mubr.f32.mxu0 0.0
        %5315 = vmatmul.mubr.f32.gmra.mrb[0].mxu0 %v4039
        %v5316 = vpop.f32.mrb[0].mxu0
        %v5317 = vadd.f32 %v5092, %v5316
        %v5318 = vpop.f32.mrb[0].mxu0
        %5319 = vmatprep.mubr.f32.mxu0 0.0
        %5320 = vmatmul.mubr.f32.gmra.mrb[0].mxu0 %v4048
        %v5321 = vpop.f32.mrb[0].mxu0
        %v5322 = vadd.f32 %v5097, %v5321
        %v5323 = vpop.f32.mrb[0].mxu0
        %5324 = vdwg.mxu0
        %v5325 = vmax.f32 %v5167, 0.0
        %v5326 = vmax.f32 %v5172, 0.0
        %v5327 = vmax.f32 %v5177, 0.0
        %v5328 = vmax.f32 %v5182, 0.0
        %v5329 = vmax.f32 %v5187, 0.0
        %v5330 = vmax.f32 %v5192, 0.0
        %v5331 = vmax.f32 %v5197, 0.0
        %v5332 = vmax.f32 %v5202, 0.0
        %v5333 = vmax.f32 %v5207, 0.0
        %v5334 = vmax.f32 %v5212, 0.0
        %v5335 = vmax.f32 %v5217, 0.0
        %v5336 = vmax.f32 %v5222, 0.0
        %v5337 = vmax.f32 %v5227, 0.0
        %v5338 = vmax.f32 %v5232, 0.0
        %v5339 = vmax.f32 %v5237, 0.0
        %v5340 = vmax.f32 %v5242, 0.0
        %v5341 = vmax.f32 %v5247, 0.0
        %v5342 = vmax.f32 %v5252, 0.0
        %v5343 = vmax.f32 %v5257, 0.0
        %v5344 = vmax.f32 %v5262, 0.0
        %v5345 = vmax.f32 %v5267, 0.0
        %v5346 = vmax.f32 %v5272, 0.0
        %v5347 = vmax.f32 %v5277, 0.0
        %v5348 = vmax.f32 %v5282, 0.0
        %v5349 = vmax.f32 %v5287, 0.0
        %v5350 = vmax.f32 %v5292, 0.0
        %v5351 = vmax.f32 %v5297, 0.0
        %v5352 = vmax.f32 %v5302, 0.0
        %v5353 = vmax.f32 %v5307, 0.0
        %v5354 = vmax.f32 %v5312, 0.0
        %v5355 = vmax.f32 %v5317, 0.0
        %v5356 = vmax.f32 %v5322, 0.0
        %5389 = vrot.lane.b32.xlu0 %v5325, 64
        %v5390 = vpop.permute.xlu0 %5389
        %5391 = vrot.lane.b32.xlu0 %v5326, 64
        %v5392 = vpop.permute.xlu0 %5391
        %5393 = vrot.lane.b32.xlu0 %v5327, 64
        %v5394 = vpop.permute.xlu0 %5393
        %5395 = vrot.lane.b32.xlu0 %v5328, 64
        %v5396 = vpop.permute.xlu0 %5395
        %5397 = vrot.lane.b32.xlu0 %v5329, 64
        %v5398 = vpop.permute.xlu0 %5397
        %5399 = vrot.lane.b32.xlu0 %v5330, 64
        %v5400 = vpop.permute.xlu0 %5399
        %5401 = vrot.lane.b32.xlu0 %v5331, 64
        %v5402 = vpop.permute.xlu0 %5401
        %5403 = vrot.lane.b32.xlu0 %v5332, 64
        %v5404 = vpop.permute.xlu0 %5403
        %5405 = vrot.lane.b32.xlu0 %v5333, 64
        %v5406 = vpop.permute.xlu0 %5405
        %5407 = vrot.lane.b32.xlu0 %v5334, 64
        %v5408 = vpop.permute.xlu0 %5407
        %5409 = vrot.lane.b32.xlu0 %v5335, 64
        %v5410 = vpop.permute.xlu0 %5409
        %5411 = vrot.lane.b32.xlu0 %v5336, 64
        %v5412 = vpop.permute.xlu0 %5411
        %5413 = vrot.lane.b32.xlu0 %v5337, 64
        %v5414 = vpop.permute.xlu0 %5413
        %5415 = vrot.lane.b32.xlu0 %v5338, 64
        %v5416 = vpop.permute.xlu0 %5415
        %5417 = vrot.lane.b32.xlu0 %v5339, 64
        %v5418 = vpop.permute.xlu0 %5417
        %5419 = vrot.lane.b32.xlu0 %v5340, 64
        %v5420 = vpop.permute.xlu0 %5419
        %5421 = vrot.lane.b32.xlu0 %v5341, 64
        %v5422 = vpop.permute.xlu0 %5421
        %5423 = vrot.lane.b32.xlu0 %v5342, 64
        %v5424 = vpop.permute.xlu0 %5423
        %5425 = vrot.lane.b32.xlu0 %v5343, 64
        %v5426 = vpop.permute.xlu0 %5425
        %5427 = vrot.lane.b32.xlu0 %v5344, 64
        %v5428 = vpop.permute.xlu0 %5427
        %5429 = vrot.lane.b32.xlu0 %v5345, 64
        %v5430 = vpop.permute.xlu0 %5429
        %5431 = vrot.lane.b32.xlu0 %v5346, 64
        %v5432 = vpop.permute.xlu0 %5431
        %5433 = vrot.lane.b32.xlu0 %v5347, 64
        %v5434 = vpop.permute.xlu0 %5433
        %5435 = vrot.lane.b32.xlu0 %v5348, 64
        %v5436 = vpop.permute.xlu0 %5435
        %5437 = vrot.lane.b32.xlu0 %v5349, 64
        %v5438 = vpop.permute.xlu0 %5437
        %5439 = vrot.lane.b32.xlu0 %v5350, 64
        %v5440 = vpop.permute.xlu0 %5439
        %5441 = vrot.lane.b32.xlu0 %v5351, 64
        %v5442 = vpop.permute.xlu0 %5441
        %5443 = vrot.lane.b32.xlu0 %v5352, 64
        %v5444 = vpop.permute.xlu0 %5443
        %5445 = vrot.lane.b32.xlu0 %v5353, 64
        %v5446 = vpop.permute.xlu0 %5445
        %5447 = vrot.lane.b32.xlu0 %v5354, 64
        %v5448 = vpop.permute.xlu0 %5447
        %5449 = vrot.lane.b32.xlu0 %v5355, 64
        %v5450 = vpop.permute.xlu0 %5449
        %5451 = vrot.lane.b32.xlu0 %v5356, 64
        %v5452 = vpop.permute.xlu0 %5451
        %v5485 = vsub.f32 %v5325, %v5390
        %v5486 = vsub.f32 %v5326, %v5392
        %v5487 = vsub.f32 %v5327, %v5394
        %v5488 = vsub.f32 %v5328, %v5396
        %v5489 = vsub.f32 %v5329, %v5398
        %v5490 = vsub.f32 %v5330, %v5400
        %v5491 = vsub.f32 %v5331, %v5402
        %v5492 = vsub.f32 %v5332, %v5404
        %v5493 = vsub.f32 %v5333, %v5406
        %v5494 = vsub.f32 %v5334, %v5408
        %v5495 = vsub.f32 %v5335, %v5410
        %v5496 = vsub.f32 %v5336, %v5412
        %v5497 = vsub.f32 %v5337, %v5414
        %v5498 = vsub.f32 %v5338, %v5416
        %v5499 = vsub.f32 %v5339, %v5418
        %v5500 = vsub.f32 %v5340, %v5420
        %v5501 = vsub.f32 %v5341, %v5422
        %v5502 = vsub.f32 %v5342, %v5424
        %v5503 = vsub.f32 %v5343, %v5426
        %v5504 = vsub.f32 %v5344, %v5428
        %v5505 = vsub.f32 %v5345, %v5430
        %v5506 = vsub.f32 %v5346, %v5432
        %v5507 = vsub.f32 %v5347, %v5434
        %v5508 = vsub.f32 %v5348, %v5436
        %v5509 = vsub.f32 %v5349, %v5438
        %v5510 = vsub.f32 %v5350, %v5440
        %v5511 = vsub.f32 %v5351, %v5442
        %v5512 = vsub.f32 %v5352, %v5444
        %v5513 = vsub.f32 %v5353, %v5446
        %v5514 = vsub.f32 %v5354, %v5448
        %v5515 = vsub.f32 %v5355, %v5450
        %v5516 = vsub.f32 %v5356, %v5452
        %v5517 = vand.u32 2147483647, %v5485
        %v5518 = vand.u32 2147483647, %v5486
        %v5519 = vand.u32 2147483647, %v5487
        %v5520 = vand.u32 2147483647, %v5488
        %v5521 = vand.u32 2147483647, %v5489
        %v5522 = vand.u32 2147483647, %v5490
        %v5523 = vand.u32 2147483647, %v5491
        %v5524 = vand.u32 2147483647, %v5492
        %v5525 = vand.u32 2147483647, %v5493
        %v5526 = vand.u32 2147483647, %v5494
        %v5527 = vand.u32 2147483647, %v5495
        %v5528 = vand.u32 2147483647, %v5496
        %v5529 = vand.u32 2147483647, %v5497
        %v5530 = vand.u32 2147483647, %v5498
        %v5531 = vand.u32 2147483647, %v5499
        %v5532 = vand.u32 2147483647, %v5500
        %v5533 = vand.u32 2147483647, %v5501
        %v5534 = vand.u32 2147483647, %v5502
        %v5535 = vand.u32 2147483647, %v5503
        %v5536 = vand.u32 2147483647, %v5504
        %v5537 = vand.u32 2147483647, %v5505
        %v5538 = vand.u32 2147483647, %v5506
        %v5539 = vand.u32 2147483647, %v5507
        %v5540 = vand.u32 2147483647, %v5508
        %v5541 = vand.u32 2147483647, %v5509
        %v5542 = vand.u32 2147483647, %v5510
        %v5543 = vand.u32 2147483647, %v5511
        %v5544 = vand.u32 2147483647, %v5512
        %v5545 = vand.u32 2147483647, %v5513
        %v5546 = vand.u32 2147483647, %v5514
        %v5547 = vand.u32 2147483647, %v5515
        %v5548 = vand.u32 2147483647, %v5516
        %vm5549 = vcmask 523264
        %v5550 = vsel %vm5549, %v5517, 0.0
        %v5551 = vsel %vm5549, %v5518, 0.0
        %v5552 = vadd.f32 %v5550, %v5551
        %v5553 = vsel %vm5549, %v5519, 0.0
        %v5554 = vadd.f32 %v5552, %v5553
        %v5555 = vsel %vm5549, %v5520, 0.0
        %v5556 = vadd.f32 %v5554, %v5555
        %v5557 = vsel %vm5549, %v5521, 0.0
        %v5558 = vadd.f32 %v5556, %v5557
        %v5559 = vsel %vm5549, %v5522, 0.0
        %v5560 = vadd.f32 %v5558, %v5559
        %v5561 = vsel %vm5549, %v5523, 0.0
        %v5562 = vadd.f32 %v5560, %v5561
        %v5563 = vsel %vm5549, %v5524, 0.0
        %v5564 = vadd.f32 %v5562, %v5563
        %v5565 = vsel %vm5549, %v5525, 0.0
        %v5566 = vadd.f32 %v5564, %v5565
        %v5567 = vsel %vm5549, %v5526, 0.0
        %v5568 = vadd.f32 %v5566, %v5567
        %v5569 = vsel %vm5549, %v5527, 0.0
        %v5570 = vadd.f32 %v5568, %v5569
        %v5571 = vsel %vm5549, %v5528, 0.0
        %v5572 = vadd.f32 %v5570, %v5571
        %v5573 = vsel %vm5549, %v5529, 0.0
        %v5574 = vadd.f32 %v5572, %v5573
        %v5575 = vsel %vm5549, %v5530, 0.0
        %v5576 = vadd.f32 %v5574, %v5575
        %v5577 = vsel %vm5549, %v5531, 0.0
        %v5578 = vadd.f32 %v5576, %v5577
        %v5579 = vsel %vm5549, %v5532, 0.0
        %v5580 = vadd.f32 %v5578, %v5579
        %v5581 = vsel %vm5549, %v5533, 0.0
        %v5582 = vadd.f32 %v5580, %v5581
        %v5583 = vsel %vm5549, %v5534, 0.0
        %v5584 = vadd.f32 %v5582, %v5583
        %v5585 = vsel %vm5549, %v5535, 0.0
        %v5586 = vadd.f32 %v5584, %v5585
        %v5587 = vsel %vm5549, %v5536, 0.0
        %v5588 = vadd.f32 %v5586, %v5587
        %v5589 = vsel %vm5549, %v5537, 0.0
        %v5590 = vadd.f32 %v5588, %v5589
        %v5591 = vsel %vm5549, %v5538, 0.0
        %v5592 = vadd.f32 %v5590, %v5591
        %v5593 = vsel %vm5549, %v5539, 0.0
        %v5594 = vadd.f32 %v5592, %v5593
        %v5595 = vsel %vm5549, %v5540, 0.0
        %v5596 = vadd.f32 %v5594, %v5595
        %v5597 = vsel %vm5549, %v5541, 0.0
        %v5598 = vadd.f32 %v5596, %v5597
        %v5599 = vsel %vm5549, %v5542, 0.0
        %v5600 = vadd.f32 %v5598, %v5599
        %v5601 = vsel %vm5549, %v5543, 0.0
        %v5602 = vadd.f32 %v5600, %v5601
        %v5603 = vsel %vm5549, %v5544, 0.0
        %v5604 = vadd.f32 %v5602, %v5603
        %v5605 = vsel %vm5549, %v5545, 0.0
        %v5606 = vadd.f32 %v5604, %v5605
        %v5607 = vsel %vm5549, %v5546, 0.0
        %v5608 = vadd.f32 %v5606, %v5607
        %v5609 = vsel %vm5549, %v5547, 0.0
        %v5610 = vadd.f32 %v5608, %v5609
        %v5611 = vsel %vm5549, %v5548, 0.0
        %v5612 = vadd.f32 %v5610, %v5611
        %5613 = vadd.xlane.f32.xlu0 %v5612
        %v5614 = vpop.xlane.xlu0 %5613
        %v5615 = vrot.slane %v5614, 4
        %v5616 = vadd.f32 %v5614, %v5615
        %v5617 = vrot.slane %v5616, 2
        %v5618 = vadd.f32 %v5616, %v5617
        %v5619 = vrot.slane %v5618, 1
        %v5620 = vadd.f32 %v5618, %v5619
        %s5621 = vtos %v5620
        %v5622 = vstv %s5621
        %5623 = vst.msk [vmem:[%s372] sm:$0x1] %vm615, %v5622
        %p5624 = scmp.lt.s32.totalorder %s22, 1
        %s5625 = scalar_select %p5624, %s22, 1
        %s5626 = scalar_lea.vmem %s8, %s5625
        %p5627 = scmp.lt.s32.totalorder %s22, 1
        %s5628 = scalar_select %p5627, %s22, 1
        %s5629 = scalar_lea.vmem %s9, %s5628
        // Predicated region
        $region57: #{tpu_custom_call.1} parent=51 // pred_check
          %p5630 = pneg %p218
        $region58: #{tpu_custom_call.1} parent=51 // pred_check_branch
          %5632 = sbr.rel (%p5630) target = $region60
        $region59: #{tpu_custom_call.1} parent=51 // pred_region
          _
        $region60: #{tpu_custom_call.1} parent=51 // pred_fallthru
          _
        // Predicated region
        $region61: #{tpu_custom_call.1} parent=51 // pred_check
          %p5633 = pneg %p244
        $region62: #{tpu_custom_call.1} parent=51 // pred_check_branch
          %5635 = sbr.rel (%p5633) target = $region64
        $region63: #{tpu_custom_call.1} parent=51 // pred_region
          _
        $region64: #{tpu_custom_call.1} parent=51 // pred_fallthru
          _
      $region52: #{tpu_custom_call.1} parent=5 // pred_fallthru
        _
      %p5636 = scmp.le.s32.totalorder 2, %s17
      // Predicated region
      $region65: #{tpu_custom_call.1} parent=5 // pred_check
        %p5637 = pneg %p5636
      $region66: #{tpu_custom_call.1} parent=5 // pred_check_branch
        %5639 = sbr.rel (%p5637) target = $region68
      $region67: #{tpu_custom_call.1} parent=5 // pred_region
        %s5640 = ssub.s32 %s17, 2
        // Predicated region
        $region69: #{tpu_custom_call.1} parent=67 // pred_check
          %p5641 = pneg %p224
        $region70: #{tpu_custom_call.1} parent=67 // pred_check_branch
          %5643 = sbr.rel (%p5641) target = $region72
        $region71: #{tpu_custom_call.1} parent=67 // pred_region
          %p5644 = scmp.lt.s32.totalorder %s23, 1
          %s5645 = scalar_select %p5644, %s23, 1
          %s5646 = scalar_lea.vmem %s8, %s5645
        $region72: #{tpu_custom_call.1} parent=67 // pred_fallthru
          _
        // Predicated region
        $region73: #{tpu_custom_call.1} parent=67 // pred_check
          %p5647 = pneg %p250
        $region74: #{tpu_custom_call.1} parent=67 // pred_check_branch
          %5649 = sbr.rel (%p5647) target = $region76
        $region75: #{tpu_custom_call.1} parent=67 // pred_region
          %p5650 = scmp.lt.s32.totalorder %s23, 1
          %s5651 = scalar_select %p5650, %s23, 1
          %s5652 = scalar_lea.vmem %s9, %s5651
        $region76: #{tpu_custom_call.1} parent=67 // pred_fallthru
          _
      $region68: #{tpu_custom_call.1} parent=5 // pred_fallthru
        _
    $region6: #{tpu_custom_call.1} parent=1 // loop_footer
      %s21 = sadd.s32 1, %s17
    $region7: #{tpu_custom_call.1} parent=1 // loop_footer_branch
      %16 = sbr.rel target = $region3
    $region8: #{tpu_custom_call.1} parent=1 // loop_exit
      _
    %5653 = vsyncpa [#allocation6], 1
    %s5654 = scalar_lea.sflag [#allocation6], 1
    %5655 = vsyncpa %s5654, 1

</llo_original>
